<compile_context>
chip_gen: v6e
topology: v6e:2x2x1
jax: 0.10.0
libtpu: 0.0.40
codegen_flags: <defaults>
</compile_context>

<pallas_src>
import functools

import numpy as np
import jax
import jax.numpy as jnp
from jax.experimental import pallas as pl
from jax.experimental.pallas import tpu as pltpu

FEAT_DIM = 2048        # ResNet50 layer4 channels (= ClassBlock input_dim)
BOTTLENECK = 256       # num_bottleneck in ClassBlock_PCB
BN_EPS = 1e-5
BINS = (1, 3, 6)       # scales used in PPCB mode
N_BINS = sum(BINS)     # 10 classifiers
N_GROUPS = 2           # grid steps
GROUP = N_BINS // N_GROUPS   # bins per grid step (5)


def _bin_bounds(H):
    """(h0, h1) row ranges of AdaptiveAvgPool2d((k, 1)) bins, in PPCB order."""
    bounds = []
    for k in BINS:
        for b in range(k):
            h0 = (b * H) // k
            h1 = -((-(b + 1) * H) // k)      # ceil((b + 1) * H / k)
            bounds.append((h0, h1))
    return bounds


def _pooling_matrix(H, W):
    """P[n, h*W + w] = 1/count(n) inside bin n else 0, so pooling == P @ x."""
    P = np.zeros((N_BINS, H * W), np.float32)
    for n, (h0, h1) in enumerate(_bin_bounds(H)):
        P[n, h0 * W:h1 * W] = 1.0 / ((h1 - h0) * W)
    return jnp.asarray(P)


def _ppcb_kernel(group, fused, p_ref, x_ref, *refs):
    """One grid step = `group` bins: avg-pool (MXU) -> Linear[+BN] -> [Linear]."""
    if fused:
        wa_ref, ba_ref, out_ref, pool_ref = refs
    else:
        wa_ref, ba_ref, wb_ref, bb_ref, out_ref, pool_ref = refs

    B = x_ref.shape[0]
    p = p_ref[0]                                              # (group, H*W) f32
    # adaptive average pooling for this group's bins: (group, HW) @ (HW, C)
    for b in range(B):                                        # B static -> unrolled
        pool_ref[b] = jnp.dot(p, x_ref[b],
                              preferred_element_type=jnp.float32)   # (group, C)

    for n in range(group):                                    # static unroll (5)
        pooled = pool_ref[:, n, :].astype(wa_ref.dtype)       # (B, C) bf16
        h = jnp.dot(pooled, wa_ref[n],
                    preferred_element_type=jnp.float32) + ba_ref[n]
        if not fused:
            h = jnp.dot(h.astype(wb_ref.dtype), wb_ref[n],
                        preferred_element_type=jnp.float32) + bb_ref[n]
        out_ref[n] = h                                        # (B, class_num) f32


def init_params(key, class_num):
    """f32 master params mimicking weights_init_kaiming / weights_init_classifier."""
    k1, k2, k3 = jax.random.split(key, 3)
    # nn.Linear(2048, 256), kaiming_normal_(a=0, mode='fan_out'): std=sqrt(2/fan_out);
    # stored as (in, out) so forward is x @ w1.
    w1 = jax.random.normal(k1, (N_BINS, FEAT_DIM, BOTTLENECK), jnp.float32) \
        * np.sqrt(2.0 / BOTTLENECK)
    b1 = jnp.zeros((N_BINS, BOTTLENECK), jnp.float32)
    # BatchNorm1d(256): weight ~ N(1, 0.02), bias = 0; running stats (0, 1)
    bn_gamma = 1.0 + 0.02 * jax.random.normal(k2, (N_BINS, BOTTLENECK), jnp.float32)
    bn_beta = jnp.zeros((N_BINS, BOTTLENECK), jnp.float32)
    bn_mean = jnp.zeros((N_BINS, BOTTLENECK), jnp.float32)
    bn_var = jnp.ones((N_BINS, BOTTLENECK), jnp.float32)
    # classifier Linear(256, class_num): weight ~ N(0, 0.001), bias = 0
    w2 = 0.001 * jax.random.normal(k3, (N_BINS, BOTTLENECK, class_num), jnp.float32)
    b2 = jnp.zeros((N_BINS, class_num), jnp.float32)
    return dict(w1=w1, b1=b1, bn_gamma=bn_gamma, bn_beta=bn_beta,
                bn_mean=bn_mean, bn_var=bn_var, w2=w2, b2=b2)


def prepare_head_params(params, fuse=None, weight_dtype=jnp.bfloat16):
    """Fold eval-mode BN into Linear1; optionally fuse Linear1->Linear2 (exact,
    there is no activation/dropout between them). Folds are done in f32; the
    weight matrices are then cast to bf16 for HBM/DMA, biases stay f32."""
    bn_scale = params["bn_gamma"] / jnp.sqrt(params["bn_var"] + BN_EPS)    # (N, 256)
    bn_shift = params["bn_beta"] - params["bn_mean"] * bn_scale
    w1f = params["w1"] * bn_scale[:, None, :]                              # (N, 2048, 256)
    b1f = params["b1"] * bn_scale + bn_shift                               # (N, 256)
    w2, b2 = params["w2"], params["b2"]
    class_num = w2.shape[-1]
    if fuse is None:
        fuse = class_num < BOTTLENECK
    if fuse:
        wa = jnp.einsum("nij,njk->nik", w1f, w2)                           # (N, 2048, K)
        ba = jnp.einsum("nj,njk->nk", b1f, w2) + b2                        # (N, K)
        return dict(fused=True, class_num=class_num,
                    wa=wa.astype(weight_dtype), ba=ba[:, None, :])
    return dict(fused=False, class_num=class_num,
                wa=w1f.astype(weight_dtype), ba=b1f[:, None, :],
                wb=w2.astype(weight_dtype), bb=b2[:, None, :])


def ppcb_head(x_nhwc, hp):
    """PPCB.forward(mode='PPCB') head: list of N_BINS (B, class_num) logits.

    x_nhwc: layer4 feature map in NHWC layout (B, H, W, 2048). (On TPU the
    backbone naturally emits NHWC; if only NCHW is available, transpose once
    outside this function.)"""
    B, H, W, C = x_nhwc.shape
    assert C == FEAT_DIM
    K = hp["class_num"]
    fused = hp["fused"]
    hw = H * W

    x = x_nhwc.reshape(B, hw, C)                            # contiguous (free) reshape
    P = _pooling_matrix(H, W).reshape(N_GROUPS, GROUP, hw)

    wa, ba = hp["wa"], hp["ba"]
    in_specs = [
        pl.BlockSpec((1, GROUP, hw), lambda g: (g, 0, 0)),            # pooling rows
        pl.BlockSpec((B, hw, C), lambda g: (0, 0, 0)),                # x (resident)
        pl.BlockSpec((GROUP, C, wa.shape[-1]), lambda g: (g, 0, 0)),  # W_a (bf16)
        pl.BlockSpec((GROUP, 1, ba.shape[-1]), lambda g: (g, 0, 0)),  # b_a
    ]
    args = [P, x, wa, ba]
    if not fused:
        wb, bb = hp["wb"], hp["bb"]
        in_specs += [
            pl.BlockSpec((GROUP, BOTTLENECK, K), lambda g: (g, 0, 0)),
            pl.BlockSpec((GROUP, 1, K), lambda g: (g, 0, 0)),
        ]
        args += [wb, bb]

    # Advisory cost estimate: the kernel is HBM-bound on x + (bf16) weights.
    flops = 2 * B * hw * C * N_BINS + 2 * B * C * wa.shape[-1] * N_BINS
    if not fused:
        flops += 2 * B * BOTTLENECK * K * N_BINS
    bytes_accessed = sum(int(a.size) * a.dtype.itemsize for a in args) \
        + N_BINS * B * K * 4

    out = pl.pallas_call(
        functools.partial(_ppcb_kernel, GROUP, fused),
        out_shape=jax.ShapeDtypeStruct((N_BINS, B, K), jnp.float32),
        grid_spec=pltpu.PrefetchScalarGridSpec(
            num_scalar_prefetch=0,
            grid=(N_GROUPS,),
            in_specs=in_specs,
            out_specs=pl.BlockSpec((GROUP, B, K), lambda g: (g, 0, 0)),
            scratch_shapes=[pltpu.VMEM((B, GROUP, C), jnp.float32)],
        ),
        compiler_params=pltpu.CompilerParams(
            dimension_semantics=("parallel",),     # bins independent -> v7x megacore
            vmem_limit_bytes=32 * 1024 * 1024),
        cost_estimate=pl.CostEstimate(flops=flops, transcendentals=0,
                                      bytes_accessed=bytes_accessed),
    )(*args)
    return [out[i] for i in range(N_BINS)]


def ppcb_head_ref(x_nhwc, hp):
    """Plain-JAX reference mirroring the kernel numerics (bf16 weights, f32 accum)."""
    B, H, W, C = x_nhwc.shape
    outs = []
    for n, (h0, h1) in enumerate(_bin_bounds(H)):
        pooled = jnp.mean(x_nhwc[:, h0:h1, :, :], axis=(1, 2))             # (B, C) f32
        h = jnp.dot(pooled.astype(hp["wa"].dtype), hp["wa"][n],
                    preferred_element_type=jnp.float32) + hp["ba"][n]
        if not hp["fused"]:
            h = jnp.dot(h.astype(hp["wb"].dtype), hp["wb"][n],
                        preferred_element_type=jnp.float32) + hp["bb"][n]
        outs.append(h)
    return outs


def ppcb_ref_f32(x_nchw, params):
    """f32 reference following the PyTorch forward literally (pool->Linear->BN->Linear)."""
    B, C, H, W = x_nchw.shape
    bn_scale = params["bn_gamma"] / jnp.sqrt(params["bn_var"] + BN_EPS)
    bn_shift = params["bn_beta"] - params["bn_mean"] * bn_scale
    outs = []
    for n, (h0, h1) in enumerate(_bin_bounds(H)):
        pooled = jnp.mean(x_nchw[:, :, h0:h1, :], axis=(2, 3))             # (B, C)
        f = pooled @ params["w1"][n] + params["b1"][n]
        f = f * bn_scale[n] + bn_shift[n]
        outs.append(f @ params["w2"][n] + params["b2"][n])
    return outs


if __name__ == "__main__":
    key = jax.random.PRNGKey(0)
    k_x, k_p = jax.random.split(key)

    # layer4 feature map of a 384x128 input (stride-1 mod): NHWC (B, 24, 8, 2048)
    B, H, W, CLASS_NUM = 2, 24, 8, 8
    x_nhwc = jax.random.normal(k_x, (B, H, W, FEAT_DIM), jnp.float32)
    x_nchw = jnp.transpose(x_nhwc, (0, 3, 1, 2))            # only for the f32 reference
    params = init_params(k_p, CLASS_NUM)

    # Exercise both kernel paths: fused (class_num < 256) and 2-matmul (general).
    for fuse in (None, False):
        hp = prepare_head_params(params, fuse=fuse)
        ys = [jax.block_until_ready(y) for y in ppcb_head(x_nhwc, hp)]
        ref_same = ppcb_head_ref(x_nhwc, hp)                # same numerics
        ref_f32 = ppcb_ref_f32(x_nchw, params)              # PyTorch-semantics f32
        for y, ra, rb in zip(ys, ref_same, ref_f32):
            assert y.shape == (B, CLASS_NUM)
            assert jnp.allclose(y, ra, rtol=1e-2, atol=1e-4), "mismatch vs mirrored ref"
            assert jnp.allclose(y, rb, rtol=5e-2, atol=5e-4), "mismatch vs f32 ref"

    print("KERNEL_OK")
</pallas_src>

<mosaic_0001>
module attributes {stable_mosaic.version = 11 : i64} {
  func.func @_ppcb_kernel(%arg0: i32, %arg1: memref<1x5x192xf32, #tpu.memory_space<vmem>>, %arg2: memref<2x192x2048xf32, #tpu.memory_space<vmem>>, %arg3: memref<5x2048x8xbf16, #tpu.memory_space<vmem>>, %arg4: memref<5x1x8xf32, #tpu.memory_space<vmem>>, %arg5: memref<5x2x8xf32, #tpu.memory_space<vmem>>, %arg6: memref<2x5x2048xf32, #tpu.memory_space<vmem>>) attributes {dimension_semantics = [#tpu.dimension_semantics<parallel>], iteration_bounds = array<i64: 2>, scalar_prefetch = 0 : i64, scratch_operands = 1 : i64, tpu.core_type = #tpu.core_type<tc>, window_params = [{transform_indices = @transform_0, window_bounds = array<i64: 1, 5, 192>}, {pipeline_mode = #tpu.pipeline_mode<synchronous>, transform_indices = @transform_1, window_bounds = array<i64: 2, 192, 2048>}, {transform_indices = @transform_2, window_bounds = array<i64: 5, 2048, 8>}, {transform_indices = @transform_3, window_bounds = array<i64: 5, 1, 8>}, {transform_indices = @transform_4, window_bounds = array<i64: 5, 2, 8>}]} {
    %c0 = arith.constant 0 : index
    %c0_0 = arith.constant 0 : index
    %c0_1 = arith.constant 0 : index
    %0 = vector.load %arg1[%c0, %c0_0, %c0_1] : memref<1x5x192xf32, #tpu.memory_space<vmem>>, vector<1x5x192xf32>
    %1 = vector.shape_cast %0 : vector<1x5x192xf32> to vector<5x192xf32>
    %c0_2 = arith.constant 0 : index
    %c0_3 = arith.constant 0 : index
    %c0_4 = arith.constant 0 : index
    %2 = vector.load %arg2[%c0_2, %c0_3, %c0_4] : memref<2x192x2048xf32, #tpu.memory_space<vmem>>, vector<1x192x2048xf32>
    %3 = vector.shape_cast %2 : vector<1x192x2048xf32> to vector<192x2048xf32>
    %cst = arith.constant dense<0.000000e+00> : vector<5x2048xf32>
    %4 = tpu.matmul %1, %3, %cst {dimension_numbers = #tpu.dot_dimension_numbers<[1], [0], [0], [1], [0, 0, 1, 1], [], []>} : vector<5x192xf32>, vector<192x2048xf32>, vector<5x2048xf32> -> vector<5x2048xf32>
    %c0_5 = arith.constant 0 : index
    %c0_6 = arith.constant 0 : index
    %c0_7 = arith.constant 0 : index
    %5 = vector.load %arg6[%c0_5, %c0_6, %c0_7] : memref<2x5x2048xf32, #tpu.memory_space<vmem>>, vector<1x5x2048xf32>
    %6 = vector.shape_cast %5 : vector<1x5x2048xf32> to vector<5x2048xf32>
    %7 = vector.shape_cast %4 : vector<5x2048xf32> to vector<1x5x2048xf32>
    tpu.vector_store %arg6[%c0_5, %c0_6, %c0_7], %7 {strides = array<i32>} : memref<2x5x2048xf32, #tpu.memory_space<vmem>>, vector<1x5x2048xf32>,
    %c1 = arith.constant 1 : index
    %c0_8 = arith.constant 0 : index
    %c0_9 = arith.constant 0 : index
    %8 = vector.load %arg2[%c1, %c0_8, %c0_9] : memref<2x192x2048xf32, #tpu.memory_space<vmem>>, vector<1x192x2048xf32>
    %9 = vector.shape_cast %8 : vector<1x192x2048xf32> to vector<192x2048xf32>
    %cst_10 = arith.constant dense<0.000000e+00> : vector<5x2048xf32>
    %10 = tpu.matmul %1, %9, %cst_10 {dimension_numbers = #tpu.dot_dimension_numbers<[1], [0], [0], [1], [0, 0, 1, 1], [], []>} : vector<5x192xf32>, vector<192x2048xf32>, vector<5x2048xf32> -> vector<5x2048xf32>
    %c1_11 = arith.constant 1 : index
    %c0_12 = arith.constant 0 : index
    %c0_13 = arith.constant 0 : index
    %11 = vector.load %arg6[%c1_11, %c0_12, %c0_13] : memref<2x5x2048xf32, #tpu.memory_space<vmem>>, vector<1x5x2048xf32>
    %12 = vector.shape_cast %11 : vector<1x5x2048xf32> to vector<5x2048xf32>
    %13 = vector.shape_cast %10 : vector<5x2048xf32> to vector<1x5x2048xf32>
    tpu.vector_store %arg6[%c1_11, %c0_12, %c0_13], %13 {strides = array<i32>} : memref<2x5x2048xf32, #tpu.memory_space<vmem>>, vector<1x5x2048xf32>,
    %c0_14 = arith.constant 0 : index
    %c0_15 = arith.constant 0 : index
    %c0_16 = arith.constant 0 : index
    %14 = vector.load %arg6[%c0_14, %c0_15, %c0_16] : memref<2x5x2048xf32, #tpu.memory_space<vmem>>, vector<2x1x2048xf32>
    %15 = vector.shape_cast %14 : vector<2x1x2048xf32> to vector<2x2048xf32>
    %16 = arith.truncf %15 : vector<2x2048xf32> to vector<2x2048xbf16>
    %c0_17 = arith.constant 0 : index
    %c0_18 = arith.constant 0 : index
    %c0_19 = arith.constant 0 : index
    %17 = vector.load %arg3[%c0_17, %c0_18, %c0_19] : memref<5x2048x8xbf16, #tpu.memory_space<vmem>>, vector<1x2048x8xbf16>
    %18 = vector.shape_cast %17 : vector<1x2048x8xbf16> to vector<2048x8xbf16>
    %cst_20 = arith.constant dense<0.000000e+00> : vector<2x8xf32>
    %19 = tpu.matmul %16, %18, %cst_20 {dimension_numbers = #tpu.dot_dimension_numbers<[1], [0], [0], [1], [0, 0, 1, 1], [], []>} : vector<2x2048xbf16>, vector<2048x8xbf16>, vector<2x8xf32> -> vector<2x8xf32>
    %c0_21 = arith.constant 0 : index
    %c0_22 = arith.constant 0 : index
    %c0_23 = arith.constant 0 : index
    %20 = vector.load %arg4[%c0_21, %c0_22, %c0_23] : memref<5x1x8xf32, #tpu.memory_space<vmem>>, vector<1x1x8xf32>
    %21 = vector.shape_cast %20 : vector<1x1x8xf32> to vector<1x8xf32>
    %22 = vector.broadcast %21 : vector<1x8xf32> to vector<2x8xf32>
    %23 = arith.addf %19, %22 : vector<2x8xf32>
    %c0_24 = arith.constant 0 : index
    %c0_25 = arith.constant 0 : index
    %c0_26 = arith.constant 0 : index
    %24 = vector.load %arg5[%c0_24, %c0_25, %c0_26] : memref<5x2x8xf32, #tpu.memory_space<vmem>>, vector<1x2x8xf32>
    %25 = vector.shape_cast %24 : vector<1x2x8xf32> to vector<2x8xf32>
    %26 = vector.shape_cast %23 : vector<2x8xf32> to vector<1x2x8xf32>
    tpu.vector_store %arg5[%c0_24, %c0_25, %c0_26], %26 {strides = array<i32>} : memref<5x2x8xf32, #tpu.memory_space<vmem>>, vector<1x2x8xf32>,
    %c0_27 = arith.constant 0 : index
    %c1_28 = arith.constant 1 : index
    %c0_29 = arith.constant 0 : index
    %27 = vector.load %arg6[%c0_27, %c1_28, %c0_29] : memref<2x5x2048xf32, #tpu.memory_space<vmem>>, vector<2x1x2048xf32>
    %28 = vector.shape_cast %27 : vector<2x1x2048xf32> to vector<2x2048xf32>
    %29 = arith.truncf %28 : vector<2x2048xf32> to vector<2x2048xbf16>
    %c1_30 = arith.constant 1 : index
    %c0_31 = arith.constant 0 : index
    %c0_32 = arith.constant 0 : index
    %30 = vector.load %arg3[%c1_30, %c0_31, %c0_32] : memref<5x2048x8xbf16, #tpu.memory_space<vmem>>, vector<1x2048x8xbf16>
    %31 = vector.shape_cast %30 : vector<1x2048x8xbf16> to vector<2048x8xbf16>
    %cst_33 = arith.constant dense<0.000000e+00> : vector<2x8xf32>
    %32 = tpu.matmul %29, %31, %cst_33 {dimension_numbers = #tpu.dot_dimension_numbers<[1], [0], [0], [1], [0, 0, 1, 1], [], []>} : vector<2x2048xbf16>, vector<2048x8xbf16>, vector<2x8xf32> -> vector<2x8xf32>
    %c1_34 = arith.constant 1 : index
    %c0_35 = arith.constant 0 : index
    %c0_36 = arith.constant 0 : index
    %33 = vector.load %arg4[%c1_34, %c0_35, %c0_36] : memref<5x1x8xf32, #tpu.memory_space<vmem>>, vector<1x1x8xf32>
    %34 = vector.shape_cast %33 : vector<1x1x8xf32> to vector<1x8xf32>
    %35 = vector.broadcast %34 : vector<1x8xf32> to vector<2x8xf32>
    %36 = arith.addf %32, %35 : vector<2x8xf32>
    %c1_37 = arith.constant 1 : index
    %c0_38 = arith.constant 0 : index
    %c0_39 = arith.constant 0 : index
    %37 = vector.load %arg5[%c1_37, %c0_38, %c0_39] : memref<5x2x8xf32, #tpu.memory_space<vmem>>, vector<1x2x8xf32>
    %38 = vector.shape_cast %37 : vector<1x2x8xf32> to vector<2x8xf32>
    %39 = vector.shape_cast %36 : vector<2x8xf32> to vector<1x2x8xf32>
    tpu.vector_store %arg5[%c1_37, %c0_38, %c0_39], %39 {strides = array<i32>} : memref<5x2x8xf32, #tpu.memory_space<vmem>>, vector<1x2x8xf32>,
    %c0_40 = arith.constant 0 : index
    %c2 = arith.constant 2 : index
    %c0_41 = arith.constant 0 : index
    %40 = vector.load %arg6[%c0_40, %c2, %c0_41] : memref<2x5x2048xf32, #tpu.memory_space<vmem>>, vector<2x1x2048xf32>
    %41 = vector.shape_cast %40 : vector<2x1x2048xf32> to vector<2x2048xf32>
    %42 = arith.truncf %41 : vector<2x2048xf32> to vector<2x2048xbf16>
    %c2_42 = arith.constant 2 : index
    %c0_43 = arith.constant 0 : index
    %c0_44 = arith.constant 0 : index
    %43 = vector.load %arg3[%c2_42, %c0_43, %c0_44] : memref<5x2048x8xbf16, #tpu.memory_space<vmem>>, vector<1x2048x8xbf16>
    %44 = vector.shape_cast %43 : vector<1x2048x8xbf16> to vector<2048x8xbf16>
    %cst_45 = arith.constant dense<0.000000e+00> : vector<2x8xf32>
    %45 = tpu.matmul %42, %44, %cst_45 {dimension_numbers = #tpu.dot_dimension_numbers<[1], [0], [0], [1], [0, 0, 1, 1], [], []>} : vector<2x2048xbf16>, vector<2048x8xbf16>, vector<2x8xf32> -> vector<2x8xf32>
    %c2_46 = arith.constant 2 : index
    %c0_47 = arith.constant 0 : index
    %c0_48 = arith.constant 0 : index
    %46 = vector.load %arg4[%c2_46, %c0_47, %c0_48] : memref<5x1x8xf32, #tpu.memory_space<vmem>>, vector<1x1x8xf32>
    %47 = vector.shape_cast %46 : vector<1x1x8xf32> to vector<1x8xf32>
    %48 = vector.broadcast %47 : vector<1x8xf32> to vector<2x8xf32>
    %49 = arith.addf %45, %48 : vector<2x8xf32>
    %c2_49 = arith.constant 2 : index
    %c0_50 = arith.constant 0 : index
    %c0_51 = arith.constant 0 : index
    %50 = vector.load %arg5[%c2_49, %c0_50, %c0_51] : memref<5x2x8xf32, #tpu.memory_space<vmem>>, vector<1x2x8xf32>
    %51 = vector.shape_cast %50 : vector<1x2x8xf32> to vector<2x8xf32>
    %52 = vector.shape_cast %49 : vector<2x8xf32> to vector<1x2x8xf32>
    tpu.vector_store %arg5[%c2_49, %c0_50, %c0_51], %52 {strides = array<i32>} : memref<5x2x8xf32, #tpu.memory_space<vmem>>, vector<1x2x8xf32>,
    %c0_52 = arith.constant 0 : index
    %c3 = arith.constant 3 : index
    %c0_53 = arith.constant 0 : index
    %53 = vector.load %arg6[%c0_52, %c3, %c0_53] : memref<2x5x2048xf32, #tpu.memory_space<vmem>>, vector<2x1x2048xf32>
    %54 = vector.shape_cast %53 : vector<2x1x2048xf32> to vector<2x2048xf32>
    %55 = arith.truncf %54 : vector<2x2048xf32> to vector<2x2048xbf16>
    %c3_54 = arith.constant 3 : index
    %c0_55 = arith.constant 0 : index
    %c0_56 = arith.constant 0 : index
    %56 = vector.load %arg3[%c3_54, %c0_55, %c0_56] : memref<5x2048x8xbf16, #tpu.memory_space<vmem>>, vector<1x2048x8xbf16>
    %57 = vector.shape_cast %56 : vector<1x2048x8xbf16> to vector<2048x8xbf16>
    %cst_57 = arith.constant dense<0.000000e+00> : vector<2x8xf32>
    %58 = tpu.matmul %55, %57, %cst_57 {dimension_numbers = #tpu.dot_dimension_numbers<[1], [0], [0], [1], [0, 0, 1, 1], [], []>} : vector<2x2048xbf16>, vector<2048x8xbf16>, vector<2x8xf32> -> vector<2x8xf32>
    %c3_58 = arith.constant 3 : index
    %c0_59 = arith.constant 0 : index
    %c0_60 = arith.constant 0 : index
    %59 = vector.load %arg4[%c3_58, %c0_59, %c0_60] : memref<5x1x8xf32, #tpu.memory_space<vmem>>, vector<1x1x8xf32>
    %60 = vector.shape_cast %59 : vector<1x1x8xf32> to vector<1x8xf32>
    %61 = vector.broadcast %60 : vector<1x8xf32> to vector<2x8xf32>
    %62 = arith.addf %58, %61 : vector<2x8xf32>
    %c3_61 = arith.constant 3 : index
    %c0_62 = arith.constant 0 : index
    %c0_63 = arith.constant 0 : index
    %63 = vector.load %arg5[%c3_61, %c0_62, %c0_63] : memref<5x2x8xf32, #tpu.memory_space<vmem>>, vector<1x2x8xf32>
    %64 = vector.shape_cast %63 : vector<1x2x8xf32> to vector<2x8xf32>
    %65 = vector.shape_cast %62 : vector<2x8xf32> to vector<1x2x8xf32>
    tpu.vector_store %arg5[%c3_61, %c0_62, %c0_63], %65 {strides = array<i32>} : memref<5x2x8xf32, #tpu.memory_space<vmem>>, vector<1x2x8xf32>,
    %c0_64 = arith.constant 0 : index
    %c4 = arith.constant 4 : index
    %c0_65 = arith.constant 0 : index
    %66 = vector.load %arg6[%c0_64, %c4, %c0_65] : memref<2x5x2048xf32, #tpu.memory_space<vmem>>, vector<2x1x2048xf32>
    %67 = vector.shape_cast %66 : vector<2x1x2048xf32> to vector<2x2048xf32>
    %68 = arith.truncf %67 : vector<2x2048xf32> to vector<2x2048xbf16>
    %c4_66 = arith.constant 4 : index
    %c0_67 = arith.constant 0 : index
    %c0_68 = arith.constant 0 : index
    %69 = vector.load %arg3[%c4_66, %c0_67, %c0_68] : memref<5x2048x8xbf16, #tpu.memory_space<vmem>>, vector<1x2048x8xbf16>
    %70 = vector.shape_cast %69 : vector<1x2048x8xbf16> to vector<2048x8xbf16>
    %cst_69 = arith.constant dense<0.000000e+00> : vector<2x8xf32>
    %71 = tpu.matmul %68, %70, %cst_69 {dimension_numbers = #tpu.dot_dimension_numbers<[1], [0], [0], [1], [0, 0, 1, 1], [], []>} : vector<2x2048xbf16>, vector<2048x8xbf16>, vector<2x8xf32> -> vector<2x8xf32>
    %c4_70 = arith.constant 4 : index
    %c0_71 = arith.constant 0 : index
    %c0_72 = arith.constant 0 : index
    %72 = vector.load %arg4[%c4_70, %c0_71, %c0_72] : memref<5x1x8xf32, #tpu.memory_space<vmem>>, vector<1x1x8xf32>
    %73 = vector.shape_cast %72 : vector<1x1x8xf32> to vector<1x8xf32>
    %74 = vector.broadcast %73 : vector<1x8xf32> to vector<2x8xf32>
    %75 = arith.addf %71, %74 : vector<2x8xf32>
    %c4_73 = arith.constant 4 : index
    %c0_74 = arith.constant 0 : index
    %c0_75 = arith.constant 0 : index
    %76 = vector.load %arg5[%c4_73, %c0_74, %c0_75] : memref<5x2x8xf32, #tpu.memory_space<vmem>>, vector<1x2x8xf32>
    %77 = vector.shape_cast %76 : vector<1x2x8xf32> to vector<2x8xf32>
    %78 = vector.shape_cast %75 : vector<2x8xf32> to vector<1x2x8xf32>
    tpu.vector_store %arg5[%c4_73, %c0_74, %c0_75], %78 {strides = array<i32>} : memref<5x2x8xf32, #tpu.memory_space<vmem>>, vector<1x2x8xf32>,
    return
  }
  func.func @transform_0(%arg0: i32) -> (i32, i32, i32) {
    %c0_i32 = arith.constant 0 : i32
    %c0_i32_0 = arith.constant 0 : i32
    %c0_i32_1 = arith.constant 0 : i32
    return %arg0, %c0_i32, %c0_i32_0 : i32, i32, i32
  }
  func.func @transform_1(%arg0: i32) -> (i32, i32, i32) {
    %c0_i32 = arith.constant 0 : i32
    %c0_i32_0 = arith.constant 0 : i32
    %c0_i32_1 = arith.constant 0 : i32
    %c0_i32_2 = arith.constant 0 : i32
    return %c0_i32, %c0_i32_0, %c0_i32_1 : i32, i32, i32
  }
  func.func @transform_2(%arg0: i32) -> (i32, i32, i32) {
    %c0_i32 = arith.constant 0 : i32
    %c0_i32_0 = arith.constant 0 : i32
    %c0_i32_1 = arith.constant 0 : i32
    return %arg0, %c0_i32, %c0_i32_0 : i32, i32, i32
  }
  func.func @transform_3(%arg0: i32) -> (i32, i32, i32) {
    %c0_i32 = arith.constant 0 : i32
    %c0_i32_0 = arith.constant 0 : i32
    %c0_i32_1 = arith.constant 0 : i32
    return %arg0, %c0_i32, %c0_i32_0 : i32, i32, i32
  }
  func.func @transform_4(%arg0: i32) -> (i32, i32, i32) {
    %c0_i32 = arith.constant 0 : i32
    %c0_i32_0 = arith.constant 0 : i32
    %c0_i32_1 = arith.constant 0 : i32
    return %arg0, %c0_i32, %c0_i32_0 : i32, i32, i32
  }
}

</mosaic_0001>

<llo_original>
// kernel: tpu_custom_call.1
$region0: #{tpu_custom_call.1}
  #allocation0 [shape = 'u32[]', space=smem, size = 0x4, offset = 0x4, fixed_abs, tag = 'smem constant byte address 0x4 - core index']
  #allocation1 [shape = 'u32[144,128]{1,0:T(1,128)}', space=vmem, size = 0x12000, scoped, tag = 'internal scratch']
  #allocation2 [shape = 'f32[2,5,2048]{2,1,0:T(8,128)}', space=vmem, size = 0x20000, scoped, tag = 'scratch operand']
  %s0 = inlined_call_operand.vmem [shape: f32[2,5,192], index: 0, kind: input, shape index: {}]
  %s1 = inlined_call_operand.vmem [shape: f32[2,192,2048], index: 1, kind: input, shape index: {}]
  %s2 = inlined_call_operand.vmem [shape: bf16[10,2048,8], index: 2, kind: input, shape index: {}]
  %s3 = inlined_call_operand.vmem [shape: f32[10,1,8], index: 3, kind: input, shape index: {}]
  %s4 = inlined_call_operand.vmem [shape: f32[10,2,8], index: 4, kind: output, shape index: {}]
  %s5 = sld [smem:[#allocation0]]
  $region49: #{tpu_custom_call.1} parent=0
    _
  %s7 = ssub.s32 1, %s5
  %s8 = scalar_select 0, %s7, %s5
  loop: start=0, step=1, limit=4
  $region2: #{tpu_custom_call.1} parent=0 // loop_pre_header
    _
  $region3: #{tpu_custom_call.1} parent=0 // loop_header
    %s10 = sphi 0, %s14
    %p11 = scmp.ge.s32.totalorder %s10, 4
    %s20 = sphi 0, %s22
    %s23 = sphi 0, %s20
    %s24 = sphi 0, %s23
    %s40 = sphi 0, %s24
    %s44 = sphi 0, %s44
    %s46 = sphi 0, %s44
    %s47 = sphi 0, %s46
    %s61 = sphi 0, %s47
    %s67 = sphi 0, %s69
    %s70 = sphi 0, %s67
    %s71 = sphi 0, %s70
    %s87 = sphi 0, %s71
    %s93 = sphi 0, %s95
    %s96 = sphi 0, %s93
    %s97 = sphi 0, %s96
    %s113 = sphi 0, %s97
    %s119 = sphi 0, %s121
    %s122 = sphi 0, %s119
    %s123 = sphi 0, %s122
    %s139 = sphi 0, %s123
  $region4: #{tpu_custom_call.1} parent=0 // loop_header_branch
    %13 = sbr.rel (%p11) target = $region8
  $region5: #{tpu_custom_call.1} parent=0 // loop_body
    %s15 = ssub.s32 %s10, 1
    %s16 = ssub.s32 %s10, 2
    %s17 = sadd.s32 %s10, 1
    %s18 = ssub.s32 %s10, %s17
    %p19 = scmp.eq.s32.totalorder %s18, 0
    %s21 = sadd.s32 %s20, 1
    %s22 = scalar_select %p19, %s20, %s21
    %p25 = pneg %p19
    %p26 = scmp.eq.s32.totalorder %s10, 1
    %p27 = por %p25, %p26
    %p28 = scmp.ne.s32.totalorder %s20, %s23
    %p29 = scmp.eq.s32.totalorder %s10, 0
    %p30 = por %p28, %p29
    %p31 = scmp.ne.s32.totalorder %s20, %s23
    %p32 = scmp.eq.s32.totalorder %s15, 1
    %p33 = por %p31, %p32
    %p34 = scmp.ne.s32.totalorder %s23, %s24
    %p35 = scmp.eq.s32.totalorder %s15, 0
    %p36 = por %p34, %p35
    %p37 = scmp.ne.s32.totalorder %s23, %s24
    %p38 = scmp.eq.s32.totalorder %s16, 1
    %p39 = por %p37, %p38
    %p41 = scmp.ne.s32.totalorder %s24, %s40
    %p42 = scmp.eq.s32.totalorder %s16, 0
    %p43 = por %p41, %p42
    %s45 = sadd.s32 %s44, 1
    %p48 = scmp.eq.s32.totalorder %s10, 1
    %p49 = scmp.ne.s32.totalorder %s44, %s46
    %p50 = scmp.eq.s32.totalorder %s10, 0
    %p51 = por %p49, %p50
    %p52 = scmp.ne.s32.totalorder %s44, %s46
    %p53 = scmp.eq.s32.totalorder %s15, 1
    %p54 = por %p52, %p53
    %p55 = scmp.ne.s32.totalorder %s46, %s47
    %p56 = scmp.eq.s32.totalorder %s15, 0
    %p57 = por %p55, %p56
    %p58 = scmp.ne.s32.totalorder %s46, %s47
    %p59 = scmp.eq.s32.totalorder %s16, 1
    %p60 = por %p58, %p59
    %p62 = scmp.ne.s32.totalorder %s47, %s61
    %p63 = scmp.eq.s32.totalorder %s16, 0
    %p64 = por %p62, %p63
    %s65 = ssub.s32 %s10, %s17
    %p66 = scmp.eq.s32.totalorder %s65, 0
    %s68 = sadd.s32 %s67, 1
    %s69 = scalar_select %p66, %s67, %s68
    %p72 = pneg %p66
    %p73 = scmp.eq.s32.totalorder %s10, 1
    %p74 = por %p72, %p73
    %p75 = scmp.ne.s32.totalorder %s67, %s70
    %p76 = scmp.eq.s32.totalorder %s10, 0
    %p77 = por %p75, %p76
    %p78 = scmp.ne.s32.totalorder %s67, %s70
    %p79 = scmp.eq.s32.totalorder %s15, 1
    %p80 = por %p78, %p79
    %p81 = scmp.ne.s32.totalorder %s70, %s71
    %p82 = scmp.eq.s32.totalorder %s15, 0
    %p83 = por %p81, %p82
    %p84 = scmp.ne.s32.totalorder %s70, %s71
    %p85 = scmp.eq.s32.totalorder %s16, 1
    %p86 = por %p84, %p85
    %p88 = scmp.ne.s32.totalorder %s71, %s87
    %p89 = scmp.eq.s32.totalorder %s16, 0
    %p90 = por %p88, %p89
    %s91 = ssub.s32 %s10, %s17
    %p92 = scmp.eq.s32.totalorder %s91, 0
    %s94 = sadd.s32 %s93, 1
    %s95 = scalar_select %p92, %s93, %s94
    %p98 = pneg %p92
    %p99 = scmp.eq.s32.totalorder %s10, 1
    %p100 = por %p98, %p99
    %p101 = scmp.ne.s32.totalorder %s93, %s96
    %p102 = scmp.eq.s32.totalorder %s10, 0
    %p103 = por %p101, %p102
    %p104 = scmp.ne.s32.totalorder %s93, %s96
    %p105 = scmp.eq.s32.totalorder %s15, 1
    %p106 = por %p104, %p105
    %p107 = scmp.ne.s32.totalorder %s96, %s97
    %p108 = scmp.eq.s32.totalorder %s15, 0
    %p109 = por %p107, %p108
    %p110 = scmp.ne.s32.totalorder %s96, %s97
    %p111 = scmp.eq.s32.totalorder %s16, 1
    %p112 = por %p110, %p111
    %p114 = scmp.ne.s32.totalorder %s97, %s113
    %p115 = scmp.eq.s32.totalorder %s16, 0
    %p116 = por %p114, %p115
    %s117 = ssub.s32 %s10, %s17
    %p118 = scmp.eq.s32.totalorder %s117, 0
    %s120 = sadd.s32 %s119, 1
    %s121 = scalar_select %p118, %s119, %s120
    %p124 = pneg %p118
    %p125 = scmp.eq.s32.totalorder %s10, 1
    %p126 = por %p124, %p125
    %p127 = scmp.ne.s32.totalorder %s119, %s122
    %p128 = scmp.eq.s32.totalorder %s10, 0
    %p129 = por %p127, %p128
    %p130 = scmp.ne.s32.totalorder %s119, %s122
    %p131 = scmp.eq.s32.totalorder %s15, 1
    %p132 = por %p130, %p131
    %p133 = scmp.ne.s32.totalorder %s122, %s123
    %p134 = scmp.eq.s32.totalorder %s15, 0
    %p135 = por %p133, %p134
    %p136 = scmp.ne.s32.totalorder %s122, %s123
    %p137 = scmp.eq.s32.totalorder %s16, 1
    %p138 = por %p136, %p137
    %p140 = scmp.ne.s32.totalorder %s123, %s139
    %p141 = scmp.eq.s32.totalorder %s16, 0
    %p142 = por %p140, %p141
    %p143 = scmp.le.s32.totalorder 1, %s10
    %p144 = scmp.lt.s32.totalorder %s10, 3
    %p145 = pnand %p143, %p144
    %p146 = pneg %p145
    // Predicated region
    $region9: #{tpu_custom_call.1} parent=5 // pred_check
      _
    $region10: #{tpu_custom_call.1} parent=5 // pred_check_branch
      %148 = sbr.rel (%p145) target = $region12
    $region11: #{tpu_custom_call.1} parent=5 // pred_region
      %s149 = ssub.s32 %s10, 1
      // Predicated region
      $region13: #{tpu_custom_call.1} parent=11 // pred_check
        %p150 = pneg %p57
      $region14: #{tpu_custom_call.1} parent=11 // pred_check_branch
        %152 = sbr.rel (%p150) target = $region16
      $region15: #{tpu_custom_call.1} parent=11 // pred_region
        _
      $region16: #{tpu_custom_call.1} parent=11 // pred_fallthru
        _
    $region12: #{tpu_custom_call.1} parent=5 // pred_fallthru
      _
    %p153 = scmp.lt.s32.totalorder %s10, 2
    // Predicated region
    $region17: #{tpu_custom_call.1} parent=5 // pred_check
      %p154 = pneg %p153
    $region18: #{tpu_custom_call.1} parent=5 // pred_check_branch
      %156 = sbr.rel (%p154) target = $region20
    $region19: #{tpu_custom_call.1} parent=5 // pred_region
      // Predicated region
      $region21: #{tpu_custom_call.1} parent=19 // pred_check
        %p157 = pneg %p30
      $region22: #{tpu_custom_call.1} parent=19 // pred_check_branch
        %159 = sbr.rel (%p157) target = $region24
      $region23: #{tpu_custom_call.1} parent=19 // pred_region
        %p160 = scmp.lt.s32.totalorder %s10, 1
        %s161 = scalar_select %p160, %s10, 1
        %s162 = smul.addr %s161, 2
        %s163 = smul.addr %s162, 8
        %s164 = scalar_lea.vmem %s0, %s163
      $region24: #{tpu_custom_call.1} parent=19 // pred_fallthru
        _
      // Predicated region
      $region25: #{tpu_custom_call.1} parent=19 // pred_check
        %p165 = pneg %p77
      $region26: #{tpu_custom_call.1} parent=19 // pred_check_branch
        %167 = sbr.rel (%p165) target = $region28
      $region27: #{tpu_custom_call.1} parent=19 // pred_region
        %s168 = smul.u32 5, %s10
        %p169 = scmp.lt.s32.totalorder %s168, 9
        %s170 = scalar_select %p169, %s168, 9
        %s171 = smul.addr %s170, 256
        %s172 = smul.addr %s171, 4
        %s173 = scalar_lea.vmem %s2, %s172
        %s174 = smul.u32 5, %s10
      $region28: #{tpu_custom_call.1} parent=19 // pred_fallthru
        _
      // Predicated region
      $region29: #{tpu_custom_call.1} parent=19 // pred_check
        %p175 = pneg %p103
      $region30: #{tpu_custom_call.1} parent=19 // pred_check_branch
        %177 = sbr.rel (%p175) target = $region32
      $region31: #{tpu_custom_call.1} parent=19 // pred_region
        %s178 = smul.u32 5, %s10
        %p179 = scmp.lt.s32.totalorder %s178, 9
        %s180 = scalar_select %p179, %s178, 9
        %s181 = scalar_lea.vmem %s3, %s180
        %s182 = smul.u32 5, %s10
      $region32: #{tpu_custom_call.1} parent=19 // pred_fallthru
        _
    $region20: #{tpu_custom_call.1} parent=5 // pred_fallthru
      _
    %p183 = scmp.le.s32.totalorder 1, %s10
    %p184 = scmp.lt.s32.totalorder %s10, 3
    %p185 = pnand %p183, %p184
    %p186 = pneg %p185
    // Predicated region
    $region33: #{tpu_custom_call.1} parent=5 // pred_check
      _
    $region34: #{tpu_custom_call.1} parent=5 // pred_check_branch
      %188 = sbr.rel (%p185) target = $region36
    $region35: #{tpu_custom_call.1} parent=5 // pred_region
      %s189 = ssub.s32 %s10, 1
      %p190 = scmp.lt.s32.totalorder %s15, 1
      %s191 = scalar_select %p190, %s15, 1
      %s192 = smul.addr %s191, 2
      %s193 = smul.addr %s192, 8
      %s194 = scalar_lea.vmem %s0, %s193
      %p195 = pneg %p36
      %p196 = pneg %p33
      %p197 = pneg %p57
      %p198 = pneg %p54
      %s199 = smul.u32 5, %s15
      %p200 = scmp.lt.s32.totalorder %s199, 9
      %s201 = scalar_select %p200, %s199, 9
      %s202 = smul.addr %s201, 256
      %s203 = smul.addr %s202, 4
      %s204 = scalar_lea.vmem %s2, %s203
      %p205 = pneg %p83
      %p206 = pneg %p80
      %s207 = smul.u32 5, %s15
      %p208 = scmp.lt.s32.totalorder %s207, 9
      %s209 = scalar_select %p208, %s207, 9
      %s210 = scalar_lea.vmem %s3, %s209
      %p211 = pneg %p109
      %p212 = pneg %p106
      %p213 = pneg %p135
      %p214 = pneg %p132
      %s215 = smul.u32 5, %s15
      %p216 = scmp.lt.s32.totalorder %s215, 9
      %s217 = scalar_select %p216, %s215, 9
      %s218 = smul.addr %s217, 2
      %s219 = scalar_lea.vmem %s4, %s218
      %p220 = scmp.lt.s32.totalorder %s15, 1
      %s221 = scalar_select %p220, %s15, 1
      %s222 = smul.addr %s221, 2
      %s223 = smul.addr %s222, 8
      %s224 = scalar_lea.vmem %s0, %s223
      %s225 = smul.u32 5, %s15
      %p226 = scmp.lt.s32.totalorder %s225, 9
      %s227 = scalar_select %p226, %s225, 9
      %s228 = smul.addr %s227, 256
      %s229 = smul.addr %s228, 4
      %s230 = scalar_lea.vmem %s2, %s229
      %s231 = smul.u32 5, %s15
      %s232 = smul.u32 5, %s15
      %p233 = scmp.lt.s32.totalorder %s232, 9
      %s234 = scalar_select %p233, %s232, 9
      %s235 = scalar_lea.vmem %s3, %s234
      %s236 = smul.u32 5, %s15
      %s237 = smul.u32 5, %s15
      %p238 = scmp.lt.s32.totalorder %s237, 9
      %s239 = scalar_select %p238, %s237, 9
      %s240 = smul.addr %s239, 2
      %s241 = scalar_lea.vmem %s4, %s240
      %s242 = smul.u32 5, %s15
      %v244 = vld [vmem:[%s224] sm:$0x1f]
      %v245 = vld [vmem:[%s224 + $0x8] sm:$0x1f]
      %v246 = vld [vmem:[%s1] sm:$0xff]
      %v247 = vld [vmem:[%s1 + $0x8] sm:$0xff]
      %v248 = vld [vmem:[%s1 + $0x10] sm:$0xff]
      %v249 = vld [vmem:[%s1 + $0x18] sm:$0xff]
      %v250 = vld [vmem:[%s1 + $0x20] sm:$0xff]
      %v251 = vld [vmem:[%s1 + $0x28] sm:$0xff]
      %v252 = vld [vmem:[%s1 + $0x30] sm:$0xff]
      %v253 = vld [vmem:[%s1 + $0x38] sm:$0xff]
      %v254 = vld [vmem:[%s1 + $0x40] sm:$0xff]
      %v255 = vld [vmem:[%s1 + $0x48] sm:$0xff]
      %v256 = vld [vmem:[%s1 + $0x50] sm:$0xff]
      %v257 = vld [vmem:[%s1 + $0x58] sm:$0xff]
      %v258 = vld [vmem:[%s1 + $0x60] sm:$0xff]
      %v259 = vld [vmem:[%s1 + $0x68] sm:$0xff]
      %v260 = vld [vmem:[%s1 + $0x70] sm:$0xff]
      %v261 = vld [vmem:[%s1 + $0x78] sm:$0xff]
      %v262 = vld [vmem:[%s1 + $0x80] sm:$0xff]
      %v263 = vld [vmem:[%s1 + $0x88] sm:$0xff]
      %v264 = vld [vmem:[%s1 + $0x90] sm:$0xff]
      %v265 = vld [vmem:[%s1 + $0x98] sm:$0xff]
      %v266 = vld [vmem:[%s1 + $0xa0] sm:$0xff]
      %v267 = vld [vmem:[%s1 + $0xa8] sm:$0xff]
      %v268 = vld [vmem:[%s1 + $0xb0] sm:$0xff]
      %v269 = vld [vmem:[%s1 + $0xb8] sm:$0xff]
      %v270 = vld [vmem:[%s1 + $0xc0] sm:$0xff]
      %v271 = vld [vmem:[%s1 + $0xc8] sm:$0xff]
      %v272 = vld [vmem:[%s1 + $0xd0] sm:$0xff]
      %v273 = vld [vmem:[%s1 + $0xd8] sm:$0xff]
      %v274 = vld [vmem:[%s1 + $0xe0] sm:$0xff]
      %v275 = vld [vmem:[%s1 + $0xe8] sm:$0xff]
      %v276 = vld [vmem:[%s1 + $0xf0] sm:$0xff]
      %v277 = vld [vmem:[%s1 + $0xf8] sm:$0xff]
      %v278 = vld [vmem:[%s1 + $0x100] sm:$0xff]
      %v279 = vld [vmem:[%s1 + $0x108] sm:$0xff]
      %v280 = vld [vmem:[%s1 + $0x110] sm:$0xff]
      %v281 = vld [vmem:[%s1 + $0x118] sm:$0xff]
      %v282 = vld [vmem:[%s1 + $0x120] sm:$0xff]
      %v283 = vld [vmem:[%s1 + $0x128] sm:$0xff]
      %v284 = vld [vmem:[%s1 + $0x130] sm:$0xff]
      %v285 = vld [vmem:[%s1 + $0x138] sm:$0xff]
      %v286 = vld [vmem:[%s1 + $0x140] sm:$0xff]
      %v287 = vld [vmem:[%s1 + $0x148] sm:$0xff]
      %v288 = vld [vmem:[%s1 + $0x150] sm:$0xff]
      %v289 = vld [vmem:[%s1 + $0x158] sm:$0xff]
      %v290 = vld [vmem:[%s1 + $0x160] sm:$0xff]
      %v291 = vld [vmem:[%s1 + $0x168] sm:$0xff]
      %v292 = vld [vmem:[%s1 + $0x170] sm:$0xff]
      %v293 = vld [vmem:[%s1 + $0x178] sm:$0xff]
      %v294 = vld [vmem:[%s1 + $0x180] sm:$0xff]
      %v295 = vld [vmem:[%s1 + $0x188] sm:$0xff]
      %v296 = vld [vmem:[%s1 + $0x190] sm:$0xff]
      %v297 = vld [vmem:[%s1 + $0x198] sm:$0xff]
      %v298 = vld [vmem:[%s1 + $0x1a0] sm:$0xff]
      %v299 = vld [vmem:[%s1 + $0x1a8] sm:$0xff]
      %v300 = vld [vmem:[%s1 + $0x1b0] sm:$0xff]
      %v301 = vld [vmem:[%s1 + $0x1b8] sm:$0xff]
      %v302 = vld [vmem:[%s1 + $0x1c0] sm:$0xff]
      %v303 = vld [vmem:[%s1 + $0x1c8] sm:$0xff]
      %v304 = vld [vmem:[%s1 + $0x1d0] sm:$0xff]
      %v305 = vld [vmem:[%s1 + $0x1d8] sm:$0xff]
      %v306 = vld [vmem:[%s1 + $0x1e0] sm:$0xff]
      %v307 = vld [vmem:[%s1 + $0x1e8] sm:$0xff]
      %v308 = vld [vmem:[%s1 + $0x1f0] sm:$0xff]
      %v309 = vld [vmem:[%s1 + $0x1f8] sm:$0xff]
      %v310 = vld [vmem:[%s1 + $0x200] sm:$0xff]
      %v311 = vld [vmem:[%s1 + $0x208] sm:$0xff]
      %v312 = vld [vmem:[%s1 + $0x210] sm:$0xff]
      %v313 = vld [vmem:[%s1 + $0x218] sm:$0xff]
      %v314 = vld [vmem:[%s1 + $0x220] sm:$0xff]
      %v315 = vld [vmem:[%s1 + $0x228] sm:$0xff]
      %v316 = vld [vmem:[%s1 + $0x230] sm:$0xff]
      %v317 = vld [vmem:[%s1 + $0x238] sm:$0xff]
      %v318 = vld [vmem:[%s1 + $0x240] sm:$0xff]
      %v319 = vld [vmem:[%s1 + $0x248] sm:$0xff]
      %v320 = vld [vmem:[%s1 + $0x250] sm:$0xff]
      %v321 = vld [vmem:[%s1 + $0x258] sm:$0xff]
      %v322 = vld [vmem:[%s1 + $0x260] sm:$0xff]
      %v323 = vld [vmem:[%s1 + $0x268] sm:$0xff]
      %v324 = vld [vmem:[%s1 + $0x270] sm:$0xff]
      %v325 = vld [vmem:[%s1 + $0x278] sm:$0xff]
      %v326 = vld [vmem:[%s1 + $0x280] sm:$0xff]
      %v327 = vld [vmem:[%s1 + $0x288] sm:$0xff]
      %v328 = vld [vmem:[%s1 + $0x290] sm:$0xff]
      %v329 = vld [vmem:[%s1 + $0x298] sm:$0xff]
      %v330 = vld [vmem:[%s1 + $0x2a0] sm:$0xff]
      %v331 = vld [vmem:[%s1 + $0x2a8] sm:$0xff]
      %v332 = vld [vmem:[%s1 + $0x2b0] sm:$0xff]
      %v333 = vld [vmem:[%s1 + $0x2b8] sm:$0xff]
      %v334 = vld [vmem:[%s1 + $0x2c0] sm:$0xff]
      %v335 = vld [vmem:[%s1 + $0x2c8] sm:$0xff]
      %v336 = vld [vmem:[%s1 + $0x2d0] sm:$0xff]
      %v337 = vld [vmem:[%s1 + $0x2d8] sm:$0xff]
      %v338 = vld [vmem:[%s1 + $0x2e0] sm:$0xff]
      %v339 = vld [vmem:[%s1 + $0x2e8] sm:$0xff]
      %v340 = vld [vmem:[%s1 + $0x2f0] sm:$0xff]
      %v341 = vld [vmem:[%s1 + $0x2f8] sm:$0xff]
      %v342 = vld [vmem:[%s1 + $0x300] sm:$0xff]
      %v343 = vld [vmem:[%s1 + $0x308] sm:$0xff]
      %v344 = vld [vmem:[%s1 + $0x310] sm:$0xff]
      %v345 = vld [vmem:[%s1 + $0x318] sm:$0xff]
      %v346 = vld [vmem:[%s1 + $0x320] sm:$0xff]
      %v347 = vld [vmem:[%s1 + $0x328] sm:$0xff]
      %v348 = vld [vmem:[%s1 + $0x330] sm:$0xff]
      %v349 = vld [vmem:[%s1 + $0x338] sm:$0xff]
      %v350 = vld [vmem:[%s1 + $0x340] sm:$0xff]
      %v351 = vld [vmem:[%s1 + $0x348] sm:$0xff]
      %v352 = vld [vmem:[%s1 + $0x350] sm:$0xff]
      %v353 = vld [vmem:[%s1 + $0x358] sm:$0xff]
      %v354 = vld [vmem:[%s1 + $0x360] sm:$0xff]
      %v355 = vld [vmem:[%s1 + $0x368] sm:$0xff]
      %v356 = vld [vmem:[%s1 + $0x370] sm:$0xff]
      %v357 = vld [vmem:[%s1 + $0x378] sm:$0xff]
      %v358 = vld [vmem:[%s1 + $0x380] sm:$0xff]
      %v359 = vld [vmem:[%s1 + $0x388] sm:$0xff]
      %v360 = vld [vmem:[%s1 + $0x390] sm:$0xff]
      %v361 = vld [vmem:[%s1 + $0x398] sm:$0xff]
      %v362 = vld [vmem:[%s1 + $0x3a0] sm:$0xff]
      %v363 = vld [vmem:[%s1 + $0x3a8] sm:$0xff]
      %v364 = vld [vmem:[%s1 + $0x3b0] sm:$0xff]
      %v365 = vld [vmem:[%s1 + $0x3b8] sm:$0xff]
      %v366 = vld [vmem:[%s1 + $0x3c0] sm:$0xff]
      %v367 = vld [vmem:[%s1 + $0x3c8] sm:$0xff]
      %v368 = vld [vmem:[%s1 + $0x3d0] sm:$0xff]
      %v369 = vld [vmem:[%s1 + $0x3d8] sm:$0xff]
      %v370 = vld [vmem:[%s1 + $0x3e0] sm:$0xff]
      %v371 = vld [vmem:[%s1 + $0x3e8] sm:$0xff]
      %v372 = vld [vmem:[%s1 + $0x3f0] sm:$0xff]
      %v373 = vld [vmem:[%s1 + $0x3f8] sm:$0xff]
      %v374 = vld [vmem:[%s1 + $0x400] sm:$0xff]
      %v375 = vld [vmem:[%s1 + $0x408] sm:$0xff]
      %v376 = vld [vmem:[%s1 + $0x410] sm:$0xff]
      %v377 = vld [vmem:[%s1 + $0x418] sm:$0xff]
      %v378 = vld [vmem:[%s1 + $0x420] sm:$0xff]
      %v379 = vld [vmem:[%s1 + $0x428] sm:$0xff]
      %v380 = vld [vmem:[%s1 + $0x430] sm:$0xff]
      %v381 = vld [vmem:[%s1 + $0x438] sm:$0xff]
      %v382 = vld [vmem:[%s1 + $0x440] sm:$0xff]
      %v383 = vld [vmem:[%s1 + $0x448] sm:$0xff]
      %v384 = vld [vmem:[%s1 + $0x450] sm:$0xff]
      %v385 = vld [vmem:[%s1 + $0x458] sm:$0xff]
      %v386 = vld [vmem:[%s1 + $0x460] sm:$0xff]
      %v387 = vld [vmem:[%s1 + $0x468] sm:$0xff]
      %v388 = vld [vmem:[%s1 + $0x470] sm:$0xff]
      %v389 = vld [vmem:[%s1 + $0x478] sm:$0xff]
      %v390 = vld [vmem:[%s1 + $0x480] sm:$0xff]
      %v391 = vld [vmem:[%s1 + $0x488] sm:$0xff]
      %v392 = vld [vmem:[%s1 + $0x490] sm:$0xff]
      %v393 = vld [vmem:[%s1 + $0x498] sm:$0xff]
      %v394 = vld [vmem:[%s1 + $0x4a0] sm:$0xff]
      %v395 = vld [vmem:[%s1 + $0x4a8] sm:$0xff]
      %v396 = vld [vmem:[%s1 + $0x4b0] sm:$0xff]
      %v397 = vld [vmem:[%s1 + $0x4b8] sm:$0xff]
      %v398 = vld [vmem:[%s1 + $0x4c0] sm:$0xff]
      %v399 = vld [vmem:[%s1 + $0x4c8] sm:$0xff]
      %v400 = vld [vmem:[%s1 + $0x4d0] sm:$0xff]
      %v401 = vld [vmem:[%s1 + $0x4d8] sm:$0xff]
      %v402 = vld [vmem:[%s1 + $0x4e0] sm:$0xff]
      %v403 = vld [vmem:[%s1 + $0x4e8] sm:$0xff]
      %v404 = vld [vmem:[%s1 + $0x4f0] sm:$0xff]
      %v405 = vld [vmem:[%s1 + $0x4f8] sm:$0xff]
      %v406 = vld [vmem:[%s1 + $0x500] sm:$0xff]
      %v407 = vld [vmem:[%s1 + $0x508] sm:$0xff]
      %v408 = vld [vmem:[%s1 + $0x510] sm:$0xff]
      %v409 = vld [vmem:[%s1 + $0x518] sm:$0xff]
      %v410 = vld [vmem:[%s1 + $0x520] sm:$0xff]
      %v411 = vld [vmem:[%s1 + $0x528] sm:$0xff]
      %v412 = vld [vmem:[%s1 + $0x530] sm:$0xff]
      %v413 = vld [vmem:[%s1 + $0x538] sm:$0xff]
      %v414 = vld [vmem:[%s1 + $0x540] sm:$0xff]
      %v415 = vld [vmem:[%s1 + $0x548] sm:$0xff]
      %v416 = vld [vmem:[%s1 + $0x550] sm:$0xff]
      %v417 = vld [vmem:[%s1 + $0x558] sm:$0xff]
      %v418 = vld [vmem:[%s1 + $0x560] sm:$0xff]
      %v419 = vld [vmem:[%s1 + $0x568] sm:$0xff]
      %v420 = vld [vmem:[%s1 + $0x570] sm:$0xff]
      %v421 = vld [vmem:[%s1 + $0x578] sm:$0xff]
      %v422 = vld [vmem:[%s1 + $0x580] sm:$0xff]
      %v423 = vld [vmem:[%s1 + $0x588] sm:$0xff]
      %v424 = vld [vmem:[%s1 + $0x590] sm:$0xff]
      %v425 = vld [vmem:[%s1 + $0x598] sm:$0xff]
      %v426 = vld [vmem:[%s1 + $0x5a0] sm:$0xff]
      %v427 = vld [vmem:[%s1 + $0x5a8] sm:$0xff]
      %v428 = vld [vmem:[%s1 + $0x5b0] sm:$0xff]
      %v429 = vld [vmem:[%s1 + $0x5b8] sm:$0xff]
      %v430 = vld [vmem:[%s1 + $0x5c0] sm:$0xff]
      %v431 = vld [vmem:[%s1 + $0x5c8] sm:$0xff]
      %v432 = vld [vmem:[%s1 + $0x5d0] sm:$0xff]
      %v433 = vld [vmem:[%s1 + $0x5d8] sm:$0xff]
      %v434 = vld [vmem:[%s1 + $0x5e0] sm:$0xff]
      %v435 = vld [vmem:[%s1 + $0x5e8] sm:$0xff]
      %v436 = vld [vmem:[%s1 + $0x5f0] sm:$0xff]
      %v437 = vld [vmem:[%s1 + $0x5f8] sm:$0xff]
      %v438 = vld [vmem:[%s1 + $0x600] sm:$0xff]
      %v439 = vld [vmem:[%s1 + $0x608] sm:$0xff]
      %v440 = vld [vmem:[%s1 + $0x610] sm:$0xff]
      %v441 = vld [vmem:[%s1 + $0x618] sm:$0xff]
      %v442 = vld [vmem:[%s1 + $0x620] sm:$0xff]
      %v443 = vld [vmem:[%s1 + $0x628] sm:$0xff]
      %v444 = vld [vmem:[%s1 + $0x630] sm:$0xff]
      %v445 = vld [vmem:[%s1 + $0x638] sm:$0xff]
      %v446 = vld [vmem:[%s1 + $0x640] sm:$0xff]
      %v447 = vld [vmem:[%s1 + $0x648] sm:$0xff]
      %v448 = vld [vmem:[%s1 + $0x650] sm:$0xff]
      %v449 = vld [vmem:[%s1 + $0x658] sm:$0xff]
      %v450 = vld [vmem:[%s1 + $0x660] sm:$0xff]
      %v451 = vld [vmem:[%s1 + $0x668] sm:$0xff]
      %v452 = vld [vmem:[%s1 + $0x670] sm:$0xff]
      %v453 = vld [vmem:[%s1 + $0x678] sm:$0xff]
      %v454 = vld [vmem:[%s1 + $0x680] sm:$0xff]
      %v455 = vld [vmem:[%s1 + $0x688] sm:$0xff]
      %v456 = vld [vmem:[%s1 + $0x690] sm:$0xff]
      %v457 = vld [vmem:[%s1 + $0x698] sm:$0xff]
      %v458 = vld [vmem:[%s1 + $0x6a0] sm:$0xff]
      %v459 = vld [vmem:[%s1 + $0x6a8] sm:$0xff]
      %v460 = vld [vmem:[%s1 + $0x6b0] sm:$0xff]
      %v461 = vld [vmem:[%s1 + $0x6b8] sm:$0xff]
      %v462 = vld [vmem:[%s1 + $0x6c0] sm:$0xff]
      %v463 = vld [vmem:[%s1 + $0x6c8] sm:$0xff]
      %v464 = vld [vmem:[%s1 + $0x6d0] sm:$0xff]
      %v465 = vld [vmem:[%s1 + $0x6d8] sm:$0xff]
      %v466 = vld [vmem:[%s1 + $0x6e0] sm:$0xff]
      %v467 = vld [vmem:[%s1 + $0x6e8] sm:$0xff]
      %v468 = vld [vmem:[%s1 + $0x6f0] sm:$0xff]
      %v469 = vld [vmem:[%s1 + $0x6f8] sm:$0xff]
      %v470 = vld [vmem:[%s1 + $0x700] sm:$0xff]
      %v471 = vld [vmem:[%s1 + $0x708] sm:$0xff]
      %v472 = vld [vmem:[%s1 + $0x710] sm:$0xff]
      %v473 = vld [vmem:[%s1 + $0x718] sm:$0xff]
      %v474 = vld [vmem:[%s1 + $0x720] sm:$0xff]
      %v475 = vld [vmem:[%s1 + $0x728] sm:$0xff]
      %v476 = vld [vmem:[%s1 + $0x730] sm:$0xff]
      %v477 = vld [vmem:[%s1 + $0x738] sm:$0xff]
      %v478 = vld [vmem:[%s1 + $0x740] sm:$0xff]
      %v479 = vld [vmem:[%s1 + $0x748] sm:$0xff]
      %v480 = vld [vmem:[%s1 + $0x750] sm:$0xff]
      %v481 = vld [vmem:[%s1 + $0x758] sm:$0xff]
      %v482 = vld [vmem:[%s1 + $0x760] sm:$0xff]
      %v483 = vld [vmem:[%s1 + $0x768] sm:$0xff]
      %v484 = vld [vmem:[%s1 + $0x770] sm:$0xff]
      %v485 = vld [vmem:[%s1 + $0x778] sm:$0xff]
      %v486 = vld [vmem:[%s1 + $0x780] sm:$0xff]
      %v487 = vld [vmem:[%s1 + $0x788] sm:$0xff]
      %v488 = vld [vmem:[%s1 + $0x790] sm:$0xff]
      %v489 = vld [vmem:[%s1 + $0x798] sm:$0xff]
      %v490 = vld [vmem:[%s1 + $0x7a0] sm:$0xff]
      %v491 = vld [vmem:[%s1 + $0x7a8] sm:$0xff]
      %v492 = vld [vmem:[%s1 + $0x7b0] sm:$0xff]
      %v493 = vld [vmem:[%s1 + $0x7b8] sm:$0xff]
      %v494 = vld [vmem:[%s1 + $0x7c0] sm:$0xff]
      %v495 = vld [vmem:[%s1 + $0x7c8] sm:$0xff]
      %v496 = vld [vmem:[%s1 + $0x7d0] sm:$0xff]
      %v497 = vld [vmem:[%s1 + $0x7d8] sm:$0xff]
      %v498 = vld [vmem:[%s1 + $0x7e0] sm:$0xff]
      %v499 = vld [vmem:[%s1 + $0x7e8] sm:$0xff]
      %v500 = vld [vmem:[%s1 + $0x7f0] sm:$0xff]
      %v501 = vld [vmem:[%s1 + $0x7f8] sm:$0xff]
      %v502 = vld [vmem:[%s1 + $0x800] sm:$0xff]
      %v503 = vld [vmem:[%s1 + $0x808] sm:$0xff]
      %v504 = vld [vmem:[%s1 + $0x810] sm:$0xff]
      %v505 = vld [vmem:[%s1 + $0x818] sm:$0xff]
      %v506 = vld [vmem:[%s1 + $0x820] sm:$0xff]
      %v507 = vld [vmem:[%s1 + $0x828] sm:$0xff]
      %v508 = vld [vmem:[%s1 + $0x830] sm:$0xff]
      %v509 = vld [vmem:[%s1 + $0x838] sm:$0xff]
      %v510 = vld [vmem:[%s1 + $0x840] sm:$0xff]
      %v511 = vld [vmem:[%s1 + $0x848] sm:$0xff]
      %v512 = vld [vmem:[%s1 + $0x850] sm:$0xff]
      %v513 = vld [vmem:[%s1 + $0x858] sm:$0xff]
      %v514 = vld [vmem:[%s1 + $0x860] sm:$0xff]
      %v515 = vld [vmem:[%s1 + $0x868] sm:$0xff]
      %v516 = vld [vmem:[%s1 + $0x870] sm:$0xff]
      %v517 = vld [vmem:[%s1 + $0x878] sm:$0xff]
      %v518 = vld [vmem:[%s1 + $0x880] sm:$0xff]
      %v519 = vld [vmem:[%s1 + $0x888] sm:$0xff]
      %v520 = vld [vmem:[%s1 + $0x890] sm:$0xff]
      %v521 = vld [vmem:[%s1 + $0x898] sm:$0xff]
      %v522 = vld [vmem:[%s1 + $0x8a0] sm:$0xff]
      %v523 = vld [vmem:[%s1 + $0x8a8] sm:$0xff]
      %v524 = vld [vmem:[%s1 + $0x8b0] sm:$0xff]
      %v525 = vld [vmem:[%s1 + $0x8b8] sm:$0xff]
      %v526 = vld [vmem:[%s1 + $0x8c0] sm:$0xff]
      %v527 = vld [vmem:[%s1 + $0x8c8] sm:$0xff]
      %v528 = vld [vmem:[%s1 + $0x8d0] sm:$0xff]
      %v529 = vld [vmem:[%s1 + $0x8d8] sm:$0xff]
      %v530 = vld [vmem:[%s1 + $0x8e0] sm:$0xff]
      %v531 = vld [vmem:[%s1 + $0x8e8] sm:$0xff]
      %v532 = vld [vmem:[%s1 + $0x8f0] sm:$0xff]
      %v533 = vld [vmem:[%s1 + $0x8f8] sm:$0xff]
      %v534 = vld [vmem:[%s1 + $0x900] sm:$0xff]
      %v535 = vld [vmem:[%s1 + $0x908] sm:$0xff]
      %v536 = vld [vmem:[%s1 + $0x910] sm:$0xff]
      %v537 = vld [vmem:[%s1 + $0x918] sm:$0xff]
      %v538 = vld [vmem:[%s1 + $0x920] sm:$0xff]
      %v539 = vld [vmem:[%s1 + $0x928] sm:$0xff]
      %v540 = vld [vmem:[%s1 + $0x930] sm:$0xff]
      %v541 = vld [vmem:[%s1 + $0x938] sm:$0xff]
      %v542 = vld [vmem:[%s1 + $0x940] sm:$0xff]
      %v543 = vld [vmem:[%s1 + $0x948] sm:$0xff]
      %v544 = vld [vmem:[%s1 + $0x950] sm:$0xff]
      %v545 = vld [vmem:[%s1 + $0x958] sm:$0xff]
      %v546 = vld [vmem:[%s1 + $0x960] sm:$0xff]
      %v547 = vld [vmem:[%s1 + $0x968] sm:$0xff]
      %v548 = vld [vmem:[%s1 + $0x970] sm:$0xff]
      %v549 = vld [vmem:[%s1 + $0x978] sm:$0xff]
      %v550 = vld [vmem:[%s1 + $0x980] sm:$0xff]
      %v551 = vld [vmem:[%s1 + $0x988] sm:$0xff]
      %v552 = vld [vmem:[%s1 + $0x990] sm:$0xff]
      %v553 = vld [vmem:[%s1 + $0x998] sm:$0xff]
      %v554 = vld [vmem:[%s1 + $0x9a0] sm:$0xff]
      %v555 = vld [vmem:[%s1 + $0x9a8] sm:$0xff]
      %v556 = vld [vmem:[%s1 + $0x9b0] sm:$0xff]
      %v557 = vld [vmem:[%s1 + $0x9b8] sm:$0xff]
      %v558 = vld [vmem:[%s1 + $0x9c0] sm:$0xff]
      %v559 = vld [vmem:[%s1 + $0x9c8] sm:$0xff]
      %v560 = vld [vmem:[%s1 + $0x9d0] sm:$0xff]
      %v561 = vld [vmem:[%s1 + $0x9d8] sm:$0xff]
      %v562 = vld [vmem:[%s1 + $0x9e0] sm:$0xff]
      %v563 = vld [vmem:[%s1 + $0x9e8] sm:$0xff]
      %v564 = vld [vmem:[%s1 + $0x9f0] sm:$0xff]
      %v565 = vld [vmem:[%s1 + $0x9f8] sm:$0xff]
      %v566 = vld [vmem:[%s1 + $0xa00] sm:$0xff]
      %v567 = vld [vmem:[%s1 + $0xa08] sm:$0xff]
      %v568 = vld [vmem:[%s1 + $0xa10] sm:$0xff]
      %v569 = vld [vmem:[%s1 + $0xa18] sm:$0xff]
      %v570 = vld [vmem:[%s1 + $0xa20] sm:$0xff]
      %v571 = vld [vmem:[%s1 + $0xa28] sm:$0xff]
      %v572 = vld [vmem:[%s1 + $0xa30] sm:$0xff]
      %v573 = vld [vmem:[%s1 + $0xa38] sm:$0xff]
      %v574 = vld [vmem:[%s1 + $0xa40] sm:$0xff]
      %v575 = vld [vmem:[%s1 + $0xa48] sm:$0xff]
      %v576 = vld [vmem:[%s1 + $0xa50] sm:$0xff]
      %v577 = vld [vmem:[%s1 + $0xa58] sm:$0xff]
      %v578 = vld [vmem:[%s1 + $0xa60] sm:$0xff]
      %v579 = vld [vmem:[%s1 + $0xa68] sm:$0xff]
      %v580 = vld [vmem:[%s1 + $0xa70] sm:$0xff]
      %v581 = vld [vmem:[%s1 + $0xa78] sm:$0xff]
      %v582 = vld [vmem:[%s1 + $0xa80] sm:$0xff]
      %v583 = vld [vmem:[%s1 + $0xa88] sm:$0xff]
      %v584 = vld [vmem:[%s1 + $0xa90] sm:$0xff]
      %v585 = vld [vmem:[%s1 + $0xa98] sm:$0xff]
      %v586 = vld [vmem:[%s1 + $0xaa0] sm:$0xff]
      %v587 = vld [vmem:[%s1 + $0xaa8] sm:$0xff]
      %v588 = vld [vmem:[%s1 + $0xab0] sm:$0xff]
      %v589 = vld [vmem:[%s1 + $0xab8] sm:$0xff]
      %v590 = vld [vmem:[%s1 + $0xac0] sm:$0xff]
      %v591 = vld [vmem:[%s1 + $0xac8] sm:$0xff]
      %v592 = vld [vmem:[%s1 + $0xad0] sm:$0xff]
      %v593 = vld [vmem:[%s1 + $0xad8] sm:$0xff]
      %v594 = vld [vmem:[%s1 + $0xae0] sm:$0xff]
      %v595 = vld [vmem:[%s1 + $0xae8] sm:$0xff]
      %v596 = vld [vmem:[%s1 + $0xaf0] sm:$0xff]
      %v597 = vld [vmem:[%s1 + $0xaf8] sm:$0xff]
      %v598 = vld [vmem:[%s1 + $0xb00] sm:$0xff]
      %v599 = vld [vmem:[%s1 + $0xb08] sm:$0xff]
      %v600 = vld [vmem:[%s1 + $0xb10] sm:$0xff]
      %v601 = vld [vmem:[%s1 + $0xb18] sm:$0xff]
      %v602 = vld [vmem:[%s1 + $0xb20] sm:$0xff]
      %v603 = vld [vmem:[%s1 + $0xb28] sm:$0xff]
      %v604 = vld [vmem:[%s1 + $0xb30] sm:$0xff]
      %v605 = vld [vmem:[%s1 + $0xb38] sm:$0xff]
      %v606 = vld [vmem:[%s1 + $0xb40] sm:$0xff]
      %v607 = vld [vmem:[%s1 + $0xb48] sm:$0xff]
      %v608 = vld [vmem:[%s1 + $0xb50] sm:$0xff]
      %v609 = vld [vmem:[%s1 + $0xb58] sm:$0xff]
      %v610 = vld [vmem:[%s1 + $0xb60] sm:$0xff]
      %v611 = vld [vmem:[%s1 + $0xb68] sm:$0xff]
      %v612 = vld [vmem:[%s1 + $0xb70] sm:$0xff]
      %v613 = vld [vmem:[%s1 + $0xb78] sm:$0xff]
      %v614 = vld [vmem:[%s1 + $0xb80] sm:$0xff]
      %v615 = vld [vmem:[%s1 + $0xb88] sm:$0xff]
      %v616 = vld [vmem:[%s1 + $0xb90] sm:$0xff]
      %v617 = vld [vmem:[%s1 + $0xb98] sm:$0xff]
      %v618 = vld [vmem:[%s1 + $0xba0] sm:$0xff]
      %v619 = vld [vmem:[%s1 + $0xba8] sm:$0xff]
      %v620 = vld [vmem:[%s1 + $0xbb0] sm:$0xff]
      %v621 = vld [vmem:[%s1 + $0xbb8] sm:$0xff]
      %v622 = vld [vmem:[%s1 + $0xbc0] sm:$0xff]
      %v623 = vld [vmem:[%s1 + $0xbc8] sm:$0xff]
      %v624 = vld [vmem:[%s1 + $0xbd0] sm:$0xff]
      %v625 = vld [vmem:[%s1 + $0xbd8] sm:$0xff]
      %v626 = vld [vmem:[%s1 + $0xbe0] sm:$0xff]
      %v627 = vld [vmem:[%s1 + $0xbe8] sm:$0xff]
      %v628 = vld [vmem:[%s1 + $0xbf0] sm:$0xff]
      %v629 = vld [vmem:[%s1 + $0xbf8] sm:$0xff]
      %vm630 = vcmask 523264
      %v632 = vsel %vm630, %v245, 0
      %634 = vmatprep.subr.mxu0 %v487
      %635 = vmatpush1.msra.mxu0 %v486
      %636 = vmatprep.subr.mxu0 %v471
      %637 = vmatpush1.msra.mxu0 %v470
      %638 = vmatprep.subr.mxu0 %v455
      %639 = vmatpush1.msra.mxu0 %v454
      %640 = vmatprep.subr.mxu0 %v439
      %641 = vmatpush1.msra.mxu0 %v438
      %642 = vmatprep.subr.mxu0 %v423
      %643 = vmatpush1.msra.mxu0 %v422
      %644 = vmatprep.subr.mxu0 %v407
      %645 = vmatpush1.msra.mxu0 %v406
      %646 = vmatprep.subr.mxu0 %v391
      %647 = vmatpush1.msra.mxu0 %v390
      %648 = vmatprep.subr.mxu0 %v375
      %649 = vmatpush1.msra.mxu0 %v374
      %650 = vmatprep.subr.mxu0 %v359
      %651 = vmatpush1.msra.mxu0 %v358
      %652 = vmatprep.subr.mxu0 %v343
      %653 = vmatpush1.msra.mxu0 %v342
      %654 = vmatprep.subr.mxu0 %v327
      %655 = vmatpush1.msra.mxu0 %v326
      %656 = vmatprep.subr.mxu0 %v311
      %657 = vmatpush1.msra.mxu0 %v310
      %658 = vmatprep.subr.mxu0 %v295
      %659 = vmatpush1.msra.mxu0 %v294
      %660 = vmatprep.subr.mxu0 %v279
      %661 = vmatpush1.msra.mxu0 %v278
      %662 = vmatprep.subr.mxu0 %v263
      %663 = vmatpush1.msra.mxu0 %v262
      %664 = vmatprep.subr.mxu0 %v247
      %665 = vmatpush1.msra.mxu0 %v246
      %666 = vmatprep.subr.mxu0 0.0
      %667 = vmatpush2.msra.mxu0 0.0
      %668 = vmatprep.subr.mxu0 0.0
      %669 = vmatpush2.msra.mxu0 0.0
      %670 = vmatprep.subr.mxu0 0.0
      %671 = vmatpush2.msra.mxu0 0.0
      %672 = vmatprep.subr.mxu0 0.0
      %673 = vmatpush2.msra.mxu0 0.0
      %674 = vmatprep.subr.mxu0 0.0
      %675 = vmatpush2.msra.mxu0 0.0
      %676 = vmatprep.subr.mxu0 0.0
      %677 = vmatpush2.msra.mxu0 0.0
      %678 = vmatprep.subr.mxu0 0.0
      %679 = vmatpush2.msra.mxu0 0.0
      %680 = vmatprep.subr.mxu0 0.0
      %681 = vmatpush2.msra.mxu0 0.0
      %682 = vmatprep.subr.mxu0 %v615
      %683 = vmatpush2.msra.mxu0 %v614
      %684 = vmatprep.subr.mxu0 %v599
      %685 = vmatpush2.msra.mxu0 %v598
      %686 = vmatprep.subr.mxu0 %v583
      %687 = vmatpush2.msra.mxu0 %v582
      %688 = vmatprep.subr.mxu0 %v567
      %689 = vmatpush2.msra.mxu0 %v566
      %690 = vmatprep.subr.mxu0 %v551
      %691 = vmatpush2.msra.mxu0 %v550
      %692 = vmatprep.subr.mxu0 %v535
      %693 = vmatpush2.msra.mxu0 %v534
      %694 = vmatprep.subr.mxu0 %v519
      %695 = vmatpush2.msra.mxu0 %v518
      %696 = vmatprep.subr.mxu0 %v503
      %697 = vmatpush2.msra.mxu0 %v502
      %698 = vmatprep.mubr.f32.mxu0 %v632
      %699 = vmatmul.mubr.f32.gmra.mxu0 %v244
      %v700 = vpop.f32.mrf.mxu0
      %v701 = vadd.f32 0.0, %v700
      %v702 = vpop.f32.mrf.mxu0
      %v703 = vadd.f32 0.0, %v702
      %704 = vdwg.mxu0
      %705 = vmatprep.subr.mxu0 %v489
      %706 = vmatpush1.msra.mxu0 %v488
      %707 = vmatprep.subr.mxu0 %v473
      %708 = vmatpush1.msra.mxu0 %v472
      %709 = vmatprep.subr.mxu0 %v457
      %710 = vmatpush1.msra.mxu0 %v456
      %711 = vmatprep.subr.mxu0 %v441
      %712 = vmatpush1.msra.mxu0 %v440
      %713 = vmatprep.subr.mxu0 %v425
      %714 = vmatpush1.msra.mxu0 %v424
      %715 = vmatprep.subr.mxu0 %v409
      %716 = vmatpush1.msra.mxu0 %v408
      %717 = vmatprep.subr.mxu0 %v393
      %718 = vmatpush1.msra.mxu0 %v392
      %719 = vmatprep.subr.mxu0 %v377
      %720 = vmatpush1.msra.mxu0 %v376
      %721 = vmatprep.subr.mxu0 %v361
      %722 = vmatpush1.msra.mxu0 %v360
      %723 = vmatprep.subr.mxu0 %v345
      %724 = vmatpush1.msra.mxu0 %v344
      %725 = vmatprep.subr.mxu0 %v329
      %726 = vmatpush1.msra.mxu0 %v328
      %727 = vmatprep.subr.mxu0 %v313
      %728 = vmatpush1.msra.mxu0 %v312
      %729 = vmatprep.subr.mxu0 %v297
      %730 = vmatpush1.msra.mxu0 %v296
      %731 = vmatprep.subr.mxu0 %v281
      %732 = vmatpush1.msra.mxu0 %v280
      %733 = vmatprep.subr.mxu0 %v265
      %734 = vmatpush1.msra.mxu0 %v264
      %735 = vmatprep.subr.mxu0 %v249
      %736 = vmatpush1.msra.mxu0 %v248
      %737 = vmatprep.subr.mxu0 0.0
      %738 = vmatpush2.msra.mxu0 0.0
      %739 = vmatprep.subr.mxu0 0.0
      %740 = vmatpush2.msra.mxu0 0.0
      %741 = vmatprep.subr.mxu0 0.0
      %742 = vmatpush2.msra.mxu0 0.0
      %743 = vmatprep.subr.mxu0 0.0
      %744 = vmatpush2.msra.mxu0 0.0
      %745 = vmatprep.subr.mxu0 0.0
      %746 = vmatpush2.msra.mxu0 0.0
      %747 = vmatprep.subr.mxu0 0.0
      %748 = vmatpush2.msra.mxu0 0.0
      %749 = vmatprep.subr.mxu0 0.0
      %750 = vmatpush2.msra.mxu0 0.0
      %751 = vmatprep.subr.mxu0 0.0
      %752 = vmatpush2.msra.mxu0 0.0
      %753 = vmatprep.subr.mxu0 %v617
      %754 = vmatpush2.msra.mxu0 %v616
      %755 = vmatprep.subr.mxu0 %v601
      %756 = vmatpush2.msra.mxu0 %v600
      %757 = vmatprep.subr.mxu0 %v585
      %758 = vmatpush2.msra.mxu0 %v584
      %759 = vmatprep.subr.mxu0 %v569
      %760 = vmatpush2.msra.mxu0 %v568
      %761 = vmatprep.subr.mxu0 %v553
      %762 = vmatpush2.msra.mxu0 %v552
      %763 = vmatprep.subr.mxu0 %v537
      %764 = vmatpush2.msra.mxu0 %v536
      %765 = vmatprep.subr.mxu0 %v521
      %766 = vmatpush2.msra.mxu0 %v520
      %767 = vmatprep.subr.mxu0 %v505
      %768 = vmatpush2.msra.mxu0 %v504
      %769 = vmatprep.mubr.f32.mxu0 %v632
      %770 = vmatmul.mubr.f32.gmra.mxu0 %v244
      %v771 = vpop.f32.mrf.mxu0
      %v772 = vadd.f32 0.0, %v771
      %v773 = vpop.f32.mrf.mxu0
      %v774 = vadd.f32 0.0, %v773
      %775 = vdwg.mxu0
      %776 = vmatprep.subr.mxu0 %v491
      %777 = vmatpush1.msra.mxu0 %v490
      %778 = vmatprep.subr.mxu0 %v475
      %779 = vmatpush1.msra.mxu0 %v474
      %780 = vmatprep.subr.mxu0 %v459
      %781 = vmatpush1.msra.mxu0 %v458
      %782 = vmatprep.subr.mxu0 %v443
      %783 = vmatpush1.msra.mxu0 %v442
      %784 = vmatprep.subr.mxu0 %v427
      %785 = vmatpush1.msra.mxu0 %v426
      %786 = vmatprep.subr.mxu0 %v411
      %787 = vmatpush1.msra.mxu0 %v410
      %788 = vmatprep.subr.mxu0 %v395
      %789 = vmatpush1.msra.mxu0 %v394
      %790 = vmatprep.subr.mxu0 %v379
      %791 = vmatpush1.msra.mxu0 %v378
      %792 = vmatprep.subr.mxu0 %v363
      %793 = vmatpush1.msra.mxu0 %v362
      %794 = vmatprep.subr.mxu0 %v347
      %795 = vmatpush1.msra.mxu0 %v346
      %796 = vmatprep.subr.mxu0 %v331
      %797 = vmatpush1.msra.mxu0 %v330
      %798 = vmatprep.subr.mxu0 %v315
      %799 = vmatpush1.msra.mxu0 %v314
      %800 = vmatprep.subr.mxu0 %v299
      %801 = vmatpush1.msra.mxu0 %v298
      %802 = vmatprep.subr.mxu0 %v283
      %803 = vmatpush1.msra.mxu0 %v282
      %804 = vmatprep.subr.mxu0 %v267
      %805 = vmatpush1.msra.mxu0 %v266
      %806 = vmatprep.subr.mxu0 %v251
      %807 = vmatpush1.msra.mxu0 %v250
      %808 = vmatprep.subr.mxu0 0.0
      %809 = vmatpush2.msra.mxu0 0.0
      %810 = vmatprep.subr.mxu0 0.0
      %811 = vmatpush2.msra.mxu0 0.0
      %812 = vmatprep.subr.mxu0 0.0
      %813 = vmatpush2.msra.mxu0 0.0
      %814 = vmatprep.subr.mxu0 0.0
      %815 = vmatpush2.msra.mxu0 0.0
      %816 = vmatprep.subr.mxu0 0.0
      %817 = vmatpush2.msra.mxu0 0.0
      %818 = vmatprep.subr.mxu0 0.0
      %819 = vmatpush2.msra.mxu0 0.0
      %820 = vmatprep.subr.mxu0 0.0
      %821 = vmatpush2.msra.mxu0 0.0
      %822 = vmatprep.subr.mxu0 0.0
      %823 = vmatpush2.msra.mxu0 0.0
      %824 = vmatprep.subr.mxu0 %v619
      %825 = vmatpush2.msra.mxu0 %v618
      %826 = vmatprep.subr.mxu0 %v603
      %827 = vmatpush2.msra.mxu0 %v602
      %828 = vmatprep.subr.mxu0 %v587
      %829 = vmatpush2.msra.mxu0 %v586
      %830 = vmatprep.subr.mxu0 %v571
      %831 = vmatpush2.msra.mxu0 %v570
      %832 = vmatprep.subr.mxu0 %v555
      %833 = vmatpush2.msra.mxu0 %v554
      %834 = vmatprep.subr.mxu0 %v539
      %835 = vmatpush2.msra.mxu0 %v538
      %836 = vmatprep.subr.mxu0 %v523
      %837 = vmatpush2.msra.mxu0 %v522
      %838 = vmatprep.subr.mxu0 %v507
      %839 = vmatpush2.msra.mxu0 %v506
      %840 = vmatprep.mubr.f32.mxu0 %v632
      %841 = vmatmul.mubr.f32.gmra.mxu0 %v244
      %v842 = vpop.f32.mrf.mxu0
      %v843 = vadd.f32 0.0, %v842
      %v844 = vpop.f32.mrf.mxu0
      %v845 = vadd.f32 0.0, %v844
      %846 = vdwg.mxu0
      %847 = vmatprep.subr.mxu0 %v493
      %848 = vmatpush1.msra.mxu0 %v492
      %849 = vmatprep.subr.mxu0 %v477
      %850 = vmatpush1.msra.mxu0 %v476
      %851 = vmatprep.subr.mxu0 %v461
      %852 = vmatpush1.msra.mxu0 %v460
      %853 = vmatprep.subr.mxu0 %v445
      %854 = vmatpush1.msra.mxu0 %v444
      %855 = vmatprep.subr.mxu0 %v429
      %856 = vmatpush1.msra.mxu0 %v428
      %857 = vmatprep.subr.mxu0 %v413
      %858 = vmatpush1.msra.mxu0 %v412
      %859 = vmatprep.subr.mxu0 %v397
      %860 = vmatpush1.msra.mxu0 %v396
      %861 = vmatprep.subr.mxu0 %v381
      %862 = vmatpush1.msra.mxu0 %v380
      %863 = vmatprep.subr.mxu0 %v365
      %864 = vmatpush1.msra.mxu0 %v364
      %865 = vmatprep.subr.mxu0 %v349
      %866 = vmatpush1.msra.mxu0 %v348
      %867 = vmatprep.subr.mxu0 %v333
      %868 = vmatpush1.msra.mxu0 %v332
      %869 = vmatprep.subr.mxu0 %v317
      %870 = vmatpush1.msra.mxu0 %v316
      %871 = vmatprep.subr.mxu0 %v301
      %872 = vmatpush1.msra.mxu0 %v300
      %873 = vmatprep.subr.mxu0 %v285
      %874 = vmatpush1.msra.mxu0 %v284
      %875 = vmatprep.subr.mxu0 %v269
      %876 = vmatpush1.msra.mxu0 %v268
      %877 = vmatprep.subr.mxu0 %v253
      %878 = vmatpush1.msra.mxu0 %v252
      %879 = vmatprep.subr.mxu0 0.0
      %880 = vmatpush2.msra.mxu0 0.0
      %881 = vmatprep.subr.mxu0 0.0
      %882 = vmatpush2.msra.mxu0 0.0
      %883 = vmatprep.subr.mxu0 0.0
      %884 = vmatpush2.msra.mxu0 0.0
      %885 = vmatprep.subr.mxu0 0.0
      %886 = vmatpush2.msra.mxu0 0.0
      %887 = vmatprep.subr.mxu0 0.0
      %888 = vmatpush2.msra.mxu0 0.0
      %889 = vmatprep.subr.mxu0 0.0
      %890 = vmatpush2.msra.mxu0 0.0
      %891 = vmatprep.subr.mxu0 0.0
      %892 = vmatpush2.msra.mxu0 0.0
      %893 = vmatprep.subr.mxu0 0.0
      %894 = vmatpush2.msra.mxu0 0.0
      %895 = vmatprep.subr.mxu0 %v621
      %896 = vmatpush2.msra.mxu0 %v620
      %897 = vmatprep.subr.mxu0 %v605
      %898 = vmatpush2.msra.mxu0 %v604
      %899 = vmatprep.subr.mxu0 %v589
      %900 = vmatpush2.msra.mxu0 %v588
      %901 = vmatprep.subr.mxu0 %v573
      %902 = vmatpush2.msra.mxu0 %v572
      %903 = vmatprep.subr.mxu0 %v557
      %904 = vmatpush2.msra.mxu0 %v556
      %905 = vmatprep.subr.mxu0 %v541
      %906 = vmatpush2.msra.mxu0 %v540
      %907 = vmatprep.subr.mxu0 %v525
      %908 = vmatpush2.msra.mxu0 %v524
      %909 = vmatprep.subr.mxu0 %v509
      %910 = vmatpush2.msra.mxu0 %v508
      %911 = vmatprep.mubr.f32.mxu0 %v632
      %912 = vmatmul.mubr.f32.gmra.mxu0 %v244
      %v913 = vpop.f32.mrf.mxu0
      %v914 = vadd.f32 0.0, %v913
      %v915 = vpop.f32.mrf.mxu0
      %v916 = vadd.f32 0.0, %v915
      %917 = vdwg.mxu0
      %918 = vmatprep.subr.mxu0 %v495
      %919 = vmatpush1.msra.mxu0 %v494
      %920 = vmatprep.subr.mxu0 %v479
      %921 = vmatpush1.msra.mxu0 %v478
      %922 = vmatprep.subr.mxu0 %v463
      %923 = vmatpush1.msra.mxu0 %v462
      %924 = vmatprep.subr.mxu0 %v447
      %925 = vmatpush1.msra.mxu0 %v446
      %926 = vmatprep.subr.mxu0 %v431
      %927 = vmatpush1.msra.mxu0 %v430
      %928 = vmatprep.subr.mxu0 %v415
      %929 = vmatpush1.msra.mxu0 %v414
      %930 = vmatprep.subr.mxu0 %v399
      %931 = vmatpush1.msra.mxu0 %v398
      %932 = vmatprep.subr.mxu0 %v383
      %933 = vmatpush1.msra.mxu0 %v382
      %934 = vmatprep.subr.mxu0 %v367
      %935 = vmatpush1.msra.mxu0 %v366
      %936 = vmatprep.subr.mxu0 %v351
      %937 = vmatpush1.msra.mxu0 %v350
      %938 = vmatprep.subr.mxu0 %v335
      %939 = vmatpush1.msra.mxu0 %v334
      %940 = vmatprep.subr.mxu0 %v319
      %941 = vmatpush1.msra.mxu0 %v318
      %942 = vmatprep.subr.mxu0 %v303
      %943 = vmatpush1.msra.mxu0 %v302
      %944 = vmatprep.subr.mxu0 %v287
      %945 = vmatpush1.msra.mxu0 %v286
      %946 = vmatprep.subr.mxu0 %v271
      %947 = vmatpush1.msra.mxu0 %v270
      %948 = vmatprep.subr.mxu0 %v255
      %949 = vmatpush1.msra.mxu0 %v254
      %950 = vmatprep.subr.mxu0 0.0
      %951 = vmatpush2.msra.mxu0 0.0
      %952 = vmatprep.subr.mxu0 0.0
      %953 = vmatpush2.msra.mxu0 0.0
      %954 = vmatprep.subr.mxu0 0.0
      %955 = vmatpush2.msra.mxu0 0.0
      %956 = vmatprep.subr.mxu0 0.0
      %957 = vmatpush2.msra.mxu0 0.0
      %958 = vmatprep.subr.mxu0 0.0
      %959 = vmatpush2.msra.mxu0 0.0
      %960 = vmatprep.subr.mxu0 0.0
      %961 = vmatpush2.msra.mxu0 0.0
      %962 = vmatprep.subr.mxu0 0.0
      %963 = vmatpush2.msra.mxu0 0.0
      %964 = vmatprep.subr.mxu0 0.0
      %965 = vmatpush2.msra.mxu0 0.0
      %966 = vmatprep.subr.mxu0 %v623
      %967 = vmatpush2.msra.mxu0 %v622
      %968 = vmatprep.subr.mxu0 %v607
      %969 = vmatpush2.msra.mxu0 %v606
      %970 = vmatprep.subr.mxu0 %v591
      %971 = vmatpush2.msra.mxu0 %v590
      %972 = vmatprep.subr.mxu0 %v575
      %973 = vmatpush2.msra.mxu0 %v574
      %974 = vmatprep.subr.mxu0 %v559
      %975 = vmatpush2.msra.mxu0 %v558
      %976 = vmatprep.subr.mxu0 %v543
      %977 = vmatpush2.msra.mxu0 %v542
      %978 = vmatprep.subr.mxu0 %v527
      %979 = vmatpush2.msra.mxu0 %v526
      %980 = vmatprep.subr.mxu0 %v511
      %981 = vmatpush2.msra.mxu0 %v510
      %982 = vmatprep.mubr.f32.mxu0 %v632
      %983 = vmatmul.mubr.f32.gmra.mxu0 %v244
      %v984 = vpop.f32.mrf.mxu0
      %v985 = vadd.f32 0.0, %v984
      %v986 = vpop.f32.mrf.mxu0
      %v987 = vadd.f32 0.0, %v986
      %988 = vdwg.mxu0
      %989 = vmatprep.subr.mxu0 %v497
      %990 = vmatpush1.msra.mxu0 %v496
      %991 = vmatprep.subr.mxu0 %v481
      %992 = vmatpush1.msra.mxu0 %v480
      %993 = vmatprep.subr.mxu0 %v465
      %994 = vmatpush1.msra.mxu0 %v464
      %995 = vmatprep.subr.mxu0 %v449
      %996 = vmatpush1.msra.mxu0 %v448
      %997 = vmatprep.subr.mxu0 %v433
      %998 = vmatpush1.msra.mxu0 %v432
      %999 = vmatprep.subr.mxu0 %v417
      %1000 = vmatpush1.msra.mxu0 %v416
      %1001 = vmatprep.subr.mxu0 %v401
      %1002 = vmatpush1.msra.mxu0 %v400
      %1003 = vmatprep.subr.mxu0 %v385
      %1004 = vmatpush1.msra.mxu0 %v384
      %1005 = vmatprep.subr.mxu0 %v369
      %1006 = vmatpush1.msra.mxu0 %v368
      %1007 = vmatprep.subr.mxu0 %v353
      %1008 = vmatpush1.msra.mxu0 %v352
      %1009 = vmatprep.subr.mxu0 %v337
      %1010 = vmatpush1.msra.mxu0 %v336
      %1011 = vmatprep.subr.mxu0 %v321
      %1012 = vmatpush1.msra.mxu0 %v320
      %1013 = vmatprep.subr.mxu0 %v305
      %1014 = vmatpush1.msra.mxu0 %v304
      %1015 = vmatprep.subr.mxu0 %v289
      %1016 = vmatpush1.msra.mxu0 %v288
      %1017 = vmatprep.subr.mxu0 %v273
      %1018 = vmatpush1.msra.mxu0 %v272
      %1019 = vmatprep.subr.mxu0 %v257
      %1020 = vmatpush1.msra.mxu0 %v256
      %1021 = vmatprep.subr.mxu0 0.0
      %1022 = vmatpush2.msra.mxu0 0.0
      %1023 = vmatprep.subr.mxu0 0.0
      %1024 = vmatpush2.msra.mxu0 0.0
      %1025 = vmatprep.subr.mxu0 0.0
      %1026 = vmatpush2.msra.mxu0 0.0
      %1027 = vmatprep.subr.mxu0 0.0
      %1028 = vmatpush2.msra.mxu0 0.0
      %1029 = vmatprep.subr.mxu0 0.0
      %1030 = vmatpush2.msra.mxu0 0.0
      %1031 = vmatprep.subr.mxu0 0.0
      %1032 = vmatpush2.msra.mxu0 0.0
      %1033 = vmatprep.subr.mxu0 0.0
      %1034 = vmatpush2.msra.mxu0 0.0
      %1035 = vmatprep.subr.mxu0 0.0
      %1036 = vmatpush2.msra.mxu0 0.0
      %1037 = vmatprep.subr.mxu0 %v625
      %1038 = vmatpush2.msra.mxu0 %v624
      %1039 = vmatprep.subr.mxu0 %v609
      %1040 = vmatpush2.msra.mxu0 %v608
      %1041 = vmatprep.subr.mxu0 %v593
      %1042 = vmatpush2.msra.mxu0 %v592
      %1043 = vmatprep.subr.mxu0 %v577
      %1044 = vmatpush2.msra.mxu0 %v576
      %1045 = vmatprep.subr.mxu0 %v561
      %1046 = vmatpush2.msra.mxu0 %v560
      %1047 = vmatprep.subr.mxu0 %v545
      %1048 = vmatpush2.msra.mxu0 %v544
      %1049 = vmatprep.subr.mxu0 %v529
      %1050 = vmatpush2.msra.mxu0 %v528
      %1051 = vmatprep.subr.mxu0 %v513
      %1052 = vmatpush2.msra.mxu0 %v512
      %1053 = vmatprep.mubr.f32.mxu0 %v632
      %1054 = vmatmul.mubr.f32.gmra.mxu0 %v244
      %v1055 = vpop.f32.mrf.mxu0
      %v1056 = vadd.f32 0.0, %v1055
      %v1057 = vpop.f32.mrf.mxu0
      %v1058 = vadd.f32 0.0, %v1057
      %1059 = vdwg.mxu0
      %1060 = vmatprep.subr.mxu0 %v499
      %1061 = vmatpush1.msra.mxu0 %v498
      %1062 = vmatprep.subr.mxu0 %v483
      %1063 = vmatpush1.msra.mxu0 %v482
      %1064 = vmatprep.subr.mxu0 %v467
      %1065 = vmatpush1.msra.mxu0 %v466
      %1066 = vmatprep.subr.mxu0 %v451
      %1067 = vmatpush1.msra.mxu0 %v450
      %1068 = vmatprep.subr.mxu0 %v435
      %1069 = vmatpush1.msra.mxu0 %v434
      %1070 = vmatprep.subr.mxu0 %v419
      %1071 = vmatpush1.msra.mxu0 %v418
      %1072 = vmatprep.subr.mxu0 %v403
      %1073 = vmatpush1.msra.mxu0 %v402
      %1074 = vmatprep.subr.mxu0 %v387
      %1075 = vmatpush1.msra.mxu0 %v386
      %1076 = vmatprep.subr.mxu0 %v371
      %1077 = vmatpush1.msra.mxu0 %v370
      %1078 = vmatprep.subr.mxu0 %v355
      %1079 = vmatpush1.msra.mxu0 %v354
      %1080 = vmatprep.subr.mxu0 %v339
      %1081 = vmatpush1.msra.mxu0 %v338
      %1082 = vmatprep.subr.mxu0 %v323
      %1083 = vmatpush1.msra.mxu0 %v322
      %1084 = vmatprep.subr.mxu0 %v307
      %1085 = vmatpush1.msra.mxu0 %v306
      %1086 = vmatprep.subr.mxu0 %v291
      %1087 = vmatpush1.msra.mxu0 %v290
      %1088 = vmatprep.subr.mxu0 %v275
      %1089 = vmatpush1.msra.mxu0 %v274
      %1090 = vmatprep.subr.mxu0 %v259
      %1091 = vmatpush1.msra.mxu0 %v258
      %1092 = vmatprep.subr.mxu0 0.0
      %1093 = vmatpush2.msra.mxu0 0.0
      %1094 = vmatprep.subr.mxu0 0.0
      %1095 = vmatpush2.msra.mxu0 0.0
      %1096 = vmatprep.subr.mxu0 0.0
      %1097 = vmatpush2.msra.mxu0 0.0
      %1098 = vmatprep.subr.mxu0 0.0
      %1099 = vmatpush2.msra.mxu0 0.0
      %1100 = vmatprep.subr.mxu0 0.0
      %1101 = vmatpush2.msra.mxu0 0.0
      %1102 = vmatprep.subr.mxu0 0.0
      %1103 = vmatpush2.msra.mxu0 0.0
      %1104 = vmatprep.subr.mxu0 0.0
      %1105 = vmatpush2.msra.mxu0 0.0
      %1106 = vmatprep.subr.mxu0 0.0
      %1107 = vmatpush2.msra.mxu0 0.0
      %1108 = vmatprep.subr.mxu0 %v627
      %1109 = vmatpush2.msra.mxu0 %v626
      %1110 = vmatprep.subr.mxu0 %v611
      %1111 = vmatpush2.msra.mxu0 %v610
      %1112 = vmatprep.subr.mxu0 %v595
      %1113 = vmatpush2.msra.mxu0 %v594
      %1114 = vmatprep.subr.mxu0 %v579
      %1115 = vmatpush2.msra.mxu0 %v578
      %1116 = vmatprep.subr.mxu0 %v563
      %1117 = vmatpush2.msra.mxu0 %v562
      %1118 = vmatprep.subr.mxu0 %v547
      %1119 = vmatpush2.msra.mxu0 %v546
      %1120 = vmatprep.subr.mxu0 %v531
      %1121 = vmatpush2.msra.mxu0 %v530
      %1122 = vmatprep.subr.mxu0 %v515
      %1123 = vmatpush2.msra.mxu0 %v514
      %1124 = vmatprep.mubr.f32.mxu0 %v632
      %1125 = vmatmul.mubr.f32.gmra.mxu0 %v244
      %v1126 = vpop.f32.mrf.mxu0
      %v1127 = vadd.f32 0.0, %v1126
      %v1128 = vpop.f32.mrf.mxu0
      %v1129 = vadd.f32 0.0, %v1128
      %1130 = vdwg.mxu0
      %1131 = vmatprep.subr.mxu0 %v501
      %1132 = vmatpush1.msra.mxu0 %v500
      %1133 = vmatprep.subr.mxu0 %v485
      %1134 = vmatpush1.msra.mxu0 %v484
      %1135 = vmatprep.subr.mxu0 %v469
      %1136 = vmatpush1.msra.mxu0 %v468
      %1137 = vmatprep.subr.mxu0 %v453
      %1138 = vmatpush1.msra.mxu0 %v452
      %1139 = vmatprep.subr.mxu0 %v437
      %1140 = vmatpush1.msra.mxu0 %v436
      %1141 = vmatprep.subr.mxu0 %v421
      %1142 = vmatpush1.msra.mxu0 %v420
      %1143 = vmatprep.subr.mxu0 %v405
      %1144 = vmatpush1.msra.mxu0 %v404
      %1145 = vmatprep.subr.mxu0 %v389
      %1146 = vmatpush1.msra.mxu0 %v388
      %1147 = vmatprep.subr.mxu0 %v373
      %1148 = vmatpush1.msra.mxu0 %v372
      %1149 = vmatprep.subr.mxu0 %v357
      %1150 = vmatpush1.msra.mxu0 %v356
      %1151 = vmatprep.subr.mxu0 %v341
      %1152 = vmatpush1.msra.mxu0 %v340
      %1153 = vmatprep.subr.mxu0 %v325
      %1154 = vmatpush1.msra.mxu0 %v324
      %1155 = vmatprep.subr.mxu0 %v309
      %1156 = vmatpush1.msra.mxu0 %v308
      %1157 = vmatprep.subr.mxu0 %v293
      %1158 = vmatpush1.msra.mxu0 %v292
      %1159 = vmatprep.subr.mxu0 %v277
      %1160 = vmatpush1.msra.mxu0 %v276
      %1161 = vmatprep.subr.mxu0 %v261
      %1162 = vmatpush1.msra.mxu0 %v260
      %1163 = vmatprep.subr.mxu0 0.0
      %1164 = vmatpush2.msra.mxu0 0.0
      %1165 = vmatprep.subr.mxu0 0.0
      %1166 = vmatpush2.msra.mxu0 0.0
      %1167 = vmatprep.subr.mxu0 0.0
      %1168 = vmatpush2.msra.mxu0 0.0
      %1169 = vmatprep.subr.mxu0 0.0
      %1170 = vmatpush2.msra.mxu0 0.0
      %1171 = vmatprep.subr.mxu0 0.0
      %1172 = vmatpush2.msra.mxu0 0.0
      %1173 = vmatprep.subr.mxu0 0.0
      %1174 = vmatpush2.msra.mxu0 0.0
      %1175 = vmatprep.subr.mxu0 0.0
      %1176 = vmatpush2.msra.mxu0 0.0
      %1177 = vmatprep.subr.mxu0 0.0
      %1178 = vmatpush2.msra.mxu0 0.0
      %1179 = vmatprep.subr.mxu0 %v629
      %1180 = vmatpush2.msra.mxu0 %v628
      %1181 = vmatprep.subr.mxu0 %v613
      %1182 = vmatpush2.msra.mxu0 %v612
      %1183 = vmatprep.subr.mxu0 %v597
      %1184 = vmatpush2.msra.mxu0 %v596
      %1185 = vmatprep.subr.mxu0 %v581
      %1186 = vmatpush2.msra.mxu0 %v580
      %1187 = vmatprep.subr.mxu0 %v565
      %1188 = vmatpush2.msra.mxu0 %v564
      %1189 = vmatprep.subr.mxu0 %v549
      %1190 = vmatpush2.msra.mxu0 %v548
      %1191 = vmatprep.subr.mxu0 %v533
      %1192 = vmatpush2.msra.mxu0 %v532
      %1193 = vmatprep.subr.mxu0 %v517
      %1194 = vmatpush2.msra.mxu0 %v516
      %1195 = vmatprep.mubr.f32.mxu0 %v632
      %1196 = vmatmul.mubr.f32.gmra.mxu0 %v244
      %v1197 = vpop.f32.mrf.mxu0
      %v1198 = vadd.f32 0.0, %v1197
      %v1199 = vpop.f32.mrf.mxu0
      %v1200 = vadd.f32 0.0, %v1199
      %1201 = vdwg.mxu0
      %1202 = vst [vmem:[#allocation2] sm:$0x1f] %v701
      %1203 = vst [vmem:[#allocation2 + $0x8] sm:$0x1f] %v703
      %1204 = vst [vmem:[#allocation2 + $0x10] sm:$0x1f] %v772
      %1205 = vst [vmem:[#allocation2 + $0x18] sm:$0x1f] %v774
      %1206 = vst [vmem:[#allocation2 + $0x20] sm:$0x1f] %v843
      %1207 = vst [vmem:[#allocation2 + $0x28] sm:$0x1f] %v845
      %1208 = vst [vmem:[#allocation2 + $0x30] sm:$0x1f] %v914
      %1209 = vst [vmem:[#allocation2 + $0x38] sm:$0x1f] %v916
      %1210 = vst [vmem:[#allocation2 + $0x40] sm:$0x1f] %v985
      %1211 = vst [vmem:[#allocation2 + $0x48] sm:$0x1f] %v987
      %1212 = vst [vmem:[#allocation2 + $0x50] sm:$0x1f] %v1056
      %1213 = vst [vmem:[#allocation2 + $0x58] sm:$0x1f] %v1058
      %1214 = vst [vmem:[#allocation2 + $0x60] sm:$0x1f] %v1127
      %1215 = vst [vmem:[#allocation2 + $0x68] sm:$0x1f] %v1129
      %1216 = vst [vmem:[#allocation2 + $0x70] sm:$0x1f] %v1198
      %1217 = vst [vmem:[#allocation2 + $0x78] sm:$0x1f] %v1200
      %s1218 = scalar_lea.vmem %s1, 3072
      %v1219 = vld [vmem:[%s1218] sm:$0xff]
      %v1220 = vld [vmem:[%s1218 + $0x8] sm:$0xff]
      %v1221 = vld [vmem:[%s1218 + $0x10] sm:$0xff]
      %v1222 = vld [vmem:[%s1218 + $0x18] sm:$0xff]
      %v1223 = vld [vmem:[%s1218 + $0x20] sm:$0xff]
      %v1224 = vld [vmem:[%s1218 + $0x28] sm:$0xff]
      %v1225 = vld [vmem:[%s1218 + $0x30] sm:$0xff]
      %v1226 = vld [vmem:[%s1218 + $0x38] sm:$0xff]
      %v1227 = vld [vmem:[%s1218 + $0x40] sm:$0xff]
      %v1228 = vld [vmem:[%s1218 + $0x48] sm:$0xff]
      %v1229 = vld [vmem:[%s1218 + $0x50] sm:$0xff]
      %v1230 = vld [vmem:[%s1218 + $0x58] sm:$0xff]
      %v1231 = vld [vmem:[%s1218 + $0x60] sm:$0xff]
      %v1232 = vld [vmem:[%s1218 + $0x68] sm:$0xff]
      %v1233 = vld [vmem:[%s1218 + $0x70] sm:$0xff]
      %v1234 = vld [vmem:[%s1218 + $0x78] sm:$0xff]
      %v1235 = vld [vmem:[%s1218 + $0x80] sm:$0xff]
      %v1236 = vld [vmem:[%s1218 + $0x88] sm:$0xff]
      %v1237 = vld [vmem:[%s1218 + $0x90] sm:$0xff]
      %v1238 = vld [vmem:[%s1218 + $0x98] sm:$0xff]
      %v1239 = vld [vmem:[%s1218 + $0xa0] sm:$0xff]
      %v1240 = vld [vmem:[%s1218 + $0xa8] sm:$0xff]
      %v1241 = vld [vmem:[%s1218 + $0xb0] sm:$0xff]
      %v1242 = vld [vmem:[%s1218 + $0xb8] sm:$0xff]
      %v1243 = vld [vmem:[%s1218 + $0xc0] sm:$0xff]
      %v1244 = vld [vmem:[%s1218 + $0xc8] sm:$0xff]
      %v1245 = vld [vmem:[%s1218 + $0xd0] sm:$0xff]
      %v1246 = vld [vmem:[%s1218 + $0xd8] sm:$0xff]
      %v1247 = vld [vmem:[%s1218 + $0xe0] sm:$0xff]
      %v1248 = vld [vmem:[%s1218 + $0xe8] sm:$0xff]
      %v1249 = vld [vmem:[%s1218 + $0xf0] sm:$0xff]
      %v1250 = vld [vmem:[%s1218 + $0xf8] sm:$0xff]
      %v1251 = vld [vmem:[%s1218 + $0x100] sm:$0xff]
      %v1252 = vld [vmem:[%s1218 + $0x108] sm:$0xff]
      %v1253 = vld [vmem:[%s1218 + $0x110] sm:$0xff]
      %v1254 = vld [vmem:[%s1218 + $0x118] sm:$0xff]
      %v1255 = vld [vmem:[%s1218 + $0x120] sm:$0xff]
      %v1256 = vld [vmem:[%s1218 + $0x128] sm:$0xff]
      %v1257 = vld [vmem:[%s1218 + $0x130] sm:$0xff]
      %v1258 = vld [vmem:[%s1218 + $0x138] sm:$0xff]
      %v1259 = vld [vmem:[%s1218 + $0x140] sm:$0xff]
      %v1260 = vld [vmem:[%s1218 + $0x148] sm:$0xff]
      %v1261 = vld [vmem:[%s1218 + $0x150] sm:$0xff]
      %v1262 = vld [vmem:[%s1218 + $0x158] sm:$0xff]
      %v1263 = vld [vmem:[%s1218 + $0x160] sm:$0xff]
      %v1264 = vld [vmem:[%s1218 + $0x168] sm:$0xff]
      %v1265 = vld [vmem:[%s1218 + $0x170] sm:$0xff]
      %v1266 = vld [vmem:[%s1218 + $0x178] sm:$0xff]
      %v1267 = vld [vmem:[%s1218 + $0x180] sm:$0xff]
      %v1268 = vld [vmem:[%s1218 + $0x188] sm:$0xff]
      %v1269 = vld [vmem:[%s1218 + $0x190] sm:$0xff]
      %v1270 = vld [vmem:[%s1218 + $0x198] sm:$0xff]
      %v1271 = vld [vmem:[%s1218 + $0x1a0] sm:$0xff]
      %v1272 = vld [vmem:[%s1218 + $0x1a8] sm:$0xff]
      %v1273 = vld [vmem:[%s1218 + $0x1b0] sm:$0xff]
      %v1274 = vld [vmem:[%s1218 + $0x1b8] sm:$0xff]
      %v1275 = vld [vmem:[%s1218 + $0x1c0] sm:$0xff]
      %v1276 = vld [vmem:[%s1218 + $0x1c8] sm:$0xff]
      %v1277 = vld [vmem:[%s1218 + $0x1d0] sm:$0xff]
      %v1278 = vld [vmem:[%s1218 + $0x1d8] sm:$0xff]
      %v1279 = vld [vmem:[%s1218 + $0x1e0] sm:$0xff]
      %v1280 = vld [vmem:[%s1218 + $0x1e8] sm:$0xff]
      %v1281 = vld [vmem:[%s1218 + $0x1f0] sm:$0xff]
      %v1282 = vld [vmem:[%s1218 + $0x1f8] sm:$0xff]
      %v1283 = vld [vmem:[%s1218 + $0x200] sm:$0xff]
      %v1284 = vld [vmem:[%s1218 + $0x208] sm:$0xff]
      %v1285 = vld [vmem:[%s1218 + $0x210] sm:$0xff]
      %v1286 = vld [vmem:[%s1218 + $0x218] sm:$0xff]
      %v1287 = vld [vmem:[%s1218 + $0x220] sm:$0xff]
      %v1288 = vld [vmem:[%s1218 + $0x228] sm:$0xff]
      %v1289 = vld [vmem:[%s1218 + $0x230] sm:$0xff]
      %v1290 = vld [vmem:[%s1218 + $0x238] sm:$0xff]
      %v1291 = vld [vmem:[%s1218 + $0x240] sm:$0xff]
      %v1292 = vld [vmem:[%s1218 + $0x248] sm:$0xff]
      %v1293 = vld [vmem:[%s1218 + $0x250] sm:$0xff]
      %v1294 = vld [vmem:[%s1218 + $0x258] sm:$0xff]
      %v1295 = vld [vmem:[%s1218 + $0x260] sm:$0xff]
      %v1296 = vld [vmem:[%s1218 + $0x268] sm:$0xff]
      %v1297 = vld [vmem:[%s1218 + $0x270] sm:$0xff]
      %v1298 = vld [vmem:[%s1218 + $0x278] sm:$0xff]
      %v1299 = vld [vmem:[%s1218 + $0x280] sm:$0xff]
      %v1300 = vld [vmem:[%s1218 + $0x288] sm:$0xff]
      %v1301 = vld [vmem:[%s1218 + $0x290] sm:$0xff]
      %v1302 = vld [vmem:[%s1218 + $0x298] sm:$0xff]
      %v1303 = vld [vmem:[%s1218 + $0x2a0] sm:$0xff]
      %v1304 = vld [vmem:[%s1218 + $0x2a8] sm:$0xff]
      %v1305 = vld [vmem:[%s1218 + $0x2b0] sm:$0xff]
      %v1306 = vld [vmem:[%s1218 + $0x2b8] sm:$0xff]
      %v1307 = vld [vmem:[%s1218 + $0x2c0] sm:$0xff]
      %v1308 = vld [vmem:[%s1218 + $0x2c8] sm:$0xff]
      %v1309 = vld [vmem:[%s1218 + $0x2d0] sm:$0xff]
      %v1310 = vld [vmem:[%s1218 + $0x2d8] sm:$0xff]
      %v1311 = vld [vmem:[%s1218 + $0x2e0] sm:$0xff]
      %v1312 = vld [vmem:[%s1218 + $0x2e8] sm:$0xff]
      %v1313 = vld [vmem:[%s1218 + $0x2f0] sm:$0xff]
      %v1314 = vld [vmem:[%s1218 + $0x2f8] sm:$0xff]
      %v1315 = vld [vmem:[%s1218 + $0x300] sm:$0xff]
      %v1316 = vld [vmem:[%s1218 + $0x308] sm:$0xff]
      %v1317 = vld [vmem:[%s1218 + $0x310] sm:$0xff]
      %v1318 = vld [vmem:[%s1218 + $0x318] sm:$0xff]
      %v1319 = vld [vmem:[%s1218 + $0x320] sm:$0xff]
      %v1320 = vld [vmem:[%s1218 + $0x328] sm:$0xff]
      %v1321 = vld [vmem:[%s1218 + $0x330] sm:$0xff]
      %v1322 = vld [vmem:[%s1218 + $0x338] sm:$0xff]
      %v1323 = vld [vmem:[%s1218 + $0x340] sm:$0xff]
      %v1324 = vld [vmem:[%s1218 + $0x348] sm:$0xff]
      %v1325 = vld [vmem:[%s1218 + $0x350] sm:$0xff]
      %v1326 = vld [vmem:[%s1218 + $0x358] sm:$0xff]
      %v1327 = vld [vmem:[%s1218 + $0x360] sm:$0xff]
      %v1328 = vld [vmem:[%s1218 + $0x368] sm:$0xff]
      %v1329 = vld [vmem:[%s1218 + $0x370] sm:$0xff]
      %v1330 = vld [vmem:[%s1218 + $0x378] sm:$0xff]
      %v1331 = vld [vmem:[%s1218 + $0x380] sm:$0xff]
      %v1332 = vld [vmem:[%s1218 + $0x388] sm:$0xff]
      %v1333 = vld [vmem:[%s1218 + $0x390] sm:$0xff]
      %v1334 = vld [vmem:[%s1218 + $0x398] sm:$0xff]
      %v1335 = vld [vmem:[%s1218 + $0x3a0] sm:$0xff]
      %v1336 = vld [vmem:[%s1218 + $0x3a8] sm:$0xff]
      %v1337 = vld [vmem:[%s1218 + $0x3b0] sm:$0xff]
      %v1338 = vld [vmem:[%s1218 + $0x3b8] sm:$0xff]
      %v1339 = vld [vmem:[%s1218 + $0x3c0] sm:$0xff]
      %v1340 = vld [vmem:[%s1218 + $0x3c8] sm:$0xff]
      %v1341 = vld [vmem:[%s1218 + $0x3d0] sm:$0xff]
      %v1342 = vld [vmem:[%s1218 + $0x3d8] sm:$0xff]
      %v1343 = vld [vmem:[%s1218 + $0x3e0] sm:$0xff]
      %v1344 = vld [vmem:[%s1218 + $0x3e8] sm:$0xff]
      %v1345 = vld [vmem:[%s1218 + $0x3f0] sm:$0xff]
      %v1346 = vld [vmem:[%s1218 + $0x3f8] sm:$0xff]
      %v1347 = vld [vmem:[%s1218 + $0x400] sm:$0xff]
      %v1348 = vld [vmem:[%s1218 + $0x408] sm:$0xff]
      %v1349 = vld [vmem:[%s1218 + $0x410] sm:$0xff]
      %v1350 = vld [vmem:[%s1218 + $0x418] sm:$0xff]
      %v1351 = vld [vmem:[%s1218 + $0x420] sm:$0xff]
      %v1352 = vld [vmem:[%s1218 + $0x428] sm:$0xff]
      %v1353 = vld [vmem:[%s1218 + $0x430] sm:$0xff]
      %v1354 = vld [vmem:[%s1218 + $0x438] sm:$0xff]
      %v1355 = vld [vmem:[%s1218 + $0x440] sm:$0xff]
      %v1356 = vld [vmem:[%s1218 + $0x448] sm:$0xff]
      %v1357 = vld [vmem:[%s1218 + $0x450] sm:$0xff]
      %v1358 = vld [vmem:[%s1218 + $0x458] sm:$0xff]
      %v1359 = vld [vmem:[%s1218 + $0x460] sm:$0xff]
      %v1360 = vld [vmem:[%s1218 + $0x468] sm:$0xff]
      %v1361 = vld [vmem:[%s1218 + $0x470] sm:$0xff]
      %v1362 = vld [vmem:[%s1218 + $0x478] sm:$0xff]
      %v1363 = vld [vmem:[%s1218 + $0x480] sm:$0xff]
      %v1364 = vld [vmem:[%s1218 + $0x488] sm:$0xff]
      %v1365 = vld [vmem:[%s1218 + $0x490] sm:$0xff]
      %v1366 = vld [vmem:[%s1218 + $0x498] sm:$0xff]
      %v1367 = vld [vmem:[%s1218 + $0x4a0] sm:$0xff]
      %v1368 = vld [vmem:[%s1218 + $0x4a8] sm:$0xff]
      %v1369 = vld [vmem:[%s1218 + $0x4b0] sm:$0xff]
      %v1370 = vld [vmem:[%s1218 + $0x4b8] sm:$0xff]
      %v1371 = vld [vmem:[%s1218 + $0x4c0] sm:$0xff]
      %v1372 = vld [vmem:[%s1218 + $0x4c8] sm:$0xff]
      %v1373 = vld [vmem:[%s1218 + $0x4d0] sm:$0xff]
      %v1374 = vld [vmem:[%s1218 + $0x4d8] sm:$0xff]
      %v1375 = vld [vmem:[%s1218 + $0x4e0] sm:$0xff]
      %v1376 = vld [vmem:[%s1218 + $0x4e8] sm:$0xff]
      %v1377 = vld [vmem:[%s1218 + $0x4f0] sm:$0xff]
      %v1378 = vld [vmem:[%s1218 + $0x4f8] sm:$0xff]
      %v1379 = vld [vmem:[%s1218 + $0x500] sm:$0xff]
      %v1380 = vld [vmem:[%s1218 + $0x508] sm:$0xff]
      %v1381 = vld [vmem:[%s1218 + $0x510] sm:$0xff]
      %v1382 = vld [vmem:[%s1218 + $0x518] sm:$0xff]
      %v1383 = vld [vmem:[%s1218 + $0x520] sm:$0xff]
      %v1384 = vld [vmem:[%s1218 + $0x528] sm:$0xff]
      %v1385 = vld [vmem:[%s1218 + $0x530] sm:$0xff]
      %v1386 = vld [vmem:[%s1218 + $0x538] sm:$0xff]
      %v1387 = vld [vmem:[%s1218 + $0x540] sm:$0xff]
      %v1388 = vld [vmem:[%s1218 + $0x548] sm:$0xff]
      %v1389 = vld [vmem:[%s1218 + $0x550] sm:$0xff]
      %v1390 = vld [vmem:[%s1218 + $0x558] sm:$0xff]
      %v1391 = vld [vmem:[%s1218 + $0x560] sm:$0xff]
      %v1392 = vld [vmem:[%s1218 + $0x568] sm:$0xff]
      %v1393 = vld [vmem:[%s1218 + $0x570] sm:$0xff]
      %v1394 = vld [vmem:[%s1218 + $0x578] sm:$0xff]
      %v1395 = vld [vmem:[%s1218 + $0x580] sm:$0xff]
      %v1396 = vld [vmem:[%s1218 + $0x588] sm:$0xff]
      %v1397 = vld [vmem:[%s1218 + $0x590] sm:$0xff]
      %v1398 = vld [vmem:[%s1218 + $0x598] sm:$0xff]
      %v1399 = vld [vmem:[%s1218 + $0x5a0] sm:$0xff]
      %v1400 = vld [vmem:[%s1218 + $0x5a8] sm:$0xff]
      %v1401 = vld [vmem:[%s1218 + $0x5b0] sm:$0xff]
      %v1402 = vld [vmem:[%s1218 + $0x5b8] sm:$0xff]
      %v1403 = vld [vmem:[%s1218 + $0x5c0] sm:$0xff]
      %v1404 = vld [vmem:[%s1218 + $0x5c8] sm:$0xff]
      %v1405 = vld [vmem:[%s1218 + $0x5d0] sm:$0xff]
      %v1406 = vld [vmem:[%s1218 + $0x5d8] sm:$0xff]
      %v1407 = vld [vmem:[%s1218 + $0x5e0] sm:$0xff]
      %v1408 = vld [vmem:[%s1218 + $0x5e8] sm:$0xff]
      %v1409 = vld [vmem:[%s1218 + $0x5f0] sm:$0xff]
      %v1410 = vld [vmem:[%s1218 + $0x5f8] sm:$0xff]
      %v1411 = vld [vmem:[%s1218 + $0x600] sm:$0xff]
      %v1412 = vld [vmem:[%s1218 + $0x608] sm:$0xff]
      %v1413 = vld [vmem:[%s1218 + $0x610] sm:$0xff]
      %v1414 = vld [vmem:[%s1218 + $0x618] sm:$0xff]
      %v1415 = vld [vmem:[%s1218 + $0x620] sm:$0xff]
      %v1416 = vld [vmem:[%s1218 + $0x628] sm:$0xff]
      %v1417 = vld [vmem:[%s1218 + $0x630] sm:$0xff]
      %v1418 = vld [vmem:[%s1218 + $0x638] sm:$0xff]
      %v1419 = vld [vmem:[%s1218 + $0x640] sm:$0xff]
      %v1420 = vld [vmem:[%s1218 + $0x648] sm:$0xff]
      %v1421 = vld [vmem:[%s1218 + $0x650] sm:$0xff]
      %v1422 = vld [vmem:[%s1218 + $0x658] sm:$0xff]
      %v1423 = vld [vmem:[%s1218 + $0x660] sm:$0xff]
      %v1424 = vld [vmem:[%s1218 + $0x668] sm:$0xff]
      %v1425 = vld [vmem:[%s1218 + $0x670] sm:$0xff]
      %v1426 = vld [vmem:[%s1218 + $0x678] sm:$0xff]
      %v1427 = vld [vmem:[%s1218 + $0x680] sm:$0xff]
      %v1428 = vld [vmem:[%s1218 + $0x688] sm:$0xff]
      %v1429 = vld [vmem:[%s1218 + $0x690] sm:$0xff]
      %v1430 = vld [vmem:[%s1218 + $0x698] sm:$0xff]
      %v1431 = vld [vmem:[%s1218 + $0x6a0] sm:$0xff]
      %v1432 = vld [vmem:[%s1218 + $0x6a8] sm:$0xff]
      %v1433 = vld [vmem:[%s1218 + $0x6b0] sm:$0xff]
      %v1434 = vld [vmem:[%s1218 + $0x6b8] sm:$0xff]
      %v1435 = vld [vmem:[%s1218 + $0x6c0] sm:$0xff]
      %v1436 = vld [vmem:[%s1218 + $0x6c8] sm:$0xff]
      %v1437 = vld [vmem:[%s1218 + $0x6d0] sm:$0xff]
      %v1438 = vld [vmem:[%s1218 + $0x6d8] sm:$0xff]
      %v1439 = vld [vmem:[%s1218 + $0x6e0] sm:$0xff]
      %v1440 = vld [vmem:[%s1218 + $0x6e8] sm:$0xff]
      %v1441 = vld [vmem:[%s1218 + $0x6f0] sm:$0xff]
      %v1442 = vld [vmem:[%s1218 + $0x6f8] sm:$0xff]
      %v1443 = vld [vmem:[%s1218 + $0x700] sm:$0xff]
      %v1444 = vld [vmem:[%s1218 + $0x708] sm:$0xff]
      %v1445 = vld [vmem:[%s1218 + $0x710] sm:$0xff]
      %v1446 = vld [vmem:[%s1218 + $0x718] sm:$0xff]
      %v1447 = vld [vmem:[%s1218 + $0x720] sm:$0xff]
      %v1448 = vld [vmem:[%s1218 + $0x728] sm:$0xff]
      %v1449 = vld [vmem:[%s1218 + $0x730] sm:$0xff]
      %v1450 = vld [vmem:[%s1218 + $0x738] sm:$0xff]
      %v1451 = vld [vmem:[%s1218 + $0x740] sm:$0xff]
      %v1452 = vld [vmem:[%s1218 + $0x748] sm:$0xff]
      %v1453 = vld [vmem:[%s1218 + $0x750] sm:$0xff]
      %v1454 = vld [vmem:[%s1218 + $0x758] sm:$0xff]
      %v1455 = vld [vmem:[%s1218 + $0x760] sm:$0xff]
      %v1456 = vld [vmem:[%s1218 + $0x768] sm:$0xff]
      %v1457 = vld [vmem:[%s1218 + $0x770] sm:$0xff]
      %v1458 = vld [vmem:[%s1218 + $0x778] sm:$0xff]
      %v1459 = vld [vmem:[%s1218 + $0x780] sm:$0xff]
      %v1460 = vld [vmem:[%s1218 + $0x788] sm:$0xff]
      %v1461 = vld [vmem:[%s1218 + $0x790] sm:$0xff]
      %v1462 = vld [vmem:[%s1218 + $0x798] sm:$0xff]
      %v1463 = vld [vmem:[%s1218 + $0x7a0] sm:$0xff]
      %v1464 = vld [vmem:[%s1218 + $0x7a8] sm:$0xff]
      %v1465 = vld [vmem:[%s1218 + $0x7b0] sm:$0xff]
      %v1466 = vld [vmem:[%s1218 + $0x7b8] sm:$0xff]
      %v1467 = vld [vmem:[%s1218 + $0x7c0] sm:$0xff]
      %v1468 = vld [vmem:[%s1218 + $0x7c8] sm:$0xff]
      %v1469 = vld [vmem:[%s1218 + $0x7d0] sm:$0xff]
      %v1470 = vld [vmem:[%s1218 + $0x7d8] sm:$0xff]
      %v1471 = vld [vmem:[%s1218 + $0x7e0] sm:$0xff]
      %v1472 = vld [vmem:[%s1218 + $0x7e8] sm:$0xff]
      %v1473 = vld [vmem:[%s1218 + $0x7f0] sm:$0xff]
      %v1474 = vld [vmem:[%s1218 + $0x7f8] sm:$0xff]
      %v1475 = vld [vmem:[%s1218 + $0x800] sm:$0xff]
      %v1476 = vld [vmem:[%s1218 + $0x808] sm:$0xff]
      %v1477 = vld [vmem:[%s1218 + $0x810] sm:$0xff]
      %v1478 = vld [vmem:[%s1218 + $0x818] sm:$0xff]
      %v1479 = vld [vmem:[%s1218 + $0x820] sm:$0xff]
      %v1480 = vld [vmem:[%s1218 + $0x828] sm:$0xff]
      %v1481 = vld [vmem:[%s1218 + $0x830] sm:$0xff]
      %v1482 = vld [vmem:[%s1218 + $0x838] sm:$0xff]
      %v1483 = vld [vmem:[%s1218 + $0x840] sm:$0xff]
      %v1484 = vld [vmem:[%s1218 + $0x848] sm:$0xff]
      %v1485 = vld [vmem:[%s1218 + $0x850] sm:$0xff]
      %v1486 = vld [vmem:[%s1218 + $0x858] sm:$0xff]
      %v1487 = vld [vmem:[%s1218 + $0x860] sm:$0xff]
      %v1488 = vld [vmem:[%s1218 + $0x868] sm:$0xff]
      %v1489 = vld [vmem:[%s1218 + $0x870] sm:$0xff]
      %v1490 = vld [vmem:[%s1218 + $0x878] sm:$0xff]
      %v1491 = vld [vmem:[%s1218 + $0x880] sm:$0xff]
      %v1492 = vld [vmem:[%s1218 + $0x888] sm:$0xff]
      %v1493 = vld [vmem:[%s1218 + $0x890] sm:$0xff]
      %v1494 = vld [vmem:[%s1218 + $0x898] sm:$0xff]
      %v1495 = vld [vmem:[%s1218 + $0x8a0] sm:$0xff]
      %v1496 = vld [vmem:[%s1218 + $0x8a8] sm:$0xff]
      %v1497 = vld [vmem:[%s1218 + $0x8b0] sm:$0xff]
      %v1498 = vld [vmem:[%s1218 + $0x8b8] sm:$0xff]
      %v1499 = vld [vmem:[%s1218 + $0x8c0] sm:$0xff]
      %v1500 = vld [vmem:[%s1218 + $0x8c8] sm:$0xff]
      %v1501 = vld [vmem:[%s1218 + $0x8d0] sm:$0xff]
      %v1502 = vld [vmem:[%s1218 + $0x8d8] sm:$0xff]
      %v1503 = vld [vmem:[%s1218 + $0x8e0] sm:$0xff]
      %v1504 = vld [vmem:[%s1218 + $0x8e8] sm:$0xff]
      %v1505 = vld [vmem:[%s1218 + $0x8f0] sm:$0xff]
      %v1506 = vld [vmem:[%s1218 + $0x8f8] sm:$0xff]
      %v1507 = vld [vmem:[%s1218 + $0x900] sm:$0xff]
      %v1508 = vld [vmem:[%s1218 + $0x908] sm:$0xff]
      %v1509 = vld [vmem:[%s1218 + $0x910] sm:$0xff]
      %v1510 = vld [vmem:[%s1218 + $0x918] sm:$0xff]
      %v1511 = vld [vmem:[%s1218 + $0x920] sm:$0xff]
      %v1512 = vld [vmem:[%s1218 + $0x928] sm:$0xff]
      %v1513 = vld [vmem:[%s1218 + $0x930] sm:$0xff]
      %v1514 = vld [vmem:[%s1218 + $0x938] sm:$0xff]
      %v1515 = vld [vmem:[%s1218 + $0x940] sm:$0xff]
      %v1516 = vld [vmem:[%s1218 + $0x948] sm:$0xff]
      %v1517 = vld [vmem:[%s1218 + $0x950] sm:$0xff]
      %v1518 = vld [vmem:[%s1218 + $0x958] sm:$0xff]
      %v1519 = vld [vmem:[%s1218 + $0x960] sm:$0xff]
      %v1520 = vld [vmem:[%s1218 + $0x968] sm:$0xff]
      %v1521 = vld [vmem:[%s1218 + $0x970] sm:$0xff]
      %v1522 = vld [vmem:[%s1218 + $0x978] sm:$0xff]
      %v1523 = vld [vmem:[%s1218 + $0x980] sm:$0xff]
      %v1524 = vld [vmem:[%s1218 + $0x988] sm:$0xff]
      %v1525 = vld [vmem:[%s1218 + $0x990] sm:$0xff]
      %v1526 = vld [vmem:[%s1218 + $0x998] sm:$0xff]
      %v1527 = vld [vmem:[%s1218 + $0x9a0] sm:$0xff]
      %v1528 = vld [vmem:[%s1218 + $0x9a8] sm:$0xff]
      %v1529 = vld [vmem:[%s1218 + $0x9b0] sm:$0xff]
      %v1530 = vld [vmem:[%s1218 + $0x9b8] sm:$0xff]
      %v1531 = vld [vmem:[%s1218 + $0x9c0] sm:$0xff]
      %v1532 = vld [vmem:[%s1218 + $0x9c8] sm:$0xff]
      %v1533 = vld [vmem:[%s1218 + $0x9d0] sm:$0xff]
      %v1534 = vld [vmem:[%s1218 + $0x9d8] sm:$0xff]
      %v1535 = vld [vmem:[%s1218 + $0x9e0] sm:$0xff]
      %v1536 = vld [vmem:[%s1218 + $0x9e8] sm:$0xff]
      %v1537 = vld [vmem:[%s1218 + $0x9f0] sm:$0xff]
      %v1538 = vld [vmem:[%s1218 + $0x9f8] sm:$0xff]
      %v1539 = vld [vmem:[%s1218 + $0xa00] sm:$0xff]
      %v1540 = vld [vmem:[%s1218 + $0xa08] sm:$0xff]
      %v1541 = vld [vmem:[%s1218 + $0xa10] sm:$0xff]
      %v1542 = vld [vmem:[%s1218 + $0xa18] sm:$0xff]
      %v1543 = vld [vmem:[%s1218 + $0xa20] sm:$0xff]
      %v1544 = vld [vmem:[%s1218 + $0xa28] sm:$0xff]
      %v1545 = vld [vmem:[%s1218 + $0xa30] sm:$0xff]
      %v1546 = vld [vmem:[%s1218 + $0xa38] sm:$0xff]
      %v1547 = vld [vmem:[%s1218 + $0xa40] sm:$0xff]
      %v1548 = vld [vmem:[%s1218 + $0xa48] sm:$0xff]
      %v1549 = vld [vmem:[%s1218 + $0xa50] sm:$0xff]
      %v1550 = vld [vmem:[%s1218 + $0xa58] sm:$0xff]
      %v1551 = vld [vmem:[%s1218 + $0xa60] sm:$0xff]
      %v1552 = vld [vmem:[%s1218 + $0xa68] sm:$0xff]
      %v1553 = vld [vmem:[%s1218 + $0xa70] sm:$0xff]
      %v1554 = vld [vmem:[%s1218 + $0xa78] sm:$0xff]
      %v1555 = vld [vmem:[%s1218 + $0xa80] sm:$0xff]
      %v1556 = vld [vmem:[%s1218 + $0xa88] sm:$0xff]
      %v1557 = vld [vmem:[%s1218 + $0xa90] sm:$0xff]
      %v1558 = vld [vmem:[%s1218 + $0xa98] sm:$0xff]
      %v1559 = vld [vmem:[%s1218 + $0xaa0] sm:$0xff]
      %v1560 = vld [vmem:[%s1218 + $0xaa8] sm:$0xff]
      %v1561 = vld [vmem:[%s1218 + $0xab0] sm:$0xff]
      %v1562 = vld [vmem:[%s1218 + $0xab8] sm:$0xff]
      %v1563 = vld [vmem:[%s1218 + $0xac0] sm:$0xff]
      %v1564 = vld [vmem:[%s1218 + $0xac8] sm:$0xff]
      %v1565 = vld [vmem:[%s1218 + $0xad0] sm:$0xff]
      %v1566 = vld [vmem:[%s1218 + $0xad8] sm:$0xff]
      %v1567 = vld [vmem:[%s1218 + $0xae0] sm:$0xff]
      %v1568 = vld [vmem:[%s1218 + $0xae8] sm:$0xff]
      %v1569 = vld [vmem:[%s1218 + $0xaf0] sm:$0xff]
      %v1570 = vld [vmem:[%s1218 + $0xaf8] sm:$0xff]
      %v1571 = vld [vmem:[%s1218 + $0xb00] sm:$0xff]
      %v1572 = vld [vmem:[%s1218 + $0xb08] sm:$0xff]
      %v1573 = vld [vmem:[%s1218 + $0xb10] sm:$0xff]
      %v1574 = vld [vmem:[%s1218 + $0xb18] sm:$0xff]
      %v1575 = vld [vmem:[%s1218 + $0xb20] sm:$0xff]
      %v1576 = vld [vmem:[%s1218 + $0xb28] sm:$0xff]
      %v1577 = vld [vmem:[%s1218 + $0xb30] sm:$0xff]
      %v1578 = vld [vmem:[%s1218 + $0xb38] sm:$0xff]
      %v1579 = vld [vmem:[%s1218 + $0xb40] sm:$0xff]
      %v1580 = vld [vmem:[%s1218 + $0xb48] sm:$0xff]
      %v1581 = vld [vmem:[%s1218 + $0xb50] sm:$0xff]
      %v1582 = vld [vmem:[%s1218 + $0xb58] sm:$0xff]
      %v1583 = vld [vmem:[%s1218 + $0xb60] sm:$0xff]
      %v1584 = vld [vmem:[%s1218 + $0xb68] sm:$0xff]
      %v1585 = vld [vmem:[%s1218 + $0xb70] sm:$0xff]
      %v1586 = vld [vmem:[%s1218 + $0xb78] sm:$0xff]
      %v1587 = vld [vmem:[%s1218 + $0xb80] sm:$0xff]
      %v1588 = vld [vmem:[%s1218 + $0xb88] sm:$0xff]
      %v1589 = vld [vmem:[%s1218 + $0xb90] sm:$0xff]
      %v1590 = vld [vmem:[%s1218 + $0xb98] sm:$0xff]
      %v1591 = vld [vmem:[%s1218 + $0xba0] sm:$0xff]
      %v1592 = vld [vmem:[%s1218 + $0xba8] sm:$0xff]
      %v1593 = vld [vmem:[%s1218 + $0xbb0] sm:$0xff]
      %v1594 = vld [vmem:[%s1218 + $0xbb8] sm:$0xff]
      %v1595 = vld [vmem:[%s1218 + $0xbc0] sm:$0xff]
      %v1596 = vld [vmem:[%s1218 + $0xbc8] sm:$0xff]
      %v1597 = vld [vmem:[%s1218 + $0xbd0] sm:$0xff]
      %v1598 = vld [vmem:[%s1218 + $0xbd8] sm:$0xff]
      %v1599 = vld [vmem:[%s1218 + $0xbe0] sm:$0xff]
      %v1600 = vld [vmem:[%s1218 + $0xbe8] sm:$0xff]
      %v1601 = vld [vmem:[%s1218 + $0xbf0] sm:$0xff]
      %v1602 = vld [vmem:[%s1218 + $0xbf8] sm:$0xff]
      %1603 = vmatprep.subr.mxu0 %v1460
      %1604 = vmatpush1.msra.mxu0 %v1459
      %1605 = vmatprep.subr.mxu0 %v1444
      %1606 = vmatpush1.msra.mxu0 %v1443
      %1607 = vmatprep.subr.mxu0 %v1428
      %1608 = vmatpush1.msra.mxu0 %v1427
      %1609 = vmatprep.subr.mxu0 %v1412
      %1610 = vmatpush1.msra.mxu0 %v1411
      %1611 = vmatprep.subr.mxu0 %v1396
      %1612 = vmatpush1.msra.mxu0 %v1395
      %1613 = vmatprep.subr.mxu0 %v1380
      %1614 = vmatpush1.msra.mxu0 %v1379
      %1615 = vmatprep.subr.mxu0 %v1364
      %1616 = vmatpush1.msra.mxu0 %v1363
      %1617 = vmatprep.subr.mxu0 %v1348
      %1618 = vmatpush1.msra.mxu0 %v1347
      %1619 = vmatprep.subr.mxu0 %v1332
      %1620 = vmatpush1.msra.mxu0 %v1331
      %1621 = vmatprep.subr.mxu0 %v1316
      %1622 = vmatpush1.msra.mxu0 %v1315
      %1623 = vmatprep.subr.mxu0 %v1300
      %1624 = vmatpush1.msra.mxu0 %v1299
      %1625 = vmatprep.subr.mxu0 %v1284
      %1626 = vmatpush1.msra.mxu0 %v1283
      %1627 = vmatprep.subr.mxu0 %v1268
      %1628 = vmatpush1.msra.mxu0 %v1267
      %1629 = vmatprep.subr.mxu0 %v1252
      %1630 = vmatpush1.msra.mxu0 %v1251
      %1631 = vmatprep.subr.mxu0 %v1236
      %1632 = vmatpush1.msra.mxu0 %v1235
      %1633 = vmatprep.subr.mxu0 %v1220
      %1634 = vmatpush1.msra.mxu0 %v1219
      %1635 = vmatprep.subr.mxu0 0.0
      %1636 = vmatpush2.msra.mxu0 0.0
      %1637 = vmatprep.subr.mxu0 0.0
      %1638 = vmatpush2.msra.mxu0 0.0
      %1639 = vmatprep.subr.mxu0 0.0
      %1640 = vmatpush2.msra.mxu0 0.0
      %1641 = vmatprep.subr.mxu0 0.0
      %1642 = vmatpush2.msra.mxu0 0.0
      %1643 = vmatprep.subr.mxu0 0.0
      %1644 = vmatpush2.msra.mxu0 0.0
      %1645 = vmatprep.subr.mxu0 0.0
      %1646 = vmatpush2.msra.mxu0 0.0
      %1647 = vmatprep.subr.mxu0 0.0
      %1648 = vmatpush2.msra.mxu0 0.0
      %1649 = vmatprep.subr.mxu0 0.0
      %1650 = vmatpush2.msra.mxu0 0.0
      %1651 = vmatprep.subr.mxu0 %v1588
      %1652 = vmatpush2.msra.mxu0 %v1587
      %1653 = vmatprep.subr.mxu0 %v1572
      %1654 = vmatpush2.msra.mxu0 %v1571
      %1655 = vmatprep.subr.mxu0 %v1556
      %1656 = vmatpush2.msra.mxu0 %v1555
      %1657 = vmatprep.subr.mxu0 %v1540
      %1658 = vmatpush2.msra.mxu0 %v1539
      %1659 = vmatprep.subr.mxu0 %v1524
      %1660 = vmatpush2.msra.mxu0 %v1523
      %1661 = vmatprep.subr.mxu0 %v1508
      %1662 = vmatpush2.msra.mxu0 %v1507
      %1663 = vmatprep.subr.mxu0 %v1492
      %1664 = vmatpush2.msra.mxu0 %v1491
      %1665 = vmatprep.subr.mxu0 %v1476
      %1666 = vmatpush2.msra.mxu0 %v1475
      %1667 = vmatprep.mubr.f32.mxu0 %v632
      %1668 = vmatmul.mubr.f32.gmra.mxu0 %v244
      %v1669 = vpop.f32.mrf.mxu0
      %v1670 = vadd.f32 0.0, %v1669
      %v1671 = vpop.f32.mrf.mxu0
      %v1672 = vadd.f32 0.0, %v1671
      %1673 = vdwg.mxu0
      %1674 = vmatprep.subr.mxu0 %v1462
      %1675 = vmatpush1.msra.mxu0 %v1461
      %1676 = vmatprep.subr.mxu0 %v1446
      %1677 = vmatpush1.msra.mxu0 %v1445
      %1678 = vmatprep.subr.mxu0 %v1430
      %1679 = vmatpush1.msra.mxu0 %v1429
      %1680 = vmatprep.subr.mxu0 %v1414
      %1681 = vmatpush1.msra.mxu0 %v1413
      %1682 = vmatprep.subr.mxu0 %v1398
      %1683 = vmatpush1.msra.mxu0 %v1397
      %1684 = vmatprep.subr.mxu0 %v1382
      %1685 = vmatpush1.msra.mxu0 %v1381
      %1686 = vmatprep.subr.mxu0 %v1366
      %1687 = vmatpush1.msra.mxu0 %v1365
      %1688 = vmatprep.subr.mxu0 %v1350
      %1689 = vmatpush1.msra.mxu0 %v1349
      %1690 = vmatprep.subr.mxu0 %v1334
      %1691 = vmatpush1.msra.mxu0 %v1333
      %1692 = vmatprep.subr.mxu0 %v1318
      %1693 = vmatpush1.msra.mxu0 %v1317
      %1694 = vmatprep.subr.mxu0 %v1302
      %1695 = vmatpush1.msra.mxu0 %v1301
      %1696 = vmatprep.subr.mxu0 %v1286
      %1697 = vmatpush1.msra.mxu0 %v1285
      %1698 = vmatprep.subr.mxu0 %v1270
      %1699 = vmatpush1.msra.mxu0 %v1269
      %1700 = vmatprep.subr.mxu0 %v1254
      %1701 = vmatpush1.msra.mxu0 %v1253
      %1702 = vmatprep.subr.mxu0 %v1238
      %1703 = vmatpush1.msra.mxu0 %v1237
      %1704 = vmatprep.subr.mxu0 %v1222
      %1705 = vmatpush1.msra.mxu0 %v1221
      %1706 = vmatprep.subr.mxu0 0.0
      %1707 = vmatpush2.msra.mxu0 0.0
      %1708 = vmatprep.subr.mxu0 0.0
      %1709 = vmatpush2.msra.mxu0 0.0
      %1710 = vmatprep.subr.mxu0 0.0
      %1711 = vmatpush2.msra.mxu0 0.0
      %1712 = vmatprep.subr.mxu0 0.0
      %1713 = vmatpush2.msra.mxu0 0.0
      %1714 = vmatprep.subr.mxu0 0.0
      %1715 = vmatpush2.msra.mxu0 0.0
      %1716 = vmatprep.subr.mxu0 0.0
      %1717 = vmatpush2.msra.mxu0 0.0
      %1718 = vmatprep.subr.mxu0 0.0
      %1719 = vmatpush2.msra.mxu0 0.0
      %1720 = vmatprep.subr.mxu0 0.0
      %1721 = vmatpush2.msra.mxu0 0.0
      %1722 = vmatprep.subr.mxu0 %v1590
      %1723 = vmatpush2.msra.mxu0 %v1589
      %1724 = vmatprep.subr.mxu0 %v1574
      %1725 = vmatpush2.msra.mxu0 %v1573
      %1726 = vmatprep.subr.mxu0 %v1558
      %1727 = vmatpush2.msra.mxu0 %v1557
      %1728 = vmatprep.subr.mxu0 %v1542
      %1729 = vmatpush2.msra.mxu0 %v1541
      %1730 = vmatprep.subr.mxu0 %v1526
      %1731 = vmatpush2.msra.mxu0 %v1525
      %1732 = vmatprep.subr.mxu0 %v1510
      %1733 = vmatpush2.msra.mxu0 %v1509
      %1734 = vmatprep.subr.mxu0 %v1494
      %1735 = vmatpush2.msra.mxu0 %v1493
      %1736 = vmatprep.subr.mxu0 %v1478
      %1737 = vmatpush2.msra.mxu0 %v1477
      %1738 = vmatprep.mubr.f32.mxu0 %v632
      %1739 = vmatmul.mubr.f32.gmra.mxu0 %v244
      %v1740 = vpop.f32.mrf.mxu0
      %v1741 = vadd.f32 0.0, %v1740
      %v1742 = vpop.f32.mrf.mxu0
      %v1743 = vadd.f32 0.0, %v1742
      %1744 = vdwg.mxu0
      %1745 = vmatprep.subr.mxu0 %v1464
      %1746 = vmatpush1.msra.mxu0 %v1463
      %1747 = vmatprep.subr.mxu0 %v1448
      %1748 = vmatpush1.msra.mxu0 %v1447
      %1749 = vmatprep.subr.mxu0 %v1432
      %1750 = vmatpush1.msra.mxu0 %v1431
      %1751 = vmatprep.subr.mxu0 %v1416
      %1752 = vmatpush1.msra.mxu0 %v1415
      %1753 = vmatprep.subr.mxu0 %v1400
      %1754 = vmatpush1.msra.mxu0 %v1399
      %1755 = vmatprep.subr.mxu0 %v1384
      %1756 = vmatpush1.msra.mxu0 %v1383
      %1757 = vmatprep.subr.mxu0 %v1368
      %1758 = vmatpush1.msra.mxu0 %v1367
      %1759 = vmatprep.subr.mxu0 %v1352
      %1760 = vmatpush1.msra.mxu0 %v1351
      %1761 = vmatprep.subr.mxu0 %v1336
      %1762 = vmatpush1.msra.mxu0 %v1335
      %1763 = vmatprep.subr.mxu0 %v1320
      %1764 = vmatpush1.msra.mxu0 %v1319
      %1765 = vmatprep.subr.mxu0 %v1304
      %1766 = vmatpush1.msra.mxu0 %v1303
      %1767 = vmatprep.subr.mxu0 %v1288
      %1768 = vmatpush1.msra.mxu0 %v1287
      %1769 = vmatprep.subr.mxu0 %v1272
      %1770 = vmatpush1.msra.mxu0 %v1271
      %1771 = vmatprep.subr.mxu0 %v1256
      %1772 = vmatpush1.msra.mxu0 %v1255
      %1773 = vmatprep.subr.mxu0 %v1240
      %1774 = vmatpush1.msra.mxu0 %v1239
      %1775 = vmatprep.subr.mxu0 %v1224
      %1776 = vmatpush1.msra.mxu0 %v1223
      %1777 = vmatprep.subr.mxu0 0.0
      %1778 = vmatpush2.msra.mxu0 0.0
      %1779 = vmatprep.subr.mxu0 0.0
      %1780 = vmatpush2.msra.mxu0 0.0
      %1781 = vmatprep.subr.mxu0 0.0
      %1782 = vmatpush2.msra.mxu0 0.0
      %1783 = vmatprep.subr.mxu0 0.0
      %1784 = vmatpush2.msra.mxu0 0.0
      %1785 = vmatprep.subr.mxu0 0.0
      %1786 = vmatpush2.msra.mxu0 0.0
      %1787 = vmatprep.subr.mxu0 0.0
      %1788 = vmatpush2.msra.mxu0 0.0
      %1789 = vmatprep.subr.mxu0 0.0
      %1790 = vmatpush2.msra.mxu0 0.0
      %1791 = vmatprep.subr.mxu0 0.0
      %1792 = vmatpush2.msra.mxu0 0.0
      %1793 = vmatprep.subr.mxu0 %v1592
      %1794 = vmatpush2.msra.mxu0 %v1591
      %1795 = vmatprep.subr.mxu0 %v1576
      %1796 = vmatpush2.msra.mxu0 %v1575
      %1797 = vmatprep.subr.mxu0 %v1560
      %1798 = vmatpush2.msra.mxu0 %v1559
      %1799 = vmatprep.subr.mxu0 %v1544
      %1800 = vmatpush2.msra.mxu0 %v1543
      %1801 = vmatprep.subr.mxu0 %v1528
      %1802 = vmatpush2.msra.mxu0 %v1527
      %1803 = vmatprep.subr.mxu0 %v1512
      %1804 = vmatpush2.msra.mxu0 %v1511
      %1805 = vmatprep.subr.mxu0 %v1496
      %1806 = vmatpush2.msra.mxu0 %v1495
      %1807 = vmatprep.subr.mxu0 %v1480
      %1808 = vmatpush2.msra.mxu0 %v1479
      %1809 = vmatprep.mubr.f32.mxu0 %v632
      %1810 = vmatmul.mubr.f32.gmra.mxu0 %v244
      %v1811 = vpop.f32.mrf.mxu0
      %v1812 = vadd.f32 0.0, %v1811
      %v1813 = vpop.f32.mrf.mxu0
      %v1814 = vadd.f32 0.0, %v1813
      %1815 = vdwg.mxu0
      %1816 = vmatprep.subr.mxu0 %v1466
      %1817 = vmatpush1.msra.mxu0 %v1465
      %1818 = vmatprep.subr.mxu0 %v1450
      %1819 = vmatpush1.msra.mxu0 %v1449
      %1820 = vmatprep.subr.mxu0 %v1434
      %1821 = vmatpush1.msra.mxu0 %v1433
      %1822 = vmatprep.subr.mxu0 %v1418
      %1823 = vmatpush1.msra.mxu0 %v1417
      %1824 = vmatprep.subr.mxu0 %v1402
      %1825 = vmatpush1.msra.mxu0 %v1401
      %1826 = vmatprep.subr.mxu0 %v1386
      %1827 = vmatpush1.msra.mxu0 %v1385
      %1828 = vmatprep.subr.mxu0 %v1370
      %1829 = vmatpush1.msra.mxu0 %v1369
      %1830 = vmatprep.subr.mxu0 %v1354
      %1831 = vmatpush1.msra.mxu0 %v1353
      %1832 = vmatprep.subr.mxu0 %v1338
      %1833 = vmatpush1.msra.mxu0 %v1337
      %1834 = vmatprep.subr.mxu0 %v1322
      %1835 = vmatpush1.msra.mxu0 %v1321
      %1836 = vmatprep.subr.mxu0 %v1306
      %1837 = vmatpush1.msra.mxu0 %v1305
      %1838 = vmatprep.subr.mxu0 %v1290
      %1839 = vmatpush1.msra.mxu0 %v1289
      %1840 = vmatprep.subr.mxu0 %v1274
      %1841 = vmatpush1.msra.mxu0 %v1273
      %1842 = vmatprep.subr.mxu0 %v1258
      %1843 = vmatpush1.msra.mxu0 %v1257
      %1844 = vmatprep.subr.mxu0 %v1242
      %1845 = vmatpush1.msra.mxu0 %v1241
      %1846 = vmatprep.subr.mxu0 %v1226
      %1847 = vmatpush1.msra.mxu0 %v1225
      %1848 = vmatprep.subr.mxu0 0.0
      %1849 = vmatpush2.msra.mxu0 0.0
      %1850 = vmatprep.subr.mxu0 0.0
      %1851 = vmatpush2.msra.mxu0 0.0
      %1852 = vmatprep.subr.mxu0 0.0
      %1853 = vmatpush2.msra.mxu0 0.0
      %1854 = vmatprep.subr.mxu0 0.0
      %1855 = vmatpush2.msra.mxu0 0.0
      %1856 = vmatprep.subr.mxu0 0.0
      %1857 = vmatpush2.msra.mxu0 0.0
      %1858 = vmatprep.subr.mxu0 0.0
      %1859 = vmatpush2.msra.mxu0 0.0
      %1860 = vmatprep.subr.mxu0 0.0
      %1861 = vmatpush2.msra.mxu0 0.0
      %1862 = vmatprep.subr.mxu0 0.0
      %1863 = vmatpush2.msra.mxu0 0.0
      %1864 = vmatprep.subr.mxu0 %v1594
      %1865 = vmatpush2.msra.mxu0 %v1593
      %1866 = vmatprep.subr.mxu0 %v1578
      %1867 = vmatpush2.msra.mxu0 %v1577
      %1868 = vmatprep.subr.mxu0 %v1562
      %1869 = vmatpush2.msra.mxu0 %v1561
      %1870 = vmatprep.subr.mxu0 %v1546
      %1871 = vmatpush2.msra.mxu0 %v1545
      %1872 = vmatprep.subr.mxu0 %v1530
      %1873 = vmatpush2.msra.mxu0 %v1529
      %1874 = vmatprep.subr.mxu0 %v1514
      %1875 = vmatpush2.msra.mxu0 %v1513
      %1876 = vmatprep.subr.mxu0 %v1498
      %1877 = vmatpush2.msra.mxu0 %v1497
      %1878 = vmatprep.subr.mxu0 %v1482
      %1879 = vmatpush2.msra.mxu0 %v1481
      %1880 = vmatprep.mubr.f32.mxu0 %v632
      %1881 = vmatmul.mubr.f32.gmra.mxu0 %v244
      %v1882 = vpop.f32.mrf.mxu0
      %v1883 = vadd.f32 0.0, %v1882
      %v1884 = vpop.f32.mrf.mxu0
      %v1885 = vadd.f32 0.0, %v1884
      %1886 = vdwg.mxu0
      %1887 = vmatprep.subr.mxu0 %v1468
      %1888 = vmatpush1.msra.mxu0 %v1467
      %1889 = vmatprep.subr.mxu0 %v1452
      %1890 = vmatpush1.msra.mxu0 %v1451
      %1891 = vmatprep.subr.mxu0 %v1436
      %1892 = vmatpush1.msra.mxu0 %v1435
      %1893 = vmatprep.subr.mxu0 %v1420
      %1894 = vmatpush1.msra.mxu0 %v1419
      %1895 = vmatprep.subr.mxu0 %v1404
      %1896 = vmatpush1.msra.mxu0 %v1403
      %1897 = vmatprep.subr.mxu0 %v1388
      %1898 = vmatpush1.msra.mxu0 %v1387
      %1899 = vmatprep.subr.mxu0 %v1372
      %1900 = vmatpush1.msra.mxu0 %v1371
      %1901 = vmatprep.subr.mxu0 %v1356
      %1902 = vmatpush1.msra.mxu0 %v1355
      %1903 = vmatprep.subr.mxu0 %v1340
      %1904 = vmatpush1.msra.mxu0 %v1339
      %1905 = vmatprep.subr.mxu0 %v1324
      %1906 = vmatpush1.msra.mxu0 %v1323
      %1907 = vmatprep.subr.mxu0 %v1308
      %1908 = vmatpush1.msra.mxu0 %v1307
      %1909 = vmatprep.subr.mxu0 %v1292
      %1910 = vmatpush1.msra.mxu0 %v1291
      %1911 = vmatprep.subr.mxu0 %v1276
      %1912 = vmatpush1.msra.mxu0 %v1275
      %1913 = vmatprep.subr.mxu0 %v1260
      %1914 = vmatpush1.msra.mxu0 %v1259
      %1915 = vmatprep.subr.mxu0 %v1244
      %1916 = vmatpush1.msra.mxu0 %v1243
      %1917 = vmatprep.subr.mxu0 %v1228
      %1918 = vmatpush1.msra.mxu0 %v1227
      %1919 = vmatprep.subr.mxu0 0.0
      %1920 = vmatpush2.msra.mxu0 0.0
      %1921 = vmatprep.subr.mxu0 0.0
      %1922 = vmatpush2.msra.mxu0 0.0
      %1923 = vmatprep.subr.mxu0 0.0
      %1924 = vmatpush2.msra.mxu0 0.0
      %1925 = vmatprep.subr.mxu0 0.0
      %1926 = vmatpush2.msra.mxu0 0.0
      %1927 = vmatprep.subr.mxu0 0.0
      %1928 = vmatpush2.msra.mxu0 0.0
      %1929 = vmatprep.subr.mxu0 0.0
      %1930 = vmatpush2.msra.mxu0 0.0
      %1931 = vmatprep.subr.mxu0 0.0
      %1932 = vmatpush2.msra.mxu0 0.0
      %1933 = vmatprep.subr.mxu0 0.0
      %1934 = vmatpush2.msra.mxu0 0.0
      %1935 = vmatprep.subr.mxu0 %v1596
      %1936 = vmatpush2.msra.mxu0 %v1595
      %1937 = vmatprep.subr.mxu0 %v1580
      %1938 = vmatpush2.msra.mxu0 %v1579
      %1939 = vmatprep.subr.mxu0 %v1564
      %1940 = vmatpush2.msra.mxu0 %v1563
      %1941 = vmatprep.subr.mxu0 %v1548
      %1942 = vmatpush2.msra.mxu0 %v1547
      %1943 = vmatprep.subr.mxu0 %v1532
      %1944 = vmatpush2.msra.mxu0 %v1531
      %1945 = vmatprep.subr.mxu0 %v1516
      %1946 = vmatpush2.msra.mxu0 %v1515
      %1947 = vmatprep.subr.mxu0 %v1500
      %1948 = vmatpush2.msra.mxu0 %v1499
      %1949 = vmatprep.subr.mxu0 %v1484
      %1950 = vmatpush2.msra.mxu0 %v1483
      %1951 = vmatprep.mubr.f32.mxu0 %v632
      %1952 = vmatmul.mubr.f32.gmra.mxu0 %v244
      %v1953 = vpop.f32.mrf.mxu0
      %v1954 = vadd.f32 0.0, %v1953
      %v1955 = vpop.f32.mrf.mxu0
      %v1956 = vadd.f32 0.0, %v1955
      %1957 = vdwg.mxu0
      %1958 = vmatprep.subr.mxu0 %v1470
      %1959 = vmatpush1.msra.mxu0 %v1469
      %1960 = vmatprep.subr.mxu0 %v1454
      %1961 = vmatpush1.msra.mxu0 %v1453
      %1962 = vmatprep.subr.mxu0 %v1438
      %1963 = vmatpush1.msra.mxu0 %v1437
      %1964 = vmatprep.subr.mxu0 %v1422
      %1965 = vmatpush1.msra.mxu0 %v1421
      %1966 = vmatprep.subr.mxu0 %v1406
      %1967 = vmatpush1.msra.mxu0 %v1405
      %1968 = vmatprep.subr.mxu0 %v1390
      %1969 = vmatpush1.msra.mxu0 %v1389
      %1970 = vmatprep.subr.mxu0 %v1374
      %1971 = vmatpush1.msra.mxu0 %v1373
      %1972 = vmatprep.subr.mxu0 %v1358
      %1973 = vmatpush1.msra.mxu0 %v1357
      %1974 = vmatprep.subr.mxu0 %v1342
      %1975 = vmatpush1.msra.mxu0 %v1341
      %1976 = vmatprep.subr.mxu0 %v1326
      %1977 = vmatpush1.msra.mxu0 %v1325
      %1978 = vmatprep.subr.mxu0 %v1310
      %1979 = vmatpush1.msra.mxu0 %v1309
      %1980 = vmatprep.subr.mxu0 %v1294
      %1981 = vmatpush1.msra.mxu0 %v1293
      %1982 = vmatprep.subr.mxu0 %v1278
      %1983 = vmatpush1.msra.mxu0 %v1277
      %1984 = vmatprep.subr.mxu0 %v1262
      %1985 = vmatpush1.msra.mxu0 %v1261
      %1986 = vmatprep.subr.mxu0 %v1246
      %1987 = vmatpush1.msra.mxu0 %v1245
      %1988 = vmatprep.subr.mxu0 %v1230
      %1989 = vmatpush1.msra.mxu0 %v1229
      %1990 = vmatprep.subr.mxu0 0.0
      %1991 = vmatpush2.msra.mxu0 0.0
      %1992 = vmatprep.subr.mxu0 0.0
      %1993 = vmatpush2.msra.mxu0 0.0
      %1994 = vmatprep.subr.mxu0 0.0
      %1995 = vmatpush2.msra.mxu0 0.0
      %1996 = vmatprep.subr.mxu0 0.0
      %1997 = vmatpush2.msra.mxu0 0.0
      %1998 = vmatprep.subr.mxu0 0.0
      %1999 = vmatpush2.msra.mxu0 0.0
      %2000 = vmatprep.subr.mxu0 0.0
      %2001 = vmatpush2.msra.mxu0 0.0
      %2002 = vmatprep.subr.mxu0 0.0
      %2003 = vmatpush2.msra.mxu0 0.0
      %2004 = vmatprep.subr.mxu0 0.0
      %2005 = vmatpush2.msra.mxu0 0.0
      %2006 = vmatprep.subr.mxu0 %v1598
      %2007 = vmatpush2.msra.mxu0 %v1597
      %2008 = vmatprep.subr.mxu0 %v1582
      %2009 = vmatpush2.msra.mxu0 %v1581
      %2010 = vmatprep.subr.mxu0 %v1566
      %2011 = vmatpush2.msra.mxu0 %v1565
      %2012 = vmatprep.subr.mxu0 %v1550
      %2013 = vmatpush2.msra.mxu0 %v1549
      %2014 = vmatprep.subr.mxu0 %v1534
      %2015 = vmatpush2.msra.mxu0 %v1533
      %2016 = vmatprep.subr.mxu0 %v1518
      %2017 = vmatpush2.msra.mxu0 %v1517
      %2018 = vmatprep.subr.mxu0 %v1502
      %2019 = vmatpush2.msra.mxu0 %v1501
      %2020 = vmatprep.subr.mxu0 %v1486
      %2021 = vmatpush2.msra.mxu0 %v1485
      %2022 = vmatprep.mubr.f32.mxu0 %v632
      %2023 = vmatmul.mubr.f32.gmra.mxu0 %v244
      %v2024 = vpop.f32.mrf.mxu0
      %v2025 = vadd.f32 0.0, %v2024
      %v2026 = vpop.f32.mrf.mxu0
      %v2027 = vadd.f32 0.0, %v2026
      %2028 = vdwg.mxu0
      %2029 = vmatprep.subr.mxu0 %v1472
      %2030 = vmatpush1.msra.mxu0 %v1471
      %2031 = vmatprep.subr.mxu0 %v1456
      %2032 = vmatpush1.msra.mxu0 %v1455
      %2033 = vmatprep.subr.mxu0 %v1440
      %2034 = vmatpush1.msra.mxu0 %v1439
      %2035 = vmatprep.subr.mxu0 %v1424
      %2036 = vmatpush1.msra.mxu0 %v1423
      %2037 = vmatprep.subr.mxu0 %v1408
      %2038 = vmatpush1.msra.mxu0 %v1407
      %2039 = vmatprep.subr.mxu0 %v1392
      %2040 = vmatpush1.msra.mxu0 %v1391
      %2041 = vmatprep.subr.mxu0 %v1376
      %2042 = vmatpush1.msra.mxu0 %v1375
      %2043 = vmatprep.subr.mxu0 %v1360
      %2044 = vmatpush1.msra.mxu0 %v1359
      %2045 = vmatprep.subr.mxu0 %v1344
      %2046 = vmatpush1.msra.mxu0 %v1343
      %2047 = vmatprep.subr.mxu0 %v1328
      %2048 = vmatpush1.msra.mxu0 %v1327
      %2049 = vmatprep.subr.mxu0 %v1312
      %2050 = vmatpush1.msra.mxu0 %v1311
      %2051 = vmatprep.subr.mxu0 %v1296
      %2052 = vmatpush1.msra.mxu0 %v1295
      %2053 = vmatprep.subr.mxu0 %v1280
      %2054 = vmatpush1.msra.mxu0 %v1279
      %2055 = vmatprep.subr.mxu0 %v1264
      %2056 = vmatpush1.msra.mxu0 %v1263
      %2057 = vmatprep.subr.mxu0 %v1248
      %2058 = vmatpush1.msra.mxu0 %v1247
      %2059 = vmatprep.subr.mxu0 %v1232
      %2060 = vmatpush1.msra.mxu0 %v1231
      %2061 = vmatprep.subr.mxu0 0.0
      %2062 = vmatpush2.msra.mxu0 0.0
      %2063 = vmatprep.subr.mxu0 0.0
      %2064 = vmatpush2.msra.mxu0 0.0
      %2065 = vmatprep.subr.mxu0 0.0
      %2066 = vmatpush2.msra.mxu0 0.0
      %2067 = vmatprep.subr.mxu0 0.0
      %2068 = vmatpush2.msra.mxu0 0.0
      %2069 = vmatprep.subr.mxu0 0.0
      %2070 = vmatpush2.msra.mxu0 0.0
      %2071 = vmatprep.subr.mxu0 0.0
      %2072 = vmatpush2.msra.mxu0 0.0
      %2073 = vmatprep.subr.mxu0 0.0
      %2074 = vmatpush2.msra.mxu0 0.0
      %2075 = vmatprep.subr.mxu0 0.0
      %2076 = vmatpush2.msra.mxu0 0.0
      %2077 = vmatprep.subr.mxu0 %v1600
      %2078 = vmatpush2.msra.mxu0 %v1599
      %2079 = vmatprep.subr.mxu0 %v1584
      %2080 = vmatpush2.msra.mxu0 %v1583
      %2081 = vmatprep.subr.mxu0 %v1568
      %2082 = vmatpush2.msra.mxu0 %v1567
      %2083 = vmatprep.subr.mxu0 %v1552
      %2084 = vmatpush2.msra.mxu0 %v1551
      %2085 = vmatprep.subr.mxu0 %v1536
      %2086 = vmatpush2.msra.mxu0 %v1535
      %2087 = vmatprep.subr.mxu0 %v1520
      %2088 = vmatpush2.msra.mxu0 %v1519
      %2089 = vmatprep.subr.mxu0 %v1504
      %2090 = vmatpush2.msra.mxu0 %v1503
      %2091 = vmatprep.subr.mxu0 %v1488
      %2092 = vmatpush2.msra.mxu0 %v1487
      %2093 = vmatprep.mubr.f32.mxu0 %v632
      %2094 = vmatmul.mubr.f32.gmra.mxu0 %v244
      %v2095 = vpop.f32.mrf.mxu0
      %v2096 = vadd.f32 0.0, %v2095
      %v2097 = vpop.f32.mrf.mxu0
      %v2098 = vadd.f32 0.0, %v2097
      %2099 = vdwg.mxu0
      %2100 = vmatprep.subr.mxu0 %v1474
      %2101 = vmatpush1.msra.mxu0 %v1473
      %2102 = vmatprep.subr.mxu0 %v1458
      %2103 = vmatpush1.msra.mxu0 %v1457
      %2104 = vmatprep.subr.mxu0 %v1442
      %2105 = vmatpush1.msra.mxu0 %v1441
      %2106 = vmatprep.subr.mxu0 %v1426
      %2107 = vmatpush1.msra.mxu0 %v1425
      %2108 = vmatprep.subr.mxu0 %v1410
      %2109 = vmatpush1.msra.mxu0 %v1409
      %2110 = vmatprep.subr.mxu0 %v1394
      %2111 = vmatpush1.msra.mxu0 %v1393
      %2112 = vmatprep.subr.mxu0 %v1378
      %2113 = vmatpush1.msra.mxu0 %v1377
      %2114 = vmatprep.subr.mxu0 %v1362
      %2115 = vmatpush1.msra.mxu0 %v1361
      %2116 = vmatprep.subr.mxu0 %v1346
      %2117 = vmatpush1.msra.mxu0 %v1345
      %2118 = vmatprep.subr.mxu0 %v1330
      %2119 = vmatpush1.msra.mxu0 %v1329
      %2120 = vmatprep.subr.mxu0 %v1314
      %2121 = vmatpush1.msra.mxu0 %v1313
      %2122 = vmatprep.subr.mxu0 %v1298
      %2123 = vmatpush1.msra.mxu0 %v1297
      %2124 = vmatprep.subr.mxu0 %v1282
      %2125 = vmatpush1.msra.mxu0 %v1281
      %2126 = vmatprep.subr.mxu0 %v1266
      %2127 = vmatpush1.msra.mxu0 %v1265
      %2128 = vmatprep.subr.mxu0 %v1250
      %2129 = vmatpush1.msra.mxu0 %v1249
      %2130 = vmatprep.subr.mxu0 %v1234
      %2131 = vmatpush1.msra.mxu0 %v1233
      %2132 = vmatprep.subr.mxu0 0.0
      %2133 = vmatpush2.msra.mxu0 0.0
      %2134 = vmatprep.subr.mxu0 0.0
      %2135 = vmatpush2.msra.mxu0 0.0
      %2136 = vmatprep.subr.mxu0 0.0
      %2137 = vmatpush2.msra.mxu0 0.0
      %2138 = vmatprep.subr.mxu0 0.0
      %2139 = vmatpush2.msra.mxu0 0.0
      %2140 = vmatprep.subr.mxu0 0.0
      %2141 = vmatpush2.msra.mxu0 0.0
      %2142 = vmatprep.subr.mxu0 0.0
      %2143 = vmatpush2.msra.mxu0 0.0
      %2144 = vmatprep.subr.mxu0 0.0
      %2145 = vmatpush2.msra.mxu0 0.0
      %2146 = vmatprep.subr.mxu0 0.0
      %2147 = vmatpush2.msra.mxu0 0.0
      %2148 = vmatprep.subr.mxu0 %v1602
      %2149 = vmatpush2.msra.mxu0 %v1601
      %2150 = vmatprep.subr.mxu0 %v1586
      %2151 = vmatpush2.msra.mxu0 %v1585
      %2152 = vmatprep.subr.mxu0 %v1570
      %2153 = vmatpush2.msra.mxu0 %v1569
      %2154 = vmatprep.subr.mxu0 %v1554
      %2155 = vmatpush2.msra.mxu0 %v1553
      %2156 = vmatprep.subr.mxu0 %v1538
      %2157 = vmatpush2.msra.mxu0 %v1537
      %2158 = vmatprep.subr.mxu0 %v1522
      %2159 = vmatpush2.msra.mxu0 %v1521
      %2160 = vmatprep.subr.mxu0 %v1506
      %2161 = vmatpush2.msra.mxu0 %v1505
      %2162 = vmatprep.subr.mxu0 %v1490
      %2163 = vmatpush2.msra.mxu0 %v1489
      %2164 = vmatprep.mubr.f32.mxu0 %v632
      %2165 = vmatmul.mubr.f32.gmra.mxu0 %v244
      %v2166 = vpop.f32.mrf.mxu0
      %v2167 = vadd.f32 0.0, %v2166
      %v2168 = vpop.f32.mrf.mxu0
      %v2169 = vadd.f32 0.0, %v2168
      %2170 = vdwg.mxu0
      %s2171 = scalar_lea.vmem [#allocation2], 128
      %2172 = vst [vmem:[%s2171] sm:$0x1f] %v1670
      %2173 = vst [vmem:[%s2171 + $0x8] sm:$0x1f] %v1672
      %2174 = vst [vmem:[%s2171 + $0x10] sm:$0x1f] %v1741
      %2175 = vst [vmem:[%s2171 + $0x18] sm:$0x1f] %v1743
      %2176 = vst [vmem:[%s2171 + $0x20] sm:$0x1f] %v1812
      %2177 = vst [vmem:[%s2171 + $0x28] sm:$0x1f] %v1814
      %2178 = vst [vmem:[%s2171 + $0x30] sm:$0x1f] %v1883
      %2179 = vst [vmem:[%s2171 + $0x38] sm:$0x1f] %v1885
      %2180 = vst [vmem:[%s2171 + $0x40] sm:$0x1f] %v1954
      %2181 = vst [vmem:[%s2171 + $0x48] sm:$0x1f] %v1956
      %2182 = vst [vmem:[%s2171 + $0x50] sm:$0x1f] %v2025
      %2183 = vst [vmem:[%s2171 + $0x58] sm:$0x1f] %v2027
      %2184 = vst [vmem:[%s2171 + $0x60] sm:$0x1f] %v2096
      %2185 = vst [vmem:[%s2171 + $0x68] sm:$0x1f] %v2098
      %2186 = vst [vmem:[%s2171 + $0x70] sm:$0x1f] %v2167
      %2187 = vst [vmem:[%s2171 + $0x78] sm:$0x1f] %v2169
      %v2188 = vld [vmem:[#allocation2] ss:$8 sm:$0xf]
      %v2189 = vld [vmem:[#allocation2] ss:$8 sm:$0xf0]
      %v2190 = vor.u32 %v2188, %v2189
      %s2191 = scalar_lea.vmem [#allocation2], 64
      %v2192 = vld [vmem:[%s2191] ss:$8 sm:$0xf]
      %v2193 = vld [vmem:[%s2191] ss:$8 sm:$0xf0]
      %v2194 = vor.u32 %v2192, %v2193
      %s2195 = scalar_lea.vmem [#allocation2], 128
      %v2196 = vld [vmem:[%s2195] ss:$8 sm:$0xf]
      %v2197 = vld [vmem:[%s2195] ss:$8 sm:$0xf0]
      %v2198 = vor.u32 %v2196, %v2197
      %s2199 = scalar_lea.vmem [#allocation2], 192
      %v2200 = vld [vmem:[%s2199] ss:$8 sm:$0xf]
      %v2201 = vld [vmem:[%s2199] ss:$8 sm:$0xf0]
      %v2202 = vor.u32 %v2200, %v2201
      %v2207 = vlaneseq
      %v2208 = vshrl.u32 %v2207, 7
      %v2209 = vsub.s32 0, %v2208
      %v2210 = vrot.slane %v2190, %v2209
      %v2211 = vlaneseq
      %v2212 = vshrl.u32 %v2211, 7
      %v2213 = vsub.s32 1, %v2212
      %v2214 = vrot.slane %v2190, %v2213
      %v2215 = vlaneseq
      %v2216 = vshrl.u32 %v2215, 7
      %v2217 = vsub.s32 2, %v2216
      %v2218 = vrot.slane %v2190, %v2217
      %v2219 = vlaneseq
      %v2220 = vshrl.u32 %v2219, 7
      %v2221 = vsub.s32 3, %v2220
      %v2222 = vrot.slane %v2190, %v2221
      %v2223 = vlaneseq
      %v2224 = vshrl.u32 %v2223, 7
      %v2225 = vsub.s32 4, %v2224
      %v2226 = vrot.slane %v2190, %v2225
      %v2227 = vlaneseq
      %v2228 = vshrl.u32 %v2227, 7
      %v2229 = vsub.s32 5, %v2228
      %v2230 = vrot.slane %v2190, %v2229
      %v2231 = vlaneseq
      %v2232 = vshrl.u32 %v2231, 7
      %v2233 = vsub.s32 6, %v2232
      %v2234 = vrot.slane %v2190, %v2233
      %v2235 = vlaneseq
      %v2236 = vshrl.u32 %v2235, 7
      %v2237 = vsub.s32 7, %v2236
      %v2238 = vrot.slane %v2190, %v2237
      %v2239 = vlaneseq
      %v2240 = vshrl.u32 %v2239, 7
      %v2241 = vsub.s32 0, %v2240
      %v2242 = vrot.slane %v2194, %v2241
      %v2243 = vlaneseq
      %v2244 = vshrl.u32 %v2243, 7
      %v2245 = vsub.s32 1, %v2244
      %v2246 = vrot.slane %v2194, %v2245
      %v2247 = vlaneseq
      %v2248 = vshrl.u32 %v2247, 7
      %v2249 = vsub.s32 2, %v2248
      %v2250 = vrot.slane %v2194, %v2249
      %v2251 = vlaneseq
      %v2252 = vshrl.u32 %v2251, 7
      %v2253 = vsub.s32 3, %v2252
      %v2254 = vrot.slane %v2194, %v2253
      %v2255 = vlaneseq
      %v2256 = vshrl.u32 %v2255, 7
      %v2257 = vsub.s32 4, %v2256
      %v2258 = vrot.slane %v2194, %v2257
      %v2259 = vlaneseq
      %v2260 = vshrl.u32 %v2259, 7
      %v2261 = vsub.s32 5, %v2260
      %v2262 = vrot.slane %v2194, %v2261
      %v2263 = vlaneseq
      %v2264 = vshrl.u32 %v2263, 7
      %v2265 = vsub.s32 6, %v2264
      %v2266 = vrot.slane %v2194, %v2265
      %v2267 = vlaneseq
      %v2268 = vshrl.u32 %v2267, 7
      %v2269 = vsub.s32 7, %v2268
      %v2270 = vrot.slane %v2194, %v2269
      %v2271 = vlaneseq
      %v2272 = vshrl.u32 %v2271, 7
      %v2273 = vsub.s32 0, %v2272
      %v2274 = vrot.slane %v2198, %v2273
      %v2275 = vlaneseq
      %v2276 = vshrl.u32 %v2275, 7
      %v2277 = vsub.s32 1, %v2276
      %v2278 = vrot.slane %v2198, %v2277
      %v2279 = vlaneseq
      %v2280 = vshrl.u32 %v2279, 7
      %v2281 = vsub.s32 2, %v2280
      %v2282 = vrot.slane %v2198, %v2281
      %v2283 = vlaneseq
      %v2284 = vshrl.u32 %v2283, 7
      %v2285 = vsub.s32 3, %v2284
      %v2286 = vrot.slane %v2198, %v2285
      %v2287 = vlaneseq
      %v2288 = vshrl.u32 %v2287, 7
      %v2289 = vsub.s32 4, %v2288
      %v2290 = vrot.slane %v2198, %v2289
      %v2291 = vlaneseq
      %v2292 = vshrl.u32 %v2291, 7
      %v2293 = vsub.s32 5, %v2292
      %v2294 = vrot.slane %v2198, %v2293
      %v2295 = vlaneseq
      %v2296 = vshrl.u32 %v2295, 7
      %v2297 = vsub.s32 6, %v2296
      %v2298 = vrot.slane %v2198, %v2297
      %v2299 = vlaneseq
      %v2300 = vshrl.u32 %v2299, 7
      %v2301 = vsub.s32 7, %v2300
      %v2302 = vrot.slane %v2198, %v2301
      %v2303 = vlaneseq
      %v2304 = vshrl.u32 %v2303, 7
      %v2305 = vsub.s32 0, %v2304
      %v2306 = vrot.slane %v2202, %v2305
      %v2307 = vlaneseq
      %v2308 = vshrl.u32 %v2307, 7
      %v2309 = vsub.s32 1, %v2308
      %v2310 = vrot.slane %v2202, %v2309
      %v2311 = vlaneseq
      %v2312 = vshrl.u32 %v2311, 7
      %v2313 = vsub.s32 2, %v2312
      %v2314 = vrot.slane %v2202, %v2313
      %v2315 = vlaneseq
      %v2316 = vshrl.u32 %v2315, 7
      %v2317 = vsub.s32 3, %v2316
      %v2318 = vrot.slane %v2202, %v2317
      %v2319 = vlaneseq
      %v2320 = vshrl.u32 %v2319, 7
      %v2321 = vsub.s32 4, %v2320
      %v2322 = vrot.slane %v2202, %v2321
      %v2323 = vlaneseq
      %v2324 = vshrl.u32 %v2323, 7
      %v2325 = vsub.s32 5, %v2324
      %v2326 = vrot.slane %v2202, %v2325
      %v2327 = vlaneseq
      %v2328 = vshrl.u32 %v2327, 7
      %v2329 = vsub.s32 6, %v2328
      %v2330 = vrot.slane %v2202, %v2329
      %v2331 = vlaneseq
      %v2332 = vshrl.u32 %v2331, 7
      %v2333 = vsub.s32 7, %v2332
      %v2334 = vrot.slane %v2202, %v2333
      %v2367 = vpack.c.bf16 %v2210, %v2210
      %v2368 = vpack.c.bf16 %v2214, %v2214
      %v2369 = vpack.c.bf16 %v2218, %v2218
      %v2370 = vpack.c.bf16 %v2222, %v2222
      %v2371 = vpack.c.bf16 %v2226, %v2226
      %v2372 = vpack.c.bf16 %v2230, %v2230
      %v2373 = vpack.c.bf16 %v2234, %v2234
      %v2374 = vpack.c.bf16 %v2238, %v2238
      %v2375 = vpack.c.bf16 %v2242, %v2242
      %v2376 = vpack.c.bf16 %v2246, %v2246
      %v2377 = vpack.c.bf16 %v2250, %v2250
      %v2378 = vpack.c.bf16 %v2254, %v2254
      %v2379 = vpack.c.bf16 %v2258, %v2258
      %v2380 = vpack.c.bf16 %v2262, %v2262
      %v2381 = vpack.c.bf16 %v2266, %v2266
      %v2382 = vpack.c.bf16 %v2270, %v2270
      %v2383 = vpack.c.bf16 %v2274, %v2274
      %v2384 = vpack.c.bf16 %v2278, %v2278
      %v2385 = vpack.c.bf16 %v2282, %v2282
      %v2386 = vpack.c.bf16 %v2286, %v2286
      %v2387 = vpack.c.bf16 %v2290, %v2290
      %v2388 = vpack.c.bf16 %v2294, %v2294
      %v2389 = vpack.c.bf16 %v2298, %v2298
      %v2390 = vpack.c.bf16 %v2302, %v2302
      %v2391 = vpack.c.bf16 %v2306, %v2306
      %v2392 = vpack.c.bf16 %v2310, %v2310
      %v2393 = vpack.c.bf16 %v2314, %v2314
      %v2394 = vpack.c.bf16 %v2318, %v2318
      %v2395 = vpack.c.bf16 %v2322, %v2322
      %v2396 = vpack.c.bf16 %v2326, %v2326
      %v2397 = vpack.c.bf16 %v2330, %v2330
      %v2398 = vpack.c.bf16 %v2334, %v2334
      %v2399 = vld [vmem:[%s230] sm:$0xf]
      %v2400 = vld [vmem:[%s230 + $0x4] sm:$0xf]
      %v2401 = vld [vmem:[%s230 + $0x8] sm:$0xf]
      %v2402 = vld [vmem:[%s230 + $0xc] sm:$0xf]
      %v2403 = vld [vmem:[%s230 + $0x10] sm:$0xf]
      %v2404 = vld [vmem:[%s230 + $0x14] sm:$0xf]
      %v2405 = vld [vmem:[%s230 + $0x18] sm:$0xf]
      %v2406 = vld [vmem:[%s230 + $0x1c] sm:$0xf]
      %v2407 = vld [vmem:[%s230 + $0x20] sm:$0xf]
      %v2408 = vld [vmem:[%s230 + $0x24] sm:$0xf]
      %v2409 = vld [vmem:[%s230 + $0x28] sm:$0xf]
      %v2410 = vld [vmem:[%s230 + $0x2c] sm:$0xf]
      %v2411 = vld [vmem:[%s230 + $0x30] sm:$0xf]
      %v2412 = vld [vmem:[%s230 + $0x34] sm:$0xf]
      %v2413 = vld [vmem:[%s230 + $0x38] sm:$0xf]
      %v2414 = vld [vmem:[%s230 + $0x3c] sm:$0xf]
      %v2415 = vld [vmem:[%s230 + $0x40] sm:$0xf]
      %v2416 = vld [vmem:[%s230 + $0x44] sm:$0xf]
      %v2417 = vld [vmem:[%s230 + $0x48] sm:$0xf]
      %v2418 = vld [vmem:[%s230 + $0x4c] sm:$0xf]
      %v2419 = vld [vmem:[%s230 + $0x50] sm:$0xf]
      %v2420 = vld [vmem:[%s230 + $0x54] sm:$0xf]
      %v2421 = vld [vmem:[%s230 + $0x58] sm:$0xf]
      %v2422 = vld [vmem:[%s230 + $0x5c] sm:$0xf]
      %v2423 = vld [vmem:[%s230 + $0x60] sm:$0xf]
      %v2424 = vld [vmem:[%s230 + $0x64] sm:$0xf]
      %v2425 = vld [vmem:[%s230 + $0x68] sm:$0xf]
      %v2426 = vld [vmem:[%s230 + $0x6c] sm:$0xf]
      %v2427 = vld [vmem:[%s230 + $0x70] sm:$0xf]
      %v2428 = vld [vmem:[%s230 + $0x74] sm:$0xf]
      %v2429 = vld [vmem:[%s230 + $0x78] sm:$0xf]
      %v2430 = vld [vmem:[%s230 + $0x7c] sm:$0xf]
      %v2431 = vld [vmem:[%s230 + $0x80] sm:$0xf]
      %v2432 = vld [vmem:[%s230 + $0x84] sm:$0xf]
      %v2433 = vld [vmem:[%s230 + $0x88] sm:$0xf]
      %v2434 = vld [vmem:[%s230 + $0x8c] sm:$0xf]
      %v2435 = vld [vmem:[%s230 + $0x90] sm:$0xf]
      %v2436 = vld [vmem:[%s230 + $0x94] sm:$0xf]
      %v2437 = vld [vmem:[%s230 + $0x98] sm:$0xf]
      %v2438 = vld [vmem:[%s230 + $0x9c] sm:$0xf]
      %v2439 = vld [vmem:[%s230 + $0xa0] sm:$0xf]
      %v2440 = vld [vmem:[%s230 + $0xa4] sm:$0xf]
      %v2441 = vld [vmem:[%s230 + $0xa8] sm:$0xf]
      %v2442 = vld [vmem:[%s230 + $0xac] sm:$0xf]
      %v2443 = vld [vmem:[%s230 + $0xb0] sm:$0xf]
      %v2444 = vld [vmem:[%s230 + $0xb4] sm:$0xf]
      %v2445 = vld [vmem:[%s230 + $0xb8] sm:$0xf]
      %v2446 = vld [vmem:[%s230 + $0xbc] sm:$0xf]
      %v2447 = vld [vmem:[%s230 + $0xc0] sm:$0xf]
      %v2448 = vld [vmem:[%s230 + $0xc4] sm:$0xf]
      %v2449 = vld [vmem:[%s230 + $0xc8] sm:$0xf]
      %v2450 = vld [vmem:[%s230 + $0xcc] sm:$0xf]
      %v2451 = vld [vmem:[%s230 + $0xd0] sm:$0xf]
      %v2452 = vld [vmem:[%s230 + $0xd4] sm:$0xf]
      %v2453 = vld [vmem:[%s230 + $0xd8] sm:$0xf]
      %v2454 = vld [vmem:[%s230 + $0xdc] sm:$0xf]
      %v2455 = vld [vmem:[%s230 + $0xe0] sm:$0xf]
      %v2456 = vld [vmem:[%s230 + $0xe4] sm:$0xf]
      %v2457 = vld [vmem:[%s230 + $0xe8] sm:$0xf]
      %v2458 = vld [vmem:[%s230 + $0xec] sm:$0xf]
      %v2459 = vld [vmem:[%s230 + $0xf0] sm:$0xf]
      %v2460 = vld [vmem:[%s230 + $0xf4] sm:$0xf]
      %v2461 = vld [vmem:[%s230 + $0xf8] sm:$0xf]
      %v2462 = vld [vmem:[%s230 + $0xfc] sm:$0xf]
      %v2463 = vld [vmem:[%s230 + $0x100] sm:$0xf]
      %v2464 = vld [vmem:[%s230 + $0x104] sm:$0xf]
      %v2465 = vld [vmem:[%s230 + $0x108] sm:$0xf]
      %v2466 = vld [vmem:[%s230 + $0x10c] sm:$0xf]
      %v2467 = vld [vmem:[%s230 + $0x110] sm:$0xf]
      %v2468 = vld [vmem:[%s230 + $0x114] sm:$0xf]
      %v2469 = vld [vmem:[%s230 + $0x118] sm:$0xf]
      %v2470 = vld [vmem:[%s230 + $0x11c] sm:$0xf]
      %v2471 = vld [vmem:[%s230 + $0x120] sm:$0xf]
      %v2472 = vld [vmem:[%s230 + $0x124] sm:$0xf]
      %v2473 = vld [vmem:[%s230 + $0x128] sm:$0xf]
      %v2474 = vld [vmem:[%s230 + $0x12c] sm:$0xf]
      %v2475 = vld [vmem:[%s230 + $0x130] sm:$0xf]
      %v2476 = vld [vmem:[%s230 + $0x134] sm:$0xf]
      %v2477 = vld [vmem:[%s230 + $0x138] sm:$0xf]
      %v2478 = vld [vmem:[%s230 + $0x13c] sm:$0xf]
      %v2479 = vld [vmem:[%s230 + $0x140] sm:$0xf]
      %v2480 = vld [vmem:[%s230 + $0x144] sm:$0xf]
      %v2481 = vld [vmem:[%s230 + $0x148] sm:$0xf]
      %v2482 = vld [vmem:[%s230 + $0x14c] sm:$0xf]
      %v2483 = vld [vmem:[%s230 + $0x150] sm:$0xf]
      %v2484 = vld [vmem:[%s230 + $0x154] sm:$0xf]
      %v2485 = vld [vmem:[%s230 + $0x158] sm:$0xf]
      %v2486 = vld [vmem:[%s230 + $0x15c] sm:$0xf]
      %v2487 = vld [vmem:[%s230 + $0x160] sm:$0xf]
      %v2488 = vld [vmem:[%s230 + $0x164] sm:$0xf]
      %v2489 = vld [vmem:[%s230 + $0x168] sm:$0xf]
      %v2490 = vld [vmem:[%s230 + $0x16c] sm:$0xf]
      %v2491 = vld [vmem:[%s230 + $0x170] sm:$0xf]
      %v2492 = vld [vmem:[%s230 + $0x174] sm:$0xf]
      %v2493 = vld [vmem:[%s230 + $0x178] sm:$0xf]
      %v2494 = vld [vmem:[%s230 + $0x17c] sm:$0xf]
      %v2495 = vld [vmem:[%s230 + $0x180] sm:$0xf]
      %v2496 = vld [vmem:[%s230 + $0x184] sm:$0xf]
      %v2497 = vld [vmem:[%s230 + $0x188] sm:$0xf]
      %v2498 = vld [vmem:[%s230 + $0x18c] sm:$0xf]
      %v2499 = vld [vmem:[%s230 + $0x190] sm:$0xf]
      %v2500 = vld [vmem:[%s230 + $0x194] sm:$0xf]
      %v2501 = vld [vmem:[%s230 + $0x198] sm:$0xf]
      %v2502 = vld [vmem:[%s230 + $0x19c] sm:$0xf]
      %v2503 = vld [vmem:[%s230 + $0x1a0] sm:$0xf]
      %v2504 = vld [vmem:[%s230 + $0x1a4] sm:$0xf]
      %v2505 = vld [vmem:[%s230 + $0x1a8] sm:$0xf]
      %v2506 = vld [vmem:[%s230 + $0x1ac] sm:$0xf]
      %v2507 = vld [vmem:[%s230 + $0x1b0] sm:$0xf]
      %v2508 = vld [vmem:[%s230 + $0x1b4] sm:$0xf]
      %v2509 = vld [vmem:[%s230 + $0x1b8] sm:$0xf]
      %v2510 = vld [vmem:[%s230 + $0x1bc] sm:$0xf]
      %v2511 = vld [vmem:[%s230 + $0x1c0] sm:$0xf]
      %v2512 = vld [vmem:[%s230 + $0x1c4] sm:$0xf]
      %v2513 = vld [vmem:[%s230 + $0x1c8] sm:$0xf]
      %v2514 = vld [vmem:[%s230 + $0x1cc] sm:$0xf]
      %v2515 = vld [vmem:[%s230 + $0x1d0] sm:$0xf]
      %v2516 = vld [vmem:[%s230 + $0x1d4] sm:$0xf]
      %v2517 = vld [vmem:[%s230 + $0x1d8] sm:$0xf]
      %v2518 = vld [vmem:[%s230 + $0x1dc] sm:$0xf]
      %v2519 = vld [vmem:[%s230 + $0x1e0] sm:$0xf]
      %v2520 = vld [vmem:[%s230 + $0x1e4] sm:$0xf]
      %v2521 = vld [vmem:[%s230 + $0x1e8] sm:$0xf]
      %v2522 = vld [vmem:[%s230 + $0x1ec] sm:$0xf]
      %v2523 = vld [vmem:[%s230 + $0x1f0] sm:$0xf]
      %v2524 = vld [vmem:[%s230 + $0x1f4] sm:$0xf]
      %v2525 = vld [vmem:[%s230 + $0x1f8] sm:$0xf]
      %v2526 = vld [vmem:[%s230 + $0x1fc] sm:$0xf]
      %v2527 = vld [vmem:[%s230 + $0x200] sm:$0xf]
      %v2528 = vld [vmem:[%s230 + $0x204] sm:$0xf]
      %v2529 = vld [vmem:[%s230 + $0x208] sm:$0xf]
      %v2530 = vld [vmem:[%s230 + $0x20c] sm:$0xf]
      %v2531 = vld [vmem:[%s230 + $0x210] sm:$0xf]
      %v2532 = vld [vmem:[%s230 + $0x214] sm:$0xf]
      %v2533 = vld [vmem:[%s230 + $0x218] sm:$0xf]
      %v2534 = vld [vmem:[%s230 + $0x21c] sm:$0xf]
      %v2535 = vld [vmem:[%s230 + $0x220] sm:$0xf]
      %v2536 = vld [vmem:[%s230 + $0x224] sm:$0xf]
      %v2537 = vld [vmem:[%s230 + $0x228] sm:$0xf]
      %v2538 = vld [vmem:[%s230 + $0x22c] sm:$0xf]
      %v2539 = vld [vmem:[%s230 + $0x230] sm:$0xf]
      %v2540 = vld [vmem:[%s230 + $0x234] sm:$0xf]
      %v2541 = vld [vmem:[%s230 + $0x238] sm:$0xf]
      %v2542 = vld [vmem:[%s230 + $0x23c] sm:$0xf]
      %v2543 = vld [vmem:[%s230 + $0x240] sm:$0xf]
      %v2544 = vld [vmem:[%s230 + $0x244] sm:$0xf]
      %v2545 = vld [vmem:[%s230 + $0x248] sm:$0xf]
      %v2546 = vld [vmem:[%s230 + $0x24c] sm:$0xf]
      %v2547 = vld [vmem:[%s230 + $0x250] sm:$0xf]
      %v2548 = vld [vmem:[%s230 + $0x254] sm:$0xf]
      %v2549 = vld [vmem:[%s230 + $0x258] sm:$0xf]
      %v2550 = vld [vmem:[%s230 + $0x25c] sm:$0xf]
      %v2551 = vld [vmem:[%s230 + $0x260] sm:$0xf]
      %v2552 = vld [vmem:[%s230 + $0x264] sm:$0xf]
      %v2553 = vld [vmem:[%s230 + $0x268] sm:$0xf]
      %v2554 = vld [vmem:[%s230 + $0x26c] sm:$0xf]
      %v2555 = vld [vmem:[%s230 + $0x270] sm:$0xf]
      %v2556 = vld [vmem:[%s230 + $0x274] sm:$0xf]
      %v2557 = vld [vmem:[%s230 + $0x278] sm:$0xf]
      %v2558 = vld [vmem:[%s230 + $0x27c] sm:$0xf]
      %v2559 = vld [vmem:[%s230 + $0x280] sm:$0xf]
      %v2560 = vld [vmem:[%s230 + $0x284] sm:$0xf]
      %v2561 = vld [vmem:[%s230 + $0x288] sm:$0xf]
      %v2562 = vld [vmem:[%s230 + $0x28c] sm:$0xf]
      %v2563 = vld [vmem:[%s230 + $0x290] sm:$0xf]
      %v2564 = vld [vmem:[%s230 + $0x294] sm:$0xf]
      %v2565 = vld [vmem:[%s230 + $0x298] sm:$0xf]
      %v2566 = vld [vmem:[%s230 + $0x29c] sm:$0xf]
      %v2567 = vld [vmem:[%s230 + $0x2a0] sm:$0xf]
      %v2568 = vld [vmem:[%s230 + $0x2a4] sm:$0xf]
      %v2569 = vld [vmem:[%s230 + $0x2a8] sm:$0xf]
      %v2570 = vld [vmem:[%s230 + $0x2ac] sm:$0xf]
      %v2571 = vld [vmem:[%s230 + $0x2b0] sm:$0xf]
      %v2572 = vld [vmem:[%s230 + $0x2b4] sm:$0xf]
      %v2573 = vld [vmem:[%s230 + $0x2b8] sm:$0xf]
      %v2574 = vld [vmem:[%s230 + $0x2bc] sm:$0xf]
      %v2575 = vld [vmem:[%s230 + $0x2c0] sm:$0xf]
      %v2576 = vld [vmem:[%s230 + $0x2c4] sm:$0xf]
      %v2577 = vld [vmem:[%s230 + $0x2c8] sm:$0xf]
      %v2578 = vld [vmem:[%s230 + $0x2cc] sm:$0xf]
      %v2579 = vld [vmem:[%s230 + $0x2d0] sm:$0xf]
      %v2580 = vld [vmem:[%s230 + $0x2d4] sm:$0xf]
      %v2581 = vld [vmem:[%s230 + $0x2d8] sm:$0xf]
      %v2582 = vld [vmem:[%s230 + $0x2dc] sm:$0xf]
      %v2583 = vld [vmem:[%s230 + $0x2e0] sm:$0xf]
      %v2584 = vld [vmem:[%s230 + $0x2e4] sm:$0xf]
      %v2585 = vld [vmem:[%s230 + $0x2e8] sm:$0xf]
      %v2586 = vld [vmem:[%s230 + $0x2ec] sm:$0xf]
      %v2587 = vld [vmem:[%s230 + $0x2f0] sm:$0xf]
      %v2588 = vld [vmem:[%s230 + $0x2f4] sm:$0xf]
      %v2589 = vld [vmem:[%s230 + $0x2f8] sm:$0xf]
      %v2590 = vld [vmem:[%s230 + $0x2fc] sm:$0xf]
      %v2591 = vld [vmem:[%s230 + $0x300] sm:$0xf]
      %v2592 = vld [vmem:[%s230 + $0x304] sm:$0xf]
      %v2593 = vld [vmem:[%s230 + $0x308] sm:$0xf]
      %v2594 = vld [vmem:[%s230 + $0x30c] sm:$0xf]
      %v2595 = vld [vmem:[%s230 + $0x310] sm:$0xf]
      %v2596 = vld [vmem:[%s230 + $0x314] sm:$0xf]
      %v2597 = vld [vmem:[%s230 + $0x318] sm:$0xf]
      %v2598 = vld [vmem:[%s230 + $0x31c] sm:$0xf]
      %v2599 = vld [vmem:[%s230 + $0x320] sm:$0xf]
      %v2600 = vld [vmem:[%s230 + $0x324] sm:$0xf]
      %v2601 = vld [vmem:[%s230 + $0x328] sm:$0xf]
      %v2602 = vld [vmem:[%s230 + $0x32c] sm:$0xf]
      %v2603 = vld [vmem:[%s230 + $0x330] sm:$0xf]
      %v2604 = vld [vmem:[%s230 + $0x334] sm:$0xf]
      %v2605 = vld [vmem:[%s230 + $0x338] sm:$0xf]
      %v2606 = vld [vmem:[%s230 + $0x33c] sm:$0xf]
      %v2607 = vld [vmem:[%s230 + $0x340] sm:$0xf]
      %v2608 = vld [vmem:[%s230 + $0x344] sm:$0xf]
      %v2609 = vld [vmem:[%s230 + $0x348] sm:$0xf]
      %v2610 = vld [vmem:[%s230 + $0x34c] sm:$0xf]
      %v2611 = vld [vmem:[%s230 + $0x350] sm:$0xf]
      %v2612 = vld [vmem:[%s230 + $0x354] sm:$0xf]
      %v2613 = vld [vmem:[%s230 + $0x358] sm:$0xf]
      %v2614 = vld [vmem:[%s230 + $0x35c] sm:$0xf]
      %v2615 = vld [vmem:[%s230 + $0x360] sm:$0xf]
      %v2616 = vld [vmem:[%s230 + $0x364] sm:$0xf]
      %v2617 = vld [vmem:[%s230 + $0x368] sm:$0xf]
      %v2618 = vld [vmem:[%s230 + $0x36c] sm:$0xf]
      %v2619 = vld [vmem:[%s230 + $0x370] sm:$0xf]
      %v2620 = vld [vmem:[%s230 + $0x374] sm:$0xf]
      %v2621 = vld [vmem:[%s230 + $0x378] sm:$0xf]
      %v2622 = vld [vmem:[%s230 + $0x37c] sm:$0xf]
      %v2623 = vld [vmem:[%s230 + $0x380] sm:$0xf]
      %v2624 = vld [vmem:[%s230 + $0x384] sm:$0xf]
      %v2625 = vld [vmem:[%s230 + $0x388] sm:$0xf]
      %v2626 = vld [vmem:[%s230 + $0x38c] sm:$0xf]
      %v2627 = vld [vmem:[%s230 + $0x390] sm:$0xf]
      %v2628 = vld [vmem:[%s230 + $0x394] sm:$0xf]
      %v2629 = vld [vmem:[%s230 + $0x398] sm:$0xf]
      %v2630 = vld [vmem:[%s230 + $0x39c] sm:$0xf]
      %v2631 = vld [vmem:[%s230 + $0x3a0] sm:$0xf]
      %v2632 = vld [vmem:[%s230 + $0x3a4] sm:$0xf]
      %v2633 = vld [vmem:[%s230 + $0x3a8] sm:$0xf]
      %v2634 = vld [vmem:[%s230 + $0x3ac] sm:$0xf]
      %v2635 = vld [vmem:[%s230 + $0x3b0] sm:$0xf]
      %v2636 = vld [vmem:[%s230 + $0x3b4] sm:$0xf]
      %v2637 = vld [vmem:[%s230 + $0x3b8] sm:$0xf]
      %v2638 = vld [vmem:[%s230 + $0x3bc] sm:$0xf]
      %v2639 = vld [vmem:[%s230 + $0x3c0] sm:$0xf]
      %v2640 = vld [vmem:[%s230 + $0x3c4] sm:$0xf]
      %v2641 = vld [vmem:[%s230 + $0x3c8] sm:$0xf]
      %v2642 = vld [vmem:[%s230 + $0x3cc] sm:$0xf]
      %v2643 = vld [vmem:[%s230 + $0x3d0] sm:$0xf]
      %v2644 = vld [vmem:[%s230 + $0x3d4] sm:$0xf]
      %v2645 = vld [vmem:[%s230 + $0x3d8] sm:$0xf]
      %v2646 = vld [vmem:[%s230 + $0x3dc] sm:$0xf]
      %v2647 = vld [vmem:[%s230 + $0x3e0] sm:$0xf]
      %v2648 = vld [vmem:[%s230 + $0x3e4] sm:$0xf]
      %v2649 = vld [vmem:[%s230 + $0x3e8] sm:$0xf]
      %v2650 = vld [vmem:[%s230 + $0x3ec] sm:$0xf]
      %v2651 = vld [vmem:[%s230 + $0x3f0] sm:$0xf]
      %v2652 = vld [vmem:[%s230 + $0x3f4] sm:$0xf]
      %v2653 = vld [vmem:[%s230 + $0x3f8] sm:$0xf]
      %v2654 = vld [vmem:[%s230 + $0x3fc] sm:$0xf]
      %v2655 = vld [vmem:[%s235] sm:$0x1]
      %v2657 = vlaneseq
      %v2658 = vshrl.u32 %v2657, 7
      %v2659 = vsub.s32 0, %v2658
      %v2660 = vrot.slane %v2655, %v2659
      %v2694 = vunpack.c.l.b16 %v2367
      %v2695 = vunpack.c.l.b16 %v2368
      %v2696 = vunpack.c.l.b16 %v2369
      %v2697 = vunpack.c.l.b16 %v2370
      %v2698 = vunpack.c.l.b16 %v2371
      %v2699 = vunpack.c.l.b16 %v2372
      %v2700 = vunpack.c.l.b16 %v2373
      %v2701 = vunpack.c.l.b16 %v2374
      %v2702 = vunpack.c.l.b16 %v2375
      %v2703 = vunpack.c.l.b16 %v2376
      %v2704 = vunpack.c.l.b16 %v2377
      %v2705 = vunpack.c.l.b16 %v2378
      %v2706 = vunpack.c.l.b16 %v2379
      %v2707 = vunpack.c.l.b16 %v2380
      %v2708 = vunpack.c.l.b16 %v2381
      %v2709 = vunpack.c.l.b16 %v2382
      %v2710 = vunpack.c.l.b16 %v2383
      %v2711 = vunpack.c.l.b16 %v2384
      %v2712 = vunpack.c.l.b16 %v2385
      %v2713 = vunpack.c.l.b16 %v2386
      %v2714 = vunpack.c.l.b16 %v2387
      %v2715 = vunpack.c.l.b16 %v2388
      %v2716 = vunpack.c.l.b16 %v2389
      %v2717 = vunpack.c.l.b16 %v2390
      %v2718 = vunpack.c.l.b16 %v2391
      %v2719 = vunpack.c.l.b16 %v2392
      %v2720 = vunpack.c.l.b16 %v2393
      %v2721 = vunpack.c.l.b16 %v2394
      %v2722 = vunpack.c.l.b16 %v2395
      %v2723 = vunpack.c.l.b16 %v2396
      %v2724 = vunpack.c.l.b16 %v2397
      %v2725 = vunpack.c.l.b16 %v2398
      %v2726 = vrot.slane %v2710, 7
      %vm2727 = vcmask 1041409
      %v2728 = vsel %vm2727, %v2726, %v2694
      %v2729 = vrot.slane %v2711, 7
      %v2730 = vsel %vm2727, %v2729, %v2695
      %v2731 = vrot.slane %v2712, 7
      %v2732 = vsel %vm2727, %v2731, %v2696
      %v2733 = vrot.slane %v2713, 7
      %v2734 = vsel %vm2727, %v2733, %v2697
      %v2735 = vrot.slane %v2714, 7
      %v2736 = vsel %vm2727, %v2735, %v2698
      %v2737 = vrot.slane %v2715, 7
      %v2738 = vsel %vm2727, %v2737, %v2699
      %v2739 = vrot.slane %v2716, 7
      %v2740 = vsel %vm2727, %v2739, %v2700
      %v2741 = vrot.slane %v2717, 7
      %v2742 = vsel %vm2727, %v2741, %v2701
      %v2743 = vrot.slane %v2718, 7
      %v2744 = vsel %vm2727, %v2743, %v2702
      %v2745 = vrot.slane %v2719, 7
      %v2746 = vsel %vm2727, %v2745, %v2703
      %v2747 = vrot.slane %v2720, 7
      %v2748 = vsel %vm2727, %v2747, %v2704
      %v2749 = vrot.slane %v2721, 7
      %v2750 = vsel %vm2727, %v2749, %v2705
      %v2751 = vrot.slane %v2722, 7
      %v2752 = vsel %vm2727, %v2751, %v2706
      %v2753 = vrot.slane %v2723, 7
      %v2754 = vsel %vm2727, %v2753, %v2707
      %v2755 = vrot.slane %v2724, 7
      %v2756 = vsel %vm2727, %v2755, %v2708
      %v2757 = vrot.slane %v2725, 7
      %v2758 = vsel %vm2727, %v2757, %v2709
      %v2759 = vpack.c.b16 %v2728, %v2728
      %v2760 = vpack.c.b16 %v2730, %v2730
      %v2761 = vpack.c.b16 %v2732, %v2732
      %v2762 = vpack.c.b16 %v2734, %v2734
      %v2763 = vpack.c.b16 %v2736, %v2736
      %v2764 = vpack.c.b16 %v2738, %v2738
      %v2765 = vpack.c.b16 %v2740, %v2740
      %v2766 = vpack.c.b16 %v2742, %v2742
      %v2767 = vpack.c.b16 %v2744, %v2744
      %v2768 = vpack.c.b16 %v2746, %v2746
      %v2769 = vpack.c.b16 %v2748, %v2748
      %v2770 = vpack.c.b16 %v2750, %v2750
      %v2771 = vpack.c.b16 %v2752, %v2752
      %v2772 = vpack.c.b16 %v2754, %v2754
      %v2773 = vpack.c.b16 %v2756, %v2756
      %v2774 = vpack.c.b16 %v2758, %v2758
      %v3047 = vunpack.c.l.b16 %v2399
      %v3048 = vunpack.c.l.b16 %v2400
      %v3049 = vunpack.c.l.b16 %v2401
      %v3050 = vunpack.c.l.b16 %v2402
      %v3051 = vunpack.c.l.b16 %v2403
      %v3052 = vunpack.c.l.b16 %v2404
      %v3053 = vunpack.c.l.b16 %v2405
      %v3054 = vunpack.c.l.b16 %v2406
      %v3055 = vunpack.c.l.b16 %v2407
      %v3056 = vunpack.c.l.b16 %v2408
      %v3057 = vunpack.c.l.b16 %v2409
      %v3058 = vunpack.c.l.b16 %v2410
      %v3059 = vunpack.c.l.b16 %v2411
      %v3060 = vunpack.c.l.b16 %v2412
      %v3061 = vunpack.c.l.b16 %v2413
      %v3062 = vunpack.c.l.b16 %v2414
      %v3063 = vunpack.c.l.b16 %v2415
      %v3064 = vunpack.c.l.b16 %v2416
      %v3065 = vunpack.c.l.b16 %v2417
      %v3066 = vunpack.c.l.b16 %v2418
      %v3067 = vunpack.c.l.b16 %v2419
      %v3068 = vunpack.c.l.b16 %v2420
      %v3069 = vunpack.c.l.b16 %v2421
      %v3070 = vunpack.c.l.b16 %v2422
      %v3071 = vunpack.c.l.b16 %v2423
      %v3072 = vunpack.c.l.b16 %v2424
      %v3073 = vunpack.c.l.b16 %v2425
      %v3074 = vunpack.c.l.b16 %v2426
      %v3075 = vunpack.c.l.b16 %v2427
      %v3076 = vunpack.c.l.b16 %v2428
      %v3077 = vunpack.c.l.b16 %v2429
      %v3078 = vunpack.c.l.b16 %v2430
      %v3079 = vunpack.c.l.b16 %v2431
      %v3080 = vunpack.c.l.b16 %v2432
      %v3081 = vunpack.c.l.b16 %v2433
      %v3082 = vunpack.c.l.b16 %v2434
      %v3083 = vunpack.c.l.b16 %v2435
      %v3084 = vunpack.c.l.b16 %v2436
      %v3085 = vunpack.c.l.b16 %v2437
      %v3086 = vunpack.c.l.b16 %v2438
      %v3087 = vunpack.c.l.b16 %v2439
      %v3088 = vunpack.c.l.b16 %v2440
      %v3089 = vunpack.c.l.b16 %v2441
      %v3090 = vunpack.c.l.b16 %v2442
      %v3091 = vunpack.c.l.b16 %v2443
      %v3092 = vunpack.c.l.b16 %v2444
      %v3093 = vunpack.c.l.b16 %v2445
      %v3094 = vunpack.c.l.b16 %v2446
      %v3095 = vunpack.c.l.b16 %v2447
      %v3096 = vunpack.c.l.b16 %v2448
      %v3097 = vunpack.c.l.b16 %v2449
      %v3098 = vunpack.c.l.b16 %v2450
      %v3099 = vunpack.c.l.b16 %v2451
      %v3100 = vunpack.c.l.b16 %v2452
      %v3101 = vunpack.c.l.b16 %v2453
      %v3102 = vunpack.c.l.b16 %v2454
      %v3103 = vunpack.c.l.b16 %v2455
      %v3104 = vunpack.c.l.b16 %v2456
      %v3105 = vunpack.c.l.b16 %v2457
      %v3106 = vunpack.c.l.b16 %v2458
      %v3107 = vunpack.c.l.b16 %v2459
      %v3108 = vunpack.c.l.b16 %v2460
      %v3109 = vunpack.c.l.b16 %v2461
      %v3110 = vunpack.c.l.b16 %v2462
      %v3111 = vunpack.c.l.b16 %v2463
      %v3112 = vunpack.c.l.b16 %v2464
      %v3113 = vunpack.c.l.b16 %v2465
      %v3114 = vunpack.c.l.b16 %v2466
      %v3115 = vunpack.c.l.b16 %v2467
      %v3116 = vunpack.c.l.b16 %v2468
      %v3117 = vunpack.c.l.b16 %v2469
      %v3118 = vunpack.c.l.b16 %v2470
      %v3119 = vunpack.c.l.b16 %v2471
      %v3120 = vunpack.c.l.b16 %v2472
      %v3121 = vunpack.c.l.b16 %v2473
      %v3122 = vunpack.c.l.b16 %v2474
      %v3123 = vunpack.c.l.b16 %v2475
      %v3124 = vunpack.c.l.b16 %v2476
      %v3125 = vunpack.c.l.b16 %v2477
      %v3126 = vunpack.c.l.b16 %v2478
      %v3127 = vunpack.c.l.b16 %v2479
      %v3128 = vunpack.c.l.b16 %v2480
      %v3129 = vunpack.c.l.b16 %v2481
      %v3130 = vunpack.c.l.b16 %v2482
      %v3131 = vunpack.c.l.b16 %v2483
      %v3132 = vunpack.c.l.b16 %v2484
      %v3133 = vunpack.c.l.b16 %v2485
      %v3134 = vunpack.c.l.b16 %v2486
      %v3135 = vunpack.c.l.b16 %v2487
      %v3136 = vunpack.c.l.b16 %v2488
      %v3137 = vunpack.c.l.b16 %v2489
      %v3138 = vunpack.c.l.b16 %v2490
      %v3139 = vunpack.c.l.b16 %v2491
      %v3140 = vunpack.c.l.b16 %v2492
      %v3141 = vunpack.c.l.b16 %v2493
      %v3142 = vunpack.c.l.b16 %v2494
      %v3143 = vunpack.c.l.b16 %v2495
      %v3144 = vunpack.c.l.b16 %v2496
      %v3145 = vunpack.c.l.b16 %v2497
      %v3146 = vunpack.c.l.b16 %v2498
      %v3147 = vunpack.c.l.b16 %v2499
      %v3148 = vunpack.c.l.b16 %v2500
      %v3149 = vunpack.c.l.b16 %v2501
      %v3150 = vunpack.c.l.b16 %v2502
      %v3151 = vunpack.c.l.b16 %v2503
      %v3152 = vunpack.c.l.b16 %v2504
      %v3153 = vunpack.c.l.b16 %v2505
      %v3154 = vunpack.c.l.b16 %v2506
      %v3155 = vunpack.c.l.b16 %v2507
      %v3156 = vunpack.c.l.b16 %v2508
      %v3157 = vunpack.c.l.b16 %v2509
      %v3158 = vunpack.c.l.b16 %v2510
      %v3159 = vunpack.c.l.b16 %v2511
      %v3160 = vunpack.c.l.b16 %v2512
      %v3161 = vunpack.c.l.b16 %v2513
      %v3162 = vunpack.c.l.b16 %v2514
      %v3163 = vunpack.c.l.b16 %v2515
      %v3164 = vunpack.c.l.b16 %v2516
      %v3165 = vunpack.c.l.b16 %v2517
      %v3166 = vunpack.c.l.b16 %v2518
      %v3167 = vunpack.c.l.b16 %v2519
      %v3168 = vunpack.c.l.b16 %v2520
      %v3169 = vunpack.c.l.b16 %v2521
      %v3170 = vunpack.c.l.b16 %v2522
      %v3171 = vunpack.c.l.b16 %v2523
      %v3172 = vunpack.c.l.b16 %v2524
      %v3173 = vunpack.c.l.b16 %v2525
      %v3174 = vunpack.c.l.b16 %v2526
      %v3175 = vunpack.c.l.b16 %v2527
      %v3176 = vunpack.c.l.b16 %v2528
      %v3177 = vunpack.c.l.b16 %v2529
      %v3178 = vunpack.c.l.b16 %v2530
      %v3179 = vunpack.c.l.b16 %v2531
      %v3180 = vunpack.c.l.b16 %v2532
      %v3181 = vunpack.c.l.b16 %v2533
      %v3182 = vunpack.c.l.b16 %v2534
      %v3183 = vunpack.c.l.b16 %v2535
      %v3184 = vunpack.c.l.b16 %v2536
      %v3185 = vunpack.c.l.b16 %v2537
      %v3186 = vunpack.c.l.b16 %v2538
      %v3187 = vunpack.c.l.b16 %v2539
      %v3188 = vunpack.c.l.b16 %v2540
      %v3189 = vunpack.c.l.b16 %v2541
      %v3190 = vunpack.c.l.b16 %v2542
      %v3191 = vunpack.c.l.b16 %v2543
      %v3192 = vunpack.c.l.b16 %v2544
      %v3193 = vunpack.c.l.b16 %v2545
      %v3194 = vunpack.c.l.b16 %v2546
      %v3195 = vunpack.c.l.b16 %v2547
      %v3196 = vunpack.c.l.b16 %v2548
      %v3197 = vunpack.c.l.b16 %v2549
      %v3198 = vunpack.c.l.b16 %v2550
      %v3199 = vunpack.c.l.b16 %v2551
      %v3200 = vunpack.c.l.b16 %v2552
      %v3201 = vunpack.c.l.b16 %v2553
      %v3202 = vunpack.c.l.b16 %v2554
      %v3203 = vunpack.c.l.b16 %v2555
      %v3204 = vunpack.c.l.b16 %v2556
      %v3205 = vunpack.c.l.b16 %v2557
      %v3206 = vunpack.c.l.b16 %v2558
      %v3207 = vunpack.c.l.b16 %v2559
      %v3208 = vunpack.c.l.b16 %v2560
      %v3209 = vunpack.c.l.b16 %v2561
      %v3210 = vunpack.c.l.b16 %v2562
      %v3211 = vunpack.c.l.b16 %v2563
      %v3212 = vunpack.c.l.b16 %v2564
      %v3213 = vunpack.c.l.b16 %v2565
      %v3214 = vunpack.c.l.b16 %v2566
      %v3215 = vunpack.c.l.b16 %v2567
      %v3216 = vunpack.c.l.b16 %v2568
      %v3217 = vunpack.c.l.b16 %v2569
      %v3218 = vunpack.c.l.b16 %v2570
      %v3219 = vunpack.c.l.b16 %v2571
      %v3220 = vunpack.c.l.b16 %v2572
      %v3221 = vunpack.c.l.b16 %v2573
      %v3222 = vunpack.c.l.b16 %v2574
      %v3223 = vunpack.c.l.b16 %v2575
      %v3224 = vunpack.c.l.b16 %v2576
      %v3225 = vunpack.c.l.b16 %v2577
      %v3226 = vunpack.c.l.b16 %v2578
      %v3227 = vunpack.c.l.b16 %v2579
      %v3228 = vunpack.c.l.b16 %v2580
      %v3229 = vunpack.c.l.b16 %v2581
      %v3230 = vunpack.c.l.b16 %v2582
      %v3231 = vunpack.c.l.b16 %v2583
      %v3232 = vunpack.c.l.b16 %v2584
      %v3233 = vunpack.c.l.b16 %v2585
      %v3234 = vunpack.c.l.b16 %v2586
      %v3235 = vunpack.c.l.b16 %v2587
      %v3236 = vunpack.c.l.b16 %v2588
      %v3237 = vunpack.c.l.b16 %v2589
      %v3238 = vunpack.c.l.b16 %v2590
      %v3239 = vunpack.c.l.b16 %v2591
      %v3240 = vunpack.c.l.b16 %v2592
      %v3241 = vunpack.c.l.b16 %v2593
      %v3242 = vunpack.c.l.b16 %v2594
      %v3243 = vunpack.c.l.b16 %v2595
      %v3244 = vunpack.c.l.b16 %v2596
      %v3245 = vunpack.c.l.b16 %v2597
      %v3246 = vunpack.c.l.b16 %v2598
      %v3247 = vunpack.c.l.b16 %v2599
      %v3248 = vunpack.c.l.b16 %v2600
      %v3249 = vunpack.c.l.b16 %v2601
      %v3250 = vunpack.c.l.b16 %v2602
      %v3251 = vunpack.c.l.b16 %v2603
      %v3252 = vunpack.c.l.b16 %v2604
      %v3253 = vunpack.c.l.b16 %v2605
      %v3254 = vunpack.c.l.b16 %v2606
      %v3255 = vunpack.c.l.b16 %v2607
      %v3256 = vunpack.c.l.b16 %v2608
      %v3257 = vunpack.c.l.b16 %v2609
      %v3258 = vunpack.c.l.b16 %v2610
      %v3259 = vunpack.c.l.b16 %v2611
      %v3260 = vunpack.c.l.b16 %v2612
      %v3261 = vunpack.c.l.b16 %v2613
      %v3262 = vunpack.c.l.b16 %v2614
      %v3263 = vunpack.c.l.b16 %v2615
      %v3264 = vunpack.c.l.b16 %v2616
      %v3265 = vunpack.c.l.b16 %v2617
      %v3266 = vunpack.c.l.b16 %v2618
      %v3267 = vunpack.c.l.b16 %v2619
      %v3268 = vunpack.c.l.b16 %v2620
      %v3269 = vunpack.c.l.b16 %v2621
      %v3270 = vunpack.c.l.b16 %v2622
      %v3271 = vunpack.c.l.b16 %v2623
      %v3272 = vunpack.c.l.b16 %v2624
      %v3273 = vunpack.c.l.b16 %v2625
      %v3274 = vunpack.c.l.b16 %v2626
      %v3275 = vunpack.c.l.b16 %v2627
      %v3276 = vunpack.c.l.b16 %v2628
      %v3277 = vunpack.c.l.b16 %v2629
      %v3278 = vunpack.c.l.b16 %v2630
      %v3279 = vunpack.c.l.b16 %v2631
      %v3280 = vunpack.c.l.b16 %v2632
      %v3281 = vunpack.c.l.b16 %v2633
      %v3282 = vunpack.c.l.b16 %v2634
      %v3283 = vunpack.c.l.b16 %v2635
      %v3284 = vunpack.c.l.b16 %v2636
      %v3285 = vunpack.c.l.b16 %v2637
      %v3286 = vunpack.c.l.b16 %v2638
      %v3287 = vunpack.c.l.b16 %v2639
      %v3288 = vunpack.c.l.b16 %v2640
      %v3289 = vunpack.c.l.b16 %v2641
      %v3290 = vunpack.c.l.b16 %v2642
      %v3291 = vunpack.c.l.b16 %v2643
      %v3292 = vunpack.c.l.b16 %v2644
      %v3293 = vunpack.c.l.b16 %v2645
      %v3294 = vunpack.c.l.b16 %v2646
      %v3295 = vunpack.c.l.b16 %v2647
      %v3296 = vunpack.c.l.b16 %v2648
      %v3297 = vunpack.c.l.b16 %v2649
      %v3298 = vunpack.c.l.b16 %v2650
      %v3299 = vunpack.c.l.b16 %v2651
      %v3300 = vunpack.c.l.b16 %v2652
      %v3301 = vunpack.c.l.b16 %v2653
      %v3302 = vunpack.c.l.b16 %v2654
      %v3303 = vpack.c.b16 %v3048, %v3047
      %v3304 = vpack.c.b16 %v3050, %v3049
      %v3305 = vpack.c.b16 %v3052, %v3051
      %v3306 = vpack.c.b16 %v3054, %v3053
      %v3307 = vpack.c.b16 %v3056, %v3055
      %v3308 = vpack.c.b16 %v3058, %v3057
      %v3309 = vpack.c.b16 %v3060, %v3059
      %v3310 = vpack.c.b16 %v3062, %v3061
      %v3311 = vpack.c.b16 %v3064, %v3063
      %v3312 = vpack.c.b16 %v3066, %v3065
      %v3313 = vpack.c.b16 %v3068, %v3067
      %v3314 = vpack.c.b16 %v3070, %v3069
      %v3315 = vpack.c.b16 %v3072, %v3071
      %v3316 = vpack.c.b16 %v3074, %v3073
      %v3317 = vpack.c.b16 %v3076, %v3075
      %v3318 = vpack.c.b16 %v3078, %v3077
      %v3319 = vpack.c.b16 %v3080, %v3079
      %v3320 = vpack.c.b16 %v3082, %v3081
      %v3321 = vpack.c.b16 %v3084, %v3083
      %v3322 = vpack.c.b16 %v3086, %v3085
      %v3323 = vpack.c.b16 %v3088, %v3087
      %v3324 = vpack.c.b16 %v3090, %v3089
      %v3325 = vpack.c.b16 %v3092, %v3091
      %v3326 = vpack.c.b16 %v3094, %v3093
      %v3327 = vpack.c.b16 %v3096, %v3095
      %v3328 = vpack.c.b16 %v3098, %v3097
      %v3329 = vpack.c.b16 %v3100, %v3099
      %v3330 = vpack.c.b16 %v3102, %v3101
      %v3331 = vpack.c.b16 %v3104, %v3103
      %v3332 = vpack.c.b16 %v3106, %v3105
      %v3333 = vpack.c.b16 %v3108, %v3107
      %v3334 = vpack.c.b16 %v3110, %v3109
      %v3335 = vpack.c.b16 %v3112, %v3111
      %v3336 = vpack.c.b16 %v3114, %v3113
      %v3337 = vpack.c.b16 %v3116, %v3115
      %v3338 = vpack.c.b16 %v3118, %v3117
      %v3339 = vpack.c.b16 %v3120, %v3119
      %v3340 = vpack.c.b16 %v3122, %v3121
      %v3341 = vpack.c.b16 %v3124, %v3123
      %v3342 = vpack.c.b16 %v3126, %v3125
      %v3343 = vpack.c.b16 %v3128, %v3127
      %v3344 = vpack.c.b16 %v3130, %v3129
      %v3345 = vpack.c.b16 %v3132, %v3131
      %v3346 = vpack.c.b16 %v3134, %v3133
      %v3347 = vpack.c.b16 %v3136, %v3135
      %v3348 = vpack.c.b16 %v3138, %v3137
      %v3349 = vpack.c.b16 %v3140, %v3139
      %v3350 = vpack.c.b16 %v3142, %v3141
      %v3351 = vpack.c.b16 %v3144, %v3143
      %v3352 = vpack.c.b16 %v3146, %v3145
      %v3353 = vpack.c.b16 %v3148, %v3147
      %v3354 = vpack.c.b16 %v3150, %v3149
      %v3355 = vpack.c.b16 %v3152, %v3151
      %v3356 = vpack.c.b16 %v3154, %v3153
      %v3357 = vpack.c.b16 %v3156, %v3155
      %v3358 = vpack.c.b16 %v3158, %v3157
      %v3359 = vpack.c.b16 %v3160, %v3159
      %v3360 = vpack.c.b16 %v3162, %v3161
      %v3361 = vpack.c.b16 %v3164, %v3163
      %v3362 = vpack.c.b16 %v3166, %v3165
      %v3363 = vpack.c.b16 %v3168, %v3167
      %v3364 = vpack.c.b16 %v3170, %v3169
      %v3365 = vpack.c.b16 %v3172, %v3171
      %v3366 = vpack.c.b16 %v3174, %v3173
      %v3367 = vpack.c.b16 %v3176, %v3175
      %v3368 = vpack.c.b16 %v3178, %v3177
      %v3369 = vpack.c.b16 %v3180, %v3179
      %v3370 = vpack.c.b16 %v3182, %v3181
      %v3371 = vpack.c.b16 %v3184, %v3183
      %v3372 = vpack.c.b16 %v3186, %v3185
      %v3373 = vpack.c.b16 %v3188, %v3187
      %v3374 = vpack.c.b16 %v3190, %v3189
      %v3375 = vpack.c.b16 %v3192, %v3191
      %v3376 = vpack.c.b16 %v3194, %v3193
      %v3377 = vpack.c.b16 %v3196, %v3195
      %v3378 = vpack.c.b16 %v3198, %v3197
      %v3379 = vpack.c.b16 %v3200, %v3199
      %v3380 = vpack.c.b16 %v3202, %v3201
      %v3381 = vpack.c.b16 %v3204, %v3203
      %v3382 = vpack.c.b16 %v3206, %v3205
      %v3383 = vpack.c.b16 %v3208, %v3207
      %v3384 = vpack.c.b16 %v3210, %v3209
      %v3385 = vpack.c.b16 %v3212, %v3211
      %v3386 = vpack.c.b16 %v3214, %v3213
      %v3387 = vpack.c.b16 %v3216, %v3215
      %v3388 = vpack.c.b16 %v3218, %v3217
      %v3389 = vpack.c.b16 %v3220, %v3219
      %v3390 = vpack.c.b16 %v3222, %v3221
      %v3391 = vpack.c.b16 %v3224, %v3223
      %v3392 = vpack.c.b16 %v3226, %v3225
      %v3393 = vpack.c.b16 %v3228, %v3227
      %v3394 = vpack.c.b16 %v3230, %v3229
      %v3395 = vpack.c.b16 %v3232, %v3231
      %v3396 = vpack.c.b16 %v3234, %v3233
      %v3397 = vpack.c.b16 %v3236, %v3235
      %v3398 = vpack.c.b16 %v3238, %v3237
      %v3399 = vpack.c.b16 %v3240, %v3239
      %v3400 = vpack.c.b16 %v3242, %v3241
      %v3401 = vpack.c.b16 %v3244, %v3243
      %v3402 = vpack.c.b16 %v3246, %v3245
      %v3403 = vpack.c.b16 %v3248, %v3247
      %v3404 = vpack.c.b16 %v3250, %v3249
      %v3405 = vpack.c.b16 %v3252, %v3251
      %v3406 = vpack.c.b16 %v3254, %v3253
      %v3407 = vpack.c.b16 %v3256, %v3255
      %v3408 = vpack.c.b16 %v3258, %v3257
      %v3409 = vpack.c.b16 %v3260, %v3259
      %v3410 = vpack.c.b16 %v3262, %v3261
      %v3411 = vpack.c.b16 %v3264, %v3263
      %v3412 = vpack.c.b16 %v3266, %v3265
      %v3413 = vpack.c.b16 %v3268, %v3267
      %v3414 = vpack.c.b16 %v3270, %v3269
      %v3415 = vpack.c.b16 %v3272, %v3271
      %v3416 = vpack.c.b16 %v3274, %v3273
      %v3417 = vpack.c.b16 %v3276, %v3275
      %v3418 = vpack.c.b16 %v3278, %v3277
      %v3419 = vpack.c.b16 %v3280, %v3279
      %v3420 = vpack.c.b16 %v3282, %v3281
      %v3421 = vpack.c.b16 %v3284, %v3283
      %v3422 = vpack.c.b16 %v3286, %v3285
      %v3423 = vpack.c.b16 %v3288, %v3287
      %v3424 = vpack.c.b16 %v3290, %v3289
      %v3425 = vpack.c.b16 %v3292, %v3291
      %v3426 = vpack.c.b16 %v3294, %v3293
      %v3427 = vpack.c.b16 %v3296, %v3295
      %v3428 = vpack.c.b16 %v3298, %v3297
      %v3429 = vpack.c.b16 %v3300, %v3299
      %v3430 = vpack.c.b16 %v3302, %v3301
      %3559 = vmatprep.subr.bf16.mxu0 0
      %3560 = vmatpush1.bf16.msra.mxu0 %v3310
      %3561 = vmatprep.subr.bf16.mxu0 0
      %3562 = vmatpush1.bf16.msra.mxu0 %v3309
      %3563 = vmatprep.subr.bf16.mxu0 0
      %3564 = vmatpush1.bf16.msra.mxu0 %v3308
      %3565 = vmatprep.subr.bf16.mxu0 0
      %3566 = vmatpush1.bf16.msra.mxu0 %v3307
      %3567 = vmatprep.subr.bf16.mxu0 0
      %3568 = vmatpush1.bf16.msra.mxu0 %v3306
      %3569 = vmatprep.subr.bf16.mxu0 0
      %3570 = vmatpush1.bf16.msra.mxu0 %v3305
      %3571 = vmatprep.subr.bf16.mxu0 0
      %3572 = vmatpush1.bf16.msra.mxu0 %v3304
      %3573 = vmatprep.subr.bf16.mxu0 0
      %3574 = vmatpush1.bf16.msra.mxu0 %v3303
      %3575 = vmatprep.subr.bf16.mxu0 0
      %3576 = vmatpush2.bf16.msra.mxu0 %v3318
      %3577 = vmatprep.subr.bf16.mxu0 0
      %3578 = vmatpush2.bf16.msra.mxu0 %v3317
      %3579 = vmatprep.subr.bf16.mxu0 0
      %3580 = vmatpush2.bf16.msra.mxu0 %v3316
      %3581 = vmatprep.subr.bf16.mxu0 0
      %3582 = vmatpush2.bf16.msra.mxu0 %v3315
      %3583 = vmatprep.subr.bf16.mxu0 0
      %3584 = vmatpush2.bf16.msra.mxu0 %v3314
      %3585 = vmatprep.subr.bf16.mxu0 0
      %3586 = vmatpush2.bf16.msra.mxu0 %v3313
      %3587 = vmatprep.subr.bf16.mxu0 0
      %3588 = vmatpush2.bf16.msra.mxu0 %v3312
      %3589 = vmatprep.subr.bf16.mxu0 0
      %3590 = vmatpush2.bf16.msra.mxu0 %v3311
      %3591 = vmatprep.mubr.bf16.mxu0 %v2760
      %3592 = vmatmul.mubr.bf16.gmra.mxu0 %v2759
      %v3593 = vpop.f32.mrf.mxu0
      %v3594 = vadd.f32 %v2660, %v3593
      %v3595 = vpop.f32.mrf.mxu0
      %v3596 = vpop.f32.mrf.mxu0
      %v3597 = vpop.f32.mrf.mxu0
      %3598 = vdwg.mxu0
      %3599 = vmatprep.subr.bf16.mxu0 0
      %3600 = vmatpush1.bf16.msra.mxu0 %v3326
      %3601 = vmatprep.subr.bf16.mxu0 0
      %3602 = vmatpush1.bf16.msra.mxu0 %v3325
      %3603 = vmatprep.subr.bf16.mxu0 0
      %3604 = vmatpush1.bf16.msra.mxu0 %v3324
      %3605 = vmatprep.subr.bf16.mxu0 0
      %3606 = vmatpush1.bf16.msra.mxu0 %v3323
      %3607 = vmatprep.subr.bf16.mxu0 0
      %3608 = vmatpush1.bf16.msra.mxu0 %v3322
      %3609 = vmatprep.subr.bf16.mxu0 0
      %3610 = vmatpush1.bf16.msra.mxu0 %v3321
      %3611 = vmatprep.subr.bf16.mxu0 0
      %3612 = vmatpush1.bf16.msra.mxu0 %v3320
      %3613 = vmatprep.subr.bf16.mxu0 0
      %3614 = vmatpush1.bf16.msra.mxu0 %v3319
      %3615 = vmatprep.subr.bf16.mxu0 0
      %3616 = vmatpush2.bf16.msra.mxu0 %v3334
      %3617 = vmatprep.subr.bf16.mxu0 0
      %3618 = vmatpush2.bf16.msra.mxu0 %v3333
      %3619 = vmatprep.subr.bf16.mxu0 0
      %3620 = vmatpush2.bf16.msra.mxu0 %v3332
      %3621 = vmatprep.subr.bf16.mxu0 0
      %3622 = vmatpush2.bf16.msra.mxu0 %v3331
      %3623 = vmatprep.subr.bf16.mxu0 0
      %3624 = vmatpush2.bf16.msra.mxu0 %v3330
      %3625 = vmatprep.subr.bf16.mxu0 0
      %3626 = vmatpush2.bf16.msra.mxu0 %v3329
      %3627 = vmatprep.subr.bf16.mxu0 0
      %3628 = vmatpush2.bf16.msra.mxu0 %v3328
      %3629 = vmatprep.subr.bf16.mxu0 0
      %3630 = vmatpush2.bf16.msra.mxu0 %v3327
      %3631 = vmatprep.mubr.bf16.mxu0 %v2762
      %3632 = vmatmul.mubr.bf16.gmra.mxu0 %v2761
      %v3633 = vpop.f32.mrf.mxu0
      %v3634 = vadd.f32 %v3594, %v3633
      %v3635 = vpop.f32.mrf.mxu0
      %v3636 = vpop.f32.mrf.mxu0
      %v3637 = vpop.f32.mrf.mxu0
      %3638 = vdwg.mxu0
      %3639 = vmatprep.subr.bf16.mxu0 0
      %3640 = vmatpush1.bf16.msra.mxu0 %v3342
      %3641 = vmatprep.subr.bf16.mxu0 0
      %3642 = vmatpush1.bf16.msra.mxu0 %v3341
      %3643 = vmatprep.subr.bf16.mxu0 0
      %3644 = vmatpush1.bf16.msra.mxu0 %v3340
      %3645 = vmatprep.subr.bf16.mxu0 0
      %3646 = vmatpush1.bf16.msra.mxu0 %v3339
      %3647 = vmatprep.subr.bf16.mxu0 0
      %3648 = vmatpush1.bf16.msra.mxu0 %v3338
      %3649 = vmatprep.subr.bf16.mxu0 0
      %3650 = vmatpush1.bf16.msra.mxu0 %v3337
      %3651 = vmatprep.subr.bf16.mxu0 0
      %3652 = vmatpush1.bf16.msra.mxu0 %v3336
      %3653 = vmatprep.subr.bf16.mxu0 0
      %3654 = vmatpush1.bf16.msra.mxu0 %v3335
      %3655 = vmatprep.subr.bf16.mxu0 0
      %3656 = vmatpush2.bf16.msra.mxu0 %v3350
      %3657 = vmatprep.subr.bf16.mxu0 0
      %3658 = vmatpush2.bf16.msra.mxu0 %v3349
      %3659 = vmatprep.subr.bf16.mxu0 0
      %3660 = vmatpush2.bf16.msra.mxu0 %v3348
      %3661 = vmatprep.subr.bf16.mxu0 0
      %3662 = vmatpush2.bf16.msra.mxu0 %v3347
      %3663 = vmatprep.subr.bf16.mxu0 0
      %3664 = vmatpush2.bf16.msra.mxu0 %v3346
      %3665 = vmatprep.subr.bf16.mxu0 0
      %3666 = vmatpush2.bf16.msra.mxu0 %v3345
      %3667 = vmatprep.subr.bf16.mxu0 0
      %3668 = vmatpush2.bf16.msra.mxu0 %v3344
      %3669 = vmatprep.subr.bf16.mxu0 0
      %3670 = vmatpush2.bf16.msra.mxu0 %v3343
      %3671 = vmatprep.mubr.bf16.mxu0 %v2764
      %3672 = vmatmul.mubr.bf16.gmra.mxu0 %v2763
      %v3673 = vpop.f32.mrf.mxu0
      %v3674 = vadd.f32 %v3634, %v3673
      %v3675 = vpop.f32.mrf.mxu0
      %v3676 = vpop.f32.mrf.mxu0
      %v3677 = vpop.f32.mrf.mxu0
      %3678 = vdwg.mxu0
      %3679 = vmatprep.subr.bf16.mxu0 0
      %3680 = vmatpush1.bf16.msra.mxu0 %v3358
      %3681 = vmatprep.subr.bf16.mxu0 0
      %3682 = vmatpush1.bf16.msra.mxu0 %v3357
      %3683 = vmatprep.subr.bf16.mxu0 0
      %3684 = vmatpush1.bf16.msra.mxu0 %v3356
      %3685 = vmatprep.subr.bf16.mxu0 0
      %3686 = vmatpush1.bf16.msra.mxu0 %v3355
      %3687 = vmatprep.subr.bf16.mxu0 0
      %3688 = vmatpush1.bf16.msra.mxu0 %v3354
      %3689 = vmatprep.subr.bf16.mxu0 0
      %3690 = vmatpush1.bf16.msra.mxu0 %v3353
      %3691 = vmatprep.subr.bf16.mxu0 0
      %3692 = vmatpush1.bf16.msra.mxu0 %v3352
      %3693 = vmatprep.subr.bf16.mxu0 0
      %3694 = vmatpush1.bf16.msra.mxu0 %v3351
      %3695 = vmatprep.subr.bf16.mxu0 0
      %3696 = vmatpush2.bf16.msra.mxu0 %v3366
      %3697 = vmatprep.subr.bf16.mxu0 0
      %3698 = vmatpush2.bf16.msra.mxu0 %v3365
      %3699 = vmatprep.subr.bf16.mxu0 0
      %3700 = vmatpush2.bf16.msra.mxu0 %v3364
      %3701 = vmatprep.subr.bf16.mxu0 0
      %3702 = vmatpush2.bf16.msra.mxu0 %v3363
      %3703 = vmatprep.subr.bf16.mxu0 0
      %3704 = vmatpush2.bf16.msra.mxu0 %v3362
      %3705 = vmatprep.subr.bf16.mxu0 0
      %3706 = vmatpush2.bf16.msra.mxu0 %v3361
      %3707 = vmatprep.subr.bf16.mxu0 0
      %3708 = vmatpush2.bf16.msra.mxu0 %v3360
      %3709 = vmatprep.subr.bf16.mxu0 0
      %3710 = vmatpush2.bf16.msra.mxu0 %v3359
      %3711 = vmatprep.mubr.bf16.mxu0 %v2766
      %3712 = vmatmul.mubr.bf16.gmra.mxu0 %v2765
      %v3713 = vpop.f32.mrf.mxu0
      %v3714 = vadd.f32 %v3674, %v3713
      %v3715 = vpop.f32.mrf.mxu0
      %v3716 = vpop.f32.mrf.mxu0
      %v3717 = vpop.f32.mrf.mxu0
      %3718 = vdwg.mxu0
      %3719 = vmatprep.subr.bf16.mxu0 0
      %3720 = vmatpush1.bf16.msra.mxu0 %v3374
      %3721 = vmatprep.subr.bf16.mxu0 0
      %3722 = vmatpush1.bf16.msra.mxu0 %v3373
      %3723 = vmatprep.subr.bf16.mxu0 0
      %3724 = vmatpush1.bf16.msra.mxu0 %v3372
      %3725 = vmatprep.subr.bf16.mxu0 0
      %3726 = vmatpush1.bf16.msra.mxu0 %v3371
      %3727 = vmatprep.subr.bf16.mxu0 0
      %3728 = vmatpush1.bf16.msra.mxu0 %v3370
      %3729 = vmatprep.subr.bf16.mxu0 0
      %3730 = vmatpush1.bf16.msra.mxu0 %v3369
      %3731 = vmatprep.subr.bf16.mxu0 0
      %3732 = vmatpush1.bf16.msra.mxu0 %v3368
      %3733 = vmatprep.subr.bf16.mxu0 0
      %3734 = vmatpush1.bf16.msra.mxu0 %v3367
      %3735 = vmatprep.subr.bf16.mxu0 0
      %3736 = vmatpush2.bf16.msra.mxu0 %v3382
      %3737 = vmatprep.subr.bf16.mxu0 0
      %3738 = vmatpush2.bf16.msra.mxu0 %v3381
      %3739 = vmatprep.subr.bf16.mxu0 0
      %3740 = vmatpush2.bf16.msra.mxu0 %v3380
      %3741 = vmatprep.subr.bf16.mxu0 0
      %3742 = vmatpush2.bf16.msra.mxu0 %v3379
      %3743 = vmatprep.subr.bf16.mxu0 0
      %3744 = vmatpush2.bf16.msra.mxu0 %v3378
      %3745 = vmatprep.subr.bf16.mxu0 0
      %3746 = vmatpush2.bf16.msra.mxu0 %v3377
      %3747 = vmatprep.subr.bf16.mxu0 0
      %3748 = vmatpush2.bf16.msra.mxu0 %v3376
      %3749 = vmatprep.subr.bf16.mxu0 0
      %3750 = vmatpush2.bf16.msra.mxu0 %v3375
      %3751 = vmatprep.mubr.bf16.mxu0 %v2768
      %3752 = vmatmul.mubr.bf16.gmra.mxu0 %v2767
      %v3753 = vpop.f32.mrf.mxu0
      %v3754 = vadd.f32 %v3714, %v3753
      %v3755 = vpop.f32.mrf.mxu0
      %v3756 = vpop.f32.mrf.mxu0
      %v3757 = vpop.f32.mrf.mxu0
      %3758 = vdwg.mxu0
      %3759 = vmatprep.subr.bf16.mxu0 0
      %3760 = vmatpush1.bf16.msra.mxu0 %v3390
      %3761 = vmatprep.subr.bf16.mxu0 0
      %3762 = vmatpush1.bf16.msra.mxu0 %v3389
      %3763 = vmatprep.subr.bf16.mxu0 0
      %3764 = vmatpush1.bf16.msra.mxu0 %v3388
      %3765 = vmatprep.subr.bf16.mxu0 0
      %3766 = vmatpush1.bf16.msra.mxu0 %v3387
      %3767 = vmatprep.subr.bf16.mxu0 0
      %3768 = vmatpush1.bf16.msra.mxu0 %v3386
      %3769 = vmatprep.subr.bf16.mxu0 0
      %3770 = vmatpush1.bf16.msra.mxu0 %v3385
      %3771 = vmatprep.subr.bf16.mxu0 0
      %3772 = vmatpush1.bf16.msra.mxu0 %v3384
      %3773 = vmatprep.subr.bf16.mxu0 0
      %3774 = vmatpush1.bf16.msra.mxu0 %v3383
      %3775 = vmatprep.subr.bf16.mxu0 0
      %3776 = vmatpush2.bf16.msra.mxu0 %v3398
      %3777 = vmatprep.subr.bf16.mxu0 0
      %3778 = vmatpush2.bf16.msra.mxu0 %v3397
      %3779 = vmatprep.subr.bf16.mxu0 0
      %3780 = vmatpush2.bf16.msra.mxu0 %v3396
      %3781 = vmatprep.subr.bf16.mxu0 0
      %3782 = vmatpush2.bf16.msra.mxu0 %v3395
      %3783 = vmatprep.subr.bf16.mxu0 0
      %3784 = vmatpush2.bf16.msra.mxu0 %v3394
      %3785 = vmatprep.subr.bf16.mxu0 0
      %3786 = vmatpush2.bf16.msra.mxu0 %v3393
      %3787 = vmatprep.subr.bf16.mxu0 0
      %3788 = vmatpush2.bf16.msra.mxu0 %v3392
      %3789 = vmatprep.subr.bf16.mxu0 0
      %3790 = vmatpush2.bf16.msra.mxu0 %v3391
      %3791 = vmatprep.mubr.bf16.mxu0 %v2770
      %3792 = vmatmul.mubr.bf16.gmra.mxu0 %v2769
      %v3793 = vpop.f32.mrf.mxu0
      %v3794 = vadd.f32 %v3754, %v3793
      %v3795 = vpop.f32.mrf.mxu0
      %v3796 = vpop.f32.mrf.mxu0
      %v3797 = vpop.f32.mrf.mxu0
      %3798 = vdwg.mxu0
      %3799 = vmatprep.subr.bf16.mxu0 0
      %3800 = vmatpush1.bf16.msra.mxu0 %v3406
      %3801 = vmatprep.subr.bf16.mxu0 0
      %3802 = vmatpush1.bf16.msra.mxu0 %v3405
      %3803 = vmatprep.subr.bf16.mxu0 0
      %3804 = vmatpush1.bf16.msra.mxu0 %v3404
      %3805 = vmatprep.subr.bf16.mxu0 0
      %3806 = vmatpush1.bf16.msra.mxu0 %v3403
      %3807 = vmatprep.subr.bf16.mxu0 0
      %3808 = vmatpush1.bf16.msra.mxu0 %v3402
      %3809 = vmatprep.subr.bf16.mxu0 0
      %3810 = vmatpush1.bf16.msra.mxu0 %v3401
      %3811 = vmatprep.subr.bf16.mxu0 0
      %3812 = vmatpush1.bf16.msra.mxu0 %v3400
      %3813 = vmatprep.subr.bf16.mxu0 0
      %3814 = vmatpush1.bf16.msra.mxu0 %v3399
      %3815 = vmatprep.subr.bf16.mxu0 0
      %3816 = vmatpush2.bf16.msra.mxu0 %v3414
      %3817 = vmatprep.subr.bf16.mxu0 0
      %3818 = vmatpush2.bf16.msra.mxu0 %v3413
      %3819 = vmatprep.subr.bf16.mxu0 0
      %3820 = vmatpush2.bf16.msra.mxu0 %v3412
      %3821 = vmatprep.subr.bf16.mxu0 0
      %3822 = vmatpush2.bf16.msra.mxu0 %v3411
      %3823 = vmatprep.subr.bf16.mxu0 0
      %3824 = vmatpush2.bf16.msra.mxu0 %v3410
      %3825 = vmatprep.subr.bf16.mxu0 0
      %3826 = vmatpush2.bf16.msra.mxu0 %v3409
      %3827 = vmatprep.subr.bf16.mxu0 0
      %3828 = vmatpush2.bf16.msra.mxu0 %v3408
      %3829 = vmatprep.subr.bf16.mxu0 0
      %3830 = vmatpush2.bf16.msra.mxu0 %v3407
      %3831 = vmatprep.mubr.bf16.mxu0 %v2772
      %3832 = vmatmul.mubr.bf16.gmra.mxu0 %v2771
      %v3833 = vpop.f32.mrf.mxu0
      %v3834 = vadd.f32 %v3794, %v3833
      %v3835 = vpop.f32.mrf.mxu0
      %v3836 = vpop.f32.mrf.mxu0
      %v3837 = vpop.f32.mrf.mxu0
      %3838 = vdwg.mxu0
      %3839 = vmatprep.subr.bf16.mxu0 0
      %3840 = vmatpush1.bf16.msra.mxu0 %v3422
      %3841 = vmatprep.subr.bf16.mxu0 0
      %3842 = vmatpush1.bf16.msra.mxu0 %v3421
      %3843 = vmatprep.subr.bf16.mxu0 0
      %3844 = vmatpush1.bf16.msra.mxu0 %v3420
      %3845 = vmatprep.subr.bf16.mxu0 0
      %3846 = vmatpush1.bf16.msra.mxu0 %v3419
      %3847 = vmatprep.subr.bf16.mxu0 0
      %3848 = vmatpush1.bf16.msra.mxu0 %v3418
      %3849 = vmatprep.subr.bf16.mxu0 0
      %3850 = vmatpush1.bf16.msra.mxu0 %v3417
      %3851 = vmatprep.subr.bf16.mxu0 0
      %3852 = vmatpush1.bf16.msra.mxu0 %v3416
      %3853 = vmatprep.subr.bf16.mxu0 0
      %3854 = vmatpush1.bf16.msra.mxu0 %v3415
      %3855 = vmatprep.subr.bf16.mxu0 0
      %3856 = vmatpush2.bf16.msra.mxu0 %v3430
      %3857 = vmatprep.subr.bf16.mxu0 0
      %3858 = vmatpush2.bf16.msra.mxu0 %v3429
      %3859 = vmatprep.subr.bf16.mxu0 0
      %3860 = vmatpush2.bf16.msra.mxu0 %v3428
      %3861 = vmatprep.subr.bf16.mxu0 0
      %3862 = vmatpush2.bf16.msra.mxu0 %v3427
      %3863 = vmatprep.subr.bf16.mxu0 0
      %3864 = vmatpush2.bf16.msra.mxu0 %v3426
      %3865 = vmatprep.subr.bf16.mxu0 0
      %3866 = vmatpush2.bf16.msra.mxu0 %v3425
      %3867 = vmatprep.subr.bf16.mxu0 0
      %3868 = vmatpush2.bf16.msra.mxu0 %v3424
      %3869 = vmatprep.subr.bf16.mxu0 0
      %3870 = vmatpush2.bf16.msra.mxu0 %v3423
      %3871 = vmatprep.mubr.bf16.mxu0 %v2774
      %3872 = vmatmul.mubr.bf16.gmra.mxu0 %v2773
      %v3873 = vpop.f32.mrf.mxu0
      %v3874 = vadd.f32 %v3834, %v3873
      %v3875 = vpop.f32.mrf.mxu0
      %v3876 = vpop.f32.mrf.mxu0
      %v3877 = vpop.f32.mrf.mxu0
      %3878 = vdwg.mxu0
      %vm3879 = vcmask 58368
      %3880 = vst.msk [vmem:[%s241] sm:$0x3] %vm3879, %v3874
      %s3881 = scalar_lea.vmem [#allocation2], 1
      %v3882 = vld [vmem:[%s3881] ss:$8 sm:$0xf]
      %v3883 = vld [vmem:[%s3881] ss:$8 sm:$0xf0]
      %v3884 = vor.u32 %v3882, %v3883
      %s3885 = scalar_lea.vmem [#allocation2], 65
      %v3886 = vld [vmem:[%s3885] ss:$8 sm:$0xf]
      %v3887 = vld [vmem:[%s3885] ss:$8 sm:$0xf0]
      %v3888 = vor.u32 %v3886, %v3887
      %s3889 = scalar_lea.vmem [#allocation2], 129
      %v3890 = vld [vmem:[%s3889] ss:$8 sm:$0xf]
      %v3891 = vld [vmem:[%s3889] ss:$8 sm:$0xf0]
      %v3892 = vor.u32 %v3890, %v3891
      %s3893 = scalar_lea.vmem [#allocation2], 193
      %v3894 = vld [vmem:[%s3893] ss:$8 sm:$0xf]
      %v3895 = vld [vmem:[%s3893] ss:$8 sm:$0xf0]
      %v3896 = vor.u32 %v3894, %v3895
      %v3901 = vlaneseq
      %v3902 = vshrl.u32 %v3901, 7
      %v3903 = vsub.s32 0, %v3902
      %v3904 = vrot.slane %v3884, %v3903
      %v3905 = vlaneseq
      %v3906 = vshrl.u32 %v3905, 7
      %v3907 = vsub.s32 1, %v3906
      %v3908 = vrot.slane %v3884, %v3907
      %v3909 = vlaneseq
      %v3910 = vshrl.u32 %v3909, 7
      %v3911 = vsub.s32 2, %v3910
      %v3912 = vrot.slane %v3884, %v3911
      %v3913 = vlaneseq
      %v3914 = vshrl.u32 %v3913, 7
      %v3915 = vsub.s32 3, %v3914
      %v3916 = vrot.slane %v3884, %v3915
      %v3917 = vlaneseq
      %v3918 = vshrl.u32 %v3917, 7
      %v3919 = vsub.s32 4, %v3918
      %v3920 = vrot.slane %v3884, %v3919
      %v3921 = vlaneseq
      %v3922 = vshrl.u32 %v3921, 7
      %v3923 = vsub.s32 5, %v3922
      %v3924 = vrot.slane %v3884, %v3923
      %v3925 = vlaneseq
      %v3926 = vshrl.u32 %v3925, 7
      %v3927 = vsub.s32 6, %v3926
      %v3928 = vrot.slane %v3884, %v3927
      %v3929 = vlaneseq
      %v3930 = vshrl.u32 %v3929, 7
      %v3931 = vsub.s32 7, %v3930
      %v3932 = vrot.slane %v3884, %v3931
      %v3933 = vlaneseq
      %v3934 = vshrl.u32 %v3933, 7
      %v3935 = vsub.s32 0, %v3934
      %v3936 = vrot.slane %v3888, %v3935
      %v3937 = vlaneseq
      %v3938 = vshrl.u32 %v3937, 7
      %v3939 = vsub.s32 1, %v3938
      %v3940 = vrot.slane %v3888, %v3939
      %v3941 = vlaneseq
      %v3942 = vshrl.u32 %v3941, 7
      %v3943 = vsub.s32 2, %v3942
      %v3944 = vrot.slane %v3888, %v3943
      %v3945 = vlaneseq
      %v3946 = vshrl.u32 %v3945, 7
      %v3947 = vsub.s32 3, %v3946
      %v3948 = vrot.slane %v3888, %v3947
      %v3949 = vlaneseq
      %v3950 = vshrl.u32 %v3949, 7
      %v3951 = vsub.s32 4, %v3950
      %v3952 = vrot.slane %v3888, %v3951
      %v3953 = vlaneseq
      %v3954 = vshrl.u32 %v3953, 7
      %v3955 = vsub.s32 5, %v3954
      %v3956 = vrot.slane %v3888, %v3955
      %v3957 = vlaneseq
      %v3958 = vshrl.u32 %v3957, 7
      %v3959 = vsub.s32 6, %v3958
      %v3960 = vrot.slane %v3888, %v3959
      %v3961 = vlaneseq
      %v3962 = vshrl.u32 %v3961, 7
      %v3963 = vsub.s32 7, %v3962
      %v3964 = vrot.slane %v3888, %v3963
      %v3965 = vlaneseq
      %v3966 = vshrl.u32 %v3965, 7
      %v3967 = vsub.s32 0, %v3966
      %v3968 = vrot.slane %v3892, %v3967
      %v3969 = vlaneseq
      %v3970 = vshrl.u32 %v3969, 7
      %v3971 = vsub.s32 1, %v3970
      %v3972 = vrot.slane %v3892, %v3971
      %v3973 = vlaneseq
      %v3974 = vshrl.u32 %v3973, 7
      %v3975 = vsub.s32 2, %v3974
      %v3976 = vrot.slane %v3892, %v3975
      %v3977 = vlaneseq
      %v3978 = vshrl.u32 %v3977, 7
      %v3979 = vsub.s32 3, %v3978
      %v3980 = vrot.slane %v3892, %v3979
      %v3981 = vlaneseq
      %v3982 = vshrl.u32 %v3981, 7
      %v3983 = vsub.s32 4, %v3982
      %v3984 = vrot.slane %v3892, %v3983
      %v3985 = vlaneseq
      %v3986 = vshrl.u32 %v3985, 7
      %v3987 = vsub.s32 5, %v3986
      %v3988 = vrot.slane %v3892, %v3987
      %v3989 = vlaneseq
      %v3990 = vshrl.u32 %v3989, 7
      %v3991 = vsub.s32 6, %v3990
      %v3992 = vrot.slane %v3892, %v3991
      %v3993 = vlaneseq
      %v3994 = vshrl.u32 %v3993, 7
      %v3995 = vsub.s32 7, %v3994
      %v3996 = vrot.slane %v3892, %v3995
      %v3997 = vlaneseq
      %v3998 = vshrl.u32 %v3997, 7
      %v3999 = vsub.s32 0, %v3998
      %v4000 = vrot.slane %v3896, %v3999
      %v4001 = vlaneseq
      %v4002 = vshrl.u32 %v4001, 7
      %v4003 = vsub.s32 1, %v4002
      %v4004 = vrot.slane %v3896, %v4003
      %v4005 = vlaneseq
      %v4006 = vshrl.u32 %v4005, 7
      %v4007 = vsub.s32 2, %v4006
      %v4008 = vrot.slane %v3896, %v4007
      %v4009 = vlaneseq
      %v4010 = vshrl.u32 %v4009, 7
      %v4011 = vsub.s32 3, %v4010
      %v4012 = vrot.slane %v3896, %v4011
      %v4013 = vlaneseq
      %v4014 = vshrl.u32 %v4013, 7
      %v4015 = vsub.s32 4, %v4014
      %v4016 = vrot.slane %v3896, %v4015
      %v4017 = vlaneseq
      %v4018 = vshrl.u32 %v4017, 7
      %v4019 = vsub.s32 5, %v4018
      %v4020 = vrot.slane %v3896, %v4019
      %v4021 = vlaneseq
      %v4022 = vshrl.u32 %v4021, 7
      %v4023 = vsub.s32 6, %v4022
      %v4024 = vrot.slane %v3896, %v4023
      %v4025 = vlaneseq
      %v4026 = vshrl.u32 %v4025, 7
      %v4027 = vsub.s32 7, %v4026
      %v4028 = vrot.slane %v3896, %v4027
      %v4061 = vpack.c.bf16 %v3904, %v3904
      %v4062 = vpack.c.bf16 %v3908, %v3908
      %v4063 = vpack.c.bf16 %v3912, %v3912
      %v4064 = vpack.c.bf16 %v3916, %v3916
      %v4065 = vpack.c.bf16 %v3920, %v3920
      %v4066 = vpack.c.bf16 %v3924, %v3924
      %v4067 = vpack.c.bf16 %v3928, %v3928
      %v4068 = vpack.c.bf16 %v3932, %v3932
      %v4069 = vpack.c.bf16 %v3936, %v3936
      %v4070 = vpack.c.bf16 %v3940, %v3940
      %v4071 = vpack.c.bf16 %v3944, %v3944
      %v4072 = vpack.c.bf16 %v3948, %v3948
      %v4073 = vpack.c.bf16 %v3952, %v3952
      %v4074 = vpack.c.bf16 %v3956, %v3956
      %v4075 = vpack.c.bf16 %v3960, %v3960
      %v4076 = vpack.c.bf16 %v3964, %v3964
      %v4077 = vpack.c.bf16 %v3968, %v3968
      %v4078 = vpack.c.bf16 %v3972, %v3972
      %v4079 = vpack.c.bf16 %v3976, %v3976
      %v4080 = vpack.c.bf16 %v3980, %v3980
      %v4081 = vpack.c.bf16 %v3984, %v3984
      %v4082 = vpack.c.bf16 %v3988, %v3988
      %v4083 = vpack.c.bf16 %v3992, %v3992
      %v4084 = vpack.c.bf16 %v3996, %v3996
      %v4085 = vpack.c.bf16 %v4000, %v4000
      %v4086 = vpack.c.bf16 %v4004, %v4004
      %v4087 = vpack.c.bf16 %v4008, %v4008
      %v4088 = vpack.c.bf16 %v4012, %v4012
      %v4089 = vpack.c.bf16 %v4016, %v4016
      %v4090 = vpack.c.bf16 %v4020, %v4020
      %v4091 = vpack.c.bf16 %v4024, %v4024
      %v4092 = vpack.c.bf16 %v4028, %v4028
      %s4093 = scalar_lea.vmem %s230, 1024
      %v4094 = vld [vmem:[%s4093] sm:$0xf]
      %v4095 = vld [vmem:[%s4093 + $0x4] sm:$0xf]
      %v4096 = vld [vmem:[%s4093 + $0x8] sm:$0xf]
      %v4097 = vld [vmem:[%s4093 + $0xc] sm:$0xf]
      %v4098 = vld [vmem:[%s4093 + $0x10] sm:$0xf]
      %v4099 = vld [vmem:[%s4093 + $0x14] sm:$0xf]
      %v4100 = vld [vmem:[%s4093 + $0x18] sm:$0xf]
      %v4101 = vld [vmem:[%s4093 + $0x1c] sm:$0xf]
      %v4102 = vld [vmem:[%s4093 + $0x20] sm:$0xf]
      %v4103 = vld [vmem:[%s4093 + $0x24] sm:$0xf]
      %v4104 = vld [vmem:[%s4093 + $0x28] sm:$0xf]
      %v4105 = vld [vmem:[%s4093 + $0x2c] sm:$0xf]
      %v4106 = vld [vmem:[%s4093 + $0x30] sm:$0xf]
      %v4107 = vld [vmem:[%s4093 + $0x34] sm:$0xf]
      %v4108 = vld [vmem:[%s4093 + $0x38] sm:$0xf]
      %v4109 = vld [vmem:[%s4093 + $0x3c] sm:$0xf]
      %v4110 = vld [vmem:[%s4093 + $0x40] sm:$0xf]
      %v4111 = vld [vmem:[%s4093 + $0x44] sm:$0xf]
      %v4112 = vld [vmem:[%s4093 + $0x48] sm:$0xf]
      %v4113 = vld [vmem:[%s4093 + $0x4c] sm:$0xf]
      %v4114 = vld [vmem:[%s4093 + $0x50] sm:$0xf]
      %v4115 = vld [vmem:[%s4093 + $0x54] sm:$0xf]
      %v4116 = vld [vmem:[%s4093 + $0x58] sm:$0xf]
      %v4117 = vld [vmem:[%s4093 + $0x5c] sm:$0xf]
      %v4118 = vld [vmem:[%s4093 + $0x60] sm:$0xf]
      %v4119 = vld [vmem:[%s4093 + $0x64] sm:$0xf]
      %v4120 = vld [vmem:[%s4093 + $0x68] sm:$0xf]
      %v4121 = vld [vmem:[%s4093 + $0x6c] sm:$0xf]
      %v4122 = vld [vmem:[%s4093 + $0x70] sm:$0xf]
      %v4123 = vld [vmem:[%s4093 + $0x74] sm:$0xf]
      %v4124 = vld [vmem:[%s4093 + $0x78] sm:$0xf]
      %v4125 = vld [vmem:[%s4093 + $0x7c] sm:$0xf]
      %v4126 = vld [vmem:[%s4093 + $0x80] sm:$0xf]
      %v4127 = vld [vmem:[%s4093 + $0x84] sm:$0xf]
      %v4128 = vld [vmem:[%s4093 + $0x88] sm:$0xf]
      %v4129 = vld [vmem:[%s4093 + $0x8c] sm:$0xf]
      %v4130 = vld [vmem:[%s4093 + $0x90] sm:$0xf]
      %v4131 = vld [vmem:[%s4093 + $0x94] sm:$0xf]
      %v4132 = vld [vmem:[%s4093 + $0x98] sm:$0xf]
      %v4133 = vld [vmem:[%s4093 + $0x9c] sm:$0xf]
      %v4134 = vld [vmem:[%s4093 + $0xa0] sm:$0xf]
      %v4135 = vld [vmem:[%s4093 + $0xa4] sm:$0xf]
      %v4136 = vld [vmem:[%s4093 + $0xa8] sm:$0xf]
      %v4137 = vld [vmem:[%s4093 + $0xac] sm:$0xf]
      %v4138 = vld [vmem:[%s4093 + $0xb0] sm:$0xf]
      %v4139 = vld [vmem:[%s4093 + $0xb4] sm:$0xf]
      %v4140 = vld [vmem:[%s4093 + $0xb8] sm:$0xf]
      %v4141 = vld [vmem:[%s4093 + $0xbc] sm:$0xf]
      %v4142 = vld [vmem:[%s4093 + $0xc0] sm:$0xf]
      %v4143 = vld [vmem:[%s4093 + $0xc4] sm:$0xf]
      %v4144 = vld [vmem:[%s4093 + $0xc8] sm:$0xf]
      %v4145 = vld [vmem:[%s4093 + $0xcc] sm:$0xf]
      %v4146 = vld [vmem:[%s4093 + $0xd0] sm:$0xf]
      %v4147 = vld [vmem:[%s4093 + $0xd4] sm:$0xf]
      %v4148 = vld [vmem:[%s4093 + $0xd8] sm:$0xf]
      %v4149 = vld [vmem:[%s4093 + $0xdc] sm:$0xf]
      %v4150 = vld [vmem:[%s4093 + $0xe0] sm:$0xf]
      %v4151 = vld [vmem:[%s4093 + $0xe4] sm:$0xf]
      %v4152 = vld [vmem:[%s4093 + $0xe8] sm:$0xf]
      %v4153 = vld [vmem:[%s4093 + $0xec] sm:$0xf]
      %v4154 = vld [vmem:[%s4093 + $0xf0] sm:$0xf]
      %v4155 = vld [vmem:[%s4093 + $0xf4] sm:$0xf]
      %v4156 = vld [vmem:[%s4093 + $0xf8] sm:$0xf]
      %v4157 = vld [vmem:[%s4093 + $0xfc] sm:$0xf]
      %v4158 = vld [vmem:[%s4093 + $0x100] sm:$0xf]
      %v4159 = vld [vmem:[%s4093 + $0x104] sm:$0xf]
      %v4160 = vld [vmem:[%s4093 + $0x108] sm:$0xf]
      %v4161 = vld [vmem:[%s4093 + $0x10c] sm:$0xf]
      %v4162 = vld [vmem:[%s4093 + $0x110] sm:$0xf]
      %v4163 = vld [vmem:[%s4093 + $0x114] sm:$0xf]
      %v4164 = vld [vmem:[%s4093 + $0x118] sm:$0xf]
      %v4165 = vld [vmem:[%s4093 + $0x11c] sm:$0xf]
      %v4166 = vld [vmem:[%s4093 + $0x120] sm:$0xf]
      %v4167 = vld [vmem:[%s4093 + $0x124] sm:$0xf]
      %v4168 = vld [vmem:[%s4093 + $0x128] sm:$0xf]
      %v4169 = vld [vmem:[%s4093 + $0x12c] sm:$0xf]
      %v4170 = vld [vmem:[%s4093 + $0x130] sm:$0xf]
      %v4171 = vld [vmem:[%s4093 + $0x134] sm:$0xf]
      %v4172 = vld [vmem:[%s4093 + $0x138] sm:$0xf]
      %v4173 = vld [vmem:[%s4093 + $0x13c] sm:$0xf]
      %v4174 = vld [vmem:[%s4093 + $0x140] sm:$0xf]
      %v4175 = vld [vmem:[%s4093 + $0x144] sm:$0xf]
      %v4176 = vld [vmem:[%s4093 + $0x148] sm:$0xf]
      %v4177 = vld [vmem:[%s4093 + $0x14c] sm:$0xf]
      %v4178 = vld [vmem:[%s4093 + $0x150] sm:$0xf]
      %v4179 = vld [vmem:[%s4093 + $0x154] sm:$0xf]
      %v4180 = vld [vmem:[%s4093 + $0x158] sm:$0xf]
      %v4181 = vld [vmem:[%s4093 + $0x15c] sm:$0xf]
      %v4182 = vld [vmem:[%s4093 + $0x160] sm:$0xf]
      %v4183 = vld [vmem:[%s4093 + $0x164] sm:$0xf]
      %v4184 = vld [vmem:[%s4093 + $0x168] sm:$0xf]
      %v4185 = vld [vmem:[%s4093 + $0x16c] sm:$0xf]
      %v4186 = vld [vmem:[%s4093 + $0x170] sm:$0xf]
      %v4187 = vld [vmem:[%s4093 + $0x174] sm:$0xf]
      %v4188 = vld [vmem:[%s4093 + $0x178] sm:$0xf]
      %v4189 = vld [vmem:[%s4093 + $0x17c] sm:$0xf]
      %v4190 = vld [vmem:[%s4093 + $0x180] sm:$0xf]
      %v4191 = vld [vmem:[%s4093 + $0x184] sm:$0xf]
      %v4192 = vld [vmem:[%s4093 + $0x188] sm:$0xf]
      %v4193 = vld [vmem:[%s4093 + $0x18c] sm:$0xf]
      %v4194 = vld [vmem:[%s4093 + $0x190] sm:$0xf]
      %v4195 = vld [vmem:[%s4093 + $0x194] sm:$0xf]
      %v4196 = vld [vmem:[%s4093 + $0x198] sm:$0xf]
      %v4197 = vld [vmem:[%s4093 + $0x19c] sm:$0xf]
      %v4198 = vld [vmem:[%s4093 + $0x1a0] sm:$0xf]
      %v4199 = vld [vmem:[%s4093 + $0x1a4] sm:$0xf]
      %v4200 = vld [vmem:[%s4093 + $0x1a8] sm:$0xf]
      %v4201 = vld [vmem:[%s4093 + $0x1ac] sm:$0xf]
      %v4202 = vld [vmem:[%s4093 + $0x1b0] sm:$0xf]
      %v4203 = vld [vmem:[%s4093 + $0x1b4] sm:$0xf]
      %v4204 = vld [vmem:[%s4093 + $0x1b8] sm:$0xf]
      %v4205 = vld [vmem:[%s4093 + $0x1bc] sm:$0xf]
      %v4206 = vld [vmem:[%s4093 + $0x1c0] sm:$0xf]
      %v4207 = vld [vmem:[%s4093 + $0x1c4] sm:$0xf]
      %v4208 = vld [vmem:[%s4093 + $0x1c8] sm:$0xf]
      %v4209 = vld [vmem:[%s4093 + $0x1cc] sm:$0xf]
      %v4210 = vld [vmem:[%s4093 + $0x1d0] sm:$0xf]
      %v4211 = vld [vmem:[%s4093 + $0x1d4] sm:$0xf]
      %v4212 = vld [vmem:[%s4093 + $0x1d8] sm:$0xf]
      %v4213 = vld [vmem:[%s4093 + $0x1dc] sm:$0xf]
      %v4214 = vld [vmem:[%s4093 + $0x1e0] sm:$0xf]
      %v4215 = vld [vmem:[%s4093 + $0x1e4] sm:$0xf]
      %v4216 = vld [vmem:[%s4093 + $0x1e8] sm:$0xf]
      %v4217 = vld [vmem:[%s4093 + $0x1ec] sm:$0xf]
      %v4218 = vld [vmem:[%s4093 + $0x1f0] sm:$0xf]
      %v4219 = vld [vmem:[%s4093 + $0x1f4] sm:$0xf]
      %v4220 = vld [vmem:[%s4093 + $0x1f8] sm:$0xf]
      %v4221 = vld [vmem:[%s4093 + $0x1fc] sm:$0xf]
      %v4222 = vld [vmem:[%s4093 + $0x200] sm:$0xf]
      %v4223 = vld [vmem:[%s4093 + $0x204] sm:$0xf]
      %v4224 = vld [vmem:[%s4093 + $0x208] sm:$0xf]
      %v4225 = vld [vmem:[%s4093 + $0x20c] sm:$0xf]
      %v4226 = vld [vmem:[%s4093 + $0x210] sm:$0xf]
      %v4227 = vld [vmem:[%s4093 + $0x214] sm:$0xf]
      %v4228 = vld [vmem:[%s4093 + $0x218] sm:$0xf]
      %v4229 = vld [vmem:[%s4093 + $0x21c] sm:$0xf]
      %v4230 = vld [vmem:[%s4093 + $0x220] sm:$0xf]
      %v4231 = vld [vmem:[%s4093 + $0x224] sm:$0xf]
      %v4232 = vld [vmem:[%s4093 + $0x228] sm:$0xf]
      %v4233 = vld [vmem:[%s4093 + $0x22c] sm:$0xf]
      %v4234 = vld [vmem:[%s4093 + $0x230] sm:$0xf]
      %v4235 = vld [vmem:[%s4093 + $0x234] sm:$0xf]
      %v4236 = vld [vmem:[%s4093 + $0x238] sm:$0xf]
      %v4237 = vld [vmem:[%s4093 + $0x23c] sm:$0xf]
      %v4238 = vld [vmem:[%s4093 + $0x240] sm:$0xf]
      %v4239 = vld [vmem:[%s4093 + $0x244] sm:$0xf]
      %v4240 = vld [vmem:[%s4093 + $0x248] sm:$0xf]
      %v4241 = vld [vmem:[%s4093 + $0x24c] sm:$0xf]
      %v4242 = vld [vmem:[%s4093 + $0x250] sm:$0xf]
      %v4243 = vld [vmem:[%s4093 + $0x254] sm:$0xf]
      %v4244 = vld [vmem:[%s4093 + $0x258] sm:$0xf]
      %v4245 = vld [vmem:[%s4093 + $0x25c] sm:$0xf]
      %v4246 = vld [vmem:[%s4093 + $0x260] sm:$0xf]
      %v4247 = vld [vmem:[%s4093 + $0x264] sm:$0xf]
      %v4248 = vld [vmem:[%s4093 + $0x268] sm:$0xf]
      %v4249 = vld [vmem:[%s4093 + $0x26c] sm:$0xf]
      %v4250 = vld [vmem:[%s4093 + $0x270] sm:$0xf]
      %v4251 = vld [vmem:[%s4093 + $0x274] sm:$0xf]
      %v4252 = vld [vmem:[%s4093 + $0x278] sm:$0xf]
      %v4253 = vld [vmem:[%s4093 + $0x27c] sm:$0xf]
      %v4254 = vld [vmem:[%s4093 + $0x280] sm:$0xf]
      %v4255 = vld [vmem:[%s4093 + $0x284] sm:$0xf]
      %v4256 = vld [vmem:[%s4093 + $0x288] sm:$0xf]
      %v4257 = vld [vmem:[%s4093 + $0x28c] sm:$0xf]
      %v4258 = vld [vmem:[%s4093 + $0x290] sm:$0xf]
      %v4259 = vld [vmem:[%s4093 + $0x294] sm:$0xf]
      %v4260 = vld [vmem:[%s4093 + $0x298] sm:$0xf]
      %v4261 = vld [vmem:[%s4093 + $0x29c] sm:$0xf]
      %v4262 = vld [vmem:[%s4093 + $0x2a0] sm:$0xf]
      %v4263 = vld [vmem:[%s4093 + $0x2a4] sm:$0xf]
      %v4264 = vld [vmem:[%s4093 + $0x2a8] sm:$0xf]
      %v4265 = vld [vmem:[%s4093 + $0x2ac] sm:$0xf]
      %v4266 = vld [vmem:[%s4093 + $0x2b0] sm:$0xf]
      %v4267 = vld [vmem:[%s4093 + $0x2b4] sm:$0xf]
      %v4268 = vld [vmem:[%s4093 + $0x2b8] sm:$0xf]
      %v4269 = vld [vmem:[%s4093 + $0x2bc] sm:$0xf]
      %v4270 = vld [vmem:[%s4093 + $0x2c0] sm:$0xf]
      %v4271 = vld [vmem:[%s4093 + $0x2c4] sm:$0xf]
      %v4272 = vld [vmem:[%s4093 + $0x2c8] sm:$0xf]
      %v4273 = vld [vmem:[%s4093 + $0x2cc] sm:$0xf]
      %v4274 = vld [vmem:[%s4093 + $0x2d0] sm:$0xf]
      %v4275 = vld [vmem:[%s4093 + $0x2d4] sm:$0xf]
      %v4276 = vld [vmem:[%s4093 + $0x2d8] sm:$0xf]
      %v4277 = vld [vmem:[%s4093 + $0x2dc] sm:$0xf]
      %v4278 = vld [vmem:[%s4093 + $0x2e0] sm:$0xf]
      %v4279 = vld [vmem:[%s4093 + $0x2e4] sm:$0xf]
      %v4280 = vld [vmem:[%s4093 + $0x2e8] sm:$0xf]
      %v4281 = vld [vmem:[%s4093 + $0x2ec] sm:$0xf]
      %v4282 = vld [vmem:[%s4093 + $0x2f0] sm:$0xf]
      %v4283 = vld [vmem:[%s4093 + $0x2f4] sm:$0xf]
      %v4284 = vld [vmem:[%s4093 + $0x2f8] sm:$0xf]
      %v4285 = vld [vmem:[%s4093 + $0x2fc] sm:$0xf]
      %v4286 = vld [vmem:[%s4093 + $0x300] sm:$0xf]
      %v4287 = vld [vmem:[%s4093 + $0x304] sm:$0xf]
      %v4288 = vld [vmem:[%s4093 + $0x308] sm:$0xf]
      %v4289 = vld [vmem:[%s4093 + $0x30c] sm:$0xf]
      %v4290 = vld [vmem:[%s4093 + $0x310] sm:$0xf]
      %v4291 = vld [vmem:[%s4093 + $0x314] sm:$0xf]
      %v4292 = vld [vmem:[%s4093 + $0x318] sm:$0xf]
      %v4293 = vld [vmem:[%s4093 + $0x31c] sm:$0xf]
      %v4294 = vld [vmem:[%s4093 + $0x320] sm:$0xf]
      %v4295 = vld [vmem:[%s4093 + $0x324] sm:$0xf]
      %v4296 = vld [vmem:[%s4093 + $0x328] sm:$0xf]
      %v4297 = vld [vmem:[%s4093 + $0x32c] sm:$0xf]
      %v4298 = vld [vmem:[%s4093 + $0x330] sm:$0xf]
      %v4299 = vld [vmem:[%s4093 + $0x334] sm:$0xf]
      %v4300 = vld [vmem:[%s4093 + $0x338] sm:$0xf]
      %v4301 = vld [vmem:[%s4093 + $0x33c] sm:$0xf]
      %v4302 = vld [vmem:[%s4093 + $0x340] sm:$0xf]
      %v4303 = vld [vmem:[%s4093 + $0x344] sm:$0xf]
      %v4304 = vld [vmem:[%s4093 + $0x348] sm:$0xf]
      %v4305 = vld [vmem:[%s4093 + $0x34c] sm:$0xf]
      %v4306 = vld [vmem:[%s4093 + $0x350] sm:$0xf]
      %v4307 = vld [vmem:[%s4093 + $0x354] sm:$0xf]
      %v4308 = vld [vmem:[%s4093 + $0x358] sm:$0xf]
      %v4309 = vld [vmem:[%s4093 + $0x35c] sm:$0xf]
      %v4310 = vld [vmem:[%s4093 + $0x360] sm:$0xf]
      %v4311 = vld [vmem:[%s4093 + $0x364] sm:$0xf]
      %v4312 = vld [vmem:[%s4093 + $0x368] sm:$0xf]
      %v4313 = vld [vmem:[%s4093 + $0x36c] sm:$0xf]
      %v4314 = vld [vmem:[%s4093 + $0x370] sm:$0xf]
      %v4315 = vld [vmem:[%s4093 + $0x374] sm:$0xf]
      %v4316 = vld [vmem:[%s4093 + $0x378] sm:$0xf]
      %v4317 = vld [vmem:[%s4093 + $0x37c] sm:$0xf]
      %v4318 = vld [vmem:[%s4093 + $0x380] sm:$0xf]
      %v4319 = vld [vmem:[%s4093 + $0x384] sm:$0xf]
      %v4320 = vld [vmem:[%s4093 + $0x388] sm:$0xf]
      %v4321 = vld [vmem:[%s4093 + $0x38c] sm:$0xf]
      %v4322 = vld [vmem:[%s4093 + $0x390] sm:$0xf]
      %v4323 = vld [vmem:[%s4093 + $0x394] sm:$0xf]
      %v4324 = vld [vmem:[%s4093 + $0x398] sm:$0xf]
      %v4325 = vld [vmem:[%s4093 + $0x39c] sm:$0xf]
      %v4326 = vld [vmem:[%s4093 + $0x3a0] sm:$0xf]
      %v4327 = vld [vmem:[%s4093 + $0x3a4] sm:$0xf]
      %v4328 = vld [vmem:[%s4093 + $0x3a8] sm:$0xf]
      %v4329 = vld [vmem:[%s4093 + $0x3ac] sm:$0xf]
      %v4330 = vld [vmem:[%s4093 + $0x3b0] sm:$0xf]
      %v4331 = vld [vmem:[%s4093 + $0x3b4] sm:$0xf]
      %v4332 = vld [vmem:[%s4093 + $0x3b8] sm:$0xf]
      %v4333 = vld [vmem:[%s4093 + $0x3bc] sm:$0xf]
      %v4334 = vld [vmem:[%s4093 + $0x3c0] sm:$0xf]
      %v4335 = vld [vmem:[%s4093 + $0x3c4] sm:$0xf]
      %v4336 = vld [vmem:[%s4093 + $0x3c8] sm:$0xf]
      %v4337 = vld [vmem:[%s4093 + $0x3cc] sm:$0xf]
      %v4338 = vld [vmem:[%s4093 + $0x3d0] sm:$0xf]
      %v4339 = vld [vmem:[%s4093 + $0x3d4] sm:$0xf]
      %v4340 = vld [vmem:[%s4093 + $0x3d8] sm:$0xf]
      %v4341 = vld [vmem:[%s4093 + $0x3dc] sm:$0xf]
      %v4342 = vld [vmem:[%s4093 + $0x3e0] sm:$0xf]
      %v4343 = vld [vmem:[%s4093 + $0x3e4] sm:$0xf]
      %v4344 = vld [vmem:[%s4093 + $0x3e8] sm:$0xf]
      %v4345 = vld [vmem:[%s4093 + $0x3ec] sm:$0xf]
      %v4346 = vld [vmem:[%s4093 + $0x3f0] sm:$0xf]
      %v4347 = vld [vmem:[%s4093 + $0x3f4] sm:$0xf]
      %v4348 = vld [vmem:[%s4093 + $0x3f8] sm:$0xf]
      %v4349 = vld [vmem:[%s4093 + $0x3fc] sm:$0xf]
      %s4350 = scalar_lea.vmem %s235, 1
      %v4351 = vld [vmem:[%s4350] sm:$0x1]
      %v4353 = vlaneseq
      %v4354 = vshrl.u32 %v4353, 7
      %v4355 = vsub.s32 0, %v4354
      %v4356 = vrot.slane %v4351, %v4355
      %v4390 = vunpack.c.l.b16 %v4061
      %v4391 = vunpack.c.l.b16 %v4062
      %v4392 = vunpack.c.l.b16 %v4063
      %v4393 = vunpack.c.l.b16 %v4064
      %v4394 = vunpack.c.l.b16 %v4065
      %v4395 = vunpack.c.l.b16 %v4066
      %v4396 = vunpack.c.l.b16 %v4067
      %v4397 = vunpack.c.l.b16 %v4068
      %v4398 = vunpack.c.l.b16 %v4069
      %v4399 = vunpack.c.l.b16 %v4070
      %v4400 = vunpack.c.l.b16 %v4071
      %v4401 = vunpack.c.l.b16 %v4072
      %v4402 = vunpack.c.l.b16 %v4073
      %v4403 = vunpack.c.l.b16 %v4074
      %v4404 = vunpack.c.l.b16 %v4075
      %v4405 = vunpack.c.l.b16 %v4076
      %v4406 = vunpack.c.l.b16 %v4077
      %v4407 = vunpack.c.l.b16 %v4078
      %v4408 = vunpack.c.l.b16 %v4079
      %v4409 = vunpack.c.l.b16 %v4080
      %v4410 = vunpack.c.l.b16 %v4081
      %v4411 = vunpack.c.l.b16 %v4082
      %v4412 = vunpack.c.l.b16 %v4083
      %v4413 = vunpack.c.l.b16 %v4084
      %v4414 = vunpack.c.l.b16 %v4085
      %v4415 = vunpack.c.l.b16 %v4086
      %v4416 = vunpack.c.l.b16 %v4087
      %v4417 = vunpack.c.l.b16 %v4088
      %v4418 = vunpack.c.l.b16 %v4089
      %v4419 = vunpack.c.l.b16 %v4090
      %v4420 = vunpack.c.l.b16 %v4091
      %v4421 = vunpack.c.l.b16 %v4092
      %v4422 = vrot.slane %v4406, 7
      %v4423 = vsel %vm2727, %v4422, %v4390
      %v4424 = vrot.slane %v4407, 7
      %v4425 = vsel %vm2727, %v4424, %v4391
      %v4426 = vrot.slane %v4408, 7
      %v4427 = vsel %vm2727, %v4426, %v4392
      %v4428 = vrot.slane %v4409, 7
      %v4429 = vsel %vm2727, %v4428, %v4393
      %v4430 = vrot.slane %v4410, 7
      %v4431 = vsel %vm2727, %v4430, %v4394
      %v4432 = vrot.slane %v4411, 7
      %v4433 = vsel %vm2727, %v4432, %v4395
      %v4434 = vrot.slane %v4412, 7
      %v4435 = vsel %vm2727, %v4434, %v4396
      %v4436 = vrot.slane %v4413, 7
      %v4437 = vsel %vm2727, %v4436, %v4397
      %v4438 = vrot.slane %v4414, 7
      %v4439 = vsel %vm2727, %v4438, %v4398
      %v4440 = vrot.slane %v4415, 7
      %v4441 = vsel %vm2727, %v4440, %v4399
      %v4442 = vrot.slane %v4416, 7
      %v4443 = vsel %vm2727, %v4442, %v4400
      %v4444 = vrot.slane %v4417, 7
      %v4445 = vsel %vm2727, %v4444, %v4401
      %v4446 = vrot.slane %v4418, 7
      %v4447 = vsel %vm2727, %v4446, %v4402
      %v4448 = vrot.slane %v4419, 7
      %v4449 = vsel %vm2727, %v4448, %v4403
      %v4450 = vrot.slane %v4420, 7
      %v4451 = vsel %vm2727, %v4450, %v4404
      %v4452 = vrot.slane %v4421, 7
      %v4453 = vsel %vm2727, %v4452, %v4405
      %v4454 = vpack.c.b16 %v4423, %v4423
      %v4455 = vpack.c.b16 %v4425, %v4425
      %v4456 = vpack.c.b16 %v4427, %v4427
      %v4457 = vpack.c.b16 %v4429, %v4429
      %v4458 = vpack.c.b16 %v4431, %v4431
      %v4459 = vpack.c.b16 %v4433, %v4433
      %v4460 = vpack.c.b16 %v4435, %v4435
      %v4461 = vpack.c.b16 %v4437, %v4437
      %v4462 = vpack.c.b16 %v4439, %v4439
      %v4463 = vpack.c.b16 %v4441, %v4441
      %v4464 = vpack.c.b16 %v4443, %v4443
      %v4465 = vpack.c.b16 %v4445, %v4445
      %v4466 = vpack.c.b16 %v4447, %v4447
      %v4467 = vpack.c.b16 %v4449, %v4449
      %v4468 = vpack.c.b16 %v4451, %v4451
      %v4469 = vpack.c.b16 %v4453, %v4453
      %v4742 = vunpack.c.l.b16 %v4094
      %v4743 = vunpack.c.l.b16 %v4095
      %v4744 = vunpack.c.l.b16 %v4096
      %v4745 = vunpack.c.l.b16 %v4097
      %v4746 = vunpack.c.l.b16 %v4098
      %v4747 = vunpack.c.l.b16 %v4099
      %v4748 = vunpack.c.l.b16 %v4100
      %v4749 = vunpack.c.l.b16 %v4101
      %v4750 = vunpack.c.l.b16 %v4102
      %v4751 = vunpack.c.l.b16 %v4103
      %v4752 = vunpack.c.l.b16 %v4104
      %v4753 = vunpack.c.l.b16 %v4105
      %v4754 = vunpack.c.l.b16 %v4106
      %v4755 = vunpack.c.l.b16 %v4107
      %v4756 = vunpack.c.l.b16 %v4108
      %v4757 = vunpack.c.l.b16 %v4109
      %v4758 = vunpack.c.l.b16 %v4110
      %v4759 = vunpack.c.l.b16 %v4111
      %v4760 = vunpack.c.l.b16 %v4112
      %v4761 = vunpack.c.l.b16 %v4113
      %v4762 = vunpack.c.l.b16 %v4114
      %v4763 = vunpack.c.l.b16 %v4115
      %v4764 = vunpack.c.l.b16 %v4116
      %v4765 = vunpack.c.l.b16 %v4117
      %v4766 = vunpack.c.l.b16 %v4118
      %v4767 = vunpack.c.l.b16 %v4119
      %v4768 = vunpack.c.l.b16 %v4120
      %v4769 = vunpack.c.l.b16 %v4121
      %v4770 = vunpack.c.l.b16 %v4122
      %v4771 = vunpack.c.l.b16 %v4123
      %v4772 = vunpack.c.l.b16 %v4124
      %v4773 = vunpack.c.l.b16 %v4125
      %v4774 = vunpack.c.l.b16 %v4126
      %v4775 = vunpack.c.l.b16 %v4127
      %v4776 = vunpack.c.l.b16 %v4128
      %v4777 = vunpack.c.l.b16 %v4129
      %v4778 = vunpack.c.l.b16 %v4130
      %v4779 = vunpack.c.l.b16 %v4131
      %v4780 = vunpack.c.l.b16 %v4132
      %v4781 = vunpack.c.l.b16 %v4133
      %v4782 = vunpack.c.l.b16 %v4134
      %v4783 = vunpack.c.l.b16 %v4135
      %v4784 = vunpack.c.l.b16 %v4136
      %v4785 = vunpack.c.l.b16 %v4137
      %v4786 = vunpack.c.l.b16 %v4138
      %v4787 = vunpack.c.l.b16 %v4139
      %v4788 = vunpack.c.l.b16 %v4140
      %v4789 = vunpack.c.l.b16 %v4141
      %v4790 = vunpack.c.l.b16 %v4142
      %v4791 = vunpack.c.l.b16 %v4143
      %v4792 = vunpack.c.l.b16 %v4144
      %v4793 = vunpack.c.l.b16 %v4145
      %v4794 = vunpack.c.l.b16 %v4146
      %v4795 = vunpack.c.l.b16 %v4147
      %v4796 = vunpack.c.l.b16 %v4148
      %v4797 = vunpack.c.l.b16 %v4149
      %v4798 = vunpack.c.l.b16 %v4150
      %v4799 = vunpack.c.l.b16 %v4151
      %v4800 = vunpack.c.l.b16 %v4152
      %v4801 = vunpack.c.l.b16 %v4153
      %v4802 = vunpack.c.l.b16 %v4154
      %v4803 = vunpack.c.l.b16 %v4155
      %v4804 = vunpack.c.l.b16 %v4156
      %v4805 = vunpack.c.l.b16 %v4157
      %v4806 = vunpack.c.l.b16 %v4158
      %v4807 = vunpack.c.l.b16 %v4159
      %v4808 = vunpack.c.l.b16 %v4160
      %v4809 = vunpack.c.l.b16 %v4161
      %v4810 = vunpack.c.l.b16 %v4162
      %v4811 = vunpack.c.l.b16 %v4163
      %v4812 = vunpack.c.l.b16 %v4164
      %v4813 = vunpack.c.l.b16 %v4165
      %v4814 = vunpack.c.l.b16 %v4166
      %v4815 = vunpack.c.l.b16 %v4167
      %v4816 = vunpack.c.l.b16 %v4168
      %v4817 = vunpack.c.l.b16 %v4169
      %v4818 = vunpack.c.l.b16 %v4170
      %v4819 = vunpack.c.l.b16 %v4171
      %v4820 = vunpack.c.l.b16 %v4172
      %v4821 = vunpack.c.l.b16 %v4173
      %v4822 = vunpack.c.l.b16 %v4174
      %v4823 = vunpack.c.l.b16 %v4175
      %v4824 = vunpack.c.l.b16 %v4176
      %v4825 = vunpack.c.l.b16 %v4177
      %v4826 = vunpack.c.l.b16 %v4178
      %v4827 = vunpack.c.l.b16 %v4179
      %v4828 = vunpack.c.l.b16 %v4180
      %v4829 = vunpack.c.l.b16 %v4181
      %v4830 = vunpack.c.l.b16 %v4182
      %v4831 = vunpack.c.l.b16 %v4183
      %v4832 = vunpack.c.l.b16 %v4184
      %v4833 = vunpack.c.l.b16 %v4185
      %v4834 = vunpack.c.l.b16 %v4186
      %v4835 = vunpack.c.l.b16 %v4187
      %v4836 = vunpack.c.l.b16 %v4188
      %v4837 = vunpack.c.l.b16 %v4189
      %v4838 = vunpack.c.l.b16 %v4190
      %v4839 = vunpack.c.l.b16 %v4191
      %v4840 = vunpack.c.l.b16 %v4192
      %v4841 = vunpack.c.l.b16 %v4193
      %v4842 = vunpack.c.l.b16 %v4194
      %v4843 = vunpack.c.l.b16 %v4195
      %v4844 = vunpack.c.l.b16 %v4196
      %v4845 = vunpack.c.l.b16 %v4197
      %v4846 = vunpack.c.l.b16 %v4198
      %v4847 = vunpack.c.l.b16 %v4199
      %v4848 = vunpack.c.l.b16 %v4200
      %v4849 = vunpack.c.l.b16 %v4201
      %v4850 = vunpack.c.l.b16 %v4202
      %v4851 = vunpack.c.l.b16 %v4203
      %v4852 = vunpack.c.l.b16 %v4204
      %v4853 = vunpack.c.l.b16 %v4205
      %v4854 = vunpack.c.l.b16 %v4206
      %v4855 = vunpack.c.l.b16 %v4207
      %v4856 = vunpack.c.l.b16 %v4208
      %v4857 = vunpack.c.l.b16 %v4209
      %v4858 = vunpack.c.l.b16 %v4210
      %v4859 = vunpack.c.l.b16 %v4211
      %v4860 = vunpack.c.l.b16 %v4212
      %v4861 = vunpack.c.l.b16 %v4213
      %v4862 = vunpack.c.l.b16 %v4214
      %v4863 = vunpack.c.l.b16 %v4215
      %v4864 = vunpack.c.l.b16 %v4216
      %v4865 = vunpack.c.l.b16 %v4217
      %v4866 = vunpack.c.l.b16 %v4218
      %v4867 = vunpack.c.l.b16 %v4219
      %v4868 = vunpack.c.l.b16 %v4220
      %v4869 = vunpack.c.l.b16 %v4221
      %v4870 = vunpack.c.l.b16 %v4222
      %v4871 = vunpack.c.l.b16 %v4223
      %v4872 = vunpack.c.l.b16 %v4224
      %v4873 = vunpack.c.l.b16 %v4225
      %v4874 = vunpack.c.l.b16 %v4226
      %v4875 = vunpack.c.l.b16 %v4227
      %v4876 = vunpack.c.l.b16 %v4228
      %v4877 = vunpack.c.l.b16 %v4229
      %v4878 = vunpack.c.l.b16 %v4230
      %v4879 = vunpack.c.l.b16 %v4231
      %v4880 = vunpack.c.l.b16 %v4232
      %v4881 = vunpack.c.l.b16 %v4233
      %v4882 = vunpack.c.l.b16 %v4234
      %v4883 = vunpack.c.l.b16 %v4235
      %v4884 = vunpack.c.l.b16 %v4236
      %v4885 = vunpack.c.l.b16 %v4237
      %v4886 = vunpack.c.l.b16 %v4238
      %v4887 = vunpack.c.l.b16 %v4239
      %v4888 = vunpack.c.l.b16 %v4240
      %v4889 = vunpack.c.l.b16 %v4241
      %v4890 = vunpack.c.l.b16 %v4242
      %v4891 = vunpack.c.l.b16 %v4243
      %v4892 = vunpack.c.l.b16 %v4244
      %v4893 = vunpack.c.l.b16 %v4245
      %v4894 = vunpack.c.l.b16 %v4246
      %v4895 = vunpack.c.l.b16 %v4247
      %v4896 = vunpack.c.l.b16 %v4248
      %v4897 = vunpack.c.l.b16 %v4249
      %v4898 = vunpack.c.l.b16 %v4250
      %v4899 = vunpack.c.l.b16 %v4251
      %v4900 = vunpack.c.l.b16 %v4252
      %v4901 = vunpack.c.l.b16 %v4253
      %v4902 = vunpack.c.l.b16 %v4254
      %v4903 = vunpack.c.l.b16 %v4255
      %v4904 = vunpack.c.l.b16 %v4256
      %v4905 = vunpack.c.l.b16 %v4257
      %v4906 = vunpack.c.l.b16 %v4258
      %v4907 = vunpack.c.l.b16 %v4259
      %v4908 = vunpack.c.l.b16 %v4260
      %v4909 = vunpack.c.l.b16 %v4261
      %v4910 = vunpack.c.l.b16 %v4262
      %v4911 = vunpack.c.l.b16 %v4263
      %v4912 = vunpack.c.l.b16 %v4264
      %v4913 = vunpack.c.l.b16 %v4265
      %v4914 = vunpack.c.l.b16 %v4266
      %v4915 = vunpack.c.l.b16 %v4267
      %v4916 = vunpack.c.l.b16 %v4268
      %v4917 = vunpack.c.l.b16 %v4269
      %v4918 = vunpack.c.l.b16 %v4270
      %v4919 = vunpack.c.l.b16 %v4271
      %v4920 = vunpack.c.l.b16 %v4272
      %v4921 = vunpack.c.l.b16 %v4273
      %v4922 = vunpack.c.l.b16 %v4274
      %v4923 = vunpack.c.l.b16 %v4275
      %v4924 = vunpack.c.l.b16 %v4276
      %v4925 = vunpack.c.l.b16 %v4277
      %v4926 = vunpack.c.l.b16 %v4278
      %v4927 = vunpack.c.l.b16 %v4279
      %v4928 = vunpack.c.l.b16 %v4280
      %v4929 = vunpack.c.l.b16 %v4281
      %v4930 = vunpack.c.l.b16 %v4282
      %v4931 = vunpack.c.l.b16 %v4283
      %v4932 = vunpack.c.l.b16 %v4284
      %v4933 = vunpack.c.l.b16 %v4285
      %v4934 = vunpack.c.l.b16 %v4286
      %v4935 = vunpack.c.l.b16 %v4287
      %v4936 = vunpack.c.l.b16 %v4288
      %v4937 = vunpack.c.l.b16 %v4289
      %v4938 = vunpack.c.l.b16 %v4290
      %v4939 = vunpack.c.l.b16 %v4291
      %v4940 = vunpack.c.l.b16 %v4292
      %v4941 = vunpack.c.l.b16 %v4293
      %v4942 = vunpack.c.l.b16 %v4294
      %v4943 = vunpack.c.l.b16 %v4295
      %v4944 = vunpack.c.l.b16 %v4296
      %v4945 = vunpack.c.l.b16 %v4297
      %v4946 = vunpack.c.l.b16 %v4298
      %v4947 = vunpack.c.l.b16 %v4299
      %v4948 = vunpack.c.l.b16 %v4300
      %v4949 = vunpack.c.l.b16 %v4301
      %v4950 = vunpack.c.l.b16 %v4302
      %v4951 = vunpack.c.l.b16 %v4303
      %v4952 = vunpack.c.l.b16 %v4304
      %v4953 = vunpack.c.l.b16 %v4305
      %v4954 = vunpack.c.l.b16 %v4306
      %v4955 = vunpack.c.l.b16 %v4307
      %v4956 = vunpack.c.l.b16 %v4308
      %v4957 = vunpack.c.l.b16 %v4309
      %v4958 = vunpack.c.l.b16 %v4310
      %v4959 = vunpack.c.l.b16 %v4311
      %v4960 = vunpack.c.l.b16 %v4312
      %v4961 = vunpack.c.l.b16 %v4313
      %v4962 = vunpack.c.l.b16 %v4314
      %v4963 = vunpack.c.l.b16 %v4315
      %v4964 = vunpack.c.l.b16 %v4316
      %v4965 = vunpack.c.l.b16 %v4317
      %v4966 = vunpack.c.l.b16 %v4318
      %v4967 = vunpack.c.l.b16 %v4319
      %v4968 = vunpack.c.l.b16 %v4320
      %v4969 = vunpack.c.l.b16 %v4321
      %v4970 = vunpack.c.l.b16 %v4322
      %v4971 = vunpack.c.l.b16 %v4323
      %v4972 = vunpack.c.l.b16 %v4324
      %v4973 = vunpack.c.l.b16 %v4325
      %v4974 = vunpack.c.l.b16 %v4326
      %v4975 = vunpack.c.l.b16 %v4327
      %v4976 = vunpack.c.l.b16 %v4328
      %v4977 = vunpack.c.l.b16 %v4329
      %v4978 = vunpack.c.l.b16 %v4330
      %v4979 = vunpack.c.l.b16 %v4331
      %v4980 = vunpack.c.l.b16 %v4332
      %v4981 = vunpack.c.l.b16 %v4333
      %v4982 = vunpack.c.l.b16 %v4334
      %v4983 = vunpack.c.l.b16 %v4335
      %v4984 = vunpack.c.l.b16 %v4336
      %v4985 = vunpack.c.l.b16 %v4337
      %v4986 = vunpack.c.l.b16 %v4338
      %v4987 = vunpack.c.l.b16 %v4339
      %v4988 = vunpack.c.l.b16 %v4340
      %v4989 = vunpack.c.l.b16 %v4341
      %v4990 = vunpack.c.l.b16 %v4342
      %v4991 = vunpack.c.l.b16 %v4343
      %v4992 = vunpack.c.l.b16 %v4344
      %v4993 = vunpack.c.l.b16 %v4345
      %v4994 = vunpack.c.l.b16 %v4346
      %v4995 = vunpack.c.l.b16 %v4347
      %v4996 = vunpack.c.l.b16 %v4348
      %v4997 = vunpack.c.l.b16 %v4349
      %v4998 = vpack.c.b16 %v4743, %v4742
      %v4999 = vpack.c.b16 %v4745, %v4744
      %v5000 = vpack.c.b16 %v4747, %v4746
      %v5001 = vpack.c.b16 %v4749, %v4748
      %v5002 = vpack.c.b16 %v4751, %v4750
      %v5003 = vpack.c.b16 %v4753, %v4752
      %v5004 = vpack.c.b16 %v4755, %v4754
      %v5005 = vpack.c.b16 %v4757, %v4756
      %v5006 = vpack.c.b16 %v4759, %v4758
      %v5007 = vpack.c.b16 %v4761, %v4760
      %v5008 = vpack.c.b16 %v4763, %v4762
      %v5009 = vpack.c.b16 %v4765, %v4764
      %v5010 = vpack.c.b16 %v4767, %v4766
      %v5011 = vpack.c.b16 %v4769, %v4768
      %v5012 = vpack.c.b16 %v4771, %v4770
      %v5013 = vpack.c.b16 %v4773, %v4772
      %v5014 = vpack.c.b16 %v4775, %v4774
      %v5015 = vpack.c.b16 %v4777, %v4776
      %v5016 = vpack.c.b16 %v4779, %v4778
      %v5017 = vpack.c.b16 %v4781, %v4780
      %v5018 = vpack.c.b16 %v4783, %v4782
      %v5019 = vpack.c.b16 %v4785, %v4784
      %v5020 = vpack.c.b16 %v4787, %v4786
      %v5021 = vpack.c.b16 %v4789, %v4788
      %v5022 = vpack.c.b16 %v4791, %v4790
      %v5023 = vpack.c.b16 %v4793, %v4792
      %v5024 = vpack.c.b16 %v4795, %v4794
      %v5025 = vpack.c.b16 %v4797, %v4796
      %v5026 = vpack.c.b16 %v4799, %v4798
      %v5027 = vpack.c.b16 %v4801, %v4800
      %v5028 = vpack.c.b16 %v4803, %v4802
      %v5029 = vpack.c.b16 %v4805, %v4804
      %v5030 = vpack.c.b16 %v4807, %v4806
      %v5031 = vpack.c.b16 %v4809, %v4808
      %v5032 = vpack.c.b16 %v4811, %v4810
      %v5033 = vpack.c.b16 %v4813, %v4812
      %v5034 = vpack.c.b16 %v4815, %v4814
      %v5035 = vpack.c.b16 %v4817, %v4816
      %v5036 = vpack.c.b16 %v4819, %v4818
      %v5037 = vpack.c.b16 %v4821, %v4820
      %v5038 = vpack.c.b16 %v4823, %v4822
      %v5039 = vpack.c.b16 %v4825, %v4824
      %v5040 = vpack.c.b16 %v4827, %v4826
      %v5041 = vpack.c.b16 %v4829, %v4828
      %v5042 = vpack.c.b16 %v4831, %v4830
      %v5043 = vpack.c.b16 %v4833, %v4832
      %v5044 = vpack.c.b16 %v4835, %v4834
      %v5045 = vpack.c.b16 %v4837, %v4836
      %v5046 = vpack.c.b16 %v4839, %v4838
      %v5047 = vpack.c.b16 %v4841, %v4840
      %v5048 = vpack.c.b16 %v4843, %v4842
      %v5049 = vpack.c.b16 %v4845, %v4844
      %v5050 = vpack.c.b16 %v4847, %v4846
      %v5051 = vpack.c.b16 %v4849, %v4848
      %v5052 = vpack.c.b16 %v4851, %v4850
      %v5053 = vpack.c.b16 %v4853, %v4852
      %v5054 = vpack.c.b16 %v4855, %v4854
      %v5055 = vpack.c.b16 %v4857, %v4856
      %v5056 = vpack.c.b16 %v4859, %v4858
      %v5057 = vpack.c.b16 %v4861, %v4860
      %v5058 = vpack.c.b16 %v4863, %v4862
      %v5059 = vpack.c.b16 %v4865, %v4864
      %v5060 = vpack.c.b16 %v4867, %v4866
      %v5061 = vpack.c.b16 %v4869, %v4868
      %v5062 = vpack.c.b16 %v4871, %v4870
      %v5063 = vpack.c.b16 %v4873, %v4872
      %v5064 = vpack.c.b16 %v4875, %v4874
      %v5065 = vpack.c.b16 %v4877, %v4876
      %v5066 = vpack.c.b16 %v4879, %v4878
      %v5067 = vpack.c.b16 %v4881, %v4880
      %v5068 = vpack.c.b16 %v4883, %v4882
      %v5069 = vpack.c.b16 %v4885, %v4884
      %v5070 = vpack.c.b16 %v4887, %v4886
      %v5071 = vpack.c.b16 %v4889, %v4888
      %v5072 = vpack.c.b16 %v4891, %v4890
      %v5073 = vpack.c.b16 %v4893, %v4892
      %v5074 = vpack.c.b16 %v4895, %v4894
      %v5075 = vpack.c.b16 %v4897, %v4896
      %v5076 = vpack.c.b16 %v4899, %v4898
      %v5077 = vpack.c.b16 %v4901, %v4900
      %v5078 = vpack.c.b16 %v4903, %v4902
      %v5079 = vpack.c.b16 %v4905, %v4904
      %v5080 = vpack.c.b16 %v4907, %v4906
      %v5081 = vpack.c.b16 %v4909, %v4908
      %v5082 = vpack.c.b16 %v4911, %v4910
      %v5083 = vpack.c.b16 %v4913, %v4912
      %v5084 = vpack.c.b16 %v4915, %v4914
      %v5085 = vpack.c.b16 %v4917, %v4916
      %v5086 = vpack.c.b16 %v4919, %v4918
      %v5087 = vpack.c.b16 %v4921, %v4920
      %v5088 = vpack.c.b16 %v4923, %v4922
      %v5089 = vpack.c.b16 %v4925, %v4924
      %v5090 = vpack.c.b16 %v4927, %v4926
      %v5091 = vpack.c.b16 %v4929, %v4928
      %v5092 = vpack.c.b16 %v4931, %v4930
      %v5093 = vpack.c.b16 %v4933, %v4932
      %v5094 = vpack.c.b16 %v4935, %v4934
      %v5095 = vpack.c.b16 %v4937, %v4936
      %v5096 = vpack.c.b16 %v4939, %v4938
      %v5097 = vpack.c.b16 %v4941, %v4940
      %v5098 = vpack.c.b16 %v4943, %v4942
      %v5099 = vpack.c.b16 %v4945, %v4944
      %v5100 = vpack.c.b16 %v4947, %v4946
      %v5101 = vpack.c.b16 %v4949, %v4948
      %v5102 = vpack.c.b16 %v4951, %v4950
      %v5103 = vpack.c.b16 %v4953, %v4952
      %v5104 = vpack.c.b16 %v4955, %v4954
      %v5105 = vpack.c.b16 %v4957, %v4956
      %v5106 = vpack.c.b16 %v4959, %v4958
      %v5107 = vpack.c.b16 %v4961, %v4960
      %v5108 = vpack.c.b16 %v4963, %v4962
      %v5109 = vpack.c.b16 %v4965, %v4964
      %v5110 = vpack.c.b16 %v4967, %v4966
      %v5111 = vpack.c.b16 %v4969, %v4968
      %v5112 = vpack.c.b16 %v4971, %v4970
      %v5113 = vpack.c.b16 %v4973, %v4972
      %v5114 = vpack.c.b16 %v4975, %v4974
      %v5115 = vpack.c.b16 %v4977, %v4976
      %v5116 = vpack.c.b16 %v4979, %v4978
      %v5117 = vpack.c.b16 %v4981, %v4980
      %v5118 = vpack.c.b16 %v4983, %v4982
      %v5119 = vpack.c.b16 %v4985, %v4984
      %v5120 = vpack.c.b16 %v4987, %v4986
      %v5121 = vpack.c.b16 %v4989, %v4988
      %v5122 = vpack.c.b16 %v4991, %v4990
      %v5123 = vpack.c.b16 %v4993, %v4992
      %v5124 = vpack.c.b16 %v4995, %v4994
      %v5125 = vpack.c.b16 %v4997, %v4996
      %5254 = vmatprep.subr.bf16.mxu0 0
      %5255 = vmatpush1.bf16.msra.mxu0 %v5005
      %5256 = vmatprep.subr.bf16.mxu0 0
      %5257 = vmatpush1.bf16.msra.mxu0 %v5004
      %5258 = vmatprep.subr.bf16.mxu0 0
      %5259 = vmatpush1.bf16.msra.mxu0 %v5003
      %5260 = vmatprep.subr.bf16.mxu0 0
      %5261 = vmatpush1.bf16.msra.mxu0 %v5002
      %5262 = vmatprep.subr.bf16.mxu0 0
      %5263 = vmatpush1.bf16.msra.mxu0 %v5001
      %5264 = vmatprep.subr.bf16.mxu0 0
      %5265 = vmatpush1.bf16.msra.mxu0 %v5000
      %5266 = vmatprep.subr.bf16.mxu0 0
      %5267 = vmatpush1.bf16.msra.mxu0 %v4999
      %5268 = vmatprep.subr.bf16.mxu0 0
      %5269 = vmatpush1.bf16.msra.mxu0 %v4998
      %5270 = vmatprep.subr.bf16.mxu0 0
      %5271 = vmatpush2.bf16.msra.mxu0 %v5013
      %5272 = vmatprep.subr.bf16.mxu0 0
      %5273 = vmatpush2.bf16.msra.mxu0 %v5012
      %5274 = vmatprep.subr.bf16.mxu0 0
      %5275 = vmatpush2.bf16.msra.mxu0 %v5011
      %5276 = vmatprep.subr.bf16.mxu0 0
      %5277 = vmatpush2.bf16.msra.mxu0 %v5010
      %5278 = vmatprep.subr.bf16.mxu0 0
      %5279 = vmatpush2.bf16.msra.mxu0 %v5009
      %5280 = vmatprep.subr.bf16.mxu0 0
      %5281 = vmatpush2.bf16.msra.mxu0 %v5008
      %5282 = vmatprep.subr.bf16.mxu0 0
      %5283 = vmatpush2.bf16.msra.mxu0 %v5007
      %5284 = vmatprep.subr.bf16.mxu0 0
      %5285 = vmatpush2.bf16.msra.mxu0 %v5006
      %5286 = vmatprep.mubr.bf16.mxu0 %v4455
      %5287 = vmatmul.mubr.bf16.gmra.mxu0 %v4454
      %v5288 = vpop.f32.mrf.mxu0
      %v5289 = vadd.f32 %v4356, %v5288
      %v5290 = vpop.f32.mrf.mxu0
      %v5291 = vpop.f32.mrf.mxu0
      %v5292 = vpop.f32.mrf.mxu0
      %5293 = vdwg.mxu0
      %5294 = vmatprep.subr.bf16.mxu0 0
      %5295 = vmatpush1.bf16.msra.mxu0 %v5021
      %5296 = vmatprep.subr.bf16.mxu0 0
      %5297 = vmatpush1.bf16.msra.mxu0 %v5020
      %5298 = vmatprep.subr.bf16.mxu0 0
      %5299 = vmatpush1.bf16.msra.mxu0 %v5019
      %5300 = vmatprep.subr.bf16.mxu0 0
      %5301 = vmatpush1.bf16.msra.mxu0 %v5018
      %5302 = vmatprep.subr.bf16.mxu0 0
      %5303 = vmatpush1.bf16.msra.mxu0 %v5017
      %5304 = vmatprep.subr.bf16.mxu0 0
      %5305 = vmatpush1.bf16.msra.mxu0 %v5016
      %5306 = vmatprep.subr.bf16.mxu0 0
      %5307 = vmatpush1.bf16.msra.mxu0 %v5015
      %5308 = vmatprep.subr.bf16.mxu0 0
      %5309 = vmatpush1.bf16.msra.mxu0 %v5014
      %5310 = vmatprep.subr.bf16.mxu0 0
      %5311 = vmatpush2.bf16.msra.mxu0 %v5029
      %5312 = vmatprep.subr.bf16.mxu0 0
      %5313 = vmatpush2.bf16.msra.mxu0 %v5028
      %5314 = vmatprep.subr.bf16.mxu0 0
      %5315 = vmatpush2.bf16.msra.mxu0 %v5027
      %5316 = vmatprep.subr.bf16.mxu0 0
      %5317 = vmatpush2.bf16.msra.mxu0 %v5026
      %5318 = vmatprep.subr.bf16.mxu0 0
      %5319 = vmatpush2.bf16.msra.mxu0 %v5025
      %5320 = vmatprep.subr.bf16.mxu0 0
      %5321 = vmatpush2.bf16.msra.mxu0 %v5024
      %5322 = vmatprep.subr.bf16.mxu0 0
      %5323 = vmatpush2.bf16.msra.mxu0 %v5023
      %5324 = vmatprep.subr.bf16.mxu0 0
      %5325 = vmatpush2.bf16.msra.mxu0 %v5022
      %5326 = vmatprep.mubr.bf16.mxu0 %v4457
      %5327 = vmatmul.mubr.bf16.gmra.mxu0 %v4456
      %v5328 = vpop.f32.mrf.mxu0
      %v5329 = vadd.f32 %v5289, %v5328
      %v5330 = vpop.f32.mrf.mxu0
      %v5331 = vpop.f32.mrf.mxu0
      %v5332 = vpop.f32.mrf.mxu0
      %5333 = vdwg.mxu0
      %5334 = vmatprep.subr.bf16.mxu0 0
      %5335 = vmatpush1.bf16.msra.mxu0 %v5037
      %5336 = vmatprep.subr.bf16.mxu0 0
      %5337 = vmatpush1.bf16.msra.mxu0 %v5036
      %5338 = vmatprep.subr.bf16.mxu0 0
      %5339 = vmatpush1.bf16.msra.mxu0 %v5035
      %5340 = vmatprep.subr.bf16.mxu0 0
      %5341 = vmatpush1.bf16.msra.mxu0 %v5034
      %5342 = vmatprep.subr.bf16.mxu0 0
      %5343 = vmatpush1.bf16.msra.mxu0 %v5033
      %5344 = vmatprep.subr.bf16.mxu0 0
      %5345 = vmatpush1.bf16.msra.mxu0 %v5032
      %5346 = vmatprep.subr.bf16.mxu0 0
      %5347 = vmatpush1.bf16.msra.mxu0 %v5031
      %5348 = vmatprep.subr.bf16.mxu0 0
      %5349 = vmatpush1.bf16.msra.mxu0 %v5030
      %5350 = vmatprep.subr.bf16.mxu0 0
      %5351 = vmatpush2.bf16.msra.mxu0 %v5045
      %5352 = vmatprep.subr.bf16.mxu0 0
      %5353 = vmatpush2.bf16.msra.mxu0 %v5044
      %5354 = vmatprep.subr.bf16.mxu0 0
      %5355 = vmatpush2.bf16.msra.mxu0 %v5043
      %5356 = vmatprep.subr.bf16.mxu0 0
      %5357 = vmatpush2.bf16.msra.mxu0 %v5042
      %5358 = vmatprep.subr.bf16.mxu0 0
      %5359 = vmatpush2.bf16.msra.mxu0 %v5041
      %5360 = vmatprep.subr.bf16.mxu0 0
      %5361 = vmatpush2.bf16.msra.mxu0 %v5040
      %5362 = vmatprep.subr.bf16.mxu0 0
      %5363 = vmatpush2.bf16.msra.mxu0 %v5039
      %5364 = vmatprep.subr.bf16.mxu0 0
      %5365 = vmatpush2.bf16.msra.mxu0 %v5038
      %5366 = vmatprep.mubr.bf16.mxu0 %v4459
      %5367 = vmatmul.mubr.bf16.gmra.mxu0 %v4458
      %v5368 = vpop.f32.mrf.mxu0
      %v5369 = vadd.f32 %v5329, %v5368
      %v5370 = vpop.f32.mrf.mxu0
      %v5371 = vpop.f32.mrf.mxu0
      %v5372 = vpop.f32.mrf.mxu0
      %5373 = vdwg.mxu0
      %5374 = vmatprep.subr.bf16.mxu0 0
      %5375 = vmatpush1.bf16.msra.mxu0 %v5053
      %5376 = vmatprep.subr.bf16.mxu0 0
      %5377 = vmatpush1.bf16.msra.mxu0 %v5052
      %5378 = vmatprep.subr.bf16.mxu0 0
      %5379 = vmatpush1.bf16.msra.mxu0 %v5051
      %5380 = vmatprep.subr.bf16.mxu0 0
      %5381 = vmatpush1.bf16.msra.mxu0 %v5050
      %5382 = vmatprep.subr.bf16.mxu0 0
      %5383 = vmatpush1.bf16.msra.mxu0 %v5049
      %5384 = vmatprep.subr.bf16.mxu0 0
      %5385 = vmatpush1.bf16.msra.mxu0 %v5048
      %5386 = vmatprep.subr.bf16.mxu0 0
      %5387 = vmatpush1.bf16.msra.mxu0 %v5047
      %5388 = vmatprep.subr.bf16.mxu0 0
      %5389 = vmatpush1.bf16.msra.mxu0 %v5046
      %5390 = vmatprep.subr.bf16.mxu0 0
      %5391 = vmatpush2.bf16.msra.mxu0 %v5061
      %5392 = vmatprep.subr.bf16.mxu0 0
      %5393 = vmatpush2.bf16.msra.mxu0 %v5060
      %5394 = vmatprep.subr.bf16.mxu0 0
      %5395 = vmatpush2.bf16.msra.mxu0 %v5059
      %5396 = vmatprep.subr.bf16.mxu0 0
      %5397 = vmatpush2.bf16.msra.mxu0 %v5058
      %5398 = vmatprep.subr.bf16.mxu0 0
      %5399 = vmatpush2.bf16.msra.mxu0 %v5057
      %5400 = vmatprep.subr.bf16.mxu0 0
      %5401 = vmatpush2.bf16.msra.mxu0 %v5056
      %5402 = vmatprep.subr.bf16.mxu0 0
      %5403 = vmatpush2.bf16.msra.mxu0 %v5055
      %5404 = vmatprep.subr.bf16.mxu0 0
      %5405 = vmatpush2.bf16.msra.mxu0 %v5054
      %5406 = vmatprep.mubr.bf16.mxu0 %v4461
      %5407 = vmatmul.mubr.bf16.gmra.mxu0 %v4460
      %v5408 = vpop.f32.mrf.mxu0
      %v5409 = vadd.f32 %v5369, %v5408
      %v5410 = vpop.f32.mrf.mxu0
      %v5411 = vpop.f32.mrf.mxu0
      %v5412 = vpop.f32.mrf.mxu0
      %5413 = vdwg.mxu0
      %5414 = vmatprep.subr.bf16.mxu0 0
      %5415 = vmatpush1.bf16.msra.mxu0 %v5069
      %5416 = vmatprep.subr.bf16.mxu0 0
      %5417 = vmatpush1.bf16.msra.mxu0 %v5068
      %5418 = vmatprep.subr.bf16.mxu0 0
      %5419 = vmatpush1.bf16.msra.mxu0 %v5067
      %5420 = vmatprep.subr.bf16.mxu0 0
      %5421 = vmatpush1.bf16.msra.mxu0 %v5066
      %5422 = vmatprep.subr.bf16.mxu0 0
      %5423 = vmatpush1.bf16.msra.mxu0 %v5065
      %5424 = vmatprep.subr.bf16.mxu0 0
      %5425 = vmatpush1.bf16.msra.mxu0 %v5064
      %5426 = vmatprep.subr.bf16.mxu0 0
      %5427 = vmatpush1.bf16.msra.mxu0 %v5063
      %5428 = vmatprep.subr.bf16.mxu0 0
      %5429 = vmatpush1.bf16.msra.mxu0 %v5062
      %5430 = vmatprep.subr.bf16.mxu0 0
      %5431 = vmatpush2.bf16.msra.mxu0 %v5077
      %5432 = vmatprep.subr.bf16.mxu0 0
      %5433 = vmatpush2.bf16.msra.mxu0 %v5076
      %5434 = vmatprep.subr.bf16.mxu0 0
      %5435 = vmatpush2.bf16.msra.mxu0 %v5075
      %5436 = vmatprep.subr.bf16.mxu0 0
      %5437 = vmatpush2.bf16.msra.mxu0 %v5074
      %5438 = vmatprep.subr.bf16.mxu0 0
      %5439 = vmatpush2.bf16.msra.mxu0 %v5073
      %5440 = vmatprep.subr.bf16.mxu0 0
      %5441 = vmatpush2.bf16.msra.mxu0 %v5072
      %5442 = vmatprep.subr.bf16.mxu0 0
      %5443 = vmatpush2.bf16.msra.mxu0 %v5071
      %5444 = vmatprep.subr.bf16.mxu0 0
      %5445 = vmatpush2.bf16.msra.mxu0 %v5070
      %5446 = vmatprep.mubr.bf16.mxu0 %v4463
      %5447 = vmatmul.mubr.bf16.gmra.mxu0 %v4462
      %v5448 = vpop.f32.mrf.mxu0
      %v5449 = vadd.f32 %v5409, %v5448
      %v5450 = vpop.f32.mrf.mxu0
      %v5451 = vpop.f32.mrf.mxu0
      %v5452 = vpop.f32.mrf.mxu0
      %5453 = vdwg.mxu0
      %5454 = vmatprep.subr.bf16.mxu0 0
      %5455 = vmatpush1.bf16.msra.mxu0 %v5085
      %5456 = vmatprep.subr.bf16.mxu0 0
      %5457 = vmatpush1.bf16.msra.mxu0 %v5084
      %5458 = vmatprep.subr.bf16.mxu0 0
      %5459 = vmatpush1.bf16.msra.mxu0 %v5083
      %5460 = vmatprep.subr.bf16.mxu0 0
      %5461 = vmatpush1.bf16.msra.mxu0 %v5082
      %5462 = vmatprep.subr.bf16.mxu0 0
      %5463 = vmatpush1.bf16.msra.mxu0 %v5081
      %5464 = vmatprep.subr.bf16.mxu0 0
      %5465 = vmatpush1.bf16.msra.mxu0 %v5080
      %5466 = vmatprep.subr.bf16.mxu0 0
      %5467 = vmatpush1.bf16.msra.mxu0 %v5079
      %5468 = vmatprep.subr.bf16.mxu0 0
      %5469 = vmatpush1.bf16.msra.mxu0 %v5078
      %5470 = vmatprep.subr.bf16.mxu0 0
      %5471 = vmatpush2.bf16.msra.mxu0 %v5093
      %5472 = vmatprep.subr.bf16.mxu0 0
      %5473 = vmatpush2.bf16.msra.mxu0 %v5092
      %5474 = vmatprep.subr.bf16.mxu0 0
      %5475 = vmatpush2.bf16.msra.mxu0 %v5091
      %5476 = vmatprep.subr.bf16.mxu0 0
      %5477 = vmatpush2.bf16.msra.mxu0 %v5090
      %5478 = vmatprep.subr.bf16.mxu0 0
      %5479 = vmatpush2.bf16.msra.mxu0 %v5089
      %5480 = vmatprep.subr.bf16.mxu0 0
      %5481 = vmatpush2.bf16.msra.mxu0 %v5088
      %5482 = vmatprep.subr.bf16.mxu0 0
      %5483 = vmatpush2.bf16.msra.mxu0 %v5087
      %5484 = vmatprep.subr.bf16.mxu0 0
      %5485 = vmatpush2.bf16.msra.mxu0 %v5086
      %5486 = vmatprep.mubr.bf16.mxu0 %v4465
      %5487 = vmatmul.mubr.bf16.gmra.mxu0 %v4464
      %v5488 = vpop.f32.mrf.mxu0
      %v5489 = vadd.f32 %v5449, %v5488
      %v5490 = vpop.f32.mrf.mxu0
      %v5491 = vpop.f32.mrf.mxu0
      %v5492 = vpop.f32.mrf.mxu0
      %5493 = vdwg.mxu0
      %5494 = vmatprep.subr.bf16.mxu0 0
      %5495 = vmatpush1.bf16.msra.mxu0 %v5101
      %5496 = vmatprep.subr.bf16.mxu0 0
      %5497 = vmatpush1.bf16.msra.mxu0 %v5100
      %5498 = vmatprep.subr.bf16.mxu0 0
      %5499 = vmatpush1.bf16.msra.mxu0 %v5099
      %5500 = vmatprep.subr.bf16.mxu0 0
      %5501 = vmatpush1.bf16.msra.mxu0 %v5098
      %5502 = vmatprep.subr.bf16.mxu0 0
      %5503 = vmatpush1.bf16.msra.mxu0 %v5097
      %5504 = vmatprep.subr.bf16.mxu0 0
      %5505 = vmatpush1.bf16.msra.mxu0 %v5096
      %5506 = vmatprep.subr.bf16.mxu0 0
      %5507 = vmatpush1.bf16.msra.mxu0 %v5095
      %5508 = vmatprep.subr.bf16.mxu0 0
      %5509 = vmatpush1.bf16.msra.mxu0 %v5094
      %5510 = vmatprep.subr.bf16.mxu0 0
      %5511 = vmatpush2.bf16.msra.mxu0 %v5109
      %5512 = vmatprep.subr.bf16.mxu0 0
      %5513 = vmatpush2.bf16.msra.mxu0 %v5108
      %5514 = vmatprep.subr.bf16.mxu0 0
      %5515 = vmatpush2.bf16.msra.mxu0 %v5107
      %5516 = vmatprep.subr.bf16.mxu0 0
      %5517 = vmatpush2.bf16.msra.mxu0 %v5106
      %5518 = vmatprep.subr.bf16.mxu0 0
      %5519 = vmatpush2.bf16.msra.mxu0 %v5105
      %5520 = vmatprep.subr.bf16.mxu0 0
      %5521 = vmatpush2.bf16.msra.mxu0 %v5104
      %5522 = vmatprep.subr.bf16.mxu0 0
      %5523 = vmatpush2.bf16.msra.mxu0 %v5103
      %5524 = vmatprep.subr.bf16.mxu0 0
      %5525 = vmatpush2.bf16.msra.mxu0 %v5102
      %5526 = vmatprep.mubr.bf16.mxu0 %v4467
      %5527 = vmatmul.mubr.bf16.gmra.mxu0 %v4466
      %v5528 = vpop.f32.mrf.mxu0
      %v5529 = vadd.f32 %v5489, %v5528
      %v5530 = vpop.f32.mrf.mxu0
      %v5531 = vpop.f32.mrf.mxu0
      %v5532 = vpop.f32.mrf.mxu0
      %5533 = vdwg.mxu0
      %5534 = vmatprep.subr.bf16.mxu0 0
      %5535 = vmatpush1.bf16.msra.mxu0 %v5117
      %5536 = vmatprep.subr.bf16.mxu0 0
      %5537 = vmatpush1.bf16.msra.mxu0 %v5116
      %5538 = vmatprep.subr.bf16.mxu0 0
      %5539 = vmatpush1.bf16.msra.mxu0 %v5115
      %5540 = vmatprep.subr.bf16.mxu0 0
      %5541 = vmatpush1.bf16.msra.mxu0 %v5114
      %5542 = vmatprep.subr.bf16.mxu0 0
      %5543 = vmatpush1.bf16.msra.mxu0 %v5113
      %5544 = vmatprep.subr.bf16.mxu0 0
      %5545 = vmatpush1.bf16.msra.mxu0 %v5112
      %5546 = vmatprep.subr.bf16.mxu0 0
      %5547 = vmatpush1.bf16.msra.mxu0 %v5111
      %5548 = vmatprep.subr.bf16.mxu0 0
      %5549 = vmatpush1.bf16.msra.mxu0 %v5110
      %5550 = vmatprep.subr.bf16.mxu0 0
      %5551 = vmatpush2.bf16.msra.mxu0 %v5125
      %5552 = vmatprep.subr.bf16.mxu0 0
      %5553 = vmatpush2.bf16.msra.mxu0 %v5124
      %5554 = vmatprep.subr.bf16.mxu0 0
      %5555 = vmatpush2.bf16.msra.mxu0 %v5123
      %5556 = vmatprep.subr.bf16.mxu0 0
      %5557 = vmatpush2.bf16.msra.mxu0 %v5122
      %5558 = vmatprep.subr.bf16.mxu0 0
      %5559 = vmatpush2.bf16.msra.mxu0 %v5121
      %5560 = vmatprep.subr.bf16.mxu0 0
      %5561 = vmatpush2.bf16.msra.mxu0 %v5120
      %5562 = vmatprep.subr.bf16.mxu0 0
      %5563 = vmatpush2.bf16.msra.mxu0 %v5119
      %5564 = vmatprep.subr.bf16.mxu0 0
      %5565 = vmatpush2.bf16.msra.mxu0 %v5118
      %5566 = vmatprep.mubr.bf16.mxu0 %v4469
      %5567 = vmatmul.mubr.bf16.gmra.mxu0 %v4468
      %v5568 = vpop.f32.mrf.mxu0
      %v5569 = vadd.f32 %v5529, %v5568
      %v5570 = vpop.f32.mrf.mxu0
      %v5571 = vpop.f32.mrf.mxu0
      %v5572 = vpop.f32.mrf.mxu0
      %5573 = vdwg.mxu0
      %s5574 = scalar_lea.vmem %s241, 2
      %5575 = vst.msk [vmem:[%s5574] sm:$0x3] %vm3879, %v5569
      %s5576 = scalar_lea.vmem [#allocation2], 2
      %v5577 = vld [vmem:[%s5576] ss:$8 sm:$0xf]
      %v5578 = vld [vmem:[%s5576] ss:$8 sm:$0xf0]
      %v5579 = vor.u32 %v5577, %v5578
      %s5580 = scalar_lea.vmem [#allocation2], 66
      %v5581 = vld [vmem:[%s5580] ss:$8 sm:$0xf]
      %v5582 = vld [vmem:[%s5580] ss:$8 sm:$0xf0]
      %v5583 = vor.u32 %v5581, %v5582
      %s5584 = scalar_lea.vmem [#allocation2], 130
      %v5585 = vld [vmem:[%s5584] ss:$8 sm:$0xf]
      %v5586 = vld [vmem:[%s5584] ss:$8 sm:$0xf0]
      %v5587 = vor.u32 %v5585, %v5586
      %s5588 = scalar_lea.vmem [#allocation2], 194
      %v5589 = vld [vmem:[%s5588] ss:$8 sm:$0xf]
      %v5590 = vld [vmem:[%s5588] ss:$8 sm:$0xf0]
      %v5591 = vor.u32 %v5589, %v5590
      %v5596 = vlaneseq
      %v5597 = vshrl.u32 %v5596, 7
      %v5598 = vsub.s32 0, %v5597
      %v5599 = vrot.slane %v5579, %v5598
      %v5600 = vlaneseq
      %v5601 = vshrl.u32 %v5600, 7
      %v5602 = vsub.s32 1, %v5601
      %v5603 = vrot.slane %v5579, %v5602
      %v5604 = vlaneseq
      %v5605 = vshrl.u32 %v5604, 7
      %v5606 = vsub.s32 2, %v5605
      %v5607 = vrot.slane %v5579, %v5606
      %v5608 = vlaneseq
      %v5609 = vshrl.u32 %v5608, 7
      %v5610 = vsub.s32 3, %v5609
      %v5611 = vrot.slane %v5579, %v5610
      %v5612 = vlaneseq
      %v5613 = vshrl.u32 %v5612, 7
      %v5614 = vsub.s32 4, %v5613
      %v5615 = vrot.slane %v5579, %v5614
      %v5616 = vlaneseq
      %v5617 = vshrl.u32 %v5616, 7
      %v5618 = vsub.s32 5, %v5617
      %v5619 = vrot.slane %v5579, %v5618
      %v5620 = vlaneseq
      %v5621 = vshrl.u32 %v5620, 7
      %v5622 = vsub.s32 6, %v5621
      %v5623 = vrot.slane %v5579, %v5622
      %v5624 = vlaneseq
      %v5625 = vshrl.u32 %v5624, 7
      %v5626 = vsub.s32 7, %v5625
      %v5627 = vrot.slane %v5579, %v5626
      %v5628 = vlaneseq
      %v5629 = vshrl.u32 %v5628, 7
      %v5630 = vsub.s32 0, %v5629
      %v5631 = vrot.slane %v5583, %v5630
      %v5632 = vlaneseq
      %v5633 = vshrl.u32 %v5632, 7
      %v5634 = vsub.s32 1, %v5633
      %v5635 = vrot.slane %v5583, %v5634
      %v5636 = vlaneseq
      %v5637 = vshrl.u32 %v5636, 7
      %v5638 = vsub.s32 2, %v5637
      %v5639 = vrot.slane %v5583, %v5638
      %v5640 = vlaneseq
      %v5641 = vshrl.u32 %v5640, 7
      %v5642 = vsub.s32 3, %v5641
      %v5643 = vrot.slane %v5583, %v5642
      %v5644 = vlaneseq
      %v5645 = vshrl.u32 %v5644, 7
      %v5646 = vsub.s32 4, %v5645
      %v5647 = vrot.slane %v5583, %v5646
      %v5648 = vlaneseq
      %v5649 = vshrl.u32 %v5648, 7
      %v5650 = vsub.s32 5, %v5649
      %v5651 = vrot.slane %v5583, %v5650
      %v5652 = vlaneseq
      %v5653 = vshrl.u32 %v5652, 7
      %v5654 = vsub.s32 6, %v5653
      %v5655 = vrot.slane %v5583, %v5654
      %v5656 = vlaneseq
      %v5657 = vshrl.u32 %v5656, 7
      %v5658 = vsub.s32 7, %v5657
      %v5659 = vrot.slane %v5583, %v5658
      %v5660 = vlaneseq
      %v5661 = vshrl.u32 %v5660, 7
      %v5662 = vsub.s32 0, %v5661
      %v5663 = vrot.slane %v5587, %v5662
      %v5664 = vlaneseq
      %v5665 = vshrl.u32 %v5664, 7
      %v5666 = vsub.s32 1, %v5665
      %v5667 = vrot.slane %v5587, %v5666
      %v5668 = vlaneseq
      %v5669 = vshrl.u32 %v5668, 7
      %v5670 = vsub.s32 2, %v5669
      %v5671 = vrot.slane %v5587, %v5670
      %v5672 = vlaneseq
      %v5673 = vshrl.u32 %v5672, 7
      %v5674 = vsub.s32 3, %v5673
      %v5675 = vrot.slane %v5587, %v5674
      %v5676 = vlaneseq
      %v5677 = vshrl.u32 %v5676, 7
      %v5678 = vsub.s32 4, %v5677
      %v5679 = vrot.slane %v5587, %v5678
      %v5680 = vlaneseq
      %v5681 = vshrl.u32 %v5680, 7
      %v5682 = vsub.s32 5, %v5681
      %v5683 = vrot.slane %v5587, %v5682
      %v5684 = vlaneseq
      %v5685 = vshrl.u32 %v5684, 7
      %v5686 = vsub.s32 6, %v5685
      %v5687 = vrot.slane %v5587, %v5686
      %v5688 = vlaneseq
      %v5689 = vshrl.u32 %v5688, 7
      %v5690 = vsub.s32 7, %v5689
      %v5691 = vrot.slane %v5587, %v5690
      %v5692 = vlaneseq
      %v5693 = vshrl.u32 %v5692, 7
      %v5694 = vsub.s32 0, %v5693
      %v5695 = vrot.slane %v5591, %v5694
      %v5696 = vlaneseq
      %v5697 = vshrl.u32 %v5696, 7
      %v5698 = vsub.s32 1, %v5697
      %v5699 = vrot.slane %v5591, %v5698
      %v5700 = vlaneseq
      %v5701 = vshrl.u32 %v5700, 7
      %v5702 = vsub.s32 2, %v5701
      %v5703 = vrot.slane %v5591, %v5702
      %v5704 = vlaneseq
      %v5705 = vshrl.u32 %v5704, 7
      %v5706 = vsub.s32 3, %v5705
      %v5707 = vrot.slane %v5591, %v5706
      %v5708 = vlaneseq
      %v5709 = vshrl.u32 %v5708, 7
      %v5710 = vsub.s32 4, %v5709
      %v5711 = vrot.slane %v5591, %v5710
      %v5712 = vlaneseq
      %v5713 = vshrl.u32 %v5712, 7
      %v5714 = vsub.s32 5, %v5713
      %v5715 = vrot.slane %v5591, %v5714
      %v5716 = vlaneseq
      %v5717 = vshrl.u32 %v5716, 7
      %v5718 = vsub.s32 6, %v5717
      %v5719 = vrot.slane %v5591, %v5718
      %v5720 = vlaneseq
      %v5721 = vshrl.u32 %v5720, 7
      %v5722 = vsub.s32 7, %v5721
      %v5723 = vrot.slane %v5591, %v5722
      %v5756 = vpack.c.bf16 %v5599, %v5599
      %v5757 = vpack.c.bf16 %v5603, %v5603
      %v5758 = vpack.c.bf16 %v5607, %v5607
      %v5759 = vpack.c.bf16 %v5611, %v5611
      %v5760 = vpack.c.bf16 %v5615, %v5615
      %v5761 = vpack.c.bf16 %v5619, %v5619
      %v5762 = vpack.c.bf16 %v5623, %v5623
      %v5763 = vpack.c.bf16 %v5627, %v5627
      %v5764 = vpack.c.bf16 %v5631, %v5631
      %v5765 = vpack.c.bf16 %v5635, %v5635
      %v5766 = vpack.c.bf16 %v5639, %v5639
      %v5767 = vpack.c.bf16 %v5643, %v5643
      %v5768 = vpack.c.bf16 %v5647, %v5647
      %v5769 = vpack.c.bf16 %v5651, %v5651
      %v5770 = vpack.c.bf16 %v5655, %v5655
      %v5771 = vpack.c.bf16 %v5659, %v5659
      %v5772 = vpack.c.bf16 %v5663, %v5663
      %v5773 = vpack.c.bf16 %v5667, %v5667
      %v5774 = vpack.c.bf16 %v5671, %v5671
      %v5775 = vpack.c.bf16 %v5675, %v5675
      %v5776 = vpack.c.bf16 %v5679, %v5679
      %v5777 = vpack.c.bf16 %v5683, %v5683
      %v5778 = vpack.c.bf16 %v5687, %v5687
      %v5779 = vpack.c.bf16 %v5691, %v5691
      %v5780 = vpack.c.bf16 %v5695, %v5695
      %v5781 = vpack.c.bf16 %v5699, %v5699
      %v5782 = vpack.c.bf16 %v5703, %v5703
      %v5783 = vpack.c.bf16 %v5707, %v5707
      %v5784 = vpack.c.bf16 %v5711, %v5711
      %v5785 = vpack.c.bf16 %v5715, %v5715
      %v5786 = vpack.c.bf16 %v5719, %v5719
      %v5787 = vpack.c.bf16 %v5723, %v5723
      %s5788 = scalar_lea.vmem %s230, 2048
      %v5789 = vld [vmem:[%s5788] sm:$0xf]
      %v5790 = vld [vmem:[%s5788 + $0x4] sm:$0xf]
      %v5791 = vld [vmem:[%s5788 + $0x8] sm:$0xf]
      %v5792 = vld [vmem:[%s5788 + $0xc] sm:$0xf]
      %v5793 = vld [vmem:[%s5788 + $0x10] sm:$0xf]
      %v5794 = vld [vmem:[%s5788 + $0x14] sm:$0xf]
      %v5795 = vld [vmem:[%s5788 + $0x18] sm:$0xf]
      %v5796 = vld [vmem:[%s5788 + $0x1c] sm:$0xf]
      %v5797 = vld [vmem:[%s5788 + $0x20] sm:$0xf]
      %v5798 = vld [vmem:[%s5788 + $0x24] sm:$0xf]
      %v5799 = vld [vmem:[%s5788 + $0x28] sm:$0xf]
      %v5800 = vld [vmem:[%s5788 + $0x2c] sm:$0xf]
      %v5801 = vld [vmem:[%s5788 + $0x30] sm:$0xf]
      %v5802 = vld [vmem:[%s5788 + $0x34] sm:$0xf]
      %v5803 = vld [vmem:[%s5788 + $0x38] sm:$0xf]
      %v5804 = vld [vmem:[%s5788 + $0x3c] sm:$0xf]
      %v5805 = vld [vmem:[%s5788 + $0x40] sm:$0xf]
      %v5806 = vld [vmem:[%s5788 + $0x44] sm:$0xf]
      %v5807 = vld [vmem:[%s5788 + $0x48] sm:$0xf]
      %v5808 = vld [vmem:[%s5788 + $0x4c] sm:$0xf]
      %v5809 = vld [vmem:[%s5788 + $0x50] sm:$0xf]
      %v5810 = vld [vmem:[%s5788 + $0x54] sm:$0xf]
      %v5811 = vld [vmem:[%s5788 + $0x58] sm:$0xf]
      %v5812 = vld [vmem:[%s5788 + $0x5c] sm:$0xf]
      %v5813 = vld [vmem:[%s5788 + $0x60] sm:$0xf]
      %v5814 = vld [vmem:[%s5788 + $0x64] sm:$0xf]
      %v5815 = vld [vmem:[%s5788 + $0x68] sm:$0xf]
      %v5816 = vld [vmem:[%s5788 + $0x6c] sm:$0xf]
      %v5817 = vld [vmem:[%s5788 + $0x70] sm:$0xf]
      %v5818 = vld [vmem:[%s5788 + $0x74] sm:$0xf]
      %v5819 = vld [vmem:[%s5788 + $0x78] sm:$0xf]
      %v5820 = vld [vmem:[%s5788 + $0x7c] sm:$0xf]
      %v5821 = vld [vmem:[%s5788 + $0x80] sm:$0xf]
      %v5822 = vld [vmem:[%s5788 + $0x84] sm:$0xf]
      %v5823 = vld [vmem:[%s5788 + $0x88] sm:$0xf]
      %v5824 = vld [vmem:[%s5788 + $0x8c] sm:$0xf]
      %v5825 = vld [vmem:[%s5788 + $0x90] sm:$0xf]
      %v5826 = vld [vmem:[%s5788 + $0x94] sm:$0xf]
      %v5827 = vld [vmem:[%s5788 + $0x98] sm:$0xf]
      %v5828 = vld [vmem:[%s5788 + $0x9c] sm:$0xf]
      %v5829 = vld [vmem:[%s5788 + $0xa0] sm:$0xf]
      %v5830 = vld [vmem:[%s5788 + $0xa4] sm:$0xf]
      %v5831 = vld [vmem:[%s5788 + $0xa8] sm:$0xf]
      %v5832 = vld [vmem:[%s5788 + $0xac] sm:$0xf]
      %v5833 = vld [vmem:[%s5788 + $0xb0] sm:$0xf]
      %v5834 = vld [vmem:[%s5788 + $0xb4] sm:$0xf]
      %v5835 = vld [vmem:[%s5788 + $0xb8] sm:$0xf]
      %v5836 = vld [vmem:[%s5788 + $0xbc] sm:$0xf]
      %v5837 = vld [vmem:[%s5788 + $0xc0] sm:$0xf]
      %v5838 = vld [vmem:[%s5788 + $0xc4] sm:$0xf]
      %v5839 = vld [vmem:[%s5788 + $0xc8] sm:$0xf]
      %v5840 = vld [vmem:[%s5788 + $0xcc] sm:$0xf]
      %v5841 = vld [vmem:[%s5788 + $0xd0] sm:$0xf]
      %v5842 = vld [vmem:[%s5788 + $0xd4] sm:$0xf]
      %v5843 = vld [vmem:[%s5788 + $0xd8] sm:$0xf]
      %v5844 = vld [vmem:[%s5788 + $0xdc] sm:$0xf]
      %v5845 = vld [vmem:[%s5788 + $0xe0] sm:$0xf]
      %v5846 = vld [vmem:[%s5788 + $0xe4] sm:$0xf]
      %v5847 = vld [vmem:[%s5788 + $0xe8] sm:$0xf]
      %v5848 = vld [vmem:[%s5788 + $0xec] sm:$0xf]
      %v5849 = vld [vmem:[%s5788 + $0xf0] sm:$0xf]
      %v5850 = vld [vmem:[%s5788 + $0xf4] sm:$0xf]
      %v5851 = vld [vmem:[%s5788 + $0xf8] sm:$0xf]
      %v5852 = vld [vmem:[%s5788 + $0xfc] sm:$0xf]
      %v5853 = vld [vmem:[%s5788 + $0x100] sm:$0xf]
      %v5854 = vld [vmem:[%s5788 + $0x104] sm:$0xf]
      %v5855 = vld [vmem:[%s5788 + $0x108] sm:$0xf]
      %v5856 = vld [vmem:[%s5788 + $0x10c] sm:$0xf]
      %v5857 = vld [vmem:[%s5788 + $0x110] sm:$0xf]
      %v5858 = vld [vmem:[%s5788 + $0x114] sm:$0xf]
      %v5859 = vld [vmem:[%s5788 + $0x118] sm:$0xf]
      %v5860 = vld [vmem:[%s5788 + $0x11c] sm:$0xf]
      %v5861 = vld [vmem:[%s5788 + $0x120] sm:$0xf]
      %v5862 = vld [vmem:[%s5788 + $0x124] sm:$0xf]
      %v5863 = vld [vmem:[%s5788 + $0x128] sm:$0xf]
      %v5864 = vld [vmem:[%s5788 + $0x12c] sm:$0xf]
      %v5865 = vld [vmem:[%s5788 + $0x130] sm:$0xf]
      %v5866 = vld [vmem:[%s5788 + $0x134] sm:$0xf]
      %v5867 = vld [vmem:[%s5788 + $0x138] sm:$0xf]
      %v5868 = vld [vmem:[%s5788 + $0x13c] sm:$0xf]
      %v5869 = vld [vmem:[%s5788 + $0x140] sm:$0xf]
      %v5870 = vld [vmem:[%s5788 + $0x144] sm:$0xf]
      %v5871 = vld [vmem:[%s5788 + $0x148] sm:$0xf]
      %v5872 = vld [vmem:[%s5788 + $0x14c] sm:$0xf]
      %v5873 = vld [vmem:[%s5788 + $0x150] sm:$0xf]
      %v5874 = vld [vmem:[%s5788 + $0x154] sm:$0xf]
      %v5875 = vld [vmem:[%s5788 + $0x158] sm:$0xf]
      %v5876 = vld [vmem:[%s5788 + $0x15c] sm:$0xf]
      %v5877 = vld [vmem:[%s5788 + $0x160] sm:$0xf]
      %v5878 = vld [vmem:[%s5788 + $0x164] sm:$0xf]
      %v5879 = vld [vmem:[%s5788 + $0x168] sm:$0xf]
      %v5880 = vld [vmem:[%s5788 + $0x16c] sm:$0xf]
      %v5881 = vld [vmem:[%s5788 + $0x170] sm:$0xf]
      %v5882 = vld [vmem:[%s5788 + $0x174] sm:$0xf]
      %v5883 = vld [vmem:[%s5788 + $0x178] sm:$0xf]
      %v5884 = vld [vmem:[%s5788 + $0x17c] sm:$0xf]
      %v5885 = vld [vmem:[%s5788 + $0x180] sm:$0xf]
      %v5886 = vld [vmem:[%s5788 + $0x184] sm:$0xf]
      %v5887 = vld [vmem:[%s5788 + $0x188] sm:$0xf]
      %v5888 = vld [vmem:[%s5788 + $0x18c] sm:$0xf]
      %v5889 = vld [vmem:[%s5788 + $0x190] sm:$0xf]
      %v5890 = vld [vmem:[%s5788 + $0x194] sm:$0xf]
      %v5891 = vld [vmem:[%s5788 + $0x198] sm:$0xf]
      %v5892 = vld [vmem:[%s5788 + $0x19c] sm:$0xf]
      %v5893 = vld [vmem:[%s5788 + $0x1a0] sm:$0xf]
      %v5894 = vld [vmem:[%s5788 + $0x1a4] sm:$0xf]
      %v5895 = vld [vmem:[%s5788 + $0x1a8] sm:$0xf]
      %v5896 = vld [vmem:[%s5788 + $0x1ac] sm:$0xf]
      %v5897 = vld [vmem:[%s5788 + $0x1b0] sm:$0xf]
      %v5898 = vld [vmem:[%s5788 + $0x1b4] sm:$0xf]
      %v5899 = vld [vmem:[%s5788 + $0x1b8] sm:$0xf]
      %v5900 = vld [vmem:[%s5788 + $0x1bc] sm:$0xf]
      %v5901 = vld [vmem:[%s5788 + $0x1c0] sm:$0xf]
      %v5902 = vld [vmem:[%s5788 + $0x1c4] sm:$0xf]
      %v5903 = vld [vmem:[%s5788 + $0x1c8] sm:$0xf]
      %v5904 = vld [vmem:[%s5788 + $0x1cc] sm:$0xf]
      %v5905 = vld [vmem:[%s5788 + $0x1d0] sm:$0xf]
      %v5906 = vld [vmem:[%s5788 + $0x1d4] sm:$0xf]
      %v5907 = vld [vmem:[%s5788 + $0x1d8] sm:$0xf]
      %v5908 = vld [vmem:[%s5788 + $0x1dc] sm:$0xf]
      %v5909 = vld [vmem:[%s5788 + $0x1e0] sm:$0xf]
      %v5910 = vld [vmem:[%s5788 + $0x1e4] sm:$0xf]
      %v5911 = vld [vmem:[%s5788 + $0x1e8] sm:$0xf]
      %v5912 = vld [vmem:[%s5788 + $0x1ec] sm:$0xf]
      %v5913 = vld [vmem:[%s5788 + $0x1f0] sm:$0xf]
      %v5914 = vld [vmem:[%s5788 + $0x1f4] sm:$0xf]
      %v5915 = vld [vmem:[%s5788 + $0x1f8] sm:$0xf]
      %v5916 = vld [vmem:[%s5788 + $0x1fc] sm:$0xf]
      %v5917 = vld [vmem:[%s5788 + $0x200] sm:$0xf]
      %v5918 = vld [vmem:[%s5788 + $0x204] sm:$0xf]
      %v5919 = vld [vmem:[%s5788 + $0x208] sm:$0xf]
      %v5920 = vld [vmem:[%s5788 + $0x20c] sm:$0xf]
      %v5921 = vld [vmem:[%s5788 + $0x210] sm:$0xf]
      %v5922 = vld [vmem:[%s5788 + $0x214] sm:$0xf]
      %v5923 = vld [vmem:[%s5788 + $0x218] sm:$0xf]
      %v5924 = vld [vmem:[%s5788 + $0x21c] sm:$0xf]
      %v5925 = vld [vmem:[%s5788 + $0x220] sm:$0xf]
      %v5926 = vld [vmem:[%s5788 + $0x224] sm:$0xf]
      %v5927 = vld [vmem:[%s5788 + $0x228] sm:$0xf]
      %v5928 = vld [vmem:[%s5788 + $0x22c] sm:$0xf]
      %v5929 = vld [vmem:[%s5788 + $0x230] sm:$0xf]
      %v5930 = vld [vmem:[%s5788 + $0x234] sm:$0xf]
      %v5931 = vld [vmem:[%s5788 + $0x238] sm:$0xf]
      %v5932 = vld [vmem:[%s5788 + $0x23c] sm:$0xf]
      %v5933 = vld [vmem:[%s5788 + $0x240] sm:$0xf]
      %v5934 = vld [vmem:[%s5788 + $0x244] sm:$0xf]
      %v5935 = vld [vmem:[%s5788 + $0x248] sm:$0xf]
      %v5936 = vld [vmem:[%s5788 + $0x24c] sm:$0xf]
      %v5937 = vld [vmem:[%s5788 + $0x250] sm:$0xf]
      %v5938 = vld [vmem:[%s5788 + $0x254] sm:$0xf]
      %v5939 = vld [vmem:[%s5788 + $0x258] sm:$0xf]
      %v5940 = vld [vmem:[%s5788 + $0x25c] sm:$0xf]
      %v5941 = vld [vmem:[%s5788 + $0x260] sm:$0xf]
      %v5942 = vld [vmem:[%s5788 + $0x264] sm:$0xf]
      %v5943 = vld [vmem:[%s5788 + $0x268] sm:$0xf]
      %v5944 = vld [vmem:[%s5788 + $0x26c] sm:$0xf]
      %v5945 = vld [vmem:[%s5788 + $0x270] sm:$0xf]
      %v5946 = vld [vmem:[%s5788 + $0x274] sm:$0xf]
      %v5947 = vld [vmem:[%s5788 + $0x278] sm:$0xf]
      %v5948 = vld [vmem:[%s5788 + $0x27c] sm:$0xf]
      %v5949 = vld [vmem:[%s5788 + $0x280] sm:$0xf]
      %v5950 = vld [vmem:[%s5788 + $0x284] sm:$0xf]
      %v5951 = vld [vmem:[%s5788 + $0x288] sm:$0xf]
      %v5952 = vld [vmem:[%s5788 + $0x28c] sm:$0xf]
      %v5953 = vld [vmem:[%s5788 + $0x290] sm:$0xf]
      %v5954 = vld [vmem:[%s5788 + $0x294] sm:$0xf]
      %v5955 = vld [vmem:[%s5788 + $0x298] sm:$0xf]
      %v5956 = vld [vmem:[%s5788 + $0x29c] sm:$0xf]
      %v5957 = vld [vmem:[%s5788 + $0x2a0] sm:$0xf]
      %v5958 = vld [vmem:[%s5788 + $0x2a4] sm:$0xf]
      %v5959 = vld [vmem:[%s5788 + $0x2a8] sm:$0xf]
      %v5960 = vld [vmem:[%s5788 + $0x2ac] sm:$0xf]
      %v5961 = vld [vmem:[%s5788 + $0x2b0] sm:$0xf]
      %v5962 = vld [vmem:[%s5788 + $0x2b4] sm:$0xf]
      %v5963 = vld [vmem:[%s5788 + $0x2b8] sm:$0xf]
      %v5964 = vld [vmem:[%s5788 + $0x2bc] sm:$0xf]
      %v5965 = vld [vmem:[%s5788 + $0x2c0] sm:$0xf]
      %v5966 = vld [vmem:[%s5788 + $0x2c4] sm:$0xf]
      %v5967 = vld [vmem:[%s5788 + $0x2c8] sm:$0xf]
      %v5968 = vld [vmem:[%s5788 + $0x2cc] sm:$0xf]
      %v5969 = vld [vmem:[%s5788 + $0x2d0] sm:$0xf]
      %v5970 = vld [vmem:[%s5788 + $0x2d4] sm:$0xf]
      %v5971 = vld [vmem:[%s5788 + $0x2d8] sm:$0xf]
      %v5972 = vld [vmem:[%s5788 + $0x2dc] sm:$0xf]
      %v5973 = vld [vmem:[%s5788 + $0x2e0] sm:$0xf]
      %v5974 = vld [vmem:[%s5788 + $0x2e4] sm:$0xf]
      %v5975 = vld [vmem:[%s5788 + $0x2e8] sm:$0xf]
      %v5976 = vld [vmem:[%s5788 + $0x2ec] sm:$0xf]
      %v5977 = vld [vmem:[%s5788 + $0x2f0] sm:$0xf]
      %v5978 = vld [vmem:[%s5788 + $0x2f4] sm:$0xf]
      %v5979 = vld [vmem:[%s5788 + $0x2f8] sm:$0xf]
      %v5980 = vld [vmem:[%s5788 + $0x2fc] sm:$0xf]
      %v5981 = vld [vmem:[%s5788 + $0x300] sm:$0xf]
      %v5982 = vld [vmem:[%s5788 + $0x304] sm:$0xf]
      %v5983 = vld [vmem:[%s5788 + $0x308] sm:$0xf]
      %v5984 = vld [vmem:[%s5788 + $0x30c] sm:$0xf]
      %v5985 = vld [vmem:[%s5788 + $0x310] sm:$0xf]
      %v5986 = vld [vmem:[%s5788 + $0x314] sm:$0xf]
      %v5987 = vld [vmem:[%s5788 + $0x318] sm:$0xf]
      %v5988 = vld [vmem:[%s5788 + $0x31c] sm:$0xf]
      %v5989 = vld [vmem:[%s5788 + $0x320] sm:$0xf]
      %v5990 = vld [vmem:[%s5788 + $0x324] sm:$0xf]
      %v5991 = vld [vmem:[%s5788 + $0x328] sm:$0xf]
      %v5992 = vld [vmem:[%s5788 + $0x32c] sm:$0xf]
      %v5993 = vld [vmem:[%s5788 + $0x330] sm:$0xf]
      %v5994 = vld [vmem:[%s5788 + $0x334] sm:$0xf]
      %v5995 = vld [vmem:[%s5788 + $0x338] sm:$0xf]
      %v5996 = vld [vmem:[%s5788 + $0x33c] sm:$0xf]
      %v5997 = vld [vmem:[%s5788 + $0x340] sm:$0xf]
      %v5998 = vld [vmem:[%s5788 + $0x344] sm:$0xf]
      %v5999 = vld [vmem:[%s5788 + $0x348] sm:$0xf]
      %v6000 = vld [vmem:[%s5788 + $0x34c] sm:$0xf]
      %v6001 = vld [vmem:[%s5788 + $0x350] sm:$0xf]
      %v6002 = vld [vmem:[%s5788 + $0x354] sm:$0xf]
      %v6003 = vld [vmem:[%s5788 + $0x358] sm:$0xf]
      %v6004 = vld [vmem:[%s5788 + $0x35c] sm:$0xf]
      %v6005 = vld [vmem:[%s5788 + $0x360] sm:$0xf]
      %v6006 = vld [vmem:[%s5788 + $0x364] sm:$0xf]
      %v6007 = vld [vmem:[%s5788 + $0x368] sm:$0xf]
      %v6008 = vld [vmem:[%s5788 + $0x36c] sm:$0xf]
      %v6009 = vld [vmem:[%s5788 + $0x370] sm:$0xf]
      %v6010 = vld [vmem:[%s5788 + $0x374] sm:$0xf]
      %v6011 = vld [vmem:[%s5788 + $0x378] sm:$0xf]
      %v6012 = vld [vmem:[%s5788 + $0x37c] sm:$0xf]
      %v6013 = vld [vmem:[%s5788 + $0x380] sm:$0xf]
      %v6014 = vld [vmem:[%s5788 + $0x384] sm:$0xf]
      %v6015 = vld [vmem:[%s5788 + $0x388] sm:$0xf]
      %v6016 = vld [vmem:[%s5788 + $0x38c] sm:$0xf]
      %v6017 = vld [vmem:[%s5788 + $0x390] sm:$0xf]
      %v6018 = vld [vmem:[%s5788 + $0x394] sm:$0xf]
      %v6019 = vld [vmem:[%s5788 + $0x398] sm:$0xf]
      %v6020 = vld [vmem:[%s5788 + $0x39c] sm:$0xf]
      %v6021 = vld [vmem:[%s5788 + $0x3a0] sm:$0xf]
      %v6022 = vld [vmem:[%s5788 + $0x3a4] sm:$0xf]
      %v6023 = vld [vmem:[%s5788 + $0x3a8] sm:$0xf]
      %v6024 = vld [vmem:[%s5788 + $0x3ac] sm:$0xf]
      %v6025 = vld [vmem:[%s5788 + $0x3b0] sm:$0xf]
      %v6026 = vld [vmem:[%s5788 + $0x3b4] sm:$0xf]
      %v6027 = vld [vmem:[%s5788 + $0x3b8] sm:$0xf]
      %v6028 = vld [vmem:[%s5788 + $0x3bc] sm:$0xf]
      %v6029 = vld [vmem:[%s5788 + $0x3c0] sm:$0xf]
      %v6030 = vld [vmem:[%s5788 + $0x3c4] sm:$0xf]
      %v6031 = vld [vmem:[%s5788 + $0x3c8] sm:$0xf]
      %v6032 = vld [vmem:[%s5788 + $0x3cc] sm:$0xf]
      %v6033 = vld [vmem:[%s5788 + $0x3d0] sm:$0xf]
      %v6034 = vld [vmem:[%s5788 + $0x3d4] sm:$0xf]
      %v6035 = vld [vmem:[%s5788 + $0x3d8] sm:$0xf]
      %v6036 = vld [vmem:[%s5788 + $0x3dc] sm:$0xf]
      %v6037 = vld [vmem:[%s5788 + $0x3e0] sm:$0xf]
      %v6038 = vld [vmem:[%s5788 + $0x3e4] sm:$0xf]
      %v6039 = vld [vmem:[%s5788 + $0x3e8] sm:$0xf]
      %v6040 = vld [vmem:[%s5788 + $0x3ec] sm:$0xf]
      %v6041 = vld [vmem:[%s5788 + $0x3f0] sm:$0xf]
      %v6042 = vld [vmem:[%s5788 + $0x3f4] sm:$0xf]
      %v6043 = vld [vmem:[%s5788 + $0x3f8] sm:$0xf]
      %v6044 = vld [vmem:[%s5788 + $0x3fc] sm:$0xf]
      %s6045 = scalar_lea.vmem %s235, 2
      %v6046 = vld [vmem:[%s6045] sm:$0x1]
      %v6048 = vlaneseq
      %v6049 = vshrl.u32 %v6048, 7
      %v6050 = vsub.s32 0, %v6049
      %v6051 = vrot.slane %v6046, %v6050
      %v6085 = vunpack.c.l.b16 %v5756
      %v6086 = vunpack.c.l.b16 %v5757
      %v6087 = vunpack.c.l.b16 %v5758
      %v6088 = vunpack.c.l.b16 %v5759
      %v6089 = vunpack.c.l.b16 %v5760
      %v6090 = vunpack.c.l.b16 %v5761
      %v6091 = vunpack.c.l.b16 %v5762
      %v6092 = vunpack.c.l.b16 %v5763
      %v6093 = vunpack.c.l.b16 %v5764
      %v6094 = vunpack.c.l.b16 %v5765
      %v6095 = vunpack.c.l.b16 %v5766
      %v6096 = vunpack.c.l.b16 %v5767
      %v6097 = vunpack.c.l.b16 %v5768
      %v6098 = vunpack.c.l.b16 %v5769
      %v6099 = vunpack.c.l.b16 %v5770
      %v6100 = vunpack.c.l.b16 %v5771
      %v6101 = vunpack.c.l.b16 %v5772
      %v6102 = vunpack.c.l.b16 %v5773
      %v6103 = vunpack.c.l.b16 %v5774
      %v6104 = vunpack.c.l.b16 %v5775
      %v6105 = vunpack.c.l.b16 %v5776
      %v6106 = vunpack.c.l.b16 %v5777
      %v6107 = vunpack.c.l.b16 %v5778
      %v6108 = vunpack.c.l.b16 %v5779
      %v6109 = vunpack.c.l.b16 %v5780
      %v6110 = vunpack.c.l.b16 %v5781
      %v6111 = vunpack.c.l.b16 %v5782
      %v6112 = vunpack.c.l.b16 %v5783
      %v6113 = vunpack.c.l.b16 %v5784
      %v6114 = vunpack.c.l.b16 %v5785
      %v6115 = vunpack.c.l.b16 %v5786
      %v6116 = vunpack.c.l.b16 %v5787
      %v6117 = vrot.slane %v6101, 7
      %v6118 = vsel %vm2727, %v6117, %v6085
      %v6119 = vrot.slane %v6102, 7
      %v6120 = vsel %vm2727, %v6119, %v6086
      %v6121 = vrot.slane %v6103, 7
      %v6122 = vsel %vm2727, %v6121, %v6087
      %v6123 = vrot.slane %v6104, 7
      %v6124 = vsel %vm2727, %v6123, %v6088
      %v6125 = vrot.slane %v6105, 7
      %v6126 = vsel %vm2727, %v6125, %v6089
      %v6127 = vrot.slane %v6106, 7
      %v6128 = vsel %vm2727, %v6127, %v6090
      %v6129 = vrot.slane %v6107, 7
      %v6130 = vsel %vm2727, %v6129, %v6091
      %v6131 = vrot.slane %v6108, 7
      %v6132 = vsel %vm2727, %v6131, %v6092
      %v6133 = vrot.slane %v6109, 7
      %v6134 = vsel %vm2727, %v6133, %v6093
      %v6135 = vrot.slane %v6110, 7
      %v6136 = vsel %vm2727, %v6135, %v6094
      %v6137 = vrot.slane %v6111, 7
      %v6138 = vsel %vm2727, %v6137, %v6095
      %v6139 = vrot.slane %v6112, 7
      %v6140 = vsel %vm2727, %v6139, %v6096
      %v6141 = vrot.slane %v6113, 7
      %v6142 = vsel %vm2727, %v6141, %v6097
      %v6143 = vrot.slane %v6114, 7
      %v6144 = vsel %vm2727, %v6143, %v6098
      %v6145 = vrot.slane %v6115, 7
      %v6146 = vsel %vm2727, %v6145, %v6099
      %v6147 = vrot.slane %v6116, 7
      %v6148 = vsel %vm2727, %v6147, %v6100
      %v6149 = vpack.c.b16 %v6118, %v6118
      %v6150 = vpack.c.b16 %v6120, %v6120
      %v6151 = vpack.c.b16 %v6122, %v6122
      %v6152 = vpack.c.b16 %v6124, %v6124
      %v6153 = vpack.c.b16 %v6126, %v6126
      %v6154 = vpack.c.b16 %v6128, %v6128
      %v6155 = vpack.c.b16 %v6130, %v6130
      %v6156 = vpack.c.b16 %v6132, %v6132
      %v6157 = vpack.c.b16 %v6134, %v6134
      %v6158 = vpack.c.b16 %v6136, %v6136
      %v6159 = vpack.c.b16 %v6138, %v6138
      %v6160 = vpack.c.b16 %v6140, %v6140
      %v6161 = vpack.c.b16 %v6142, %v6142
      %v6162 = vpack.c.b16 %v6144, %v6144
      %v6163 = vpack.c.b16 %v6146, %v6146
      %v6164 = vpack.c.b16 %v6148, %v6148
      %v6437 = vunpack.c.l.b16 %v5789
      %v6438 = vunpack.c.l.b16 %v5790
      %v6439 = vunpack.c.l.b16 %v5791
      %v6440 = vunpack.c.l.b16 %v5792
      %v6441 = vunpack.c.l.b16 %v5793
      %v6442 = vunpack.c.l.b16 %v5794
      %v6443 = vunpack.c.l.b16 %v5795
      %v6444 = vunpack.c.l.b16 %v5796
      %v6445 = vunpack.c.l.b16 %v5797
      %v6446 = vunpack.c.l.b16 %v5798
      %v6447 = vunpack.c.l.b16 %v5799
      %v6448 = vunpack.c.l.b16 %v5800
      %v6449 = vunpack.c.l.b16 %v5801
      %v6450 = vunpack.c.l.b16 %v5802
      %v6451 = vunpack.c.l.b16 %v5803
      %v6452 = vunpack.c.l.b16 %v5804
      %v6453 = vunpack.c.l.b16 %v5805
      %v6454 = vunpack.c.l.b16 %v5806
      %v6455 = vunpack.c.l.b16 %v5807
      %v6456 = vunpack.c.l.b16 %v5808
      %v6457 = vunpack.c.l.b16 %v5809
      %v6458 = vunpack.c.l.b16 %v5810
      %v6459 = vunpack.c.l.b16 %v5811
      %v6460 = vunpack.c.l.b16 %v5812
      %v6461 = vunpack.c.l.b16 %v5813
      %v6462 = vunpack.c.l.b16 %v5814
      %v6463 = vunpack.c.l.b16 %v5815
      %v6464 = vunpack.c.l.b16 %v5816
      %v6465 = vunpack.c.l.b16 %v5817
      %v6466 = vunpack.c.l.b16 %v5818
      %v6467 = vunpack.c.l.b16 %v5819
      %v6468 = vunpack.c.l.b16 %v5820
      %v6469 = vunpack.c.l.b16 %v5821
      %v6470 = vunpack.c.l.b16 %v5822
      %v6471 = vunpack.c.l.b16 %v5823
      %v6472 = vunpack.c.l.b16 %v5824
      %v6473 = vunpack.c.l.b16 %v5825
      %v6474 = vunpack.c.l.b16 %v5826
      %v6475 = vunpack.c.l.b16 %v5827
      %v6476 = vunpack.c.l.b16 %v5828
      %v6477 = vunpack.c.l.b16 %v5829
      %v6478 = vunpack.c.l.b16 %v5830
      %v6479 = vunpack.c.l.b16 %v5831
      %v6480 = vunpack.c.l.b16 %v5832
      %v6481 = vunpack.c.l.b16 %v5833
      %v6482 = vunpack.c.l.b16 %v5834
      %v6483 = vunpack.c.l.b16 %v5835
      %v6484 = vunpack.c.l.b16 %v5836
      %v6485 = vunpack.c.l.b16 %v5837
      %v6486 = vunpack.c.l.b16 %v5838
      %v6487 = vunpack.c.l.b16 %v5839
      %v6488 = vunpack.c.l.b16 %v5840
      %v6489 = vunpack.c.l.b16 %v5841
      %v6490 = vunpack.c.l.b16 %v5842
      %v6491 = vunpack.c.l.b16 %v5843
      %v6492 = vunpack.c.l.b16 %v5844
      %v6493 = vunpack.c.l.b16 %v5845
      %v6494 = vunpack.c.l.b16 %v5846
      %v6495 = vunpack.c.l.b16 %v5847
      %v6496 = vunpack.c.l.b16 %v5848
      %v6497 = vunpack.c.l.b16 %v5849
      %v6498 = vunpack.c.l.b16 %v5850
      %v6499 = vunpack.c.l.b16 %v5851
      %v6500 = vunpack.c.l.b16 %v5852
      %v6501 = vunpack.c.l.b16 %v5853
      %v6502 = vunpack.c.l.b16 %v5854
      %v6503 = vunpack.c.l.b16 %v5855
      %v6504 = vunpack.c.l.b16 %v5856
      %v6505 = vunpack.c.l.b16 %v5857
      %v6506 = vunpack.c.l.b16 %v5858
      %v6507 = vunpack.c.l.b16 %v5859
      %v6508 = vunpack.c.l.b16 %v5860
      %v6509 = vunpack.c.l.b16 %v5861
      %v6510 = vunpack.c.l.b16 %v5862
      %v6511 = vunpack.c.l.b16 %v5863
      %v6512 = vunpack.c.l.b16 %v5864
      %v6513 = vunpack.c.l.b16 %v5865
      %v6514 = vunpack.c.l.b16 %v5866
      %v6515 = vunpack.c.l.b16 %v5867
      %v6516 = vunpack.c.l.b16 %v5868
      %v6517 = vunpack.c.l.b16 %v5869
      %v6518 = vunpack.c.l.b16 %v5870
      %v6519 = vunpack.c.l.b16 %v5871
      %v6520 = vunpack.c.l.b16 %v5872
      %v6521 = vunpack.c.l.b16 %v5873
      %v6522 = vunpack.c.l.b16 %v5874
      %v6523 = vunpack.c.l.b16 %v5875
      %v6524 = vunpack.c.l.b16 %v5876
      %v6525 = vunpack.c.l.b16 %v5877
      %v6526 = vunpack.c.l.b16 %v5878
      %v6527 = vunpack.c.l.b16 %v5879
      %v6528 = vunpack.c.l.b16 %v5880
      %v6529 = vunpack.c.l.b16 %v5881
      %v6530 = vunpack.c.l.b16 %v5882
      %v6531 = vunpack.c.l.b16 %v5883
      %v6532 = vunpack.c.l.b16 %v5884
      %v6533 = vunpack.c.l.b16 %v5885
      %v6534 = vunpack.c.l.b16 %v5886
      %v6535 = vunpack.c.l.b16 %v5887
      %v6536 = vunpack.c.l.b16 %v5888
      %v6537 = vunpack.c.l.b16 %v5889
      %v6538 = vunpack.c.l.b16 %v5890
      %v6539 = vunpack.c.l.b16 %v5891
      %v6540 = vunpack.c.l.b16 %v5892
      %v6541 = vunpack.c.l.b16 %v5893
      %v6542 = vunpack.c.l.b16 %v5894
      %v6543 = vunpack.c.l.b16 %v5895
      %v6544 = vunpack.c.l.b16 %v5896
      %v6545 = vunpack.c.l.b16 %v5897
      %v6546 = vunpack.c.l.b16 %v5898
      %v6547 = vunpack.c.l.b16 %v5899
      %v6548 = vunpack.c.l.b16 %v5900
      %v6549 = vunpack.c.l.b16 %v5901
      %v6550 = vunpack.c.l.b16 %v5902
      %v6551 = vunpack.c.l.b16 %v5903
      %v6552 = vunpack.c.l.b16 %v5904
      %v6553 = vunpack.c.l.b16 %v5905
      %v6554 = vunpack.c.l.b16 %v5906
      %v6555 = vunpack.c.l.b16 %v5907
      %v6556 = vunpack.c.l.b16 %v5908
      %v6557 = vunpack.c.l.b16 %v5909
      %v6558 = vunpack.c.l.b16 %v5910
      %v6559 = vunpack.c.l.b16 %v5911
      %v6560 = vunpack.c.l.b16 %v5912
      %v6561 = vunpack.c.l.b16 %v5913
      %v6562 = vunpack.c.l.b16 %v5914
      %v6563 = vunpack.c.l.b16 %v5915
      %v6564 = vunpack.c.l.b16 %v5916
      %v6565 = vunpack.c.l.b16 %v5917
      %v6566 = vunpack.c.l.b16 %v5918
      %v6567 = vunpack.c.l.b16 %v5919
      %v6568 = vunpack.c.l.b16 %v5920
      %v6569 = vunpack.c.l.b16 %v5921
      %v6570 = vunpack.c.l.b16 %v5922
      %v6571 = vunpack.c.l.b16 %v5923
      %v6572 = vunpack.c.l.b16 %v5924
      %v6573 = vunpack.c.l.b16 %v5925
      %v6574 = vunpack.c.l.b16 %v5926
      %v6575 = vunpack.c.l.b16 %v5927
      %v6576 = vunpack.c.l.b16 %v5928
      %v6577 = vunpack.c.l.b16 %v5929
      %v6578 = vunpack.c.l.b16 %v5930
      %v6579 = vunpack.c.l.b16 %v5931
      %v6580 = vunpack.c.l.b16 %v5932
      %v6581 = vunpack.c.l.b16 %v5933
      %v6582 = vunpack.c.l.b16 %v5934
      %v6583 = vunpack.c.l.b16 %v5935
      %v6584 = vunpack.c.l.b16 %v5936
      %v6585 = vunpack.c.l.b16 %v5937
      %v6586 = vunpack.c.l.b16 %v5938
      %v6587 = vunpack.c.l.b16 %v5939
      %v6588 = vunpack.c.l.b16 %v5940
      %v6589 = vunpack.c.l.b16 %v5941
      %v6590 = vunpack.c.l.b16 %v5942
      %v6591 = vunpack.c.l.b16 %v5943
      %v6592 = vunpack.c.l.b16 %v5944
      %v6593 = vunpack.c.l.b16 %v5945
      %v6594 = vunpack.c.l.b16 %v5946
      %v6595 = vunpack.c.l.b16 %v5947
      %v6596 = vunpack.c.l.b16 %v5948
      %v6597 = vunpack.c.l.b16 %v5949
      %v6598 = vunpack.c.l.b16 %v5950
      %v6599 = vunpack.c.l.b16 %v5951
      %v6600 = vunpack.c.l.b16 %v5952
      %v6601 = vunpack.c.l.b16 %v5953
      %v6602 = vunpack.c.l.b16 %v5954
      %v6603 = vunpack.c.l.b16 %v5955
      %v6604 = vunpack.c.l.b16 %v5956
      %v6605 = vunpack.c.l.b16 %v5957
      %v6606 = vunpack.c.l.b16 %v5958
      %v6607 = vunpack.c.l.b16 %v5959
      %v6608 = vunpack.c.l.b16 %v5960
      %v6609 = vunpack.c.l.b16 %v5961
      %v6610 = vunpack.c.l.b16 %v5962
      %v6611 = vunpack.c.l.b16 %v5963
      %v6612 = vunpack.c.l.b16 %v5964
      %v6613 = vunpack.c.l.b16 %v5965
      %v6614 = vunpack.c.l.b16 %v5966
      %v6615 = vunpack.c.l.b16 %v5967
      %v6616 = vunpack.c.l.b16 %v5968
      %v6617 = vunpack.c.l.b16 %v5969
      %v6618 = vunpack.c.l.b16 %v5970
      %v6619 = vunpack.c.l.b16 %v5971
      %v6620 = vunpack.c.l.b16 %v5972
      %v6621 = vunpack.c.l.b16 %v5973
      %v6622 = vunpack.c.l.b16 %v5974
      %v6623 = vunpack.c.l.b16 %v5975
      %v6624 = vunpack.c.l.b16 %v5976
      %v6625 = vunpack.c.l.b16 %v5977
      %v6626 = vunpack.c.l.b16 %v5978
      %v6627 = vunpack.c.l.b16 %v5979
      %v6628 = vunpack.c.l.b16 %v5980
      %v6629 = vunpack.c.l.b16 %v5981
      %v6630 = vunpack.c.l.b16 %v5982
      %v6631 = vunpack.c.l.b16 %v5983
      %v6632 = vunpack.c.l.b16 %v5984
      %v6633 = vunpack.c.l.b16 %v5985
      %v6634 = vunpack.c.l.b16 %v5986
      %v6635 = vunpack.c.l.b16 %v5987
      %v6636 = vunpack.c.l.b16 %v5988
      %v6637 = vunpack.c.l.b16 %v5989
      %v6638 = vunpack.c.l.b16 %v5990
      %v6639 = vunpack.c.l.b16 %v5991
      %v6640 = vunpack.c.l.b16 %v5992
      %v6641 = vunpack.c.l.b16 %v5993
      %v6642 = vunpack.c.l.b16 %v5994
      %v6643 = vunpack.c.l.b16 %v5995
      %v6644 = vunpack.c.l.b16 %v5996
      %v6645 = vunpack.c.l.b16 %v5997
      %v6646 = vunpack.c.l.b16 %v5998
      %v6647 = vunpack.c.l.b16 %v5999
      %v6648 = vunpack.c.l.b16 %v6000
      %v6649 = vunpack.c.l.b16 %v6001
      %v6650 = vunpack.c.l.b16 %v6002
      %v6651 = vunpack.c.l.b16 %v6003
      %v6652 = vunpack.c.l.b16 %v6004
      %v6653 = vunpack.c.l.b16 %v6005
      %v6654 = vunpack.c.l.b16 %v6006
      %v6655 = vunpack.c.l.b16 %v6007
      %v6656 = vunpack.c.l.b16 %v6008
      %v6657 = vunpack.c.l.b16 %v6009
      %v6658 = vunpack.c.l.b16 %v6010
      %v6659 = vunpack.c.l.b16 %v6011
      %v6660 = vunpack.c.l.b16 %v6012
      %v6661 = vunpack.c.l.b16 %v6013
      %v6662 = vunpack.c.l.b16 %v6014
      %v6663 = vunpack.c.l.b16 %v6015
      %v6664 = vunpack.c.l.b16 %v6016
      %v6665 = vunpack.c.l.b16 %v6017
      %v6666 = vunpack.c.l.b16 %v6018
      %v6667 = vunpack.c.l.b16 %v6019
      %v6668 = vunpack.c.l.b16 %v6020
      %v6669 = vunpack.c.l.b16 %v6021
      %v6670 = vunpack.c.l.b16 %v6022
      %v6671 = vunpack.c.l.b16 %v6023
      %v6672 = vunpack.c.l.b16 %v6024
      %v6673 = vunpack.c.l.b16 %v6025
      %v6674 = vunpack.c.l.b16 %v6026
      %v6675 = vunpack.c.l.b16 %v6027
      %v6676 = vunpack.c.l.b16 %v6028
      %v6677 = vunpack.c.l.b16 %v6029
      %v6678 = vunpack.c.l.b16 %v6030
      %v6679 = vunpack.c.l.b16 %v6031
      %v6680 = vunpack.c.l.b16 %v6032
      %v6681 = vunpack.c.l.b16 %v6033
      %v6682 = vunpack.c.l.b16 %v6034
      %v6683 = vunpack.c.l.b16 %v6035
      %v6684 = vunpack.c.l.b16 %v6036
      %v6685 = vunpack.c.l.b16 %v6037
      %v6686 = vunpack.c.l.b16 %v6038
      %v6687 = vunpack.c.l.b16 %v6039
      %v6688 = vunpack.c.l.b16 %v6040
      %v6689 = vunpack.c.l.b16 %v6041
      %v6690 = vunpack.c.l.b16 %v6042
      %v6691 = vunpack.c.l.b16 %v6043
      %v6692 = vunpack.c.l.b16 %v6044
      %v6693 = vpack.c.b16 %v6438, %v6437
      %v6694 = vpack.c.b16 %v6440, %v6439
      %v6695 = vpack.c.b16 %v6442, %v6441
      %v6696 = vpack.c.b16 %v6444, %v6443
      %v6697 = vpack.c.b16 %v6446, %v6445
      %v6698 = vpack.c.b16 %v6448, %v6447
      %v6699 = vpack.c.b16 %v6450, %v6449
      %v6700 = vpack.c.b16 %v6452, %v6451
      %v6701 = vpack.c.b16 %v6454, %v6453
      %v6702 = vpack.c.b16 %v6456, %v6455
      %v6703 = vpack.c.b16 %v6458, %v6457
      %v6704 = vpack.c.b16 %v6460, %v6459
      %v6705 = vpack.c.b16 %v6462, %v6461
      %v6706 = vpack.c.b16 %v6464, %v6463
      %v6707 = vpack.c.b16 %v6466, %v6465
      %v6708 = vpack.c.b16 %v6468, %v6467
      %v6709 = vpack.c.b16 %v6470, %v6469
      %v6710 = vpack.c.b16 %v6472, %v6471
      %v6711 = vpack.c.b16 %v6474, %v6473
      %v6712 = vpack.c.b16 %v6476, %v6475
      %v6713 = vpack.c.b16 %v6478, %v6477
      %v6714 = vpack.c.b16 %v6480, %v6479
      %v6715 = vpack.c.b16 %v6482, %v6481
      %v6716 = vpack.c.b16 %v6484, %v6483
      %v6717 = vpack.c.b16 %v6486, %v6485
      %v6718 = vpack.c.b16 %v6488, %v6487
      %v6719 = vpack.c.b16 %v6490, %v6489
      %v6720 = vpack.c.b16 %v6492, %v6491
      %v6721 = vpack.c.b16 %v6494, %v6493
      %v6722 = vpack.c.b16 %v6496, %v6495
      %v6723 = vpack.c.b16 %v6498, %v6497
      %v6724 = vpack.c.b16 %v6500, %v6499
      %v6725 = vpack.c.b16 %v6502, %v6501
      %v6726 = vpack.c.b16 %v6504, %v6503
      %v6727 = vpack.c.b16 %v6506, %v6505
      %v6728 = vpack.c.b16 %v6508, %v6507
      %v6729 = vpack.c.b16 %v6510, %v6509
      %v6730 = vpack.c.b16 %v6512, %v6511
      %v6731 = vpack.c.b16 %v6514, %v6513
      %v6732 = vpack.c.b16 %v6516, %v6515
      %v6733 = vpack.c.b16 %v6518, %v6517
      %v6734 = vpack.c.b16 %v6520, %v6519
      %v6735 = vpack.c.b16 %v6522, %v6521
      %v6736 = vpack.c.b16 %v6524, %v6523
      %v6737 = vpack.c.b16 %v6526, %v6525
      %v6738 = vpack.c.b16 %v6528, %v6527
      %v6739 = vpack.c.b16 %v6530, %v6529
      %v6740 = vpack.c.b16 %v6532, %v6531
      %v6741 = vpack.c.b16 %v6534, %v6533
      %v6742 = vpack.c.b16 %v6536, %v6535
      %v6743 = vpack.c.b16 %v6538, %v6537
      %v6744 = vpack.c.b16 %v6540, %v6539
      %v6745 = vpack.c.b16 %v6542, %v6541
      %v6746 = vpack.c.b16 %v6544, %v6543
      %v6747 = vpack.c.b16 %v6546, %v6545
      %v6748 = vpack.c.b16 %v6548, %v6547
      %v6749 = vpack.c.b16 %v6550, %v6549
      %v6750 = vpack.c.b16 %v6552, %v6551
      %v6751 = vpack.c.b16 %v6554, %v6553
      %v6752 = vpack.c.b16 %v6556, %v6555
      %v6753 = vpack.c.b16 %v6558, %v6557
      %v6754 = vpack.c.b16 %v6560, %v6559
      %v6755 = vpack.c.b16 %v6562, %v6561
      %v6756 = vpack.c.b16 %v6564, %v6563
      %v6757 = vpack.c.b16 %v6566, %v6565
      %v6758 = vpack.c.b16 %v6568, %v6567
      %v6759 = vpack.c.b16 %v6570, %v6569
      %v6760 = vpack.c.b16 %v6572, %v6571
      %v6761 = vpack.c.b16 %v6574, %v6573
      %v6762 = vpack.c.b16 %v6576, %v6575
      %v6763 = vpack.c.b16 %v6578, %v6577
      %v6764 = vpack.c.b16 %v6580, %v6579
      %v6765 = vpack.c.b16 %v6582, %v6581
      %v6766 = vpack.c.b16 %v6584, %v6583
      %v6767 = vpack.c.b16 %v6586, %v6585
      %v6768 = vpack.c.b16 %v6588, %v6587
      %v6769 = vpack.c.b16 %v6590, %v6589
      %v6770 = vpack.c.b16 %v6592, %v6591
      %v6771 = vpack.c.b16 %v6594, %v6593
      %v6772 = vpack.c.b16 %v6596, %v6595
      %v6773 = vpack.c.b16 %v6598, %v6597
      %v6774 = vpack.c.b16 %v6600, %v6599
      %v6775 = vpack.c.b16 %v6602, %v6601
      %v6776 = vpack.c.b16 %v6604, %v6603
      %v6777 = vpack.c.b16 %v6606, %v6605
      %v6778 = vpack.c.b16 %v6608, %v6607
      %v6779 = vpack.c.b16 %v6610, %v6609
      %v6780 = vpack.c.b16 %v6612, %v6611
      %v6781 = vpack.c.b16 %v6614, %v6613
      %v6782 = vpack.c.b16 %v6616, %v6615
      %v6783 = vpack.c.b16 %v6618, %v6617
      %v6784 = vpack.c.b16 %v6620, %v6619
      %v6785 = vpack.c.b16 %v6622, %v6621
      %v6786 = vpack.c.b16 %v6624, %v6623
      %v6787 = vpack.c.b16 %v6626, %v6625
      %v6788 = vpack.c.b16 %v6628, %v6627
      %v6789 = vpack.c.b16 %v6630, %v6629
      %v6790 = vpack.c.b16 %v6632, %v6631
      %v6791 = vpack.c.b16 %v6634, %v6633
      %v6792 = vpack.c.b16 %v6636, %v6635
      %v6793 = vpack.c.b16 %v6638, %v6637
      %v6794 = vpack.c.b16 %v6640, %v6639
      %v6795 = vpack.c.b16 %v6642, %v6641
      %v6796 = vpack.c.b16 %v6644, %v6643
      %v6797 = vpack.c.b16 %v6646, %v6645
      %v6798 = vpack.c.b16 %v6648, %v6647
      %v6799 = vpack.c.b16 %v6650, %v6649
      %v6800 = vpack.c.b16 %v6652, %v6651
      %v6801 = vpack.c.b16 %v6654, %v6653
      %v6802 = vpack.c.b16 %v6656, %v6655
      %v6803 = vpack.c.b16 %v6658, %v6657
      %v6804 = vpack.c.b16 %v6660, %v6659
      %v6805 = vpack.c.b16 %v6662, %v6661
      %v6806 = vpack.c.b16 %v6664, %v6663
      %v6807 = vpack.c.b16 %v6666, %v6665
      %v6808 = vpack.c.b16 %v6668, %v6667
      %v6809 = vpack.c.b16 %v6670, %v6669
      %v6810 = vpack.c.b16 %v6672, %v6671
      %v6811 = vpack.c.b16 %v6674, %v6673
      %v6812 = vpack.c.b16 %v6676, %v6675
      %v6813 = vpack.c.b16 %v6678, %v6677
      %v6814 = vpack.c.b16 %v6680, %v6679
      %v6815 = vpack.c.b16 %v6682, %v6681
      %v6816 = vpack.c.b16 %v6684, %v6683
      %v6817 = vpack.c.b16 %v6686, %v6685
      %v6818 = vpack.c.b16 %v6688, %v6687
      %v6819 = vpack.c.b16 %v6690, %v6689
      %v6820 = vpack.c.b16 %v6692, %v6691
      %6949 = vmatprep.subr.bf16.mxu0 0
      %6950 = vmatpush1.bf16.msra.mxu0 %v6700
      %6951 = vmatprep.subr.bf16.mxu0 0
      %6952 = vmatpush1.bf16.msra.mxu0 %v6699
      %6953 = vmatprep.subr.bf16.mxu0 0
      %6954 = vmatpush1.bf16.msra.mxu0 %v6698
      %6955 = vmatprep.subr.bf16.mxu0 0
      %6956 = vmatpush1.bf16.msra.mxu0 %v6697
      %6957 = vmatprep.subr.bf16.mxu0 0
      %6958 = vmatpush1.bf16.msra.mxu0 %v6696
      %6959 = vmatprep.subr.bf16.mxu0 0
      %6960 = vmatpush1.bf16.msra.mxu0 %v6695
      %6961 = vmatprep.subr.bf16.mxu0 0
      %6962 = vmatpush1.bf16.msra.mxu0 %v6694
      %6963 = vmatprep.subr.bf16.mxu0 0
      %6964 = vmatpush1.bf16.msra.mxu0 %v6693
      %6965 = vmatprep.subr.bf16.mxu0 0
      %6966 = vmatpush2.bf16.msra.mxu0 %v6708
      %6967 = vmatprep.subr.bf16.mxu0 0
      %6968 = vmatpush2.bf16.msra.mxu0 %v6707
      %6969 = vmatprep.subr.bf16.mxu0 0
      %6970 = vmatpush2.bf16.msra.mxu0 %v6706
      %6971 = vmatprep.subr.bf16.mxu0 0
      %6972 = vmatpush2.bf16.msra.mxu0 %v6705
      %6973 = vmatprep.subr.bf16.mxu0 0
      %6974 = vmatpush2.bf16.msra.mxu0 %v6704
      %6975 = vmatprep.subr.bf16.mxu0 0
      %6976 = vmatpush2.bf16.msra.mxu0 %v6703
      %6977 = vmatprep.subr.bf16.mxu0 0
      %6978 = vmatpush2.bf16.msra.mxu0 %v6702
      %6979 = vmatprep.subr.bf16.mxu0 0
      %6980 = vmatpush2.bf16.msra.mxu0 %v6701
      %6981 = vmatprep.mubr.bf16.mxu0 %v6150
      %6982 = vmatmul.mubr.bf16.gmra.mxu0 %v6149
      %v6983 = vpop.f32.mrf.mxu0
      %v6984 = vadd.f32 %v6051, %v6983
      %v6985 = vpop.f32.mrf.mxu0
      %v6986 = vpop.f32.mrf.mxu0
      %v6987 = vpop.f32.mrf.mxu0
      %6988 = vdwg.mxu0
      %6989 = vmatprep.subr.bf16.mxu0 0
      %6990 = vmatpush1.bf16.msra.mxu0 %v6716
      %6991 = vmatprep.subr.bf16.mxu0 0
      %6992 = vmatpush1.bf16.msra.mxu0 %v6715
      %6993 = vmatprep.subr.bf16.mxu0 0
      %6994 = vmatpush1.bf16.msra.mxu0 %v6714
      %6995 = vmatprep.subr.bf16.mxu0 0
      %6996 = vmatpush1.bf16.msra.mxu0 %v6713
      %6997 = vmatprep.subr.bf16.mxu0 0
      %6998 = vmatpush1.bf16.msra.mxu0 %v6712
      %6999 = vmatprep.subr.bf16.mxu0 0
      %7000 = vmatpush1.bf16.msra.mxu0 %v6711
      %7001 = vmatprep.subr.bf16.mxu0 0
      %7002 = vmatpush1.bf16.msra.mxu0 %v6710
      %7003 = vmatprep.subr.bf16.mxu0 0
      %7004 = vmatpush1.bf16.msra.mxu0 %v6709
      %7005 = vmatprep.subr.bf16.mxu0 0
      %7006 = vmatpush2.bf16.msra.mxu0 %v6724
      %7007 = vmatprep.subr.bf16.mxu0 0
      %7008 = vmatpush2.bf16.msra.mxu0 %v6723
      %7009 = vmatprep.subr.bf16.mxu0 0
      %7010 = vmatpush2.bf16.msra.mxu0 %v6722
      %7011 = vmatprep.subr.bf16.mxu0 0
      %7012 = vmatpush2.bf16.msra.mxu0 %v6721
      %7013 = vmatprep.subr.bf16.mxu0 0
      %7014 = vmatpush2.bf16.msra.mxu0 %v6720
      %7015 = vmatprep.subr.bf16.mxu0 0
      %7016 = vmatpush2.bf16.msra.mxu0 %v6719
      %7017 = vmatprep.subr.bf16.mxu0 0
      %7018 = vmatpush2.bf16.msra.mxu0 %v6718
      %7019 = vmatprep.subr.bf16.mxu0 0
      %7020 = vmatpush2.bf16.msra.mxu0 %v6717
      %7021 = vmatprep.mubr.bf16.mxu0 %v6152
      %7022 = vmatmul.mubr.bf16.gmra.mxu0 %v6151
      %v7023 = vpop.f32.mrf.mxu0
      %v7024 = vadd.f32 %v6984, %v7023
      %v7025 = vpop.f32.mrf.mxu0
      %v7026 = vpop.f32.mrf.mxu0
      %v7027 = vpop.f32.mrf.mxu0
      %7028 = vdwg.mxu0
      %7029 = vmatprep.subr.bf16.mxu0 0
      %7030 = vmatpush1.bf16.msra.mxu0 %v6732
      %7031 = vmatprep.subr.bf16.mxu0 0
      %7032 = vmatpush1.bf16.msra.mxu0 %v6731
      %7033 = vmatprep.subr.bf16.mxu0 0
      %7034 = vmatpush1.bf16.msra.mxu0 %v6730
      %7035 = vmatprep.subr.bf16.mxu0 0
      %7036 = vmatpush1.bf16.msra.mxu0 %v6729
      %7037 = vmatprep.subr.bf16.mxu0 0
      %7038 = vmatpush1.bf16.msra.mxu0 %v6728
      %7039 = vmatprep.subr.bf16.mxu0 0
      %7040 = vmatpush1.bf16.msra.mxu0 %v6727
      %7041 = vmatprep.subr.bf16.mxu0 0
      %7042 = vmatpush1.bf16.msra.mxu0 %v6726
      %7043 = vmatprep.subr.bf16.mxu0 0
      %7044 = vmatpush1.bf16.msra.mxu0 %v6725
      %7045 = vmatprep.subr.bf16.mxu0 0
      %7046 = vmatpush2.bf16.msra.mxu0 %v6740
      %7047 = vmatprep.subr.bf16.mxu0 0
      %7048 = vmatpush2.bf16.msra.mxu0 %v6739
      %7049 = vmatprep.subr.bf16.mxu0 0
      %7050 = vmatpush2.bf16.msra.mxu0 %v6738
      %7051 = vmatprep.subr.bf16.mxu0 0
      %7052 = vmatpush2.bf16.msra.mxu0 %v6737
      %7053 = vmatprep.subr.bf16.mxu0 0
      %7054 = vmatpush2.bf16.msra.mxu0 %v6736
      %7055 = vmatprep.subr.bf16.mxu0 0
      %7056 = vmatpush2.bf16.msra.mxu0 %v6735
      %7057 = vmatprep.subr.bf16.mxu0 0
      %7058 = vmatpush2.bf16.msra.mxu0 %v6734
      %7059 = vmatprep.subr.bf16.mxu0 0
      %7060 = vmatpush2.bf16.msra.mxu0 %v6733
      %7061 = vmatprep.mubr.bf16.mxu0 %v6154
      %7062 = vmatmul.mubr.bf16.gmra.mxu0 %v6153
      %v7063 = vpop.f32.mrf.mxu0
      %v7064 = vadd.f32 %v7024, %v7063
      %v7065 = vpop.f32.mrf.mxu0
      %v7066 = vpop.f32.mrf.mxu0
      %v7067 = vpop.f32.mrf.mxu0
      %7068 = vdwg.mxu0
      %7069 = vmatprep.subr.bf16.mxu0 0
      %7070 = vmatpush1.bf16.msra.mxu0 %v6748
      %7071 = vmatprep.subr.bf16.mxu0 0
      %7072 = vmatpush1.bf16.msra.mxu0 %v6747
      %7073 = vmatprep.subr.bf16.mxu0 0
      %7074 = vmatpush1.bf16.msra.mxu0 %v6746
      %7075 = vmatprep.subr.bf16.mxu0 0
      %7076 = vmatpush1.bf16.msra.mxu0 %v6745
      %7077 = vmatprep.subr.bf16.mxu0 0
      %7078 = vmatpush1.bf16.msra.mxu0 %v6744
      %7079 = vmatprep.subr.bf16.mxu0 0
      %7080 = vmatpush1.bf16.msra.mxu0 %v6743
      %7081 = vmatprep.subr.bf16.mxu0 0
      %7082 = vmatpush1.bf16.msra.mxu0 %v6742
      %7083 = vmatprep.subr.bf16.mxu0 0
      %7084 = vmatpush1.bf16.msra.mxu0 %v6741
      %7085 = vmatprep.subr.bf16.mxu0 0
      %7086 = vmatpush2.bf16.msra.mxu0 %v6756
      %7087 = vmatprep.subr.bf16.mxu0 0
      %7088 = vmatpush2.bf16.msra.mxu0 %v6755
      %7089 = vmatprep.subr.bf16.mxu0 0
      %7090 = vmatpush2.bf16.msra.mxu0 %v6754
      %7091 = vmatprep.subr.bf16.mxu0 0
      %7092 = vmatpush2.bf16.msra.mxu0 %v6753
      %7093 = vmatprep.subr.bf16.mxu0 0
      %7094 = vmatpush2.bf16.msra.mxu0 %v6752
      %7095 = vmatprep.subr.bf16.mxu0 0
      %7096 = vmatpush2.bf16.msra.mxu0 %v6751
      %7097 = vmatprep.subr.bf16.mxu0 0
      %7098 = vmatpush2.bf16.msra.mxu0 %v6750
      %7099 = vmatprep.subr.bf16.mxu0 0
      %7100 = vmatpush2.bf16.msra.mxu0 %v6749
      %7101 = vmatprep.mubr.bf16.mxu0 %v6156
      %7102 = vmatmul.mubr.bf16.gmra.mxu0 %v6155
      %v7103 = vpop.f32.mrf.mxu0
      %v7104 = vadd.f32 %v7064, %v7103
      %v7105 = vpop.f32.mrf.mxu0
      %v7106 = vpop.f32.mrf.mxu0
      %v7107 = vpop.f32.mrf.mxu0
      %7108 = vdwg.mxu0
      %7109 = vmatprep.subr.bf16.mxu0 0
      %7110 = vmatpush1.bf16.msra.mxu0 %v6764
      %7111 = vmatprep.subr.bf16.mxu0 0
      %7112 = vmatpush1.bf16.msra.mxu0 %v6763
      %7113 = vmatprep.subr.bf16.mxu0 0
      %7114 = vmatpush1.bf16.msra.mxu0 %v6762
      %7115 = vmatprep.subr.bf16.mxu0 0
      %7116 = vmatpush1.bf16.msra.mxu0 %v6761
      %7117 = vmatprep.subr.bf16.mxu0 0
      %7118 = vmatpush1.bf16.msra.mxu0 %v6760
      %7119 = vmatprep.subr.bf16.mxu0 0
      %7120 = vmatpush1.bf16.msra.mxu0 %v6759
      %7121 = vmatprep.subr.bf16.mxu0 0
      %7122 = vmatpush1.bf16.msra.mxu0 %v6758
      %7123 = vmatprep.subr.bf16.mxu0 0
      %7124 = vmatpush1.bf16.msra.mxu0 %v6757
      %7125 = vmatprep.subr.bf16.mxu0 0
      %7126 = vmatpush2.bf16.msra.mxu0 %v6772
      %7127 = vmatprep.subr.bf16.mxu0 0
      %7128 = vmatpush2.bf16.msra.mxu0 %v6771
      %7129 = vmatprep.subr.bf16.mxu0 0
      %7130 = vmatpush2.bf16.msra.mxu0 %v6770
      %7131 = vmatprep.subr.bf16.mxu0 0
      %7132 = vmatpush2.bf16.msra.mxu0 %v6769
      %7133 = vmatprep.subr.bf16.mxu0 0
      %7134 = vmatpush2.bf16.msra.mxu0 %v6768
      %7135 = vmatprep.subr.bf16.mxu0 0
      %7136 = vmatpush2.bf16.msra.mxu0 %v6767
      %7137 = vmatprep.subr.bf16.mxu0 0
      %7138 = vmatpush2.bf16.msra.mxu0 %v6766
      %7139 = vmatprep.subr.bf16.mxu0 0
      %7140 = vmatpush2.bf16.msra.mxu0 %v6765
      %7141 = vmatprep.mubr.bf16.mxu0 %v6158
      %7142 = vmatmul.mubr.bf16.gmra.mxu0 %v6157
      %v7143 = vpop.f32.mrf.mxu0
      %v7144 = vadd.f32 %v7104, %v7143
      %v7145 = vpop.f32.mrf.mxu0
      %v7146 = vpop.f32.mrf.mxu0
      %v7147 = vpop.f32.mrf.mxu0
      %7148 = vdwg.mxu0
      %7149 = vmatprep.subr.bf16.mxu0 0
      %7150 = vmatpush1.bf16.msra.mxu0 %v6780
      %7151 = vmatprep.subr.bf16.mxu0 0
      %7152 = vmatpush1.bf16.msra.mxu0 %v6779
      %7153 = vmatprep.subr.bf16.mxu0 0
      %7154 = vmatpush1.bf16.msra.mxu0 %v6778
      %7155 = vmatprep.subr.bf16.mxu0 0
      %7156 = vmatpush1.bf16.msra.mxu0 %v6777
      %7157 = vmatprep.subr.bf16.mxu0 0
      %7158 = vmatpush1.bf16.msra.mxu0 %v6776
      %7159 = vmatprep.subr.bf16.mxu0 0
      %7160 = vmatpush1.bf16.msra.mxu0 %v6775
      %7161 = vmatprep.subr.bf16.mxu0 0
      %7162 = vmatpush1.bf16.msra.mxu0 %v6774
      %7163 = vmatprep.subr.bf16.mxu0 0
      %7164 = vmatpush1.bf16.msra.mxu0 %v6773
      %7165 = vmatprep.subr.bf16.mxu0 0
      %7166 = vmatpush2.bf16.msra.mxu0 %v6788
      %7167 = vmatprep.subr.bf16.mxu0 0
      %7168 = vmatpush2.bf16.msra.mxu0 %v6787
      %7169 = vmatprep.subr.bf16.mxu0 0
      %7170 = vmatpush2.bf16.msra.mxu0 %v6786
      %7171 = vmatprep.subr.bf16.mxu0 0
      %7172 = vmatpush2.bf16.msra.mxu0 %v6785
      %7173 = vmatprep.subr.bf16.mxu0 0
      %7174 = vmatpush2.bf16.msra.mxu0 %v6784
      %7175 = vmatprep.subr.bf16.mxu0 0
      %7176 = vmatpush2.bf16.msra.mxu0 %v6783
      %7177 = vmatprep.subr.bf16.mxu0 0
      %7178 = vmatpush2.bf16.msra.mxu0 %v6782
      %7179 = vmatprep.subr.bf16.mxu0 0
      %7180 = vmatpush2.bf16.msra.mxu0 %v6781
      %7181 = vmatprep.mubr.bf16.mxu0 %v6160
      %7182 = vmatmul.mubr.bf16.gmra.mxu0 %v6159
      %v7183 = vpop.f32.mrf.mxu0
      %v7184 = vadd.f32 %v7144, %v7183
      %v7185 = vpop.f32.mrf.mxu0
      %v7186 = vpop.f32.mrf.mxu0
      %v7187 = vpop.f32.mrf.mxu0
      %7188 = vdwg.mxu0
      %7189 = vmatprep.subr.bf16.mxu0 0
      %7190 = vmatpush1.bf16.msra.mxu0 %v6796
      %7191 = vmatprep.subr.bf16.mxu0 0
      %7192 = vmatpush1.bf16.msra.mxu0 %v6795
      %7193 = vmatprep.subr.bf16.mxu0 0
      %7194 = vmatpush1.bf16.msra.mxu0 %v6794
      %7195 = vmatprep.subr.bf16.mxu0 0
      %7196 = vmatpush1.bf16.msra.mxu0 %v6793
      %7197 = vmatprep.subr.bf16.mxu0 0
      %7198 = vmatpush1.bf16.msra.mxu0 %v6792
      %7199 = vmatprep.subr.bf16.mxu0 0
      %7200 = vmatpush1.bf16.msra.mxu0 %v6791
      %7201 = vmatprep.subr.bf16.mxu0 0
      %7202 = vmatpush1.bf16.msra.mxu0 %v6790
      %7203 = vmatprep.subr.bf16.mxu0 0
      %7204 = vmatpush1.bf16.msra.mxu0 %v6789
      %7205 = vmatprep.subr.bf16.mxu0 0
      %7206 = vmatpush2.bf16.msra.mxu0 %v6804
      %7207 = vmatprep.subr.bf16.mxu0 0
      %7208 = vmatpush2.bf16.msra.mxu0 %v6803
      %7209 = vmatprep.subr.bf16.mxu0 0
      %7210 = vmatpush2.bf16.msra.mxu0 %v6802
      %7211 = vmatprep.subr.bf16.mxu0 0
      %7212 = vmatpush2.bf16.msra.mxu0 %v6801
      %7213 = vmatprep.subr.bf16.mxu0 0
      %7214 = vmatpush2.bf16.msra.mxu0 %v6800
      %7215 = vmatprep.subr.bf16.mxu0 0
      %7216 = vmatpush2.bf16.msra.mxu0 %v6799
      %7217 = vmatprep.subr.bf16.mxu0 0
      %7218 = vmatpush2.bf16.msra.mxu0 %v6798
      %7219 = vmatprep.subr.bf16.mxu0 0
      %7220 = vmatpush2.bf16.msra.mxu0 %v6797
      %7221 = vmatprep.mubr.bf16.mxu0 %v6162
      %7222 = vmatmul.mubr.bf16.gmra.mxu0 %v6161
      %v7223 = vpop.f32.mrf.mxu0
      %v7224 = vadd.f32 %v7184, %v7223
      %v7225 = vpop.f32.mrf.mxu0
      %v7226 = vpop.f32.mrf.mxu0
      %v7227 = vpop.f32.mrf.mxu0
      %7228 = vdwg.mxu0
      %7229 = vmatprep.subr.bf16.mxu0 0
      %7230 = vmatpush1.bf16.msra.mxu0 %v6812
      %7231 = vmatprep.subr.bf16.mxu0 0
      %7232 = vmatpush1.bf16.msra.mxu0 %v6811
      %7233 = vmatprep.subr.bf16.mxu0 0
      %7234 = vmatpush1.bf16.msra.mxu0 %v6810
      %7235 = vmatprep.subr.bf16.mxu0 0
      %7236 = vmatpush1.bf16.msra.mxu0 %v6809
      %7237 = vmatprep.subr.bf16.mxu0 0
      %7238 = vmatpush1.bf16.msra.mxu0 %v6808
      %7239 = vmatprep.subr.bf16.mxu0 0
      %7240 = vmatpush1.bf16.msra.mxu0 %v6807
      %7241 = vmatprep.subr.bf16.mxu0 0
      %7242 = vmatpush1.bf16.msra.mxu0 %v6806
      %7243 = vmatprep.subr.bf16.mxu0 0
      %7244 = vmatpush1.bf16.msra.mxu0 %v6805
      %7245 = vmatprep.subr.bf16.mxu0 0
      %7246 = vmatpush2.bf16.msra.mxu0 %v6820
      %7247 = vmatprep.subr.bf16.mxu0 0
      %7248 = vmatpush2.bf16.msra.mxu0 %v6819
      %7249 = vmatprep.subr.bf16.mxu0 0
      %7250 = vmatpush2.bf16.msra.mxu0 %v6818
      %7251 = vmatprep.subr.bf16.mxu0 0
      %7252 = vmatpush2.bf16.msra.mxu0 %v6817
      %7253 = vmatprep.subr.bf16.mxu0 0
      %7254 = vmatpush2.bf16.msra.mxu0 %v6816
      %7255 = vmatprep.subr.bf16.mxu0 0
      %7256 = vmatpush2.bf16.msra.mxu0 %v6815
      %7257 = vmatprep.subr.bf16.mxu0 0
      %7258 = vmatpush2.bf16.msra.mxu0 %v6814
      %7259 = vmatprep.subr.bf16.mxu0 0
      %7260 = vmatpush2.bf16.msra.mxu0 %v6813
      %7261 = vmatprep.mubr.bf16.mxu0 %v6164
      %7262 = vmatmul.mubr.bf16.gmra.mxu0 %v6163
      %v7263 = vpop.f32.mrf.mxu0
      %v7264 = vadd.f32 %v7224, %v7263
      %v7265 = vpop.f32.mrf.mxu0
      %v7266 = vpop.f32.mrf.mxu0
      %v7267 = vpop.f32.mrf.mxu0
      %7268 = vdwg.mxu0
      %s7269 = scalar_lea.vmem %s241, 4
      %7270 = vst.msk [vmem:[%s7269] sm:$0x3] %vm3879, %v7264
      %s7271 = scalar_lea.vmem [#allocation2], 3
      %v7272 = vld [vmem:[%s7271] ss:$8 sm:$0xf]
      %v7273 = vld [vmem:[%s7271] ss:$8 sm:$0xf0]
      %v7274 = vor.u32 %v7272, %v7273
      %s7275 = scalar_lea.vmem [#allocation2], 67
      %v7276 = vld [vmem:[%s7275] ss:$8 sm:$0xf]
      %v7277 = vld [vmem:[%s7275] ss:$8 sm:$0xf0]
      %v7278 = vor.u32 %v7276, %v7277
      %s7279 = scalar_lea.vmem [#allocation2], 131
      %v7280 = vld [vmem:[%s7279] ss:$8 sm:$0xf]
      %v7281 = vld [vmem:[%s7279] ss:$8 sm:$0xf0]
      %v7282 = vor.u32 %v7280, %v7281
      %s7283 = scalar_lea.vmem [#allocation2], 195
      %v7284 = vld [vmem:[%s7283] ss:$8 sm:$0xf]
      %v7285 = vld [vmem:[%s7283] ss:$8 sm:$0xf0]
      %v7286 = vor.u32 %v7284, %v7285
      %v7291 = vlaneseq
      %v7292 = vshrl.u32 %v7291, 7
      %v7293 = vsub.s32 0, %v7292
      %v7294 = vrot.slane %v7274, %v7293
      %v7295 = vlaneseq
      %v7296 = vshrl.u32 %v7295, 7
      %v7297 = vsub.s32 1, %v7296
      %v7298 = vrot.slane %v7274, %v7297
      %v7299 = vlaneseq
      %v7300 = vshrl.u32 %v7299, 7
      %v7301 = vsub.s32 2, %v7300
      %v7302 = vrot.slane %v7274, %v7301
      %v7303 = vlaneseq
      %v7304 = vshrl.u32 %v7303, 7
      %v7305 = vsub.s32 3, %v7304
      %v7306 = vrot.slane %v7274, %v7305
      %v7307 = vlaneseq
      %v7308 = vshrl.u32 %v7307, 7
      %v7309 = vsub.s32 4, %v7308
      %v7310 = vrot.slane %v7274, %v7309
      %v7311 = vlaneseq
      %v7312 = vshrl.u32 %v7311, 7
      %v7313 = vsub.s32 5, %v7312
      %v7314 = vrot.slane %v7274, %v7313
      %v7315 = vlaneseq
      %v7316 = vshrl.u32 %v7315, 7
      %v7317 = vsub.s32 6, %v7316
      %v7318 = vrot.slane %v7274, %v7317
      %v7319 = vlaneseq
      %v7320 = vshrl.u32 %v7319, 7
      %v7321 = vsub.s32 7, %v7320
      %v7322 = vrot.slane %v7274, %v7321
      %v7323 = vlaneseq
      %v7324 = vshrl.u32 %v7323, 7
      %v7325 = vsub.s32 0, %v7324
      %v7326 = vrot.slane %v7278, %v7325
      %v7327 = vlaneseq
      %v7328 = vshrl.u32 %v7327, 7
      %v7329 = vsub.s32 1, %v7328
      %v7330 = vrot.slane %v7278, %v7329
      %v7331 = vlaneseq
      %v7332 = vshrl.u32 %v7331, 7
      %v7333 = vsub.s32 2, %v7332
      %v7334 = vrot.slane %v7278, %v7333
      %v7335 = vlaneseq
      %v7336 = vshrl.u32 %v7335, 7
      %v7337 = vsub.s32 3, %v7336
      %v7338 = vrot.slane %v7278, %v7337
      %v7339 = vlaneseq
      %v7340 = vshrl.u32 %v7339, 7
      %v7341 = vsub.s32 4, %v7340
      %v7342 = vrot.slane %v7278, %v7341
      %v7343 = vlaneseq
      %v7344 = vshrl.u32 %v7343, 7
      %v7345 = vsub.s32 5, %v7344
      %v7346 = vrot.slane %v7278, %v7345
      %v7347 = vlaneseq
      %v7348 = vshrl.u32 %v7347, 7
      %v7349 = vsub.s32 6, %v7348
      %v7350 = vrot.slane %v7278, %v7349
      %v7351 = vlaneseq
      %v7352 = vshrl.u32 %v7351, 7
      %v7353 = vsub.s32 7, %v7352
      %v7354 = vrot.slane %v7278, %v7353
      %v7355 = vlaneseq
      %v7356 = vshrl.u32 %v7355, 7
      %v7357 = vsub.s32 0, %v7356
      %v7358 = vrot.slane %v7282, %v7357
      %v7359 = vlaneseq
      %v7360 = vshrl.u32 %v7359, 7
      %v7361 = vsub.s32 1, %v7360
      %v7362 = vrot.slane %v7282, %v7361
      %v7363 = vlaneseq
      %v7364 = vshrl.u32 %v7363, 7
      %v7365 = vsub.s32 2, %v7364
      %v7366 = vrot.slane %v7282, %v7365
      %v7367 = vlaneseq
      %v7368 = vshrl.u32 %v7367, 7
      %v7369 = vsub.s32 3, %v7368
      %v7370 = vrot.slane %v7282, %v7369
      %v7371 = vlaneseq
      %v7372 = vshrl.u32 %v7371, 7
      %v7373 = vsub.s32 4, %v7372
      %v7374 = vrot.slane %v7282, %v7373
      %v7375 = vlaneseq
      %v7376 = vshrl.u32 %v7375, 7
      %v7377 = vsub.s32 5, %v7376
      %v7378 = vrot.slane %v7282, %v7377
      %v7379 = vlaneseq
      %v7380 = vshrl.u32 %v7379, 7
      %v7381 = vsub.s32 6, %v7380
      %v7382 = vrot.slane %v7282, %v7381
      %v7383 = vlaneseq
      %v7384 = vshrl.u32 %v7383, 7
      %v7385 = vsub.s32 7, %v7384
      %v7386 = vrot.slane %v7282, %v7385
      %v7387 = vlaneseq
      %v7388 = vshrl.u32 %v7387, 7
      %v7389 = vsub.s32 0, %v7388
      %v7390 = vrot.slane %v7286, %v7389
      %v7391 = vlaneseq
      %v7392 = vshrl.u32 %v7391, 7
      %v7393 = vsub.s32 1, %v7392
      %v7394 = vrot.slane %v7286, %v7393
      %v7395 = vlaneseq
      %v7396 = vshrl.u32 %v7395, 7
      %v7397 = vsub.s32 2, %v7396
      %v7398 = vrot.slane %v7286, %v7397
      %v7399 = vlaneseq
      %v7400 = vshrl.u32 %v7399, 7
      %v7401 = vsub.s32 3, %v7400
      %v7402 = vrot.slane %v7286, %v7401
      %v7403 = vlaneseq
      %v7404 = vshrl.u32 %v7403, 7
      %v7405 = vsub.s32 4, %v7404
      %v7406 = vrot.slane %v7286, %v7405
      %v7407 = vlaneseq
      %v7408 = vshrl.u32 %v7407, 7
      %v7409 = vsub.s32 5, %v7408
      %v7410 = vrot.slane %v7286, %v7409
      %v7411 = vlaneseq
      %v7412 = vshrl.u32 %v7411, 7
      %v7413 = vsub.s32 6, %v7412
      %v7414 = vrot.slane %v7286, %v7413
      %v7415 = vlaneseq
      %v7416 = vshrl.u32 %v7415, 7
      %v7417 = vsub.s32 7, %v7416
      %v7418 = vrot.slane %v7286, %v7417
      %v7451 = vpack.c.bf16 %v7294, %v7294
      %v7452 = vpack.c.bf16 %v7298, %v7298
      %v7453 = vpack.c.bf16 %v7302, %v7302
      %v7454 = vpack.c.bf16 %v7306, %v7306
      %v7455 = vpack.c.bf16 %v7310, %v7310
      %v7456 = vpack.c.bf16 %v7314, %v7314
      %v7457 = vpack.c.bf16 %v7318, %v7318
      %v7458 = vpack.c.bf16 %v7322, %v7322
      %v7459 = vpack.c.bf16 %v7326, %v7326
      %v7460 = vpack.c.bf16 %v7330, %v7330
      %v7461 = vpack.c.bf16 %v7334, %v7334
      %v7462 = vpack.c.bf16 %v7338, %v7338
      %v7463 = vpack.c.bf16 %v7342, %v7342
      %v7464 = vpack.c.bf16 %v7346, %v7346
      %v7465 = vpack.c.bf16 %v7350, %v7350
      %v7466 = vpack.c.bf16 %v7354, %v7354
      %v7467 = vpack.c.bf16 %v7358, %v7358
      %v7468 = vpack.c.bf16 %v7362, %v7362
      %v7469 = vpack.c.bf16 %v7366, %v7366
      %v7470 = vpack.c.bf16 %v7370, %v7370
      %v7471 = vpack.c.bf16 %v7374, %v7374
      %v7472 = vpack.c.bf16 %v7378, %v7378
      %v7473 = vpack.c.bf16 %v7382, %v7382
      %v7474 = vpack.c.bf16 %v7386, %v7386
      %v7475 = vpack.c.bf16 %v7390, %v7390
      %v7476 = vpack.c.bf16 %v7394, %v7394
      %v7477 = vpack.c.bf16 %v7398, %v7398
      %v7478 = vpack.c.bf16 %v7402, %v7402
      %v7479 = vpack.c.bf16 %v7406, %v7406
      %v7480 = vpack.c.bf16 %v7410, %v7410
      %v7481 = vpack.c.bf16 %v7414, %v7414
      %v7482 = vpack.c.bf16 %v7418, %v7418
      %s7483 = scalar_lea.vmem %s230, 3072
      %v7484 = vld [vmem:[%s7483] sm:$0xf]
      %v7485 = vld [vmem:[%s7483 + $0x4] sm:$0xf]
      %v7486 = vld [vmem:[%s7483 + $0x8] sm:$0xf]
      %v7487 = vld [vmem:[%s7483 + $0xc] sm:$0xf]
      %v7488 = vld [vmem:[%s7483 + $0x10] sm:$0xf]
      %v7489 = vld [vmem:[%s7483 + $0x14] sm:$0xf]
      %v7490 = vld [vmem:[%s7483 + $0x18] sm:$0xf]
      %v7491 = vld [vmem:[%s7483 + $0x1c] sm:$0xf]
      %v7492 = vld [vmem:[%s7483 + $0x20] sm:$0xf]
      %v7493 = vld [vmem:[%s7483 + $0x24] sm:$0xf]
      %v7494 = vld [vmem:[%s7483 + $0x28] sm:$0xf]
      %v7495 = vld [vmem:[%s7483 + $0x2c] sm:$0xf]
      %v7496 = vld [vmem:[%s7483 + $0x30] sm:$0xf]
      %v7497 = vld [vmem:[%s7483 + $0x34] sm:$0xf]
      %v7498 = vld [vmem:[%s7483 + $0x38] sm:$0xf]
      %v7499 = vld [vmem:[%s7483 + $0x3c] sm:$0xf]
      %v7500 = vld [vmem:[%s7483 + $0x40] sm:$0xf]
      %v7501 = vld [vmem:[%s7483 + $0x44] sm:$0xf]
      %v7502 = vld [vmem:[%s7483 + $0x48] sm:$0xf]
      %v7503 = vld [vmem:[%s7483 + $0x4c] sm:$0xf]
      %v7504 = vld [vmem:[%s7483 + $0x50] sm:$0xf]
      %v7505 = vld [vmem:[%s7483 + $0x54] sm:$0xf]
      %v7506 = vld [vmem:[%s7483 + $0x58] sm:$0xf]
      %v7507 = vld [vmem:[%s7483 + $0x5c] sm:$0xf]
      %v7508 = vld [vmem:[%s7483 + $0x60] sm:$0xf]
      %v7509 = vld [vmem:[%s7483 + $0x64] sm:$0xf]
      %v7510 = vld [vmem:[%s7483 + $0x68] sm:$0xf]
      %v7511 = vld [vmem:[%s7483 + $0x6c] sm:$0xf]
      %v7512 = vld [vmem:[%s7483 + $0x70] sm:$0xf]
      %v7513 = vld [vmem:[%s7483 + $0x74] sm:$0xf]
      %v7514 = vld [vmem:[%s7483 + $0x78] sm:$0xf]
      %v7515 = vld [vmem:[%s7483 + $0x7c] sm:$0xf]
      %v7516 = vld [vmem:[%s7483 + $0x80] sm:$0xf]
      %v7517 = vld [vmem:[%s7483 + $0x84] sm:$0xf]
      %v7518 = vld [vmem:[%s7483 + $0x88] sm:$0xf]
      %v7519 = vld [vmem:[%s7483 + $0x8c] sm:$0xf]
      %v7520 = vld [vmem:[%s7483 + $0x90] sm:$0xf]
      %v7521 = vld [vmem:[%s7483 + $0x94] sm:$0xf]
      %v7522 = vld [vmem:[%s7483 + $0x98] sm:$0xf]
      %v7523 = vld [vmem:[%s7483 + $0x9c] sm:$0xf]
      %v7524 = vld [vmem:[%s7483 + $0xa0] sm:$0xf]
      %v7525 = vld [vmem:[%s7483 + $0xa4] sm:$0xf]
      %v7526 = vld [vmem:[%s7483 + $0xa8] sm:$0xf]
      %v7527 = vld [vmem:[%s7483 + $0xac] sm:$0xf]
      %v7528 = vld [vmem:[%s7483 + $0xb0] sm:$0xf]
      %v7529 = vld [vmem:[%s7483 + $0xb4] sm:$0xf]
      %v7530 = vld [vmem:[%s7483 + $0xb8] sm:$0xf]
      %v7531 = vld [vmem:[%s7483 + $0xbc] sm:$0xf]
      %v7532 = vld [vmem:[%s7483 + $0xc0] sm:$0xf]
      %v7533 = vld [vmem:[%s7483 + $0xc4] sm:$0xf]
      %v7534 = vld [vmem:[%s7483 + $0xc8] sm:$0xf]
      %v7535 = vld [vmem:[%s7483 + $0xcc] sm:$0xf]
      %v7536 = vld [vmem:[%s7483 + $0xd0] sm:$0xf]
      %v7537 = vld [vmem:[%s7483 + $0xd4] sm:$0xf]
      %v7538 = vld [vmem:[%s7483 + $0xd8] sm:$0xf]
      %v7539 = vld [vmem:[%s7483 + $0xdc] sm:$0xf]
      %v7540 = vld [vmem:[%s7483 + $0xe0] sm:$0xf]
      %v7541 = vld [vmem:[%s7483 + $0xe4] sm:$0xf]
      %v7542 = vld [vmem:[%s7483 + $0xe8] sm:$0xf]
      %v7543 = vld [vmem:[%s7483 + $0xec] sm:$0xf]
      %v7544 = vld [vmem:[%s7483 + $0xf0] sm:$0xf]
      %v7545 = vld [vmem:[%s7483 + $0xf4] sm:$0xf]
      %v7546 = vld [vmem:[%s7483 + $0xf8] sm:$0xf]
      %v7547 = vld [vmem:[%s7483 + $0xfc] sm:$0xf]
      %v7548 = vld [vmem:[%s7483 + $0x100] sm:$0xf]
      %v7549 = vld [vmem:[%s7483 + $0x104] sm:$0xf]
      %v7550 = vld [vmem:[%s7483 + $0x108] sm:$0xf]
      %v7551 = vld [vmem:[%s7483 + $0x10c] sm:$0xf]
      %v7552 = vld [vmem:[%s7483 + $0x110] sm:$0xf]
      %v7553 = vld [vmem:[%s7483 + $0x114] sm:$0xf]
      %v7554 = vld [vmem:[%s7483 + $0x118] sm:$0xf]
      %v7555 = vld [vmem:[%s7483 + $0x11c] sm:$0xf]
      %v7556 = vld [vmem:[%s7483 + $0x120] sm:$0xf]
      %v7557 = vld [vmem:[%s7483 + $0x124] sm:$0xf]
      %v7558 = vld [vmem:[%s7483 + $0x128] sm:$0xf]
      %v7559 = vld [vmem:[%s7483 + $0x12c] sm:$0xf]
      %v7560 = vld [vmem:[%s7483 + $0x130] sm:$0xf]
      %v7561 = vld [vmem:[%s7483 + $0x134] sm:$0xf]
      %v7562 = vld [vmem:[%s7483 + $0x138] sm:$0xf]
      %v7563 = vld [vmem:[%s7483 + $0x13c] sm:$0xf]
      %v7564 = vld [vmem:[%s7483 + $0x140] sm:$0xf]
      %v7565 = vld [vmem:[%s7483 + $0x144] sm:$0xf]
      %v7566 = vld [vmem:[%s7483 + $0x148] sm:$0xf]
      %v7567 = vld [vmem:[%s7483 + $0x14c] sm:$0xf]
      %v7568 = vld [vmem:[%s7483 + $0x150] sm:$0xf]
      %v7569 = vld [vmem:[%s7483 + $0x154] sm:$0xf]
      %v7570 = vld [vmem:[%s7483 + $0x158] sm:$0xf]
      %v7571 = vld [vmem:[%s7483 + $0x15c] sm:$0xf]
      %v7572 = vld [vmem:[%s7483 + $0x160] sm:$0xf]
      %v7573 = vld [vmem:[%s7483 + $0x164] sm:$0xf]
      %v7574 = vld [vmem:[%s7483 + $0x168] sm:$0xf]
      %v7575 = vld [vmem:[%s7483 + $0x16c] sm:$0xf]
      %v7576 = vld [vmem:[%s7483 + $0x170] sm:$0xf]
      %v7577 = vld [vmem:[%s7483 + $0x174] sm:$0xf]
      %v7578 = vld [vmem:[%s7483 + $0x178] sm:$0xf]
      %v7579 = vld [vmem:[%s7483 + $0x17c] sm:$0xf]
      %v7580 = vld [vmem:[%s7483 + $0x180] sm:$0xf]
      %v7581 = vld [vmem:[%s7483 + $0x184] sm:$0xf]
      %v7582 = vld [vmem:[%s7483 + $0x188] sm:$0xf]
      %v7583 = vld [vmem:[%s7483 + $0x18c] sm:$0xf]
      %v7584 = vld [vmem:[%s7483 + $0x190] sm:$0xf]
      %v7585 = vld [vmem:[%s7483 + $0x194] sm:$0xf]
      %v7586 = vld [vmem:[%s7483 + $0x198] sm:$0xf]
      %v7587 = vld [vmem:[%s7483 + $0x19c] sm:$0xf]
      %v7588 = vld [vmem:[%s7483 + $0x1a0] sm:$0xf]
      %v7589 = vld [vmem:[%s7483 + $0x1a4] sm:$0xf]
      %v7590 = vld [vmem:[%s7483 + $0x1a8] sm:$0xf]
      %v7591 = vld [vmem:[%s7483 + $0x1ac] sm:$0xf]
      %v7592 = vld [vmem:[%s7483 + $0x1b0] sm:$0xf]
      %v7593 = vld [vmem:[%s7483 + $0x1b4] sm:$0xf]
      %v7594 = vld [vmem:[%s7483 + $0x1b8] sm:$0xf]
      %v7595 = vld [vmem:[%s7483 + $0x1bc] sm:$0xf]
      %v7596 = vld [vmem:[%s7483 + $0x1c0] sm:$0xf]
      %v7597 = vld [vmem:[%s7483 + $0x1c4] sm:$0xf]
      %v7598 = vld [vmem:[%s7483 + $0x1c8] sm:$0xf]
      %v7599 = vld [vmem:[%s7483 + $0x1cc] sm:$0xf]
      %v7600 = vld [vmem:[%s7483 + $0x1d0] sm:$0xf]
      %v7601 = vld [vmem:[%s7483 + $0x1d4] sm:$0xf]
      %v7602 = vld [vmem:[%s7483 + $0x1d8] sm:$0xf]
      %v7603 = vld [vmem:[%s7483 + $0x1dc] sm:$0xf]
      %v7604 = vld [vmem:[%s7483 + $0x1e0] sm:$0xf]
      %v7605 = vld [vmem:[%s7483 + $0x1e4] sm:$0xf]
      %v7606 = vld [vmem:[%s7483 + $0x1e8] sm:$0xf]
      %v7607 = vld [vmem:[%s7483 + $0x1ec] sm:$0xf]
      %v7608 = vld [vmem:[%s7483 + $0x1f0] sm:$0xf]
      %v7609 = vld [vmem:[%s7483 + $0x1f4] sm:$0xf]
      %v7610 = vld [vmem:[%s7483 + $0x1f8] sm:$0xf]
      %v7611 = vld [vmem:[%s7483 + $0x1fc] sm:$0xf]
      %v7612 = vld [vmem:[%s7483 + $0x200] sm:$0xf]
      %v7613 = vld [vmem:[%s7483 + $0x204] sm:$0xf]
      %v7614 = vld [vmem:[%s7483 + $0x208] sm:$0xf]
      %v7615 = vld [vmem:[%s7483 + $0x20c] sm:$0xf]
      %v7616 = vld [vmem:[%s7483 + $0x210] sm:$0xf]
      %v7617 = vld [vmem:[%s7483 + $0x214] sm:$0xf]
      %v7618 = vld [vmem:[%s7483 + $0x218] sm:$0xf]
      %v7619 = vld [vmem:[%s7483 + $0x21c] sm:$0xf]
      %v7620 = vld [vmem:[%s7483 + $0x220] sm:$0xf]
      %v7621 = vld [vmem:[%s7483 + $0x224] sm:$0xf]
      %v7622 = vld [vmem:[%s7483 + $0x228] sm:$0xf]
      %v7623 = vld [vmem:[%s7483 + $0x22c] sm:$0xf]
      %v7624 = vld [vmem:[%s7483 + $0x230] sm:$0xf]
      %v7625 = vld [vmem:[%s7483 + $0x234] sm:$0xf]
      %v7626 = vld [vmem:[%s7483 + $0x238] sm:$0xf]
      %v7627 = vld [vmem:[%s7483 + $0x23c] sm:$0xf]
      %v7628 = vld [vmem:[%s7483 + $0x240] sm:$0xf]
      %v7629 = vld [vmem:[%s7483 + $0x244] sm:$0xf]
      %v7630 = vld [vmem:[%s7483 + $0x248] sm:$0xf]
      %v7631 = vld [vmem:[%s7483 + $0x24c] sm:$0xf]
      %v7632 = vld [vmem:[%s7483 + $0x250] sm:$0xf]
      %v7633 = vld [vmem:[%s7483 + $0x254] sm:$0xf]
      %v7634 = vld [vmem:[%s7483 + $0x258] sm:$0xf]
      %v7635 = vld [vmem:[%s7483 + $0x25c] sm:$0xf]
      %v7636 = vld [vmem:[%s7483 + $0x260] sm:$0xf]
      %v7637 = vld [vmem:[%s7483 + $0x264] sm:$0xf]
      %v7638 = vld [vmem:[%s7483 + $0x268] sm:$0xf]
      %v7639 = vld [vmem:[%s7483 + $0x26c] sm:$0xf]
      %v7640 = vld [vmem:[%s7483 + $0x270] sm:$0xf]
      %v7641 = vld [vmem:[%s7483 + $0x274] sm:$0xf]
      %v7642 = vld [vmem:[%s7483 + $0x278] sm:$0xf]
      %v7643 = vld [vmem:[%s7483 + $0x27c] sm:$0xf]
      %v7644 = vld [vmem:[%s7483 + $0x280] sm:$0xf]
      %v7645 = vld [vmem:[%s7483 + $0x284] sm:$0xf]
      %v7646 = vld [vmem:[%s7483 + $0x288] sm:$0xf]
      %v7647 = vld [vmem:[%s7483 + $0x28c] sm:$0xf]
      %v7648 = vld [vmem:[%s7483 + $0x290] sm:$0xf]
      %v7649 = vld [vmem:[%s7483 + $0x294] sm:$0xf]
      %v7650 = vld [vmem:[%s7483 + $0x298] sm:$0xf]
      %v7651 = vld [vmem:[%s7483 + $0x29c] sm:$0xf]
      %v7652 = vld [vmem:[%s7483 + $0x2a0] sm:$0xf]
      %v7653 = vld [vmem:[%s7483 + $0x2a4] sm:$0xf]
      %v7654 = vld [vmem:[%s7483 + $0x2a8] sm:$0xf]
      %v7655 = vld [vmem:[%s7483 + $0x2ac] sm:$0xf]
      %v7656 = vld [vmem:[%s7483 + $0x2b0] sm:$0xf]
      %v7657 = vld [vmem:[%s7483 + $0x2b4] sm:$0xf]
      %v7658 = vld [vmem:[%s7483 + $0x2b8] sm:$0xf]
      %v7659 = vld [vmem:[%s7483 + $0x2bc] sm:$0xf]
      %v7660 = vld [vmem:[%s7483 + $0x2c0] sm:$0xf]
      %v7661 = vld [vmem:[%s7483 + $0x2c4] sm:$0xf]
      %v7662 = vld [vmem:[%s7483 + $0x2c8] sm:$0xf]
      %v7663 = vld [vmem:[%s7483 + $0x2cc] sm:$0xf]
      %v7664 = vld [vmem:[%s7483 + $0x2d0] sm:$0xf]
      %v7665 = vld [vmem:[%s7483 + $0x2d4] sm:$0xf]
      %v7666 = vld [vmem:[%s7483 + $0x2d8] sm:$0xf]
      %v7667 = vld [vmem:[%s7483 + $0x2dc] sm:$0xf]
      %v7668 = vld [vmem:[%s7483 + $0x2e0] sm:$0xf]
      %v7669 = vld [vmem:[%s7483 + $0x2e4] sm:$0xf]
      %v7670 = vld [vmem:[%s7483 + $0x2e8] sm:$0xf]
      %v7671 = vld [vmem:[%s7483 + $0x2ec] sm:$0xf]
      %v7672 = vld [vmem:[%s7483 + $0x2f0] sm:$0xf]
      %v7673 = vld [vmem:[%s7483 + $0x2f4] sm:$0xf]
      %v7674 = vld [vmem:[%s7483 + $0x2f8] sm:$0xf]
      %v7675 = vld [vmem:[%s7483 + $0x2fc] sm:$0xf]
      %v7676 = vld [vmem:[%s7483 + $0x300] sm:$0xf]
      %v7677 = vld [vmem:[%s7483 + $0x304] sm:$0xf]
      %v7678 = vld [vmem:[%s7483 + $0x308] sm:$0xf]
      %v7679 = vld [vmem:[%s7483 + $0x30c] sm:$0xf]
      %v7680 = vld [vmem:[%s7483 + $0x310] sm:$0xf]
      %v7681 = vld [vmem:[%s7483 + $0x314] sm:$0xf]
      %v7682 = vld [vmem:[%s7483 + $0x318] sm:$0xf]
      %v7683 = vld [vmem:[%s7483 + $0x31c] sm:$0xf]
      %v7684 = vld [vmem:[%s7483 + $0x320] sm:$0xf]
      %v7685 = vld [vmem:[%s7483 + $0x324] sm:$0xf]
      %v7686 = vld [vmem:[%s7483 + $0x328] sm:$0xf]
      %v7687 = vld [vmem:[%s7483 + $0x32c] sm:$0xf]
      %v7688 = vld [vmem:[%s7483 + $0x330] sm:$0xf]
      %v7689 = vld [vmem:[%s7483 + $0x334] sm:$0xf]
      %v7690 = vld [vmem:[%s7483 + $0x338] sm:$0xf]
      %v7691 = vld [vmem:[%s7483 + $0x33c] sm:$0xf]
      %v7692 = vld [vmem:[%s7483 + $0x340] sm:$0xf]
      %v7693 = vld [vmem:[%s7483 + $0x344] sm:$0xf]
      %v7694 = vld [vmem:[%s7483 + $0x348] sm:$0xf]
      %v7695 = vld [vmem:[%s7483 + $0x34c] sm:$0xf]
      %v7696 = vld [vmem:[%s7483 + $0x350] sm:$0xf]
      %v7697 = vld [vmem:[%s7483 + $0x354] sm:$0xf]
      %v7698 = vld [vmem:[%s7483 + $0x358] sm:$0xf]
      %v7699 = vld [vmem:[%s7483 + $0x35c] sm:$0xf]
      %v7700 = vld [vmem:[%s7483 + $0x360] sm:$0xf]
      %v7701 = vld [vmem:[%s7483 + $0x364] sm:$0xf]
      %v7702 = vld [vmem:[%s7483 + $0x368] sm:$0xf]
      %v7703 = vld [vmem:[%s7483 + $0x36c] sm:$0xf]
      %v7704 = vld [vmem:[%s7483 + $0x370] sm:$0xf]
      %v7705 = vld [vmem:[%s7483 + $0x374] sm:$0xf]
      %v7706 = vld [vmem:[%s7483 + $0x378] sm:$0xf]
      %v7707 = vld [vmem:[%s7483 + $0x37c] sm:$0xf]
      %v7708 = vld [vmem:[%s7483 + $0x380] sm:$0xf]
      %v7709 = vld [vmem:[%s7483 + $0x384] sm:$0xf]
      %v7710 = vld [vmem:[%s7483 + $0x388] sm:$0xf]
      %v7711 = vld [vmem:[%s7483 + $0x38c] sm:$0xf]
      %v7712 = vld [vmem:[%s7483 + $0x390] sm:$0xf]
      %v7713 = vld [vmem:[%s7483 + $0x394] sm:$0xf]
      %v7714 = vld [vmem:[%s7483 + $0x398] sm:$0xf]
      %v7715 = vld [vmem:[%s7483 + $0x39c] sm:$0xf]
      %v7716 = vld [vmem:[%s7483 + $0x3a0] sm:$0xf]
      %v7717 = vld [vmem:[%s7483 + $0x3a4] sm:$0xf]
      %v7718 = vld [vmem:[%s7483 + $0x3a8] sm:$0xf]
      %v7719 = vld [vmem:[%s7483 + $0x3ac] sm:$0xf]
      %v7720 = vld [vmem:[%s7483 + $0x3b0] sm:$0xf]
      %v7721 = vld [vmem:[%s7483 + $0x3b4] sm:$0xf]
      %v7722 = vld [vmem:[%s7483 + $0x3b8] sm:$0xf]
      %v7723 = vld [vmem:[%s7483 + $0x3bc] sm:$0xf]
      %v7724 = vld [vmem:[%s7483 + $0x3c0] sm:$0xf]
      %v7725 = vld [vmem:[%s7483 + $0x3c4] sm:$0xf]
      %v7726 = vld [vmem:[%s7483 + $0x3c8] sm:$0xf]
      %v7727 = vld [vmem:[%s7483 + $0x3cc] sm:$0xf]
      %v7728 = vld [vmem:[%s7483 + $0x3d0] sm:$0xf]
      %v7729 = vld [vmem:[%s7483 + $0x3d4] sm:$0xf]
      %v7730 = vld [vmem:[%s7483 + $0x3d8] sm:$0xf]
      %v7731 = vld [vmem:[%s7483 + $0x3dc] sm:$0xf]
      %v7732 = vld [vmem:[%s7483 + $0x3e0] sm:$0xf]
      %v7733 = vld [vmem:[%s7483 + $0x3e4] sm:$0xf]
      %v7734 = vld [vmem:[%s7483 + $0x3e8] sm:$0xf]
      %v7735 = vld [vmem:[%s7483 + $0x3ec] sm:$0xf]
      %v7736 = vld [vmem:[%s7483 + $0x3f0] sm:$0xf]
      %v7737 = vld [vmem:[%s7483 + $0x3f4] sm:$0xf]
      %v7738 = vld [vmem:[%s7483 + $0x3f8] sm:$0xf]
      %v7739 = vld [vmem:[%s7483 + $0x3fc] sm:$0xf]
      %s7740 = scalar_lea.vmem %s235, 3
      %v7741 = vld [vmem:[%s7740] sm:$0x1]
      %v7743 = vlaneseq
      %v7744 = vshrl.u32 %v7743, 7
      %v7745 = vsub.s32 0, %v7744
      %v7746 = vrot.slane %v7741, %v7745
      %v7780 = vunpack.c.l.b16 %v7451
      %v7781 = vunpack.c.l.b16 %v7452
      %v7782 = vunpack.c.l.b16 %v7453
      %v7783 = vunpack.c.l.b16 %v7454
      %v7784 = vunpack.c.l.b16 %v7455
      %v7785 = vunpack.c.l.b16 %v7456
      %v7786 = vunpack.c.l.b16 %v7457
      %v7787 = vunpack.c.l.b16 %v7458
      %v7788 = vunpack.c.l.b16 %v7459
      %v7789 = vunpack.c.l.b16 %v7460
      %v7790 = vunpack.c.l.b16 %v7461
      %v7791 = vunpack.c.l.b16 %v7462
      %v7792 = vunpack.c.l.b16 %v7463
      %v7793 = vunpack.c.l.b16 %v7464
      %v7794 = vunpack.c.l.b16 %v7465
      %v7795 = vunpack.c.l.b16 %v7466
      %v7796 = vunpack.c.l.b16 %v7467
      %v7797 = vunpack.c.l.b16 %v7468
      %v7798 = vunpack.c.l.b16 %v7469
      %v7799 = vunpack.c.l.b16 %v7470
      %v7800 = vunpack.c.l.b16 %v7471
      %v7801 = vunpack.c.l.b16 %v7472
      %v7802 = vunpack.c.l.b16 %v7473
      %v7803 = vunpack.c.l.b16 %v7474
      %v7804 = vunpack.c.l.b16 %v7475
      %v7805 = vunpack.c.l.b16 %v7476
      %v7806 = vunpack.c.l.b16 %v7477
      %v7807 = vunpack.c.l.b16 %v7478
      %v7808 = vunpack.c.l.b16 %v7479
      %v7809 = vunpack.c.l.b16 %v7480
      %v7810 = vunpack.c.l.b16 %v7481
      %v7811 = vunpack.c.l.b16 %v7482
      %v7812 = vrot.slane %v7796, 7
      %v7813 = vsel %vm2727, %v7812, %v7780
      %v7814 = vrot.slane %v7797, 7
      %v7815 = vsel %vm2727, %v7814, %v7781
      %v7816 = vrot.slane %v7798, 7
      %v7817 = vsel %vm2727, %v7816, %v7782
      %v7818 = vrot.slane %v7799, 7
      %v7819 = vsel %vm2727, %v7818, %v7783
      %v7820 = vrot.slane %v7800, 7
      %v7821 = vsel %vm2727, %v7820, %v7784
      %v7822 = vrot.slane %v7801, 7
      %v7823 = vsel %vm2727, %v7822, %v7785
      %v7824 = vrot.slane %v7802, 7
      %v7825 = vsel %vm2727, %v7824, %v7786
      %v7826 = vrot.slane %v7803, 7
      %v7827 = vsel %vm2727, %v7826, %v7787
      %v7828 = vrot.slane %v7804, 7
      %v7829 = vsel %vm2727, %v7828, %v7788
      %v7830 = vrot.slane %v7805, 7
      %v7831 = vsel %vm2727, %v7830, %v7789
      %v7832 = vrot.slane %v7806, 7
      %v7833 = vsel %vm2727, %v7832, %v7790
      %v7834 = vrot.slane %v7807, 7
      %v7835 = vsel %vm2727, %v7834, %v7791
      %v7836 = vrot.slane %v7808, 7
      %v7837 = vsel %vm2727, %v7836, %v7792
      %v7838 = vrot.slane %v7809, 7
      %v7839 = vsel %vm2727, %v7838, %v7793
      %v7840 = vrot.slane %v7810, 7
      %v7841 = vsel %vm2727, %v7840, %v7794
      %v7842 = vrot.slane %v7811, 7
      %v7843 = vsel %vm2727, %v7842, %v7795
      %v7844 = vpack.c.b16 %v7813, %v7813
      %v7845 = vpack.c.b16 %v7815, %v7815
      %v7846 = vpack.c.b16 %v7817, %v7817
      %v7847 = vpack.c.b16 %v7819, %v7819
      %v7848 = vpack.c.b16 %v7821, %v7821
      %v7849 = vpack.c.b16 %v7823, %v7823
      %v7850 = vpack.c.b16 %v7825, %v7825
      %v7851 = vpack.c.b16 %v7827, %v7827
      %v7852 = vpack.c.b16 %v7829, %v7829
      %v7853 = vpack.c.b16 %v7831, %v7831
      %v7854 = vpack.c.b16 %v7833, %v7833
      %v7855 = vpack.c.b16 %v7835, %v7835
      %v7856 = vpack.c.b16 %v7837, %v7837
      %v7857 = vpack.c.b16 %v7839, %v7839
      %v7858 = vpack.c.b16 %v7841, %v7841
      %v7859 = vpack.c.b16 %v7843, %v7843
      %v8132 = vunpack.c.l.b16 %v7484
      %v8133 = vunpack.c.l.b16 %v7485
      %v8134 = vunpack.c.l.b16 %v7486
      %v8135 = vunpack.c.l.b16 %v7487
      %v8136 = vunpack.c.l.b16 %v7488
      %v8137 = vunpack.c.l.b16 %v7489
      %v8138 = vunpack.c.l.b16 %v7490
      %v8139 = vunpack.c.l.b16 %v7491
      %v8140 = vunpack.c.l.b16 %v7492
      %v8141 = vunpack.c.l.b16 %v7493
      %v8142 = vunpack.c.l.b16 %v7494
      %v8143 = vunpack.c.l.b16 %v7495
      %v8144 = vunpack.c.l.b16 %v7496
      %v8145 = vunpack.c.l.b16 %v7497
      %v8146 = vunpack.c.l.b16 %v7498
      %v8147 = vunpack.c.l.b16 %v7499
      %v8148 = vunpack.c.l.b16 %v7500
      %v8149 = vunpack.c.l.b16 %v7501
      %v8150 = vunpack.c.l.b16 %v7502
      %v8151 = vunpack.c.l.b16 %v7503
      %v8152 = vunpack.c.l.b16 %v7504
      %v8153 = vunpack.c.l.b16 %v7505
      %v8154 = vunpack.c.l.b16 %v7506
      %v8155 = vunpack.c.l.b16 %v7507
      %v8156 = vunpack.c.l.b16 %v7508
      %v8157 = vunpack.c.l.b16 %v7509
      %v8158 = vunpack.c.l.b16 %v7510
      %v8159 = vunpack.c.l.b16 %v7511
      %v8160 = vunpack.c.l.b16 %v7512
      %v8161 = vunpack.c.l.b16 %v7513
      %v8162 = vunpack.c.l.b16 %v7514
      %v8163 = vunpack.c.l.b16 %v7515
      %v8164 = vunpack.c.l.b16 %v7516
      %v8165 = vunpack.c.l.b16 %v7517
      %v8166 = vunpack.c.l.b16 %v7518
      %v8167 = vunpack.c.l.b16 %v7519
      %v8168 = vunpack.c.l.b16 %v7520
      %v8169 = vunpack.c.l.b16 %v7521
      %v8170 = vunpack.c.l.b16 %v7522
      %v8171 = vunpack.c.l.b16 %v7523
      %v8172 = vunpack.c.l.b16 %v7524
      %v8173 = vunpack.c.l.b16 %v7525
      %v8174 = vunpack.c.l.b16 %v7526
      %v8175 = vunpack.c.l.b16 %v7527
      %v8176 = vunpack.c.l.b16 %v7528
      %v8177 = vunpack.c.l.b16 %v7529
      %v8178 = vunpack.c.l.b16 %v7530
      %v8179 = vunpack.c.l.b16 %v7531
      %v8180 = vunpack.c.l.b16 %v7532
      %v8181 = vunpack.c.l.b16 %v7533
      %v8182 = vunpack.c.l.b16 %v7534
      %v8183 = vunpack.c.l.b16 %v7535
      %v8184 = vunpack.c.l.b16 %v7536
      %v8185 = vunpack.c.l.b16 %v7537
      %v8186 = vunpack.c.l.b16 %v7538
      %v8187 = vunpack.c.l.b16 %v7539
      %v8188 = vunpack.c.l.b16 %v7540
      %v8189 = vunpack.c.l.b16 %v7541
      %v8190 = vunpack.c.l.b16 %v7542
      %v8191 = vunpack.c.l.b16 %v7543
      %v8192 = vunpack.c.l.b16 %v7544
      %v8193 = vunpack.c.l.b16 %v7545
      %v8194 = vunpack.c.l.b16 %v7546
      %v8195 = vunpack.c.l.b16 %v7547
      %v8196 = vunpack.c.l.b16 %v7548
      %v8197 = vunpack.c.l.b16 %v7549
      %v8198 = vunpack.c.l.b16 %v7550
      %v8199 = vunpack.c.l.b16 %v7551
      %v8200 = vunpack.c.l.b16 %v7552
      %v8201 = vunpack.c.l.b16 %v7553
      %v8202 = vunpack.c.l.b16 %v7554
      %v8203 = vunpack.c.l.b16 %v7555
      %v8204 = vunpack.c.l.b16 %v7556
      %v8205 = vunpack.c.l.b16 %v7557
      %v8206 = vunpack.c.l.b16 %v7558
      %v8207 = vunpack.c.l.b16 %v7559
      %v8208 = vunpack.c.l.b16 %v7560
      %v8209 = vunpack.c.l.b16 %v7561
      %v8210 = vunpack.c.l.b16 %v7562
      %v8211 = vunpack.c.l.b16 %v7563
      %v8212 = vunpack.c.l.b16 %v7564
      %v8213 = vunpack.c.l.b16 %v7565
      %v8214 = vunpack.c.l.b16 %v7566
      %v8215 = vunpack.c.l.b16 %v7567
      %v8216 = vunpack.c.l.b16 %v7568
      %v8217 = vunpack.c.l.b16 %v7569
      %v8218 = vunpack.c.l.b16 %v7570
      %v8219 = vunpack.c.l.b16 %v7571
      %v8220 = vunpack.c.l.b16 %v7572
      %v8221 = vunpack.c.l.b16 %v7573
      %v8222 = vunpack.c.l.b16 %v7574
      %v8223 = vunpack.c.l.b16 %v7575
      %v8224 = vunpack.c.l.b16 %v7576
      %v8225 = vunpack.c.l.b16 %v7577
      %v8226 = vunpack.c.l.b16 %v7578
      %v8227 = vunpack.c.l.b16 %v7579
      %v8228 = vunpack.c.l.b16 %v7580
      %v8229 = vunpack.c.l.b16 %v7581
      %v8230 = vunpack.c.l.b16 %v7582
      %v8231 = vunpack.c.l.b16 %v7583
      %v8232 = vunpack.c.l.b16 %v7584
      %v8233 = vunpack.c.l.b16 %v7585
      %v8234 = vunpack.c.l.b16 %v7586
      %v8235 = vunpack.c.l.b16 %v7587
      %v8236 = vunpack.c.l.b16 %v7588
      %v8237 = vunpack.c.l.b16 %v7589
      %v8238 = vunpack.c.l.b16 %v7590
      %v8239 = vunpack.c.l.b16 %v7591
      %v8240 = vunpack.c.l.b16 %v7592
      %v8241 = vunpack.c.l.b16 %v7593
      %v8242 = vunpack.c.l.b16 %v7594
      %v8243 = vunpack.c.l.b16 %v7595
      %v8244 = vunpack.c.l.b16 %v7596
      %v8245 = vunpack.c.l.b16 %v7597
      %v8246 = vunpack.c.l.b16 %v7598
      %v8247 = vunpack.c.l.b16 %v7599
      %v8248 = vunpack.c.l.b16 %v7600
      %v8249 = vunpack.c.l.b16 %v7601
      %v8250 = vunpack.c.l.b16 %v7602
      %v8251 = vunpack.c.l.b16 %v7603
      %v8252 = vunpack.c.l.b16 %v7604
      %v8253 = vunpack.c.l.b16 %v7605
      %v8254 = vunpack.c.l.b16 %v7606
      %v8255 = vunpack.c.l.b16 %v7607
      %v8256 = vunpack.c.l.b16 %v7608
      %v8257 = vunpack.c.l.b16 %v7609
      %v8258 = vunpack.c.l.b16 %v7610
      %v8259 = vunpack.c.l.b16 %v7611
      %v8260 = vunpack.c.l.b16 %v7612
      %v8261 = vunpack.c.l.b16 %v7613
      %v8262 = vunpack.c.l.b16 %v7614
      %v8263 = vunpack.c.l.b16 %v7615
      %v8264 = vunpack.c.l.b16 %v7616
      %v8265 = vunpack.c.l.b16 %v7617
      %v8266 = vunpack.c.l.b16 %v7618
      %v8267 = vunpack.c.l.b16 %v7619
      %v8268 = vunpack.c.l.b16 %v7620
      %v8269 = vunpack.c.l.b16 %v7621
      %v8270 = vunpack.c.l.b16 %v7622
      %v8271 = vunpack.c.l.b16 %v7623
      %v8272 = vunpack.c.l.b16 %v7624
      %v8273 = vunpack.c.l.b16 %v7625
      %v8274 = vunpack.c.l.b16 %v7626
      %v8275 = vunpack.c.l.b16 %v7627
      %v8276 = vunpack.c.l.b16 %v7628
      %v8277 = vunpack.c.l.b16 %v7629
      %v8278 = vunpack.c.l.b16 %v7630
      %v8279 = vunpack.c.l.b16 %v7631
      %v8280 = vunpack.c.l.b16 %v7632
      %v8281 = vunpack.c.l.b16 %v7633
      %v8282 = vunpack.c.l.b16 %v7634
      %v8283 = vunpack.c.l.b16 %v7635
      %v8284 = vunpack.c.l.b16 %v7636
      %v8285 = vunpack.c.l.b16 %v7637
      %v8286 = vunpack.c.l.b16 %v7638
      %v8287 = vunpack.c.l.b16 %v7639
      %v8288 = vunpack.c.l.b16 %v7640
      %v8289 = vunpack.c.l.b16 %v7641
      %v8290 = vunpack.c.l.b16 %v7642
      %v8291 = vunpack.c.l.b16 %v7643
      %v8292 = vunpack.c.l.b16 %v7644
      %v8293 = vunpack.c.l.b16 %v7645
      %v8294 = vunpack.c.l.b16 %v7646
      %v8295 = vunpack.c.l.b16 %v7647
      %v8296 = vunpack.c.l.b16 %v7648
      %v8297 = vunpack.c.l.b16 %v7649
      %v8298 = vunpack.c.l.b16 %v7650
      %v8299 = vunpack.c.l.b16 %v7651
      %v8300 = vunpack.c.l.b16 %v7652
      %v8301 = vunpack.c.l.b16 %v7653
      %v8302 = vunpack.c.l.b16 %v7654
      %v8303 = vunpack.c.l.b16 %v7655
      %v8304 = vunpack.c.l.b16 %v7656
      %v8305 = vunpack.c.l.b16 %v7657
      %v8306 = vunpack.c.l.b16 %v7658
      %v8307 = vunpack.c.l.b16 %v7659
      %v8308 = vunpack.c.l.b16 %v7660
      %v8309 = vunpack.c.l.b16 %v7661
      %v8310 = vunpack.c.l.b16 %v7662
      %v8311 = vunpack.c.l.b16 %v7663
      %v8312 = vunpack.c.l.b16 %v7664
      %v8313 = vunpack.c.l.b16 %v7665
      %v8314 = vunpack.c.l.b16 %v7666
      %v8315 = vunpack.c.l.b16 %v7667
      %v8316 = vunpack.c.l.b16 %v7668
      %v8317 = vunpack.c.l.b16 %v7669
      %v8318 = vunpack.c.l.b16 %v7670
      %v8319 = vunpack.c.l.b16 %v7671
      %v8320 = vunpack.c.l.b16 %v7672
      %v8321 = vunpack.c.l.b16 %v7673
      %v8322 = vunpack.c.l.b16 %v7674
      %v8323 = vunpack.c.l.b16 %v7675
      %v8324 = vunpack.c.l.b16 %v7676
      %v8325 = vunpack.c.l.b16 %v7677
      %v8326 = vunpack.c.l.b16 %v7678
      %v8327 = vunpack.c.l.b16 %v7679
      %v8328 = vunpack.c.l.b16 %v7680
      %v8329 = vunpack.c.l.b16 %v7681
      %v8330 = vunpack.c.l.b16 %v7682
      %v8331 = vunpack.c.l.b16 %v7683
      %v8332 = vunpack.c.l.b16 %v7684
      %v8333 = vunpack.c.l.b16 %v7685
      %v8334 = vunpack.c.l.b16 %v7686
      %v8335 = vunpack.c.l.b16 %v7687
      %v8336 = vunpack.c.l.b16 %v7688
      %v8337 = vunpack.c.l.b16 %v7689
      %v8338 = vunpack.c.l.b16 %v7690
      %v8339 = vunpack.c.l.b16 %v7691
      %v8340 = vunpack.c.l.b16 %v7692
      %v8341 = vunpack.c.l.b16 %v7693
      %v8342 = vunpack.c.l.b16 %v7694
      %v8343 = vunpack.c.l.b16 %v7695
      %v8344 = vunpack.c.l.b16 %v7696
      %v8345 = vunpack.c.l.b16 %v7697
      %v8346 = vunpack.c.l.b16 %v7698
      %v8347 = vunpack.c.l.b16 %v7699
      %v8348 = vunpack.c.l.b16 %v7700
      %v8349 = vunpack.c.l.b16 %v7701
      %v8350 = vunpack.c.l.b16 %v7702
      %v8351 = vunpack.c.l.b16 %v7703
      %v8352 = vunpack.c.l.b16 %v7704
      %v8353 = vunpack.c.l.b16 %v7705
      %v8354 = vunpack.c.l.b16 %v7706
      %v8355 = vunpack.c.l.b16 %v7707
      %v8356 = vunpack.c.l.b16 %v7708
      %v8357 = vunpack.c.l.b16 %v7709
      %v8358 = vunpack.c.l.b16 %v7710
      %v8359 = vunpack.c.l.b16 %v7711
      %v8360 = vunpack.c.l.b16 %v7712
      %v8361 = vunpack.c.l.b16 %v7713
      %v8362 = vunpack.c.l.b16 %v7714
      %v8363 = vunpack.c.l.b16 %v7715
      %v8364 = vunpack.c.l.b16 %v7716
      %v8365 = vunpack.c.l.b16 %v7717
      %v8366 = vunpack.c.l.b16 %v7718
      %v8367 = vunpack.c.l.b16 %v7719
      %v8368 = vunpack.c.l.b16 %v7720
      %v8369 = vunpack.c.l.b16 %v7721
      %v8370 = vunpack.c.l.b16 %v7722
      %v8371 = vunpack.c.l.b16 %v7723
      %v8372 = vunpack.c.l.b16 %v7724
      %v8373 = vunpack.c.l.b16 %v7725
      %v8374 = vunpack.c.l.b16 %v7726
      %v8375 = vunpack.c.l.b16 %v7727
      %v8376 = vunpack.c.l.b16 %v7728
      %v8377 = vunpack.c.l.b16 %v7729
      %v8378 = vunpack.c.l.b16 %v7730
      %v8379 = vunpack.c.l.b16 %v7731
      %v8380 = vunpack.c.l.b16 %v7732
      %v8381 = vunpack.c.l.b16 %v7733
      %v8382 = vunpack.c.l.b16 %v7734
      %v8383 = vunpack.c.l.b16 %v7735
      %v8384 = vunpack.c.l.b16 %v7736
      %v8385 = vunpack.c.l.b16 %v7737
      %v8386 = vunpack.c.l.b16 %v7738
      %v8387 = vunpack.c.l.b16 %v7739
      %v8388 = vpack.c.b16 %v8133, %v8132
      %v8389 = vpack.c.b16 %v8135, %v8134
      %v8390 = vpack.c.b16 %v8137, %v8136
      %v8391 = vpack.c.b16 %v8139, %v8138
      %v8392 = vpack.c.b16 %v8141, %v8140
      %v8393 = vpack.c.b16 %v8143, %v8142
      %v8394 = vpack.c.b16 %v8145, %v8144
      %v8395 = vpack.c.b16 %v8147, %v8146
      %v8396 = vpack.c.b16 %v8149, %v8148
      %v8397 = vpack.c.b16 %v8151, %v8150
      %v8398 = vpack.c.b16 %v8153, %v8152
      %v8399 = vpack.c.b16 %v8155, %v8154
      %v8400 = vpack.c.b16 %v8157, %v8156
      %v8401 = vpack.c.b16 %v8159, %v8158
      %v8402 = vpack.c.b16 %v8161, %v8160
      %v8403 = vpack.c.b16 %v8163, %v8162
      %v8404 = vpack.c.b16 %v8165, %v8164
      %v8405 = vpack.c.b16 %v8167, %v8166
      %v8406 = vpack.c.b16 %v8169, %v8168
      %v8407 = vpack.c.b16 %v8171, %v8170
      %v8408 = vpack.c.b16 %v8173, %v8172
      %v8409 = vpack.c.b16 %v8175, %v8174
      %v8410 = vpack.c.b16 %v8177, %v8176
      %v8411 = vpack.c.b16 %v8179, %v8178
      %v8412 = vpack.c.b16 %v8181, %v8180
      %v8413 = vpack.c.b16 %v8183, %v8182
      %v8414 = vpack.c.b16 %v8185, %v8184
      %v8415 = vpack.c.b16 %v8187, %v8186
      %v8416 = vpack.c.b16 %v8189, %v8188
      %v8417 = vpack.c.b16 %v8191, %v8190
      %v8418 = vpack.c.b16 %v8193, %v8192
      %v8419 = vpack.c.b16 %v8195, %v8194
      %v8420 = vpack.c.b16 %v8197, %v8196
      %v8421 = vpack.c.b16 %v8199, %v8198
      %v8422 = vpack.c.b16 %v8201, %v8200
      %v8423 = vpack.c.b16 %v8203, %v8202
      %v8424 = vpack.c.b16 %v8205, %v8204
      %v8425 = vpack.c.b16 %v8207, %v8206
      %v8426 = vpack.c.b16 %v8209, %v8208
      %v8427 = vpack.c.b16 %v8211, %v8210
      %v8428 = vpack.c.b16 %v8213, %v8212
      %v8429 = vpack.c.b16 %v8215, %v8214
      %v8430 = vpack.c.b16 %v8217, %v8216
      %v8431 = vpack.c.b16 %v8219, %v8218
      %v8432 = vpack.c.b16 %v8221, %v8220
      %v8433 = vpack.c.b16 %v8223, %v8222
      %v8434 = vpack.c.b16 %v8225, %v8224
      %v8435 = vpack.c.b16 %v8227, %v8226
      %v8436 = vpack.c.b16 %v8229, %v8228
      %v8437 = vpack.c.b16 %v8231, %v8230
      %v8438 = vpack.c.b16 %v8233, %v8232
      %v8439 = vpack.c.b16 %v8235, %v8234
      %v8440 = vpack.c.b16 %v8237, %v8236
      %v8441 = vpack.c.b16 %v8239, %v8238
      %v8442 = vpack.c.b16 %v8241, %v8240
      %v8443 = vpack.c.b16 %v8243, %v8242
      %v8444 = vpack.c.b16 %v8245, %v8244
      %v8445 = vpack.c.b16 %v8247, %v8246
      %v8446 = vpack.c.b16 %v8249, %v8248
      %v8447 = vpack.c.b16 %v8251, %v8250
      %v8448 = vpack.c.b16 %v8253, %v8252
      %v8449 = vpack.c.b16 %v8255, %v8254
      %v8450 = vpack.c.b16 %v8257, %v8256
      %v8451 = vpack.c.b16 %v8259, %v8258
      %v8452 = vpack.c.b16 %v8261, %v8260
      %v8453 = vpack.c.b16 %v8263, %v8262
      %v8454 = vpack.c.b16 %v8265, %v8264
      %v8455 = vpack.c.b16 %v8267, %v8266
      %v8456 = vpack.c.b16 %v8269, %v8268
      %v8457 = vpack.c.b16 %v8271, %v8270
      %v8458 = vpack.c.b16 %v8273, %v8272
      %v8459 = vpack.c.b16 %v8275, %v8274
      %v8460 = vpack.c.b16 %v8277, %v8276
      %v8461 = vpack.c.b16 %v8279, %v8278
      %v8462 = vpack.c.b16 %v8281, %v8280
      %v8463 = vpack.c.b16 %v8283, %v8282
      %v8464 = vpack.c.b16 %v8285, %v8284
      %v8465 = vpack.c.b16 %v8287, %v8286
      %v8466 = vpack.c.b16 %v8289, %v8288
      %v8467 = vpack.c.b16 %v8291, %v8290
      %v8468 = vpack.c.b16 %v8293, %v8292
      %v8469 = vpack.c.b16 %v8295, %v8294
      %v8470 = vpack.c.b16 %v8297, %v8296
      %v8471 = vpack.c.b16 %v8299, %v8298
      %v8472 = vpack.c.b16 %v8301, %v8300
      %v8473 = vpack.c.b16 %v8303, %v8302
      %v8474 = vpack.c.b16 %v8305, %v8304
      %v8475 = vpack.c.b16 %v8307, %v8306
      %v8476 = vpack.c.b16 %v8309, %v8308
      %v8477 = vpack.c.b16 %v8311, %v8310
      %v8478 = vpack.c.b16 %v8313, %v8312
      %v8479 = vpack.c.b16 %v8315, %v8314
      %v8480 = vpack.c.b16 %v8317, %v8316
      %v8481 = vpack.c.b16 %v8319, %v8318
      %v8482 = vpack.c.b16 %v8321, %v8320
      %v8483 = vpack.c.b16 %v8323, %v8322
      %v8484 = vpack.c.b16 %v8325, %v8324
      %v8485 = vpack.c.b16 %v8327, %v8326
      %v8486 = vpack.c.b16 %v8329, %v8328
      %v8487 = vpack.c.b16 %v8331, %v8330
      %v8488 = vpack.c.b16 %v8333, %v8332
      %v8489 = vpack.c.b16 %v8335, %v8334
      %v8490 = vpack.c.b16 %v8337, %v8336
      %v8491 = vpack.c.b16 %v8339, %v8338
      %v8492 = vpack.c.b16 %v8341, %v8340
      %v8493 = vpack.c.b16 %v8343, %v8342
      %v8494 = vpack.c.b16 %v8345, %v8344
      %v8495 = vpack.c.b16 %v8347, %v8346
      %v8496 = vpack.c.b16 %v8349, %v8348
      %v8497 = vpack.c.b16 %v8351, %v8350
      %v8498 = vpack.c.b16 %v8353, %v8352
      %v8499 = vpack.c.b16 %v8355, %v8354
      %v8500 = vpack.c.b16 %v8357, %v8356
      %v8501 = vpack.c.b16 %v8359, %v8358
      %v8502 = vpack.c.b16 %v8361, %v8360
      %v8503 = vpack.c.b16 %v8363, %v8362
      %v8504 = vpack.c.b16 %v8365, %v8364
      %v8505 = vpack.c.b16 %v8367, %v8366
      %v8506 = vpack.c.b16 %v8369, %v8368
      %v8507 = vpack.c.b16 %v8371, %v8370
      %v8508 = vpack.c.b16 %v8373, %v8372
      %v8509 = vpack.c.b16 %v8375, %v8374
      %v8510 = vpack.c.b16 %v8377, %v8376
      %v8511 = vpack.c.b16 %v8379, %v8378
      %v8512 = vpack.c.b16 %v8381, %v8380
      %v8513 = vpack.c.b16 %v8383, %v8382
      %v8514 = vpack.c.b16 %v8385, %v8384
      %v8515 = vpack.c.b16 %v8387, %v8386
      %8644 = vmatprep.subr.bf16.mxu0 0
      %8645 = vmatpush1.bf16.msra.mxu0 %v8395
      %8646 = vmatprep.subr.bf16.mxu0 0
      %8647 = vmatpush1.bf16.msra.mxu0 %v8394
      %8648 = vmatprep.subr.bf16.mxu0 0
      %8649 = vmatpush1.bf16.msra.mxu0 %v8393
      %8650 = vmatprep.subr.bf16.mxu0 0
      %8651 = vmatpush1.bf16.msra.mxu0 %v8392
      %8652 = vmatprep.subr.bf16.mxu0 0
      %8653 = vmatpush1.bf16.msra.mxu0 %v8391
      %8654 = vmatprep.subr.bf16.mxu0 0
      %8655 = vmatpush1.bf16.msra.mxu0 %v8390
      %8656 = vmatprep.subr.bf16.mxu0 0
      %8657 = vmatpush1.bf16.msra.mxu0 %v8389
      %8658 = vmatprep.subr.bf16.mxu0 0
      %8659 = vmatpush1.bf16.msra.mxu0 %v8388
      %8660 = vmatprep.subr.bf16.mxu0 0
      %8661 = vmatpush2.bf16.msra.mxu0 %v8403
      %8662 = vmatprep.subr.bf16.mxu0 0
      %8663 = vmatpush2.bf16.msra.mxu0 %v8402
      %8664 = vmatprep.subr.bf16.mxu0 0
      %8665 = vmatpush2.bf16.msra.mxu0 %v8401
      %8666 = vmatprep.subr.bf16.mxu0 0
      %8667 = vmatpush2.bf16.msra.mxu0 %v8400
      %8668 = vmatprep.subr.bf16.mxu0 0
      %8669 = vmatpush2.bf16.msra.mxu0 %v8399
      %8670 = vmatprep.subr.bf16.mxu0 0
      %8671 = vmatpush2.bf16.msra.mxu0 %v8398
      %8672 = vmatprep.subr.bf16.mxu0 0
      %8673 = vmatpush2.bf16.msra.mxu0 %v8397
      %8674 = vmatprep.subr.bf16.mxu0 0
      %8675 = vmatpush2.bf16.msra.mxu0 %v8396
      %8676 = vmatprep.mubr.bf16.mxu0 %v7845
      %8677 = vmatmul.mubr.bf16.gmra.mxu0 %v7844
      %v8678 = vpop.f32.mrf.mxu0
      %v8679 = vadd.f32 %v7746, %v8678
      %v8680 = vpop.f32.mrf.mxu0
      %v8681 = vpop.f32.mrf.mxu0
      %v8682 = vpop.f32.mrf.mxu0
      %8683 = vdwg.mxu0
      %8684 = vmatprep.subr.bf16.mxu0 0
      %8685 = vmatpush1.bf16.msra.mxu0 %v8411
      %8686 = vmatprep.subr.bf16.mxu0 0
      %8687 = vmatpush1.bf16.msra.mxu0 %v8410
      %8688 = vmatprep.subr.bf16.mxu0 0
      %8689 = vmatpush1.bf16.msra.mxu0 %v8409
      %8690 = vmatprep.subr.bf16.mxu0 0
      %8691 = vmatpush1.bf16.msra.mxu0 %v8408
      %8692 = vmatprep.subr.bf16.mxu0 0
      %8693 = vmatpush1.bf16.msra.mxu0 %v8407
      %8694 = vmatprep.subr.bf16.mxu0 0
      %8695 = vmatpush1.bf16.msra.mxu0 %v8406
      %8696 = vmatprep.subr.bf16.mxu0 0
      %8697 = vmatpush1.bf16.msra.mxu0 %v8405
      %8698 = vmatprep.subr.bf16.mxu0 0
      %8699 = vmatpush1.bf16.msra.mxu0 %v8404
      %8700 = vmatprep.subr.bf16.mxu0 0
      %8701 = vmatpush2.bf16.msra.mxu0 %v8419
      %8702 = vmatprep.subr.bf16.mxu0 0
      %8703 = vmatpush2.bf16.msra.mxu0 %v8418
      %8704 = vmatprep.subr.bf16.mxu0 0
      %8705 = vmatpush2.bf16.msra.mxu0 %v8417
      %8706 = vmatprep.subr.bf16.mxu0 0
      %8707 = vmatpush2.bf16.msra.mxu0 %v8416
      %8708 = vmatprep.subr.bf16.mxu0 0
      %8709 = vmatpush2.bf16.msra.mxu0 %v8415
      %8710 = vmatprep.subr.bf16.mxu0 0
      %8711 = vmatpush2.bf16.msra.mxu0 %v8414
      %8712 = vmatprep.subr.bf16.mxu0 0
      %8713 = vmatpush2.bf16.msra.mxu0 %v8413
      %8714 = vmatprep.subr.bf16.mxu0 0
      %8715 = vmatpush2.bf16.msra.mxu0 %v8412
      %8716 = vmatprep.mubr.bf16.mxu0 %v7847
      %8717 = vmatmul.mubr.bf16.gmra.mxu0 %v7846
      %v8718 = vpop.f32.mrf.mxu0
      %v8719 = vadd.f32 %v8679, %v8718
      %v8720 = vpop.f32.mrf.mxu0
      %v8721 = vpop.f32.mrf.mxu0
      %v8722 = vpop.f32.mrf.mxu0
      %8723 = vdwg.mxu0
      %8724 = vmatprep.subr.bf16.mxu0 0
      %8725 = vmatpush1.bf16.msra.mxu0 %v8427
      %8726 = vmatprep.subr.bf16.mxu0 0
      %8727 = vmatpush1.bf16.msra.mxu0 %v8426
      %8728 = vmatprep.subr.bf16.mxu0 0
      %8729 = vmatpush1.bf16.msra.mxu0 %v8425
      %8730 = vmatprep.subr.bf16.mxu0 0
      %8731 = vmatpush1.bf16.msra.mxu0 %v8424
      %8732 = vmatprep.subr.bf16.mxu0 0
      %8733 = vmatpush1.bf16.msra.mxu0 %v8423
      %8734 = vmatprep.subr.bf16.mxu0 0
      %8735 = vmatpush1.bf16.msra.mxu0 %v8422
      %8736 = vmatprep.subr.bf16.mxu0 0
      %8737 = vmatpush1.bf16.msra.mxu0 %v8421
      %8738 = vmatprep.subr.bf16.mxu0 0
      %8739 = vmatpush1.bf16.msra.mxu0 %v8420
      %8740 = vmatprep.subr.bf16.mxu0 0
      %8741 = vmatpush2.bf16.msra.mxu0 %v8435
      %8742 = vmatprep.subr.bf16.mxu0 0
      %8743 = vmatpush2.bf16.msra.mxu0 %v8434
      %8744 = vmatprep.subr.bf16.mxu0 0
      %8745 = vmatpush2.bf16.msra.mxu0 %v8433
      %8746 = vmatprep.subr.bf16.mxu0 0
      %8747 = vmatpush2.bf16.msra.mxu0 %v8432
      %8748 = vmatprep.subr.bf16.mxu0 0
      %8749 = vmatpush2.bf16.msra.mxu0 %v8431
      %8750 = vmatprep.subr.bf16.mxu0 0
      %8751 = vmatpush2.bf16.msra.mxu0 %v8430
      %8752 = vmatprep.subr.bf16.mxu0 0
      %8753 = vmatpush2.bf16.msra.mxu0 %v8429
      %8754 = vmatprep.subr.bf16.mxu0 0
      %8755 = vmatpush2.bf16.msra.mxu0 %v8428
      %8756 = vmatprep.mubr.bf16.mxu0 %v7849
      %8757 = vmatmul.mubr.bf16.gmra.mxu0 %v7848
      %v8758 = vpop.f32.mrf.mxu0
      %v8759 = vadd.f32 %v8719, %v8758
      %v8760 = vpop.f32.mrf.mxu0
      %v8761 = vpop.f32.mrf.mxu0
      %v8762 = vpop.f32.mrf.mxu0
      %8763 = vdwg.mxu0
      %8764 = vmatprep.subr.bf16.mxu0 0
      %8765 = vmatpush1.bf16.msra.mxu0 %v8443
      %8766 = vmatprep.subr.bf16.mxu0 0
      %8767 = vmatpush1.bf16.msra.mxu0 %v8442
      %8768 = vmatprep.subr.bf16.mxu0 0
      %8769 = vmatpush1.bf16.msra.mxu0 %v8441
      %8770 = vmatprep.subr.bf16.mxu0 0
      %8771 = vmatpush1.bf16.msra.mxu0 %v8440
      %8772 = vmatprep.subr.bf16.mxu0 0
      %8773 = vmatpush1.bf16.msra.mxu0 %v8439
      %8774 = vmatprep.subr.bf16.mxu0 0
      %8775 = vmatpush1.bf16.msra.mxu0 %v8438
      %8776 = vmatprep.subr.bf16.mxu0 0
      %8777 = vmatpush1.bf16.msra.mxu0 %v8437
      %8778 = vmatprep.subr.bf16.mxu0 0
      %8779 = vmatpush1.bf16.msra.mxu0 %v8436
      %8780 = vmatprep.subr.bf16.mxu0 0
      %8781 = vmatpush2.bf16.msra.mxu0 %v8451
      %8782 = vmatprep.subr.bf16.mxu0 0
      %8783 = vmatpush2.bf16.msra.mxu0 %v8450
      %8784 = vmatprep.subr.bf16.mxu0 0
      %8785 = vmatpush2.bf16.msra.mxu0 %v8449
      %8786 = vmatprep.subr.bf16.mxu0 0
      %8787 = vmatpush2.bf16.msra.mxu0 %v8448
      %8788 = vmatprep.subr.bf16.mxu0 0
      %8789 = vmatpush2.bf16.msra.mxu0 %v8447
      %8790 = vmatprep.subr.bf16.mxu0 0
      %8791 = vmatpush2.bf16.msra.mxu0 %v8446
      %8792 = vmatprep.subr.bf16.mxu0 0
      %8793 = vmatpush2.bf16.msra.mxu0 %v8445
      %8794 = vmatprep.subr.bf16.mxu0 0
      %8795 = vmatpush2.bf16.msra.mxu0 %v8444
      %8796 = vmatprep.mubr.bf16.mxu0 %v7851
      %8797 = vmatmul.mubr.bf16.gmra.mxu0 %v7850
      %v8798 = vpop.f32.mrf.mxu0
      %v8799 = vadd.f32 %v8759, %v8798
      %v8800 = vpop.f32.mrf.mxu0
      %v8801 = vpop.f32.mrf.mxu0
      %v8802 = vpop.f32.mrf.mxu0
      %8803 = vdwg.mxu0
      %8804 = vmatprep.subr.bf16.mxu0 0
      %8805 = vmatpush1.bf16.msra.mxu0 %v8459
      %8806 = vmatprep.subr.bf16.mxu0 0
      %8807 = vmatpush1.bf16.msra.mxu0 %v8458
      %8808 = vmatprep.subr.bf16.mxu0 0
      %8809 = vmatpush1.bf16.msra.mxu0 %v8457
      %8810 = vmatprep.subr.bf16.mxu0 0
      %8811 = vmatpush1.bf16.msra.mxu0 %v8456
      %8812 = vmatprep.subr.bf16.mxu0 0
      %8813 = vmatpush1.bf16.msra.mxu0 %v8455
      %8814 = vmatprep.subr.bf16.mxu0 0
      %8815 = vmatpush1.bf16.msra.mxu0 %v8454
      %8816 = vmatprep.subr.bf16.mxu0 0
      %8817 = vmatpush1.bf16.msra.mxu0 %v8453
      %8818 = vmatprep.subr.bf16.mxu0 0
      %8819 = vmatpush1.bf16.msra.mxu0 %v8452
      %8820 = vmatprep.subr.bf16.mxu0 0
      %8821 = vmatpush2.bf16.msra.mxu0 %v8467
      %8822 = vmatprep.subr.bf16.mxu0 0
      %8823 = vmatpush2.bf16.msra.mxu0 %v8466
      %8824 = vmatprep.subr.bf16.mxu0 0
      %8825 = vmatpush2.bf16.msra.mxu0 %v8465
      %8826 = vmatprep.subr.bf16.mxu0 0
      %8827 = vmatpush2.bf16.msra.mxu0 %v8464
      %8828 = vmatprep.subr.bf16.mxu0 0
      %8829 = vmatpush2.bf16.msra.mxu0 %v8463
      %8830 = vmatprep.subr.bf16.mxu0 0
      %8831 = vmatpush2.bf16.msra.mxu0 %v8462
      %8832 = vmatprep.subr.bf16.mxu0 0
      %8833 = vmatpush2.bf16.msra.mxu0 %v8461
      %8834 = vmatprep.subr.bf16.mxu0 0
      %8835 = vmatpush2.bf16.msra.mxu0 %v8460
      %8836 = vmatprep.mubr.bf16.mxu0 %v7853
      %8837 = vmatmul.mubr.bf16.gmra.mxu0 %v7852
      %v8838 = vpop.f32.mrf.mxu0
      %v8839 = vadd.f32 %v8799, %v8838
      %v8840 = vpop.f32.mrf.mxu0
      %v8841 = vpop.f32.mrf.mxu0
      %v8842 = vpop.f32.mrf.mxu0
      %8843 = vdwg.mxu0
      %8844 = vmatprep.subr.bf16.mxu0 0
      %8845 = vmatpush1.bf16.msra.mxu0 %v8475
      %8846 = vmatprep.subr.bf16.mxu0 0
      %8847 = vmatpush1.bf16.msra.mxu0 %v8474
      %8848 = vmatprep.subr.bf16.mxu0 0
      %8849 = vmatpush1.bf16.msra.mxu0 %v8473
      %8850 = vmatprep.subr.bf16.mxu0 0
      %8851 = vmatpush1.bf16.msra.mxu0 %v8472
      %8852 = vmatprep.subr.bf16.mxu0 0
      %8853 = vmatpush1.bf16.msra.mxu0 %v8471
      %8854 = vmatprep.subr.bf16.mxu0 0
      %8855 = vmatpush1.bf16.msra.mxu0 %v8470
      %8856 = vmatprep.subr.bf16.mxu0 0
      %8857 = vmatpush1.bf16.msra.mxu0 %v8469
      %8858 = vmatprep.subr.bf16.mxu0 0
      %8859 = vmatpush1.bf16.msra.mxu0 %v8468
      %8860 = vmatprep.subr.bf16.mxu0 0
      %8861 = vmatpush2.bf16.msra.mxu0 %v8483
      %8862 = vmatprep.subr.bf16.mxu0 0
      %8863 = vmatpush2.bf16.msra.mxu0 %v8482
      %8864 = vmatprep.subr.bf16.mxu0 0
      %8865 = vmatpush2.bf16.msra.mxu0 %v8481
      %8866 = vmatprep.subr.bf16.mxu0 0
      %8867 = vmatpush2.bf16.msra.mxu0 %v8480
      %8868 = vmatprep.subr.bf16.mxu0 0
      %8869 = vmatpush2.bf16.msra.mxu0 %v8479
      %8870 = vmatprep.subr.bf16.mxu0 0
      %8871 = vmatpush2.bf16.msra.mxu0 %v8478
      %8872 = vmatprep.subr.bf16.mxu0 0
      %8873 = vmatpush2.bf16.msra.mxu0 %v8477
      %8874 = vmatprep.subr.bf16.mxu0 0
      %8875 = vmatpush2.bf16.msra.mxu0 %v8476
      %8876 = vmatprep.mubr.bf16.mxu0 %v7855
      %8877 = vmatmul.mubr.bf16.gmra.mxu0 %v7854
      %v8878 = vpop.f32.mrf.mxu0
      %v8879 = vadd.f32 %v8839, %v8878
      %v8880 = vpop.f32.mrf.mxu0
      %v8881 = vpop.f32.mrf.mxu0
      %v8882 = vpop.f32.mrf.mxu0
      %8883 = vdwg.mxu0
      %8884 = vmatprep.subr.bf16.mxu0 0
      %8885 = vmatpush1.bf16.msra.mxu0 %v8491
      %8886 = vmatprep.subr.bf16.mxu0 0
      %8887 = vmatpush1.bf16.msra.mxu0 %v8490
      %8888 = vmatprep.subr.bf16.mxu0 0
      %8889 = vmatpush1.bf16.msra.mxu0 %v8489
      %8890 = vmatprep.subr.bf16.mxu0 0
      %8891 = vmatpush1.bf16.msra.mxu0 %v8488
      %8892 = vmatprep.subr.bf16.mxu0 0
      %8893 = vmatpush1.bf16.msra.mxu0 %v8487
      %8894 = vmatprep.subr.bf16.mxu0 0
      %8895 = vmatpush1.bf16.msra.mxu0 %v8486
      %8896 = vmatprep.subr.bf16.mxu0 0
      %8897 = vmatpush1.bf16.msra.mxu0 %v8485
      %8898 = vmatprep.subr.bf16.mxu0 0
      %8899 = vmatpush1.bf16.msra.mxu0 %v8484
      %8900 = vmatprep.subr.bf16.mxu0 0
      %8901 = vmatpush2.bf16.msra.mxu0 %v8499
      %8902 = vmatprep.subr.bf16.mxu0 0
      %8903 = vmatpush2.bf16.msra.mxu0 %v8498
      %8904 = vmatprep.subr.bf16.mxu0 0
      %8905 = vmatpush2.bf16.msra.mxu0 %v8497
      %8906 = vmatprep.subr.bf16.mxu0 0
      %8907 = vmatpush2.bf16.msra.mxu0 %v8496
      %8908 = vmatprep.subr.bf16.mxu0 0
      %8909 = vmatpush2.bf16.msra.mxu0 %v8495
      %8910 = vmatprep.subr.bf16.mxu0 0
      %8911 = vmatpush2.bf16.msra.mxu0 %v8494
      %8912 = vmatprep.subr.bf16.mxu0 0
      %8913 = vmatpush2.bf16.msra.mxu0 %v8493
      %8914 = vmatprep.subr.bf16.mxu0 0
      %8915 = vmatpush2.bf16.msra.mxu0 %v8492
      %8916 = vmatprep.mubr.bf16.mxu0 %v7857
      %8917 = vmatmul.mubr.bf16.gmra.mxu0 %v7856
      %v8918 = vpop.f32.mrf.mxu0
      %v8919 = vadd.f32 %v8879, %v8918
      %v8920 = vpop.f32.mrf.mxu0
      %v8921 = vpop.f32.mrf.mxu0
      %v8922 = vpop.f32.mrf.mxu0
      %8923 = vdwg.mxu0
      %8924 = vmatprep.subr.bf16.mxu0 0
      %8925 = vmatpush1.bf16.msra.mxu0 %v8507
      %8926 = vmatprep.subr.bf16.mxu0 0
      %8927 = vmatpush1.bf16.msra.mxu0 %v8506
      %8928 = vmatprep.subr.bf16.mxu0 0
      %8929 = vmatpush1.bf16.msra.mxu0 %v8505
      %8930 = vmatprep.subr.bf16.mxu0 0
      %8931 = vmatpush1.bf16.msra.mxu0 %v8504
      %8932 = vmatprep.subr.bf16.mxu0 0
      %8933 = vmatpush1.bf16.msra.mxu0 %v8503
      %8934 = vmatprep.subr.bf16.mxu0 0
      %8935 = vmatpush1.bf16.msra.mxu0 %v8502
      %8936 = vmatprep.subr.bf16.mxu0 0
      %8937 = vmatpush1.bf16.msra.mxu0 %v8501
      %8938 = vmatprep.subr.bf16.mxu0 0
      %8939 = vmatpush1.bf16.msra.mxu0 %v8500
      %8940 = vmatprep.subr.bf16.mxu0 0
      %8941 = vmatpush2.bf16.msra.mxu0 %v8515
      %8942 = vmatprep.subr.bf16.mxu0 0
      %8943 = vmatpush2.bf16.msra.mxu0 %v8514
      %8944 = vmatprep.subr.bf16.mxu0 0
      %8945 = vmatpush2.bf16.msra.mxu0 %v8513
      %8946 = vmatprep.subr.bf16.mxu0 0
      %8947 = vmatpush2.bf16.msra.mxu0 %v8512
      %8948 = vmatprep.subr.bf16.mxu0 0
      %8949 = vmatpush2.bf16.msra.mxu0 %v8511
      %8950 = vmatprep.subr.bf16.mxu0 0
      %8951 = vmatpush2.bf16.msra.mxu0 %v8510
      %8952 = vmatprep.subr.bf16.mxu0 0
      %8953 = vmatpush2.bf16.msra.mxu0 %v8509
      %8954 = vmatprep.subr.bf16.mxu0 0
      %8955 = vmatpush2.bf16.msra.mxu0 %v8508
      %8956 = vmatprep.mubr.bf16.mxu0 %v7859
      %8957 = vmatmul.mubr.bf16.gmra.mxu0 %v7858
      %v8958 = vpop.f32.mrf.mxu0
      %v8959 = vadd.f32 %v8919, %v8958
      %v8960 = vpop.f32.mrf.mxu0
      %v8961 = vpop.f32.mrf.mxu0
      %v8962 = vpop.f32.mrf.mxu0
      %8963 = vdwg.mxu0
      %s8964 = scalar_lea.vmem %s241, 6
      %8965 = vst.msk [vmem:[%s8964] sm:$0x3] %vm3879, %v8959
      %s8966 = scalar_lea.vmem [#allocation2], 4
      %v8967 = vld [vmem:[%s8966] ss:$8 sm:$0xf]
      %v8968 = vld [vmem:[%s8966] ss:$8 sm:$0xf0]
      %v8969 = vor.u32 %v8967, %v8968
      %s8970 = scalar_lea.vmem [#allocation2], 68
      %v8971 = vld [vmem:[%s8970] ss:$8 sm:$0xf]
      %v8972 = vld [vmem:[%s8970] ss:$8 sm:$0xf0]
      %v8973 = vor.u32 %v8971, %v8972
      %s8974 = scalar_lea.vmem [#allocation2], 132
      %v8975 = vld [vmem:[%s8974] ss:$8 sm:$0xf]
      %v8976 = vld [vmem:[%s8974] ss:$8 sm:$0xf0]
      %v8977 = vor.u32 %v8975, %v8976
      %s8978 = scalar_lea.vmem [#allocation2], 196
      %v8979 = vld [vmem:[%s8978] ss:$8 sm:$0xf]
      %v8980 = vld [vmem:[%s8978] ss:$8 sm:$0xf0]
      %v8981 = vor.u32 %v8979, %v8980
      %v8986 = vlaneseq
      %v8987 = vshrl.u32 %v8986, 7
      %v8988 = vsub.s32 0, %v8987
      %v8989 = vrot.slane %v8969, %v8988
      %v8990 = vlaneseq
      %v8991 = vshrl.u32 %v8990, 7
      %v8992 = vsub.s32 1, %v8991
      %v8993 = vrot.slane %v8969, %v8992
      %v8994 = vlaneseq
      %v8995 = vshrl.u32 %v8994, 7
      %v8996 = vsub.s32 2, %v8995
      %v8997 = vrot.slane %v8969, %v8996
      %v8998 = vlaneseq
      %v8999 = vshrl.u32 %v8998, 7
      %v9000 = vsub.s32 3, %v8999
      %v9001 = vrot.slane %v8969, %v9000
      %v9002 = vlaneseq
      %v9003 = vshrl.u32 %v9002, 7
      %v9004 = vsub.s32 4, %v9003
      %v9005 = vrot.slane %v8969, %v9004
      %v9006 = vlaneseq
      %v9007 = vshrl.u32 %v9006, 7
      %v9008 = vsub.s32 5, %v9007
      %v9009 = vrot.slane %v8969, %v9008
      %v9010 = vlaneseq
      %v9011 = vshrl.u32 %v9010, 7
      %v9012 = vsub.s32 6, %v9011
      %v9013 = vrot.slane %v8969, %v9012
      %v9014 = vlaneseq
      %v9015 = vshrl.u32 %v9014, 7
      %v9016 = vsub.s32 7, %v9015
      %v9017 = vrot.slane %v8969, %v9016
      %v9018 = vlaneseq
      %v9019 = vshrl.u32 %v9018, 7
      %v9020 = vsub.s32 0, %v9019
      %v9021 = vrot.slane %v8973, %v9020
      %v9022 = vlaneseq
      %v9023 = vshrl.u32 %v9022, 7
      %v9024 = vsub.s32 1, %v9023
      %v9025 = vrot.slane %v8973, %v9024
      %v9026 = vlaneseq
      %v9027 = vshrl.u32 %v9026, 7
      %v9028 = vsub.s32 2, %v9027
      %v9029 = vrot.slane %v8973, %v9028
      %v9030 = vlaneseq
      %v9031 = vshrl.u32 %v9030, 7
      %v9032 = vsub.s32 3, %v9031
      %v9033 = vrot.slane %v8973, %v9032
      %v9034 = vlaneseq
      %v9035 = vshrl.u32 %v9034, 7
      %v9036 = vsub.s32 4, %v9035
      %v9037 = vrot.slane %v8973, %v9036
      %v9038 = vlaneseq
      %v9039 = vshrl.u32 %v9038, 7
      %v9040 = vsub.s32 5, %v9039
      %v9041 = vrot.slane %v8973, %v9040
      %v9042 = vlaneseq
      %v9043 = vshrl.u32 %v9042, 7
      %v9044 = vsub.s32 6, %v9043
      %v9045 = vrot.slane %v8973, %v9044
      %v9046 = vlaneseq
      %v9047 = vshrl.u32 %v9046, 7
      %v9048 = vsub.s32 7, %v9047
      %v9049 = vrot.slane %v8973, %v9048
      %v9050 = vlaneseq
      %v9051 = vshrl.u32 %v9050, 7
      %v9052 = vsub.s32 0, %v9051
      %v9053 = vrot.slane %v8977, %v9052
      %v9054 = vlaneseq
      %v9055 = vshrl.u32 %v9054, 7
      %v9056 = vsub.s32 1, %v9055
      %v9057 = vrot.slane %v8977, %v9056
      %v9058 = vlaneseq
      %v9059 = vshrl.u32 %v9058, 7
      %v9060 = vsub.s32 2, %v9059
      %v9061 = vrot.slane %v8977, %v9060
      %v9062 = vlaneseq
      %v9063 = vshrl.u32 %v9062, 7
      %v9064 = vsub.s32 3, %v9063
      %v9065 = vrot.slane %v8977, %v9064
      %v9066 = vlaneseq
      %v9067 = vshrl.u32 %v9066, 7
      %v9068 = vsub.s32 4, %v9067
      %v9069 = vrot.slane %v8977, %v9068
      %v9070 = vlaneseq
      %v9071 = vshrl.u32 %v9070, 7
      %v9072 = vsub.s32 5, %v9071
      %v9073 = vrot.slane %v8977, %v9072
      %v9074 = vlaneseq
      %v9075 = vshrl.u32 %v9074, 7
      %v9076 = vsub.s32 6, %v9075
      %v9077 = vrot.slane %v8977, %v9076
      %v9078 = vlaneseq
      %v9079 = vshrl.u32 %v9078, 7
      %v9080 = vsub.s32 7, %v9079
      %v9081 = vrot.slane %v8977, %v9080
      %v9082 = vlaneseq
      %v9083 = vshrl.u32 %v9082, 7
      %v9084 = vsub.s32 0, %v9083
      %v9085 = vrot.slane %v8981, %v9084
      %v9086 = vlaneseq
      %v9087 = vshrl.u32 %v9086, 7
      %v9088 = vsub.s32 1, %v9087
      %v9089 = vrot.slane %v8981, %v9088
      %v9090 = vlaneseq
      %v9091 = vshrl.u32 %v9090, 7
      %v9092 = vsub.s32 2, %v9091
      %v9093 = vrot.slane %v8981, %v9092
      %v9094 = vlaneseq
      %v9095 = vshrl.u32 %v9094, 7
      %v9096 = vsub.s32 3, %v9095
      %v9097 = vrot.slane %v8981, %v9096
      %v9098 = vlaneseq
      %v9099 = vshrl.u32 %v9098, 7
      %v9100 = vsub.s32 4, %v9099
      %v9101 = vrot.slane %v8981, %v9100
      %v9102 = vlaneseq
      %v9103 = vshrl.u32 %v9102, 7
      %v9104 = vsub.s32 5, %v9103
      %v9105 = vrot.slane %v8981, %v9104
      %v9106 = vlaneseq
      %v9107 = vshrl.u32 %v9106, 7
      %v9108 = vsub.s32 6, %v9107
      %v9109 = vrot.slane %v8981, %v9108
      %v9110 = vlaneseq
      %v9111 = vshrl.u32 %v9110, 7
      %v9112 = vsub.s32 7, %v9111
      %v9113 = vrot.slane %v8981, %v9112
      %v9146 = vpack.c.bf16 %v8989, %v8989
      %v9147 = vpack.c.bf16 %v8993, %v8993
      %v9148 = vpack.c.bf16 %v8997, %v8997
      %v9149 = vpack.c.bf16 %v9001, %v9001
      %v9150 = vpack.c.bf16 %v9005, %v9005
      %v9151 = vpack.c.bf16 %v9009, %v9009
      %v9152 = vpack.c.bf16 %v9013, %v9013
      %v9153 = vpack.c.bf16 %v9017, %v9017
      %v9154 = vpack.c.bf16 %v9021, %v9021
      %v9155 = vpack.c.bf16 %v9025, %v9025
      %v9156 = vpack.c.bf16 %v9029, %v9029
      %v9157 = vpack.c.bf16 %v9033, %v9033
      %v9158 = vpack.c.bf16 %v9037, %v9037
      %v9159 = vpack.c.bf16 %v9041, %v9041
      %v9160 = vpack.c.bf16 %v9045, %v9045
      %v9161 = vpack.c.bf16 %v9049, %v9049
      %v9162 = vpack.c.bf16 %v9053, %v9053
      %v9163 = vpack.c.bf16 %v9057, %v9057
      %v9164 = vpack.c.bf16 %v9061, %v9061
      %v9165 = vpack.c.bf16 %v9065, %v9065
      %v9166 = vpack.c.bf16 %v9069, %v9069
      %v9167 = vpack.c.bf16 %v9073, %v9073
      %v9168 = vpack.c.bf16 %v9077, %v9077
      %v9169 = vpack.c.bf16 %v9081, %v9081
      %v9170 = vpack.c.bf16 %v9085, %v9085
      %v9171 = vpack.c.bf16 %v9089, %v9089
      %v9172 = vpack.c.bf16 %v9093, %v9093
      %v9173 = vpack.c.bf16 %v9097, %v9097
      %v9174 = vpack.c.bf16 %v9101, %v9101
      %v9175 = vpack.c.bf16 %v9105, %v9105
      %v9176 = vpack.c.bf16 %v9109, %v9109
      %v9177 = vpack.c.bf16 %v9113, %v9113
      %s9178 = scalar_lea.vmem %s230, 4096
      %v9179 = vld [vmem:[%s9178] sm:$0xf]
      %v9180 = vld [vmem:[%s9178 + $0x4] sm:$0xf]
      %v9181 = vld [vmem:[%s9178 + $0x8] sm:$0xf]
      %v9182 = vld [vmem:[%s9178 + $0xc] sm:$0xf]
      %v9183 = vld [vmem:[%s9178 + $0x10] sm:$0xf]
      %v9184 = vld [vmem:[%s9178 + $0x14] sm:$0xf]
      %v9185 = vld [vmem:[%s9178 + $0x18] sm:$0xf]
      %v9186 = vld [vmem:[%s9178 + $0x1c] sm:$0xf]
      %v9187 = vld [vmem:[%s9178 + $0x20] sm:$0xf]
      %v9188 = vld [vmem:[%s9178 + $0x24] sm:$0xf]
      %v9189 = vld [vmem:[%s9178 + $0x28] sm:$0xf]
      %v9190 = vld [vmem:[%s9178 + $0x2c] sm:$0xf]
      %v9191 = vld [vmem:[%s9178 + $0x30] sm:$0xf]
      %v9192 = vld [vmem:[%s9178 + $0x34] sm:$0xf]
      %v9193 = vld [vmem:[%s9178 + $0x38] sm:$0xf]
      %v9194 = vld [vmem:[%s9178 + $0x3c] sm:$0xf]
      %v9195 = vld [vmem:[%s9178 + $0x40] sm:$0xf]
      %v9196 = vld [vmem:[%s9178 + $0x44] sm:$0xf]
      %v9197 = vld [vmem:[%s9178 + $0x48] sm:$0xf]
      %v9198 = vld [vmem:[%s9178 + $0x4c] sm:$0xf]
      %v9199 = vld [vmem:[%s9178 + $0x50] sm:$0xf]
      %v9200 = vld [vmem:[%s9178 + $0x54] sm:$0xf]
      %v9201 = vld [vmem:[%s9178 + $0x58] sm:$0xf]
      %v9202 = vld [vmem:[%s9178 + $0x5c] sm:$0xf]
      %v9203 = vld [vmem:[%s9178 + $0x60] sm:$0xf]
      %v9204 = vld [vmem:[%s9178 + $0x64] sm:$0xf]
      %v9205 = vld [vmem:[%s9178 + $0x68] sm:$0xf]
      %v9206 = vld [vmem:[%s9178 + $0x6c] sm:$0xf]
      %v9207 = vld [vmem:[%s9178 + $0x70] sm:$0xf]
      %v9208 = vld [vmem:[%s9178 + $0x74] sm:$0xf]
      %v9209 = vld [vmem:[%s9178 + $0x78] sm:$0xf]
      %v9210 = vld [vmem:[%s9178 + $0x7c] sm:$0xf]
      %v9211 = vld [vmem:[%s9178 + $0x80] sm:$0xf]
      %v9212 = vld [vmem:[%s9178 + $0x84] sm:$0xf]
      %v9213 = vld [vmem:[%s9178 + $0x88] sm:$0xf]
      %v9214 = vld [vmem:[%s9178 + $0x8c] sm:$0xf]
      %v9215 = vld [vmem:[%s9178 + $0x90] sm:$0xf]
      %v9216 = vld [vmem:[%s9178 + $0x94] sm:$0xf]
      %v9217 = vld [vmem:[%s9178 + $0x98] sm:$0xf]
      %v9218 = vld [vmem:[%s9178 + $0x9c] sm:$0xf]
      %v9219 = vld [vmem:[%s9178 + $0xa0] sm:$0xf]
      %v9220 = vld [vmem:[%s9178 + $0xa4] sm:$0xf]
      %v9221 = vld [vmem:[%s9178 + $0xa8] sm:$0xf]
      %v9222 = vld [vmem:[%s9178 + $0xac] sm:$0xf]
      %v9223 = vld [vmem:[%s9178 + $0xb0] sm:$0xf]
      %v9224 = vld [vmem:[%s9178 + $0xb4] sm:$0xf]
      %v9225 = vld [vmem:[%s9178 + $0xb8] sm:$0xf]
      %v9226 = vld [vmem:[%s9178 + $0xbc] sm:$0xf]
      %v9227 = vld [vmem:[%s9178 + $0xc0] sm:$0xf]
      %v9228 = vld [vmem:[%s9178 + $0xc4] sm:$0xf]
      %v9229 = vld [vmem:[%s9178 + $0xc8] sm:$0xf]
      %v9230 = vld [vmem:[%s9178 + $0xcc] sm:$0xf]
      %v9231 = vld [vmem:[%s9178 + $0xd0] sm:$0xf]
      %v9232 = vld [vmem:[%s9178 + $0xd4] sm:$0xf]
      %v9233 = vld [vmem:[%s9178 + $0xd8] sm:$0xf]
      %v9234 = vld [vmem:[%s9178 + $0xdc] sm:$0xf]
      %v9235 = vld [vmem:[%s9178 + $0xe0] sm:$0xf]
      %v9236 = vld [vmem:[%s9178 + $0xe4] sm:$0xf]
      %v9237 = vld [vmem:[%s9178 + $0xe8] sm:$0xf]
      %v9238 = vld [vmem:[%s9178 + $0xec] sm:$0xf]
      %v9239 = vld [vmem:[%s9178 + $0xf0] sm:$0xf]
      %v9240 = vld [vmem:[%s9178 + $0xf4] sm:$0xf]
      %v9241 = vld [vmem:[%s9178 + $0xf8] sm:$0xf]
      %v9242 = vld [vmem:[%s9178 + $0xfc] sm:$0xf]
      %v9243 = vld [vmem:[%s9178 + $0x100] sm:$0xf]
      %v9244 = vld [vmem:[%s9178 + $0x104] sm:$0xf]
      %v9245 = vld [vmem:[%s9178 + $0x108] sm:$0xf]
      %v9246 = vld [vmem:[%s9178 + $0x10c] sm:$0xf]
      %v9247 = vld [vmem:[%s9178 + $0x110] sm:$0xf]
      %v9248 = vld [vmem:[%s9178 + $0x114] sm:$0xf]
      %v9249 = vld [vmem:[%s9178 + $0x118] sm:$0xf]
      %v9250 = vld [vmem:[%s9178 + $0x11c] sm:$0xf]
      %v9251 = vld [vmem:[%s9178 + $0x120] sm:$0xf]
      %v9252 = vld [vmem:[%s9178 + $0x124] sm:$0xf]
      %v9253 = vld [vmem:[%s9178 + $0x128] sm:$0xf]
      %v9254 = vld [vmem:[%s9178 + $0x12c] sm:$0xf]
      %v9255 = vld [vmem:[%s9178 + $0x130] sm:$0xf]
      %v9256 = vld [vmem:[%s9178 + $0x134] sm:$0xf]
      %v9257 = vld [vmem:[%s9178 + $0x138] sm:$0xf]
      %v9258 = vld [vmem:[%s9178 + $0x13c] sm:$0xf]
      %v9259 = vld [vmem:[%s9178 + $0x140] sm:$0xf]
      %v9260 = vld [vmem:[%s9178 + $0x144] sm:$0xf]
      %v9261 = vld [vmem:[%s9178 + $0x148] sm:$0xf]
      %v9262 = vld [vmem:[%s9178 + $0x14c] sm:$0xf]
      %v9263 = vld [vmem:[%s9178 + $0x150] sm:$0xf]
      %v9264 = vld [vmem:[%s9178 + $0x154] sm:$0xf]
      %v9265 = vld [vmem:[%s9178 + $0x158] sm:$0xf]
      %v9266 = vld [vmem:[%s9178 + $0x15c] sm:$0xf]
      %v9267 = vld [vmem:[%s9178 + $0x160] sm:$0xf]
      %v9268 = vld [vmem:[%s9178 + $0x164] sm:$0xf]
      %v9269 = vld [vmem:[%s9178 + $0x168] sm:$0xf]
      %v9270 = vld [vmem:[%s9178 + $0x16c] sm:$0xf]
      %v9271 = vld [vmem:[%s9178 + $0x170] sm:$0xf]
      %v9272 = vld [vmem:[%s9178 + $0x174] sm:$0xf]
      %v9273 = vld [vmem:[%s9178 + $0x178] sm:$0xf]
      %v9274 = vld [vmem:[%s9178 + $0x17c] sm:$0xf]
      %v9275 = vld [vmem:[%s9178 + $0x180] sm:$0xf]
      %v9276 = vld [vmem:[%s9178 + $0x184] sm:$0xf]
      %v9277 = vld [vmem:[%s9178 + $0x188] sm:$0xf]
      %v9278 = vld [vmem:[%s9178 + $0x18c] sm:$0xf]
      %v9279 = vld [vmem:[%s9178 + $0x190] sm:$0xf]
      %v9280 = vld [vmem:[%s9178 + $0x194] sm:$0xf]
      %v9281 = vld [vmem:[%s9178 + $0x198] sm:$0xf]
      %v9282 = vld [vmem:[%s9178 + $0x19c] sm:$0xf]
      %v9283 = vld [vmem:[%s9178 + $0x1a0] sm:$0xf]
      %v9284 = vld [vmem:[%s9178 + $0x1a4] sm:$0xf]
      %v9285 = vld [vmem:[%s9178 + $0x1a8] sm:$0xf]
      %v9286 = vld [vmem:[%s9178 + $0x1ac] sm:$0xf]
      %v9287 = vld [vmem:[%s9178 + $0x1b0] sm:$0xf]
      %v9288 = vld [vmem:[%s9178 + $0x1b4] sm:$0xf]
      %v9289 = vld [vmem:[%s9178 + $0x1b8] sm:$0xf]
      %v9290 = vld [vmem:[%s9178 + $0x1bc] sm:$0xf]
      %v9291 = vld [vmem:[%s9178 + $0x1c0] sm:$0xf]
      %v9292 = vld [vmem:[%s9178 + $0x1c4] sm:$0xf]
      %v9293 = vld [vmem:[%s9178 + $0x1c8] sm:$0xf]
      %v9294 = vld [vmem:[%s9178 + $0x1cc] sm:$0xf]
      %v9295 = vld [vmem:[%s9178 + $0x1d0] sm:$0xf]
      %v9296 = vld [vmem:[%s9178 + $0x1d4] sm:$0xf]
      %v9297 = vld [vmem:[%s9178 + $0x1d8] sm:$0xf]
      %v9298 = vld [vmem:[%s9178 + $0x1dc] sm:$0xf]
      %v9299 = vld [vmem:[%s9178 + $0x1e0] sm:$0xf]
      %v9300 = vld [vmem:[%s9178 + $0x1e4] sm:$0xf]
      %v9301 = vld [vmem:[%s9178 + $0x1e8] sm:$0xf]
      %v9302 = vld [vmem:[%s9178 + $0x1ec] sm:$0xf]
      %v9303 = vld [vmem:[%s9178 + $0x1f0] sm:$0xf]
      %v9304 = vld [vmem:[%s9178 + $0x1f4] sm:$0xf]
      %v9305 = vld [vmem:[%s9178 + $0x1f8] sm:$0xf]
      %v9306 = vld [vmem:[%s9178 + $0x1fc] sm:$0xf]
      %v9307 = vld [vmem:[%s9178 + $0x200] sm:$0xf]
      %v9308 = vld [vmem:[%s9178 + $0x204] sm:$0xf]
      %v9309 = vld [vmem:[%s9178 + $0x208] sm:$0xf]
      %v9310 = vld [vmem:[%s9178 + $0x20c] sm:$0xf]
      %v9311 = vld [vmem:[%s9178 + $0x210] sm:$0xf]
      %v9312 = vld [vmem:[%s9178 + $0x214] sm:$0xf]
      %v9313 = vld [vmem:[%s9178 + $0x218] sm:$0xf]
      %v9314 = vld [vmem:[%s9178 + $0x21c] sm:$0xf]
      %v9315 = vld [vmem:[%s9178 + $0x220] sm:$0xf]
      %v9316 = vld [vmem:[%s9178 + $0x224] sm:$0xf]
      %v9317 = vld [vmem:[%s9178 + $0x228] sm:$0xf]
      %v9318 = vld [vmem:[%s9178 + $0x22c] sm:$0xf]
      %v9319 = vld [vmem:[%s9178 + $0x230] sm:$0xf]
      %v9320 = vld [vmem:[%s9178 + $0x234] sm:$0xf]
      %v9321 = vld [vmem:[%s9178 + $0x238] sm:$0xf]
      %v9322 = vld [vmem:[%s9178 + $0x23c] sm:$0xf]
      %v9323 = vld [vmem:[%s9178 + $0x240] sm:$0xf]
      %v9324 = vld [vmem:[%s9178 + $0x244] sm:$0xf]
      %v9325 = vld [vmem:[%s9178 + $0x248] sm:$0xf]
      %v9326 = vld [vmem:[%s9178 + $0x24c] sm:$0xf]
      %v9327 = vld [vmem:[%s9178 + $0x250] sm:$0xf]
      %v9328 = vld [vmem:[%s9178 + $0x254] sm:$0xf]
      %v9329 = vld [vmem:[%s9178 + $0x258] sm:$0xf]
      %v9330 = vld [vmem:[%s9178 + $0x25c] sm:$0xf]
      %v9331 = vld [vmem:[%s9178 + $0x260] sm:$0xf]
      %v9332 = vld [vmem:[%s9178 + $0x264] sm:$0xf]
      %v9333 = vld [vmem:[%s9178 + $0x268] sm:$0xf]
      %v9334 = vld [vmem:[%s9178 + $0x26c] sm:$0xf]
      %v9335 = vld [vmem:[%s9178 + $0x270] sm:$0xf]
      %v9336 = vld [vmem:[%s9178 + $0x274] sm:$0xf]
      %v9337 = vld [vmem:[%s9178 + $0x278] sm:$0xf]
      %v9338 = vld [vmem:[%s9178 + $0x27c] sm:$0xf]
      %v9339 = vld [vmem:[%s9178 + $0x280] sm:$0xf]
      %v9340 = vld [vmem:[%s9178 + $0x284] sm:$0xf]
      %v9341 = vld [vmem:[%s9178 + $0x288] sm:$0xf]
      %v9342 = vld [vmem:[%s9178 + $0x28c] sm:$0xf]
      %v9343 = vld [vmem:[%s9178 + $0x290] sm:$0xf]
      %v9344 = vld [vmem:[%s9178 + $0x294] sm:$0xf]
      %v9345 = vld [vmem:[%s9178 + $0x298] sm:$0xf]
      %v9346 = vld [vmem:[%s9178 + $0x29c] sm:$0xf]
      %v9347 = vld [vmem:[%s9178 + $0x2a0] sm:$0xf]
      %v9348 = vld [vmem:[%s9178 + $0x2a4] sm:$0xf]
      %v9349 = vld [vmem:[%s9178 + $0x2a8] sm:$0xf]
      %v9350 = vld [vmem:[%s9178 + $0x2ac] sm:$0xf]
      %v9351 = vld [vmem:[%s9178 + $0x2b0] sm:$0xf]
      %v9352 = vld [vmem:[%s9178 + $0x2b4] sm:$0xf]
      %v9353 = vld [vmem:[%s9178 + $0x2b8] sm:$0xf]
      %v9354 = vld [vmem:[%s9178 + $0x2bc] sm:$0xf]
      %v9355 = vld [vmem:[%s9178 + $0x2c0] sm:$0xf]
      %v9356 = vld [vmem:[%s9178 + $0x2c4] sm:$0xf]
      %v9357 = vld [vmem:[%s9178 + $0x2c8] sm:$0xf]
      %v9358 = vld [vmem:[%s9178 + $0x2cc] sm:$0xf]
      %v9359 = vld [vmem:[%s9178 + $0x2d0] sm:$0xf]
      %v9360 = vld [vmem:[%s9178 + $0x2d4] sm:$0xf]
      %v9361 = vld [vmem:[%s9178 + $0x2d8] sm:$0xf]
      %v9362 = vld [vmem:[%s9178 + $0x2dc] sm:$0xf]
      %v9363 = vld [vmem:[%s9178 + $0x2e0] sm:$0xf]
      %v9364 = vld [vmem:[%s9178 + $0x2e4] sm:$0xf]
      %v9365 = vld [vmem:[%s9178 + $0x2e8] sm:$0xf]
      %v9366 = vld [vmem:[%s9178 + $0x2ec] sm:$0xf]
      %v9367 = vld [vmem:[%s9178 + $0x2f0] sm:$0xf]
      %v9368 = vld [vmem:[%s9178 + $0x2f4] sm:$0xf]
      %v9369 = vld [vmem:[%s9178 + $0x2f8] sm:$0xf]
      %v9370 = vld [vmem:[%s9178 + $0x2fc] sm:$0xf]
      %v9371 = vld [vmem:[%s9178 + $0x300] sm:$0xf]
      %v9372 = vld [vmem:[%s9178 + $0x304] sm:$0xf]
      %v9373 = vld [vmem:[%s9178 + $0x308] sm:$0xf]
      %v9374 = vld [vmem:[%s9178 + $0x30c] sm:$0xf]
      %v9375 = vld [vmem:[%s9178 + $0x310] sm:$0xf]
      %v9376 = vld [vmem:[%s9178 + $0x314] sm:$0xf]
      %v9377 = vld [vmem:[%s9178 + $0x318] sm:$0xf]
      %v9378 = vld [vmem:[%s9178 + $0x31c] sm:$0xf]
      %v9379 = vld [vmem:[%s9178 + $0x320] sm:$0xf]
      %v9380 = vld [vmem:[%s9178 + $0x324] sm:$0xf]
      %v9381 = vld [vmem:[%s9178 + $0x328] sm:$0xf]
      %v9382 = vld [vmem:[%s9178 + $0x32c] sm:$0xf]
      %v9383 = vld [vmem:[%s9178 + $0x330] sm:$0xf]
      %v9384 = vld [vmem:[%s9178 + $0x334] sm:$0xf]
      %v9385 = vld [vmem:[%s9178 + $0x338] sm:$0xf]
      %v9386 = vld [vmem:[%s9178 + $0x33c] sm:$0xf]
      %v9387 = vld [vmem:[%s9178 + $0x340] sm:$0xf]
      %v9388 = vld [vmem:[%s9178 + $0x344] sm:$0xf]
      %v9389 = vld [vmem:[%s9178 + $0x348] sm:$0xf]
      %v9390 = vld [vmem:[%s9178 + $0x34c] sm:$0xf]
      %v9391 = vld [vmem:[%s9178 + $0x350] sm:$0xf]
      %v9392 = vld [vmem:[%s9178 + $0x354] sm:$0xf]
      %v9393 = vld [vmem:[%s9178 + $0x358] sm:$0xf]
      %v9394 = vld [vmem:[%s9178 + $0x35c] sm:$0xf]
      %v9395 = vld [vmem:[%s9178 + $0x360] sm:$0xf]
      %v9396 = vld [vmem:[%s9178 + $0x364] sm:$0xf]
      %v9397 = vld [vmem:[%s9178 + $0x368] sm:$0xf]
      %v9398 = vld [vmem:[%s9178 + $0x36c] sm:$0xf]
      %v9399 = vld [vmem:[%s9178 + $0x370] sm:$0xf]
      %v9400 = vld [vmem:[%s9178 + $0x374] sm:$0xf]
      %v9401 = vld [vmem:[%s9178 + $0x378] sm:$0xf]
      %v9402 = vld [vmem:[%s9178 + $0x37c] sm:$0xf]
      %v9403 = vld [vmem:[%s9178 + $0x380] sm:$0xf]
      %v9404 = vld [vmem:[%s9178 + $0x384] sm:$0xf]
      %v9405 = vld [vmem:[%s9178 + $0x388] sm:$0xf]
      %v9406 = vld [vmem:[%s9178 + $0x38c] sm:$0xf]
      %v9407 = vld [vmem:[%s9178 + $0x390] sm:$0xf]
      %v9408 = vld [vmem:[%s9178 + $0x394] sm:$0xf]
      %v9409 = vld [vmem:[%s9178 + $0x398] sm:$0xf]
      %v9410 = vld [vmem:[%s9178 + $0x39c] sm:$0xf]
      %v9411 = vld [vmem:[%s9178 + $0x3a0] sm:$0xf]
      %v9412 = vld [vmem:[%s9178 + $0x3a4] sm:$0xf]
      %v9413 = vld [vmem:[%s9178 + $0x3a8] sm:$0xf]
      %v9414 = vld [vmem:[%s9178 + $0x3ac] sm:$0xf]
      %v9415 = vld [vmem:[%s9178 + $0x3b0] sm:$0xf]
      %v9416 = vld [vmem:[%s9178 + $0x3b4] sm:$0xf]
      %v9417 = vld [vmem:[%s9178 + $0x3b8] sm:$0xf]
      %v9418 = vld [vmem:[%s9178 + $0x3bc] sm:$0xf]
      %v9419 = vld [vmem:[%s9178 + $0x3c0] sm:$0xf]
      %v9420 = vld [vmem:[%s9178 + $0x3c4] sm:$0xf]
      %v9421 = vld [vmem:[%s9178 + $0x3c8] sm:$0xf]
      %v9422 = vld [vmem:[%s9178 + $0x3cc] sm:$0xf]
      %v9423 = vld [vmem:[%s9178 + $0x3d0] sm:$0xf]
      %v9424 = vld [vmem:[%s9178 + $0x3d4] sm:$0xf]
      %v9425 = vld [vmem:[%s9178 + $0x3d8] sm:$0xf]
      %v9426 = vld [vmem:[%s9178 + $0x3dc] sm:$0xf]
      %v9427 = vld [vmem:[%s9178 + $0x3e0] sm:$0xf]
      %v9428 = vld [vmem:[%s9178 + $0x3e4] sm:$0xf]
      %v9429 = vld [vmem:[%s9178 + $0x3e8] sm:$0xf]
      %v9430 = vld [vmem:[%s9178 + $0x3ec] sm:$0xf]
      %v9431 = vld [vmem:[%s9178 + $0x3f0] sm:$0xf]
      %v9432 = vld [vmem:[%s9178 + $0x3f4] sm:$0xf]
      %v9433 = vld [vmem:[%s9178 + $0x3f8] sm:$0xf]
      %v9434 = vld [vmem:[%s9178 + $0x3fc] sm:$0xf]
      %s9435 = scalar_lea.vmem %s235, 4
      %v9436 = vld [vmem:[%s9435] sm:$0x1]
      %v9438 = vlaneseq
      %v9439 = vshrl.u32 %v9438, 7
      %v9440 = vsub.s32 0, %v9439
      %v9441 = vrot.slane %v9436, %v9440
      %v9475 = vunpack.c.l.b16 %v9146
      %v9476 = vunpack.c.l.b16 %v9147
      %v9477 = vunpack.c.l.b16 %v9148
      %v9478 = vunpack.c.l.b16 %v9149
      %v9479 = vunpack.c.l.b16 %v9150
      %v9480 = vunpack.c.l.b16 %v9151
      %v9481 = vunpack.c.l.b16 %v9152
      %v9482 = vunpack.c.l.b16 %v9153
      %v9483 = vunpack.c.l.b16 %v9154
      %v9484 = vunpack.c.l.b16 %v9155
      %v9485 = vunpack.c.l.b16 %v9156
      %v9486 = vunpack.c.l.b16 %v9157
      %v9487 = vunpack.c.l.b16 %v9158
      %v9488 = vunpack.c.l.b16 %v9159
      %v9489 = vunpack.c.l.b16 %v9160
      %v9490 = vunpack.c.l.b16 %v9161
      %v9491 = vunpack.c.l.b16 %v9162
      %v9492 = vunpack.c.l.b16 %v9163
      %v9493 = vunpack.c.l.b16 %v9164
      %v9494 = vunpack.c.l.b16 %v9165
      %v9495 = vunpack.c.l.b16 %v9166
      %v9496 = vunpack.c.l.b16 %v9167
      %v9497 = vunpack.c.l.b16 %v9168
      %v9498 = vunpack.c.l.b16 %v9169
      %v9499 = vunpack.c.l.b16 %v9170
      %v9500 = vunpack.c.l.b16 %v9171
      %v9501 = vunpack.c.l.b16 %v9172
      %v9502 = vunpack.c.l.b16 %v9173
      %v9503 = vunpack.c.l.b16 %v9174
      %v9504 = vunpack.c.l.b16 %v9175
      %v9505 = vunpack.c.l.b16 %v9176
      %v9506 = vunpack.c.l.b16 %v9177
      %v9507 = vrot.slane %v9491, 7
      %v9508 = vsel %vm2727, %v9507, %v9475
      %v9509 = vrot.slane %v9492, 7
      %v9510 = vsel %vm2727, %v9509, %v9476
      %v9511 = vrot.slane %v9493, 7
      %v9512 = vsel %vm2727, %v9511, %v9477
      %v9513 = vrot.slane %v9494, 7
      %v9514 = vsel %vm2727, %v9513, %v9478
      %v9515 = vrot.slane %v9495, 7
      %v9516 = vsel %vm2727, %v9515, %v9479
      %v9517 = vrot.slane %v9496, 7
      %v9518 = vsel %vm2727, %v9517, %v9480
      %v9519 = vrot.slane %v9497, 7
      %v9520 = vsel %vm2727, %v9519, %v9481
      %v9521 = vrot.slane %v9498, 7
      %v9522 = vsel %vm2727, %v9521, %v9482
      %v9523 = vrot.slane %v9499, 7
      %v9524 = vsel %vm2727, %v9523, %v9483
      %v9525 = vrot.slane %v9500, 7
      %v9526 = vsel %vm2727, %v9525, %v9484
      %v9527 = vrot.slane %v9501, 7
      %v9528 = vsel %vm2727, %v9527, %v9485
      %v9529 = vrot.slane %v9502, 7
      %v9530 = vsel %vm2727, %v9529, %v9486
      %v9531 = vrot.slane %v9503, 7
      %v9532 = vsel %vm2727, %v9531, %v9487
      %v9533 = vrot.slane %v9504, 7
      %v9534 = vsel %vm2727, %v9533, %v9488
      %v9535 = vrot.slane %v9505, 7
      %v9536 = vsel %vm2727, %v9535, %v9489
      %v9537 = vrot.slane %v9506, 7
      %v9538 = vsel %vm2727, %v9537, %v9490
      %v9539 = vpack.c.b16 %v9508, %v9508
      %v9540 = vpack.c.b16 %v9510, %v9510
      %v9541 = vpack.c.b16 %v9512, %v9512
      %v9542 = vpack.c.b16 %v9514, %v9514
      %v9543 = vpack.c.b16 %v9516, %v9516
      %v9544 = vpack.c.b16 %v9518, %v9518
      %v9545 = vpack.c.b16 %v9520, %v9520
      %v9546 = vpack.c.b16 %v9522, %v9522
      %v9547 = vpack.c.b16 %v9524, %v9524
      %v9548 = vpack.c.b16 %v9526, %v9526
      %v9549 = vpack.c.b16 %v9528, %v9528
      %v9550 = vpack.c.b16 %v9530, %v9530
      %v9551 = vpack.c.b16 %v9532, %v9532
      %v9552 = vpack.c.b16 %v9534, %v9534
      %v9553 = vpack.c.b16 %v9536, %v9536
      %v9554 = vpack.c.b16 %v9538, %v9538
      %v9827 = vunpack.c.l.b16 %v9179
      %v9828 = vunpack.c.l.b16 %v9180
      %v9829 = vunpack.c.l.b16 %v9181
      %v9830 = vunpack.c.l.b16 %v9182
      %v9831 = vunpack.c.l.b16 %v9183
      %v9832 = vunpack.c.l.b16 %v9184
      %v9833 = vunpack.c.l.b16 %v9185
      %v9834 = vunpack.c.l.b16 %v9186
      %v9835 = vunpack.c.l.b16 %v9187
      %v9836 = vunpack.c.l.b16 %v9188
      %v9837 = vunpack.c.l.b16 %v9189
      %v9838 = vunpack.c.l.b16 %v9190
      %v9839 = vunpack.c.l.b16 %v9191
      %v9840 = vunpack.c.l.b16 %v9192
      %v9841 = vunpack.c.l.b16 %v9193
      %v9842 = vunpack.c.l.b16 %v9194
      %v9843 = vunpack.c.l.b16 %v9195
      %v9844 = vunpack.c.l.b16 %v9196
      %v9845 = vunpack.c.l.b16 %v9197
      %v9846 = vunpack.c.l.b16 %v9198
      %v9847 = vunpack.c.l.b16 %v9199
      %v9848 = vunpack.c.l.b16 %v9200
      %v9849 = vunpack.c.l.b16 %v9201
      %v9850 = vunpack.c.l.b16 %v9202
      %v9851 = vunpack.c.l.b16 %v9203
      %v9852 = vunpack.c.l.b16 %v9204
      %v9853 = vunpack.c.l.b16 %v9205
      %v9854 = vunpack.c.l.b16 %v9206
      %v9855 = vunpack.c.l.b16 %v9207
      %v9856 = vunpack.c.l.b16 %v9208
      %v9857 = vunpack.c.l.b16 %v9209
      %v9858 = vunpack.c.l.b16 %v9210
      %v9859 = vunpack.c.l.b16 %v9211
      %v9860 = vunpack.c.l.b16 %v9212
      %v9861 = vunpack.c.l.b16 %v9213
      %v9862 = vunpack.c.l.b16 %v9214
      %v9863 = vunpack.c.l.b16 %v9215
      %v9864 = vunpack.c.l.b16 %v9216
      %v9865 = vunpack.c.l.b16 %v9217
      %v9866 = vunpack.c.l.b16 %v9218
      %v9867 = vunpack.c.l.b16 %v9219
      %v9868 = vunpack.c.l.b16 %v9220
      %v9869 = vunpack.c.l.b16 %v9221
      %v9870 = vunpack.c.l.b16 %v9222
      %v9871 = vunpack.c.l.b16 %v9223
      %v9872 = vunpack.c.l.b16 %v9224
      %v9873 = vunpack.c.l.b16 %v9225
      %v9874 = vunpack.c.l.b16 %v9226
      %v9875 = vunpack.c.l.b16 %v9227
      %v9876 = vunpack.c.l.b16 %v9228
      %v9877 = vunpack.c.l.b16 %v9229
      %v9878 = vunpack.c.l.b16 %v9230
      %v9879 = vunpack.c.l.b16 %v9231
      %v9880 = vunpack.c.l.b16 %v9232
      %v9881 = vunpack.c.l.b16 %v9233
      %v9882 = vunpack.c.l.b16 %v9234
      %v9883 = vunpack.c.l.b16 %v9235
      %v9884 = vunpack.c.l.b16 %v9236
      %v9885 = vunpack.c.l.b16 %v9237
      %v9886 = vunpack.c.l.b16 %v9238
      %v9887 = vunpack.c.l.b16 %v9239
      %v9888 = vunpack.c.l.b16 %v9240
      %v9889 = vunpack.c.l.b16 %v9241
      %v9890 = vunpack.c.l.b16 %v9242
      %v9891 = vunpack.c.l.b16 %v9243
      %v9892 = vunpack.c.l.b16 %v9244
      %v9893 = vunpack.c.l.b16 %v9245
      %v9894 = vunpack.c.l.b16 %v9246
      %v9895 = vunpack.c.l.b16 %v9247
      %v9896 = vunpack.c.l.b16 %v9248
      %v9897 = vunpack.c.l.b16 %v9249
      %v9898 = vunpack.c.l.b16 %v9250
      %v9899 = vunpack.c.l.b16 %v9251
      %v9900 = vunpack.c.l.b16 %v9252
      %v9901 = vunpack.c.l.b16 %v9253
      %v9902 = vunpack.c.l.b16 %v9254
      %v9903 = vunpack.c.l.b16 %v9255
      %v9904 = vunpack.c.l.b16 %v9256
      %v9905 = vunpack.c.l.b16 %v9257
      %v9906 = vunpack.c.l.b16 %v9258
      %v9907 = vunpack.c.l.b16 %v9259
      %v9908 = vunpack.c.l.b16 %v9260
      %v9909 = vunpack.c.l.b16 %v9261
      %v9910 = vunpack.c.l.b16 %v9262
      %v9911 = vunpack.c.l.b16 %v9263
      %v9912 = vunpack.c.l.b16 %v9264
      %v9913 = vunpack.c.l.b16 %v9265
      %v9914 = vunpack.c.l.b16 %v9266
      %v9915 = vunpack.c.l.b16 %v9267
      %v9916 = vunpack.c.l.b16 %v9268
      %v9917 = vunpack.c.l.b16 %v9269
      %v9918 = vunpack.c.l.b16 %v9270
      %v9919 = vunpack.c.l.b16 %v9271
      %v9920 = vunpack.c.l.b16 %v9272
      %v9921 = vunpack.c.l.b16 %v9273
      %v9922 = vunpack.c.l.b16 %v9274
      %v9923 = vunpack.c.l.b16 %v9275
      %v9924 = vunpack.c.l.b16 %v9276
      %v9925 = vunpack.c.l.b16 %v9277
      %v9926 = vunpack.c.l.b16 %v9278
      %v9927 = vunpack.c.l.b16 %v9279
      %v9928 = vunpack.c.l.b16 %v9280
      %v9929 = vunpack.c.l.b16 %v9281
      %v9930 = vunpack.c.l.b16 %v9282
      %v9931 = vunpack.c.l.b16 %v9283
      %v9932 = vunpack.c.l.b16 %v9284
      %v9933 = vunpack.c.l.b16 %v9285
      %v9934 = vunpack.c.l.b16 %v9286
      %v9935 = vunpack.c.l.b16 %v9287
      %v9936 = vunpack.c.l.b16 %v9288
      %v9937 = vunpack.c.l.b16 %v9289
      %v9938 = vunpack.c.l.b16 %v9290
      %v9939 = vunpack.c.l.b16 %v9291
      %v9940 = vunpack.c.l.b16 %v9292
      %v9941 = vunpack.c.l.b16 %v9293
      %v9942 = vunpack.c.l.b16 %v9294
      %v9943 = vunpack.c.l.b16 %v9295
      %v9944 = vunpack.c.l.b16 %v9296
      %v9945 = vunpack.c.l.b16 %v9297
      %v9946 = vunpack.c.l.b16 %v9298
      %v9947 = vunpack.c.l.b16 %v9299
      %v9948 = vunpack.c.l.b16 %v9300
      %v9949 = vunpack.c.l.b16 %v9301
      %v9950 = vunpack.c.l.b16 %v9302
      %v9951 = vunpack.c.l.b16 %v9303
      %v9952 = vunpack.c.l.b16 %v9304
      %v9953 = vunpack.c.l.b16 %v9305
      %v9954 = vunpack.c.l.b16 %v9306
      %v9955 = vunpack.c.l.b16 %v9307
      %v9956 = vunpack.c.l.b16 %v9308
      %v9957 = vunpack.c.l.b16 %v9309
      %v9958 = vunpack.c.l.b16 %v9310
      %v9959 = vunpack.c.l.b16 %v9311
      %v9960 = vunpack.c.l.b16 %v9312
      %v9961 = vunpack.c.l.b16 %v9313
      %v9962 = vunpack.c.l.b16 %v9314
      %v9963 = vunpack.c.l.b16 %v9315
      %v9964 = vunpack.c.l.b16 %v9316
      %v9965 = vunpack.c.l.b16 %v9317
      %v9966 = vunpack.c.l.b16 %v9318
      %v9967 = vunpack.c.l.b16 %v9319
      %v9968 = vunpack.c.l.b16 %v9320
      %v9969 = vunpack.c.l.b16 %v9321
      %v9970 = vunpack.c.l.b16 %v9322
      %v9971 = vunpack.c.l.b16 %v9323
      %v9972 = vunpack.c.l.b16 %v9324
      %v9973 = vunpack.c.l.b16 %v9325
      %v9974 = vunpack.c.l.b16 %v9326
      %v9975 = vunpack.c.l.b16 %v9327
      %v9976 = vunpack.c.l.b16 %v9328
      %v9977 = vunpack.c.l.b16 %v9329
      %v9978 = vunpack.c.l.b16 %v9330
      %v9979 = vunpack.c.l.b16 %v9331
      %v9980 = vunpack.c.l.b16 %v9332
      %v9981 = vunpack.c.l.b16 %v9333
      %v9982 = vunpack.c.l.b16 %v9334
      %v9983 = vunpack.c.l.b16 %v9335
      %v9984 = vunpack.c.l.b16 %v9336
      %v9985 = vunpack.c.l.b16 %v9337
      %v9986 = vunpack.c.l.b16 %v9338
      %v9987 = vunpack.c.l.b16 %v9339
      %v9988 = vunpack.c.l.b16 %v9340
      %v9989 = vunpack.c.l.b16 %v9341
      %v9990 = vunpack.c.l.b16 %v9342
      %v9991 = vunpack.c.l.b16 %v9343
      %v9992 = vunpack.c.l.b16 %v9344
      %v9993 = vunpack.c.l.b16 %v9345
      %v9994 = vunpack.c.l.b16 %v9346
      %v9995 = vunpack.c.l.b16 %v9347
      %v9996 = vunpack.c.l.b16 %v9348
      %v9997 = vunpack.c.l.b16 %v9349
      %v9998 = vunpack.c.l.b16 %v9350
      %v9999 = vunpack.c.l.b16 %v9351
      %v10000 = vunpack.c.l.b16 %v9352
      %v10001 = vunpack.c.l.b16 %v9353
      %v10002 = vunpack.c.l.b16 %v9354
      %v10003 = vunpack.c.l.b16 %v9355
      %v10004 = vunpack.c.l.b16 %v9356
      %v10005 = vunpack.c.l.b16 %v9357
      %v10006 = vunpack.c.l.b16 %v9358
      %v10007 = vunpack.c.l.b16 %v9359
      %v10008 = vunpack.c.l.b16 %v9360
      %v10009 = vunpack.c.l.b16 %v9361
      %v10010 = vunpack.c.l.b16 %v9362
      %v10011 = vunpack.c.l.b16 %v9363
      %v10012 = vunpack.c.l.b16 %v9364
      %v10013 = vunpack.c.l.b16 %v9365
      %v10014 = vunpack.c.l.b16 %v9366
      %v10015 = vunpack.c.l.b16 %v9367
      %v10016 = vunpack.c.l.b16 %v9368
      %v10017 = vunpack.c.l.b16 %v9369
      %v10018 = vunpack.c.l.b16 %v9370
      %v10019 = vunpack.c.l.b16 %v9371
      %v10020 = vunpack.c.l.b16 %v9372
      %v10021 = vunpack.c.l.b16 %v9373
      %v10022 = vunpack.c.l.b16 %v9374
      %v10023 = vunpack.c.l.b16 %v9375
      %v10024 = vunpack.c.l.b16 %v9376
      %v10025 = vunpack.c.l.b16 %v9377
      %v10026 = vunpack.c.l.b16 %v9378
      %v10027 = vunpack.c.l.b16 %v9379
      %v10028 = vunpack.c.l.b16 %v9380
      %v10029 = vunpack.c.l.b16 %v9381
      %v10030 = vunpack.c.l.b16 %v9382
      %v10031 = vunpack.c.l.b16 %v9383
      %v10032 = vunpack.c.l.b16 %v9384
      %v10033 = vunpack.c.l.b16 %v9385
      %v10034 = vunpack.c.l.b16 %v9386
      %v10035 = vunpack.c.l.b16 %v9387
      %v10036 = vunpack.c.l.b16 %v9388
      %v10037 = vunpack.c.l.b16 %v9389
      %v10038 = vunpack.c.l.b16 %v9390
      %v10039 = vunpack.c.l.b16 %v9391
      %v10040 = vunpack.c.l.b16 %v9392
      %v10041 = vunpack.c.l.b16 %v9393
      %v10042 = vunpack.c.l.b16 %v9394
      %v10043 = vunpack.c.l.b16 %v9395
      %v10044 = vunpack.c.l.b16 %v9396
      %v10045 = vunpack.c.l.b16 %v9397
      %v10046 = vunpack.c.l.b16 %v9398
      %v10047 = vunpack.c.l.b16 %v9399
      %v10048 = vunpack.c.l.b16 %v9400
      %v10049 = vunpack.c.l.b16 %v9401
      %v10050 = vunpack.c.l.b16 %v9402
      %v10051 = vunpack.c.l.b16 %v9403
      %v10052 = vunpack.c.l.b16 %v9404
      %v10053 = vunpack.c.l.b16 %v9405
      %v10054 = vunpack.c.l.b16 %v9406
      %v10055 = vunpack.c.l.b16 %v9407
      %v10056 = vunpack.c.l.b16 %v9408
      %v10057 = vunpack.c.l.b16 %v9409
      %v10058 = vunpack.c.l.b16 %v9410
      %v10059 = vunpack.c.l.b16 %v9411
      %v10060 = vunpack.c.l.b16 %v9412
      %v10061 = vunpack.c.l.b16 %v9413
      %v10062 = vunpack.c.l.b16 %v9414
      %v10063 = vunpack.c.l.b16 %v9415
      %v10064 = vunpack.c.l.b16 %v9416
      %v10065 = vunpack.c.l.b16 %v9417
      %v10066 = vunpack.c.l.b16 %v9418
      %v10067 = vunpack.c.l.b16 %v9419
      %v10068 = vunpack.c.l.b16 %v9420
      %v10069 = vunpack.c.l.b16 %v9421
      %v10070 = vunpack.c.l.b16 %v9422
      %v10071 = vunpack.c.l.b16 %v9423
      %v10072 = vunpack.c.l.b16 %v9424
      %v10073 = vunpack.c.l.b16 %v9425
      %v10074 = vunpack.c.l.b16 %v9426
      %v10075 = vunpack.c.l.b16 %v9427
      %v10076 = vunpack.c.l.b16 %v9428
      %v10077 = vunpack.c.l.b16 %v9429
      %v10078 = vunpack.c.l.b16 %v9430
      %v10079 = vunpack.c.l.b16 %v9431
      %v10080 = vunpack.c.l.b16 %v9432
      %v10081 = vunpack.c.l.b16 %v9433
      %v10082 = vunpack.c.l.b16 %v9434
      %v10083 = vpack.c.b16 %v9828, %v9827
      %v10084 = vpack.c.b16 %v9830, %v9829
      %v10085 = vpack.c.b16 %v9832, %v9831
      %v10086 = vpack.c.b16 %v9834, %v9833
      %v10087 = vpack.c.b16 %v9836, %v9835
      %v10088 = vpack.c.b16 %v9838, %v9837
      %v10089 = vpack.c.b16 %v9840, %v9839
      %v10090 = vpack.c.b16 %v9842, %v9841
      %v10091 = vpack.c.b16 %v9844, %v9843
      %v10092 = vpack.c.b16 %v9846, %v9845
      %v10093 = vpack.c.b16 %v9848, %v9847
      %v10094 = vpack.c.b16 %v9850, %v9849
      %v10095 = vpack.c.b16 %v9852, %v9851
      %v10096 = vpack.c.b16 %v9854, %v9853
      %v10097 = vpack.c.b16 %v9856, %v9855
      %v10098 = vpack.c.b16 %v9858, %v9857
      %v10099 = vpack.c.b16 %v9860, %v9859
      %v10100 = vpack.c.b16 %v9862, %v9861
      %v10101 = vpack.c.b16 %v9864, %v9863
      %v10102 = vpack.c.b16 %v9866, %v9865
      %v10103 = vpack.c.b16 %v9868, %v9867
      %v10104 = vpack.c.b16 %v9870, %v9869
      %v10105 = vpack.c.b16 %v9872, %v9871
      %v10106 = vpack.c.b16 %v9874, %v9873
      %v10107 = vpack.c.b16 %v9876, %v9875
      %v10108 = vpack.c.b16 %v9878, %v9877
      %v10109 = vpack.c.b16 %v9880, %v9879
      %v10110 = vpack.c.b16 %v9882, %v9881
      %v10111 = vpack.c.b16 %v9884, %v9883
      %v10112 = vpack.c.b16 %v9886, %v9885
      %v10113 = vpack.c.b16 %v9888, %v9887
      %v10114 = vpack.c.b16 %v9890, %v9889
      %v10115 = vpack.c.b16 %v9892, %v9891
      %v10116 = vpack.c.b16 %v9894, %v9893
      %v10117 = vpack.c.b16 %v9896, %v9895
      %v10118 = vpack.c.b16 %v9898, %v9897
      %v10119 = vpack.c.b16 %v9900, %v9899
      %v10120 = vpack.c.b16 %v9902, %v9901
      %v10121 = vpack.c.b16 %v9904, %v9903
      %v10122 = vpack.c.b16 %v9906, %v9905
      %v10123 = vpack.c.b16 %v9908, %v9907
      %v10124 = vpack.c.b16 %v9910, %v9909
      %v10125 = vpack.c.b16 %v9912, %v9911
      %v10126 = vpack.c.b16 %v9914, %v9913
      %v10127 = vpack.c.b16 %v9916, %v9915
      %v10128 = vpack.c.b16 %v9918, %v9917
      %v10129 = vpack.c.b16 %v9920, %v9919
      %v10130 = vpack.c.b16 %v9922, %v9921
      %v10131 = vpack.c.b16 %v9924, %v9923
      %v10132 = vpack.c.b16 %v9926, %v9925
      %v10133 = vpack.c.b16 %v9928, %v9927
      %v10134 = vpack.c.b16 %v9930, %v9929
      %v10135 = vpack.c.b16 %v9932, %v9931
      %v10136 = vpack.c.b16 %v9934, %v9933
      %v10137 = vpack.c.b16 %v9936, %v9935
      %v10138 = vpack.c.b16 %v9938, %v9937
      %v10139 = vpack.c.b16 %v9940, %v9939
      %v10140 = vpack.c.b16 %v9942, %v9941
      %v10141 = vpack.c.b16 %v9944, %v9943
      %v10142 = vpack.c.b16 %v9946, %v9945
      %v10143 = vpack.c.b16 %v9948, %v9947
      %v10144 = vpack.c.b16 %v9950, %v9949
      %v10145 = vpack.c.b16 %v9952, %v9951
      %v10146 = vpack.c.b16 %v9954, %v9953
      %v10147 = vpack.c.b16 %v9956, %v9955
      %v10148 = vpack.c.b16 %v9958, %v9957
      %v10149 = vpack.c.b16 %v9960, %v9959
      %v10150 = vpack.c.b16 %v9962, %v9961
      %v10151 = vpack.c.b16 %v9964, %v9963
      %v10152 = vpack.c.b16 %v9966, %v9965
      %v10153 = vpack.c.b16 %v9968, %v9967
      %v10154 = vpack.c.b16 %v9970, %v9969
      %v10155 = vpack.c.b16 %v9972, %v9971
      %v10156 = vpack.c.b16 %v9974, %v9973
      %v10157 = vpack.c.b16 %v9976, %v9975
      %v10158 = vpack.c.b16 %v9978, %v9977
      %v10159 = vpack.c.b16 %v9980, %v9979
      %v10160 = vpack.c.b16 %v9982, %v9981
      %v10161 = vpack.c.b16 %v9984, %v9983
      %v10162 = vpack.c.b16 %v9986, %v9985
      %v10163 = vpack.c.b16 %v9988, %v9987
      %v10164 = vpack.c.b16 %v9990, %v9989
      %v10165 = vpack.c.b16 %v9992, %v9991
      %v10166 = vpack.c.b16 %v9994, %v9993
      %v10167 = vpack.c.b16 %v9996, %v9995
      %v10168 = vpack.c.b16 %v9998, %v9997
      %v10169 = vpack.c.b16 %v10000, %v9999
      %v10170 = vpack.c.b16 %v10002, %v10001
      %v10171 = vpack.c.b16 %v10004, %v10003
      %v10172 = vpack.c.b16 %v10006, %v10005
      %v10173 = vpack.c.b16 %v10008, %v10007
      %v10174 = vpack.c.b16 %v10010, %v10009
      %v10175 = vpack.c.b16 %v10012, %v10011
      %v10176 = vpack.c.b16 %v10014, %v10013
      %v10177 = vpack.c.b16 %v10016, %v10015
      %v10178 = vpack.c.b16 %v10018, %v10017
      %v10179 = vpack.c.b16 %v10020, %v10019
      %v10180 = vpack.c.b16 %v10022, %v10021
      %v10181 = vpack.c.b16 %v10024, %v10023
      %v10182 = vpack.c.b16 %v10026, %v10025
      %v10183 = vpack.c.b16 %v10028, %v10027
      %v10184 = vpack.c.b16 %v10030, %v10029
      %v10185 = vpack.c.b16 %v10032, %v10031
      %v10186 = vpack.c.b16 %v10034, %v10033
      %v10187 = vpack.c.b16 %v10036, %v10035
      %v10188 = vpack.c.b16 %v10038, %v10037
      %v10189 = vpack.c.b16 %v10040, %v10039
      %v10190 = vpack.c.b16 %v10042, %v10041
      %v10191 = vpack.c.b16 %v10044, %v10043
      %v10192 = vpack.c.b16 %v10046, %v10045
      %v10193 = vpack.c.b16 %v10048, %v10047
      %v10194 = vpack.c.b16 %v10050, %v10049
      %v10195 = vpack.c.b16 %v10052, %v10051
      %v10196 = vpack.c.b16 %v10054, %v10053
      %v10197 = vpack.c.b16 %v10056, %v10055
      %v10198 = vpack.c.b16 %v10058, %v10057
      %v10199 = vpack.c.b16 %v10060, %v10059
      %v10200 = vpack.c.b16 %v10062, %v10061
      %v10201 = vpack.c.b16 %v10064, %v10063
      %v10202 = vpack.c.b16 %v10066, %v10065
      %v10203 = vpack.c.b16 %v10068, %v10067
      %v10204 = vpack.c.b16 %v10070, %v10069
      %v10205 = vpack.c.b16 %v10072, %v10071
      %v10206 = vpack.c.b16 %v10074, %v10073
      %v10207 = vpack.c.b16 %v10076, %v10075
      %v10208 = vpack.c.b16 %v10078, %v10077
      %v10209 = vpack.c.b16 %v10080, %v10079
      %v10210 = vpack.c.b16 %v10082, %v10081
      %10339 = vmatprep.subr.bf16.mxu0 0
      %10340 = vmatpush1.bf16.msra.mxu0 %v10090
      %10341 = vmatprep.subr.bf16.mxu0 0
      %10342 = vmatpush1.bf16.msra.mxu0 %v10089
      %10343 = vmatprep.subr.bf16.mxu0 0
      %10344 = vmatpush1.bf16.msra.mxu0 %v10088
      %10345 = vmatprep.subr.bf16.mxu0 0
      %10346 = vmatpush1.bf16.msra.mxu0 %v10087
      %10347 = vmatprep.subr.bf16.mxu0 0
      %10348 = vmatpush1.bf16.msra.mxu0 %v10086
      %10349 = vmatprep.subr.bf16.mxu0 0
      %10350 = vmatpush1.bf16.msra.mxu0 %v10085
      %10351 = vmatprep.subr.bf16.mxu0 0
      %10352 = vmatpush1.bf16.msra.mxu0 %v10084
      %10353 = vmatprep.subr.bf16.mxu0 0
      %10354 = vmatpush1.bf16.msra.mxu0 %v10083
      %10355 = vmatprep.subr.bf16.mxu0 0
      %10356 = vmatpush2.bf16.msra.mxu0 %v10098
      %10357 = vmatprep.subr.bf16.mxu0 0
      %10358 = vmatpush2.bf16.msra.mxu0 %v10097
      %10359 = vmatprep.subr.bf16.mxu0 0
      %10360 = vmatpush2.bf16.msra.mxu0 %v10096
      %10361 = vmatprep.subr.bf16.mxu0 0
      %10362 = vmatpush2.bf16.msra.mxu0 %v10095
      %10363 = vmatprep.subr.bf16.mxu0 0
      %10364 = vmatpush2.bf16.msra.mxu0 %v10094
      %10365 = vmatprep.subr.bf16.mxu0 0
      %10366 = vmatpush2.bf16.msra.mxu0 %v10093
      %10367 = vmatprep.subr.bf16.mxu0 0
      %10368 = vmatpush2.bf16.msra.mxu0 %v10092
      %10369 = vmatprep.subr.bf16.mxu0 0
      %10370 = vmatpush2.bf16.msra.mxu0 %v10091
      %10371 = vmatprep.mubr.bf16.mxu0 %v9540
      %10372 = vmatmul.mubr.bf16.gmra.mxu0 %v9539
      %v10373 = vpop.f32.mrf.mxu0
      %v10374 = vadd.f32 %v9441, %v10373
      %v10375 = vpop.f32.mrf.mxu0
      %v10376 = vpop.f32.mrf.mxu0
      %v10377 = vpop.f32.mrf.mxu0
      %10378 = vdwg.mxu0
      %10379 = vmatprep.subr.bf16.mxu0 0
      %10380 = vmatpush1.bf16.msra.mxu0 %v10106
      %10381 = vmatprep.subr.bf16.mxu0 0
      %10382 = vmatpush1.bf16.msra.mxu0 %v10105
      %10383 = vmatprep.subr.bf16.mxu0 0
      %10384 = vmatpush1.bf16.msra.mxu0 %v10104
      %10385 = vmatprep.subr.bf16.mxu0 0
      %10386 = vmatpush1.bf16.msra.mxu0 %v10103
      %10387 = vmatprep.subr.bf16.mxu0 0
      %10388 = vmatpush1.bf16.msra.mxu0 %v10102
      %10389 = vmatprep.subr.bf16.mxu0 0
      %10390 = vmatpush1.bf16.msra.mxu0 %v10101
      %10391 = vmatprep.subr.bf16.mxu0 0
      %10392 = vmatpush1.bf16.msra.mxu0 %v10100
      %10393 = vmatprep.subr.bf16.mxu0 0
      %10394 = vmatpush1.bf16.msra.mxu0 %v10099
      %10395 = vmatprep.subr.bf16.mxu0 0
      %10396 = vmatpush2.bf16.msra.mxu0 %v10114
      %10397 = vmatprep.subr.bf16.mxu0 0
      %10398 = vmatpush2.bf16.msra.mxu0 %v10113
      %10399 = vmatprep.subr.bf16.mxu0 0
      %10400 = vmatpush2.bf16.msra.mxu0 %v10112
      %10401 = vmatprep.subr.bf16.mxu0 0
      %10402 = vmatpush2.bf16.msra.mxu0 %v10111
      %10403 = vmatprep.subr.bf16.mxu0 0
      %10404 = vmatpush2.bf16.msra.mxu0 %v10110
      %10405 = vmatprep.subr.bf16.mxu0 0
      %10406 = vmatpush2.bf16.msra.mxu0 %v10109
      %10407 = vmatprep.subr.bf16.mxu0 0
      %10408 = vmatpush2.bf16.msra.mxu0 %v10108
      %10409 = vmatprep.subr.bf16.mxu0 0
      %10410 = vmatpush2.bf16.msra.mxu0 %v10107
      %10411 = vmatprep.mubr.bf16.mxu0 %v9542
      %10412 = vmatmul.mubr.bf16.gmra.mxu0 %v9541
      %v10413 = vpop.f32.mrf.mxu0
      %v10414 = vadd.f32 %v10374, %v10413
      %v10415 = vpop.f32.mrf.mxu0
      %v10416 = vpop.f32.mrf.mxu0
      %v10417 = vpop.f32.mrf.mxu0
      %10418 = vdwg.mxu0
      %10419 = vmatprep.subr.bf16.mxu0 0
      %10420 = vmatpush1.bf16.msra.mxu0 %v10122
      %10421 = vmatprep.subr.bf16.mxu0 0
      %10422 = vmatpush1.bf16.msra.mxu0 %v10121
      %10423 = vmatprep.subr.bf16.mxu0 0
      %10424 = vmatpush1.bf16.msra.mxu0 %v10120
      %10425 = vmatprep.subr.bf16.mxu0 0
      %10426 = vmatpush1.bf16.msra.mxu0 %v10119
      %10427 = vmatprep.subr.bf16.mxu0 0
      %10428 = vmatpush1.bf16.msra.mxu0 %v10118
      %10429 = vmatprep.subr.bf16.mxu0 0
      %10430 = vmatpush1.bf16.msra.mxu0 %v10117
      %10431 = vmatprep.subr.bf16.mxu0 0
      %10432 = vmatpush1.bf16.msra.mxu0 %v10116
      %10433 = vmatprep.subr.bf16.mxu0 0
      %10434 = vmatpush1.bf16.msra.mxu0 %v10115
      %10435 = vmatprep.subr.bf16.mxu0 0
      %10436 = vmatpush2.bf16.msra.mxu0 %v10130
      %10437 = vmatprep.subr.bf16.mxu0 0
      %10438 = vmatpush2.bf16.msra.mxu0 %v10129
      %10439 = vmatprep.subr.bf16.mxu0 0
      %10440 = vmatpush2.bf16.msra.mxu0 %v10128
      %10441 = vmatprep.subr.bf16.mxu0 0
      %10442 = vmatpush2.bf16.msra.mxu0 %v10127
      %10443 = vmatprep.subr.bf16.mxu0 0
      %10444 = vmatpush2.bf16.msra.mxu0 %v10126
      %10445 = vmatprep.subr.bf16.mxu0 0
      %10446 = vmatpush2.bf16.msra.mxu0 %v10125
      %10447 = vmatprep.subr.bf16.mxu0 0
      %10448 = vmatpush2.bf16.msra.mxu0 %v10124
      %10449 = vmatprep.subr.bf16.mxu0 0
      %10450 = vmatpush2.bf16.msra.mxu0 %v10123
      %10451 = vmatprep.mubr.bf16.mxu0 %v9544
      %10452 = vmatmul.mubr.bf16.gmra.mxu0 %v9543
      %v10453 = vpop.f32.mrf.mxu0
      %v10454 = vadd.f32 %v10414, %v10453
      %v10455 = vpop.f32.mrf.mxu0
      %v10456 = vpop.f32.mrf.mxu0
      %v10457 = vpop.f32.mrf.mxu0
      %10458 = vdwg.mxu0
      %10459 = vmatprep.subr.bf16.mxu0 0
      %10460 = vmatpush1.bf16.msra.mxu0 %v10138
      %10461 = vmatprep.subr.bf16.mxu0 0
      %10462 = vmatpush1.bf16.msra.mxu0 %v10137
      %10463 = vmatprep.subr.bf16.mxu0 0
      %10464 = vmatpush1.bf16.msra.mxu0 %v10136
      %10465 = vmatprep.subr.bf16.mxu0 0
      %10466 = vmatpush1.bf16.msra.mxu0 %v10135
      %10467 = vmatprep.subr.bf16.mxu0 0
      %10468 = vmatpush1.bf16.msra.mxu0 %v10134
      %10469 = vmatprep.subr.bf16.mxu0 0
      %10470 = vmatpush1.bf16.msra.mxu0 %v10133
      %10471 = vmatprep.subr.bf16.mxu0 0
      %10472 = vmatpush1.bf16.msra.mxu0 %v10132
      %10473 = vmatprep.subr.bf16.mxu0 0
      %10474 = vmatpush1.bf16.msra.mxu0 %v10131
      %10475 = vmatprep.subr.bf16.mxu0 0
      %10476 = vmatpush2.bf16.msra.mxu0 %v10146
      %10477 = vmatprep.subr.bf16.mxu0 0
      %10478 = vmatpush2.bf16.msra.mxu0 %v10145
      %10479 = vmatprep.subr.bf16.mxu0 0
      %10480 = vmatpush2.bf16.msra.mxu0 %v10144
      %10481 = vmatprep.subr.bf16.mxu0 0
      %10482 = vmatpush2.bf16.msra.mxu0 %v10143
      %10483 = vmatprep.subr.bf16.mxu0 0
      %10484 = vmatpush2.bf16.msra.mxu0 %v10142
      %10485 = vmatprep.subr.bf16.mxu0 0
      %10486 = vmatpush2.bf16.msra.mxu0 %v10141
      %10487 = vmatprep.subr.bf16.mxu0 0
      %10488 = vmatpush2.bf16.msra.mxu0 %v10140
      %10489 = vmatprep.subr.bf16.mxu0 0
      %10490 = vmatpush2.bf16.msra.mxu0 %v10139
      %10491 = vmatprep.mubr.bf16.mxu0 %v9546
      %10492 = vmatmul.mubr.bf16.gmra.mxu0 %v9545
      %v10493 = vpop.f32.mrf.mxu0
      %v10494 = vadd.f32 %v10454, %v10493
      %v10495 = vpop.f32.mrf.mxu0
      %v10496 = vpop.f32.mrf.mxu0
      %v10497 = vpop.f32.mrf.mxu0
      %10498 = vdwg.mxu0
      %10499 = vmatprep.subr.bf16.mxu0 0
      %10500 = vmatpush1.bf16.msra.mxu0 %v10154
      %10501 = vmatprep.subr.bf16.mxu0 0
      %10502 = vmatpush1.bf16.msra.mxu0 %v10153
      %10503 = vmatprep.subr.bf16.mxu0 0
      %10504 = vmatpush1.bf16.msra.mxu0 %v10152
      %10505 = vmatprep.subr.bf16.mxu0 0
      %10506 = vmatpush1.bf16.msra.mxu0 %v10151
      %10507 = vmatprep.subr.bf16.mxu0 0
      %10508 = vmatpush1.bf16.msra.mxu0 %v10150
      %10509 = vmatprep.subr.bf16.mxu0 0
      %10510 = vmatpush1.bf16.msra.mxu0 %v10149
      %10511 = vmatprep.subr.bf16.mxu0 0
      %10512 = vmatpush1.bf16.msra.mxu0 %v10148
      %10513 = vmatprep.subr.bf16.mxu0 0
      %10514 = vmatpush1.bf16.msra.mxu0 %v10147
      %10515 = vmatprep.subr.bf16.mxu0 0
      %10516 = vmatpush2.bf16.msra.mxu0 %v10162
      %10517 = vmatprep.subr.bf16.mxu0 0
      %10518 = vmatpush2.bf16.msra.mxu0 %v10161
      %10519 = vmatprep.subr.bf16.mxu0 0
      %10520 = vmatpush2.bf16.msra.mxu0 %v10160
      %10521 = vmatprep.subr.bf16.mxu0 0
      %10522 = vmatpush2.bf16.msra.mxu0 %v10159
      %10523 = vmatprep.subr.bf16.mxu0 0
      %10524 = vmatpush2.bf16.msra.mxu0 %v10158
      %10525 = vmatprep.subr.bf16.mxu0 0
      %10526 = vmatpush2.bf16.msra.mxu0 %v10157
      %10527 = vmatprep.subr.bf16.mxu0 0
      %10528 = vmatpush2.bf16.msra.mxu0 %v10156
      %10529 = vmatprep.subr.bf16.mxu0 0
      %10530 = vmatpush2.bf16.msra.mxu0 %v10155
      %10531 = vmatprep.mubr.bf16.mxu0 %v9548
      %10532 = vmatmul.mubr.bf16.gmra.mxu0 %v9547
      %v10533 = vpop.f32.mrf.mxu0
      %v10534 = vadd.f32 %v10494, %v10533
      %v10535 = vpop.f32.mrf.mxu0
      %v10536 = vpop.f32.mrf.mxu0
      %v10537 = vpop.f32.mrf.mxu0
      %10538 = vdwg.mxu0
      %10539 = vmatprep.subr.bf16.mxu0 0
      %10540 = vmatpush1.bf16.msra.mxu0 %v10170
      %10541 = vmatprep.subr.bf16.mxu0 0
      %10542 = vmatpush1.bf16.msra.mxu0 %v10169
      %10543 = vmatprep.subr.bf16.mxu0 0
      %10544 = vmatpush1.bf16.msra.mxu0 %v10168
      %10545 = vmatprep.subr.bf16.mxu0 0
      %10546 = vmatpush1.bf16.msra.mxu0 %v10167
      %10547 = vmatprep.subr.bf16.mxu0 0
      %10548 = vmatpush1.bf16.msra.mxu0 %v10166
      %10549 = vmatprep.subr.bf16.mxu0 0
      %10550 = vmatpush1.bf16.msra.mxu0 %v10165
      %10551 = vmatprep.subr.bf16.mxu0 0
      %10552 = vmatpush1.bf16.msra.mxu0 %v10164
      %10553 = vmatprep.subr.bf16.mxu0 0
      %10554 = vmatpush1.bf16.msra.mxu0 %v10163
      %10555 = vmatprep.subr.bf16.mxu0 0
      %10556 = vmatpush2.bf16.msra.mxu0 %v10178
      %10557 = vmatprep.subr.bf16.mxu0 0
      %10558 = vmatpush2.bf16.msra.mxu0 %v10177
      %10559 = vmatprep.subr.bf16.mxu0 0
      %10560 = vmatpush2.bf16.msra.mxu0 %v10176
      %10561 = vmatprep.subr.bf16.mxu0 0
      %10562 = vmatpush2.bf16.msra.mxu0 %v10175
      %10563 = vmatprep.subr.bf16.mxu0 0
      %10564 = vmatpush2.bf16.msra.mxu0 %v10174
      %10565 = vmatprep.subr.bf16.mxu0 0
      %10566 = vmatpush2.bf16.msra.mxu0 %v10173
      %10567 = vmatprep.subr.bf16.mxu0 0
      %10568 = vmatpush2.bf16.msra.mxu0 %v10172
      %10569 = vmatprep.subr.bf16.mxu0 0
      %10570 = vmatpush2.bf16.msra.mxu0 %v10171
      %10571 = vmatprep.mubr.bf16.mxu0 %v9550
      %10572 = vmatmul.mubr.bf16.gmra.mxu0 %v9549
      %v10573 = vpop.f32.mrf.mxu0
      %v10574 = vadd.f32 %v10534, %v10573
      %v10575 = vpop.f32.mrf.mxu0
      %v10576 = vpop.f32.mrf.mxu0
      %v10577 = vpop.f32.mrf.mxu0
      %10578 = vdwg.mxu0
      %10579 = vmatprep.subr.bf16.mxu0 0
      %10580 = vmatpush1.bf16.msra.mxu0 %v10186
      %10581 = vmatprep.subr.bf16.mxu0 0
      %10582 = vmatpush1.bf16.msra.mxu0 %v10185
      %10583 = vmatprep.subr.bf16.mxu0 0
      %10584 = vmatpush1.bf16.msra.mxu0 %v10184
      %10585 = vmatprep.subr.bf16.mxu0 0
      %10586 = vmatpush1.bf16.msra.mxu0 %v10183
      %10587 = vmatprep.subr.bf16.mxu0 0
      %10588 = vmatpush1.bf16.msra.mxu0 %v10182
      %10589 = vmatprep.subr.bf16.mxu0 0
      %10590 = vmatpush1.bf16.msra.mxu0 %v10181
      %10591 = vmatprep.subr.bf16.mxu0 0
      %10592 = vmatpush1.bf16.msra.mxu0 %v10180
      %10593 = vmatprep.subr.bf16.mxu0 0
      %10594 = vmatpush1.bf16.msra.mxu0 %v10179
      %10595 = vmatprep.subr.bf16.mxu0 0
      %10596 = vmatpush2.bf16.msra.mxu0 %v10194
      %10597 = vmatprep.subr.bf16.mxu0 0
      %10598 = vmatpush2.bf16.msra.mxu0 %v10193
      %10599 = vmatprep.subr.bf16.mxu0 0
      %10600 = vmatpush2.bf16.msra.mxu0 %v10192
      %10601 = vmatprep.subr.bf16.mxu0 0
      %10602 = vmatpush2.bf16.msra.mxu0 %v10191
      %10603 = vmatprep.subr.bf16.mxu0 0
      %10604 = vmatpush2.bf16.msra.mxu0 %v10190
      %10605 = vmatprep.subr.bf16.mxu0 0
      %10606 = vmatpush2.bf16.msra.mxu0 %v10189
      %10607 = vmatprep.subr.bf16.mxu0 0
      %10608 = vmatpush2.bf16.msra.mxu0 %v10188
      %10609 = vmatprep.subr.bf16.mxu0 0
      %10610 = vmatpush2.bf16.msra.mxu0 %v10187
      %10611 = vmatprep.mubr.bf16.mxu0 %v9552
      %10612 = vmatmul.mubr.bf16.gmra.mxu0 %v9551
      %v10613 = vpop.f32.mrf.mxu0
      %v10614 = vadd.f32 %v10574, %v10613
      %v10615 = vpop.f32.mrf.mxu0
      %v10616 = vpop.f32.mrf.mxu0
      %v10617 = vpop.f32.mrf.mxu0
      %10618 = vdwg.mxu0
      %10619 = vmatprep.subr.bf16.mxu0 0
      %10620 = vmatpush1.bf16.msra.mxu0 %v10202
      %10621 = vmatprep.subr.bf16.mxu0 0
      %10622 = vmatpush1.bf16.msra.mxu0 %v10201
      %10623 = vmatprep.subr.bf16.mxu0 0
      %10624 = vmatpush1.bf16.msra.mxu0 %v10200
      %10625 = vmatprep.subr.bf16.mxu0 0
      %10626 = vmatpush1.bf16.msra.mxu0 %v10199
      %10627 = vmatprep.subr.bf16.mxu0 0
      %10628 = vmatpush1.bf16.msra.mxu0 %v10198
      %10629 = vmatprep.subr.bf16.mxu0 0
      %10630 = vmatpush1.bf16.msra.mxu0 %v10197
      %10631 = vmatprep.subr.bf16.mxu0 0
      %10632 = vmatpush1.bf16.msra.mxu0 %v10196
      %10633 = vmatprep.subr.bf16.mxu0 0
      %10634 = vmatpush1.bf16.msra.mxu0 %v10195
      %10635 = vmatprep.subr.bf16.mxu0 0
      %10636 = vmatpush2.bf16.msra.mxu0 %v10210
      %10637 = vmatprep.subr.bf16.mxu0 0
      %10638 = vmatpush2.bf16.msra.mxu0 %v10209
      %10639 = vmatprep.subr.bf16.mxu0 0
      %10640 = vmatpush2.bf16.msra.mxu0 %v10208
      %10641 = vmatprep.subr.bf16.mxu0 0
      %10642 = vmatpush2.bf16.msra.mxu0 %v10207
      %10643 = vmatprep.subr.bf16.mxu0 0
      %10644 = vmatpush2.bf16.msra.mxu0 %v10206
      %10645 = vmatprep.subr.bf16.mxu0 0
      %10646 = vmatpush2.bf16.msra.mxu0 %v10205
      %10647 = vmatprep.subr.bf16.mxu0 0
      %10648 = vmatpush2.bf16.msra.mxu0 %v10204
      %10649 = vmatprep.subr.bf16.mxu0 0
      %10650 = vmatpush2.bf16.msra.mxu0 %v10203
      %10651 = vmatprep.mubr.bf16.mxu0 %v9554
      %10652 = vmatmul.mubr.bf16.gmra.mxu0 %v9553
      %v10653 = vpop.f32.mrf.mxu0
      %v10654 = vadd.f32 %v10614, %v10653
      %v10655 = vpop.f32.mrf.mxu0
      %v10656 = vpop.f32.mrf.mxu0
      %v10657 = vpop.f32.mrf.mxu0
      %10658 = vdwg.mxu0
      %s10659 = scalar_lea.vmem %s241, 8
      %10660 = vst.msk [vmem:[%s10659] sm:$0x3] %vm3879, %v10654
      %s10661 = smul.u32 5, %s15
      %p10662 = scmp.lt.s32.totalorder %s10661, 9
      %s10663 = scalar_select %p10662, %s10661, 9
      %s10664 = smul.addr %s10663, 2
      %s10665 = scalar_lea.vmem %s4, %s10664
      // Predicated region
      $region37: #{tpu_custom_call.1} parent=35 // pred_check
        %p10666 = pneg %p132
      $region38: #{tpu_custom_call.1} parent=35 // pred_check_branch
        %10668 = sbr.rel (%p10666) target = $region40
      $region39: #{tpu_custom_call.1} parent=35 // pred_region
        %s10669 = smul.u32 5, %s15
      $region40: #{tpu_custom_call.1} parent=35 // pred_fallthru
        _
    $region36: #{tpu_custom_call.1} parent=5 // pred_fallthru
      _
    %p10670 = scmp.le.s32.totalorder 2, %s10
    // Predicated region
    $region41: #{tpu_custom_call.1} parent=5 // pred_check
      %p10671 = pneg %p10670
    $region42: #{tpu_custom_call.1} parent=5 // pred_check_branch
      %10673 = sbr.rel (%p10671) target = $region44
    $region43: #{tpu_custom_call.1} parent=5 // pred_region
      %s10674 = ssub.s32 %s10, 2
      // Predicated region
      $region45: #{tpu_custom_call.1} parent=43 // pred_check
        %p10675 = pneg %p138
      $region46: #{tpu_custom_call.1} parent=43 // pred_check_branch
        %10677 = sbr.rel (%p10675) target = $region48
      $region47: #{tpu_custom_call.1} parent=43 // pred_region
        %s10678 = smul.u32 5, %s16
        %p10679 = scmp.lt.s32.totalorder %s10678, 9
        %s10680 = scalar_select %p10679, %s10678, 9
        %s10681 = smul.addr %s10680, 2
        %s10682 = scalar_lea.vmem %s4, %s10681
      $region48: #{tpu_custom_call.1} parent=43 // pred_fallthru
        _
    $region44: #{tpu_custom_call.1} parent=5 // pred_fallthru
      _
  $region6: #{tpu_custom_call.1} parent=0 // loop_footer
    %s14 = sadd.s32 1, %s10
  $region7: #{tpu_custom_call.1} parent=0 // loop_footer_branch
    %9 = sbr.rel target = $region3
  $region8: #{tpu_custom_call.1} parent=0 // loop_exit
    _

</llo_original>
